<compile_context>
chip_gen: v5e
topology: v5e:2x2
jax: 0.10.0
libtpu: 0.0.40
codegen_flags: <defaults>
</compile_context>

<pallas_src>
import functools
import numpy as np
import jax
import jax.numpy as jnp
from jax.experimental import pallas as pl
from jax.experimental.pallas import tpu as pltpu

F32 = jnp.float32
MXU_DTYPE = jnp.bfloat16       # matmul inputs; accumulation / VPU math stay f32
LN_EPS = 1e-5
BN_EPS = 1e-5
GSIZE = 8                      # channels per depthwise-conv group (groups = inner // 8)

# Ordered per-layer parameter names (kernel unpacks positionally in this order).
LAYER_PARAM_KEYS = (
    'ff1_g', 'ff1_b', 'ff1_wa', 'ff1_ba', 'ff1_wb', 'ff1_bb', 'ff1_wo', 'ff1_bo',
    'attn_g', 'attn_b', 'wq', 'bq', 'wk', 'bk', 'wv', 'bv', 'wo', 'bo',
    'conv_g', 'conv_b', 'conv_wa', 'conv_ba', 'conv_wb', 'conv_bb',
    'conv_dw', 'conv_dwb', 'bn_s', 'bn_b', 'conv_w2', 'conv_b2',
    'ff2_g', 'ff2_b', 'ff2_wa', 'ff2_ba', 'ff2_wb', 'ff2_bb', 'ff2_wo', 'ff2_bo',
    'norm_g', 'norm_b',
)


# ----------------------------- in-kernel helpers -----------------------------

def _layernorm(x, g, b):
    mu = jnp.mean(x, axis=-1, keepdims=True)
    var = jnp.mean(jnp.square(x - mu), axis=-1, keepdims=True)
    return (x - mu) * jax.lax.rsqrt(var + LN_EPS) * g + b


def _silu(x):
    return x * jax.nn.sigmoid(x)


def _mm(a, b):
    # MXU matmul: bf16 (or f32) inputs, f32 accumulation.
    return jnp.dot(a, b, preferred_element_type=F32)


def _softmax_last(s):
    m = jnp.max(s, axis=-1, keepdims=True)
    e = jnp.exp(s - m)
    return e * pl.reciprocal(jnp.sum(e, axis=-1, keepdims=True), approx=True)


def _ffn_block(x, g, b, wa, ba, wb, bb, wo, bo):
    # FeedForward with SwiGLU: proj_in split into two D-wide matmuls.
    h = _layernorm(x, g, b)
    hb = h.astype(MXU_DTYPE)
    z = _silu(_mm(hb, wa) + ba) * (_mm(hb, wb) + bb)
    return _mm(z.astype(MXU_DTYPE), wo) + bo


def _mha_block(x, g, b, wq, bq, wk, bk, wv, bv, wo, bo, tb, seq, heads, dim_head):
    # Multi-head self attention over a (tb*seq, D) row block.
    # Q/K/V/out projections are fused D-wide matmuls; only the score/context
    # einsums (inherently per head, batched over tb) remain per head.
    h = _layernorm(x, g, b)
    hb = h.astype(MXU_DTYPE)
    hd_all = heads * dim_head
    q = (_mm(hb, wq) + bq).reshape(tb, seq, hd_all)   # scale folded into wq/bq
    k = (_mm(hb, wk) + bk).reshape(tb, seq, hd_all)
    v = (_mm(hb, wv) + bv).reshape(tb, seq, hd_all)
    ctx_heads = []
    for hidx in range(heads):
        lo = hidx * dim_head
        qh = q[:, :, lo:lo + dim_head].astype(MXU_DTYPE)
        kh = k[:, :, lo:lo + dim_head].astype(MXU_DTYPE)
        vh = v[:, :, lo:lo + dim_head].astype(MXU_DTYPE)
        s = jnp.einsum('bqe,bke->bqk', qh, kh, preferred_element_type=F32)
        p = _softmax_last(s)
        ctx_heads.append(jnp.einsum('bqk,bke->bqe', p.astype(MXU_DTYPE), vh,
                                    preferred_element_type=F32))
    ctx = jnp.concatenate(ctx_heads, axis=-1).reshape(tb * seq, hd_all)
    return _mm(ctx.astype(MXU_DTYPE), wo) + bo


def _conv_block(x, g, b, wa, ba, wb, bb, dw_ref, dwb, bn_s, bn_b, w2, b2,
                pad_ref, tb, seq):
    # Conformer convolution module on a (tb*seq, D) row block.
    # dw_ref holds the true grouped depthwise weights packed as per-tap
    # block-diagonal (inner, inner) matrices -> K MXU matmuls over
    # time-shifted windows sliced straight from the VMEM scratch.
    ksize = dw_ref.shape[0]
    inner = dw_ref.shape[1]
    pad = (ksize - 1) // 2

    h = _layernorm(x, g, b)
    hb = h.astype(MXU_DTYPE)
    u = (_mm(hb, wa) + ba) * jax.nn.sigmoid(_mm(hb, wb) + bb)   # pointwise1 + GLU

    # Zero only the pad halo (middle seq rows are overwritten every step).
    # Done unconditionally: scratch is uninitialized / per-core, so this is
    # the generation-safe choice and the halo is tiny.
    if pad > 0:
        pad_ref[:, :pad, :] = jnp.zeros((tb, pad, inner), F32)
    if ksize - 1 - pad > 0:
        pad_ref[:, pad + seq:, :] = jnp.zeros((tb, ksize - 1 - pad, inner), F32)
    pad_ref[:, pad:pad + seq, :] = u.reshape(tb, seq, inner)

    # Grouped depthwise conv: K matmuls with block-diagonal per-tap weights,
    # two independent accumulators to break the serial dependence chain.
    acc = [jnp.zeros((tb * seq, inner), F32), jnp.zeros((tb * seq, inner), F32)]
    for k in range(ksize):
        win = pad_ref[:, k:k + seq, :].reshape(tb * seq, inner).astype(MXU_DTYPE)
        acc[k % 2] = acc[k % 2] + _mm(win, dw_ref[k])
    c = acc[0] + acc[1] + dwb
    # TODO(synk): BatchNorm1d folded with eval-mode running stats (mean=0, var=1);
    # train-mode batch statistics are not reproduced.
    c = c * bn_s + bn_b
    c = _silu(c)
    return _mm(c.astype(MXU_DTYPE), w2) + b2                    # pointwise conv2


# --------------------------------- kernels -----------------------------------

def in_proj_kernel(x_ref, w_ref, b_ref, pe_ref, o_ref, *, tb, seq):
    # input_projection + absolute sinusoidal positional encoding
    # (pe is a (S, D) block broadcast over the tb batch rows in-kernel).
    y = _mm(x_ref[...].astype(MXU_DTYPE), w_ref[...]) + b_ref[...]
    y = y.reshape(tb, seq, -1) + pe_ref[...][None, :, :]
    o_ref[...] = y.reshape(tb * seq, -1)


def conformer_layer_kernel(*refs, tb, seq, heads, dim_head):
    # Whole ConformerBlock fused: x + .5*FF1 -> +MHA -> +Conv -> +.5*FF2 -> LN
    x_ref = refs[0]
    (ff1_g, ff1_b, ff1_wa, ff1_ba, ff1_wb, ff1_bb, ff1_wo, ff1_bo,
     at_g, at_b, wq, bq, wk, bk, wv, bv, awo, abo,
     cv_g, cv_b, cv_wa, cv_ba, cv_wb, cv_bb, cdw, cdwb, bns, bnb, cv_w2, cv_b2,
     ff2_g, ff2_b, ff2_wa, ff2_ba, ff2_wb, ff2_bb, ff2_wo, ff2_bo,
     nm_g, nm_b) = refs[1:41]
    o_ref = refs[41]
    pad_ref = refs[42]

    x = x_ref[...]                                               # (tb*seq, D) f32

    x = x + 0.5 * _ffn_block(x, ff1_g[...], ff1_b[...], ff1_wa[...], ff1_ba[...],
                             ff1_wb[...], ff1_bb[...], ff1_wo[...], ff1_bo[...])

    x = x + _mha_block(x, at_g[...], at_b[...], wq[...], bq[...], wk[...], bk[...],
                       wv[...], bv[...], awo[...], abo[...],
                       tb, seq, heads, dim_head)

    x = x + _conv_block(x, cv_g[...], cv_b[...], cv_wa[...], cv_ba[...],
                        cv_wb[...], cv_bb[...], cdw, cdwb[...],
                        bns[...], bnb[...], cv_w2[...], cv_b2[...],
                        pad_ref, tb, seq)

    x = x + 0.5 * _ffn_block(x, ff2_g[...], ff2_b[...], ff2_wa[...], ff2_ba[...],
                             ff2_wb[...], ff2_bb[...], ff2_wo[...], ff2_bo[...])

    o_ref[...] = _layernorm(x, nm_g[...], nm_b[...])


def pool_cls_kernel(x_ref, pw1_ref, pb1_ref, pw2_ref, pb2_ref,
                    cw1_ref, cb1_ref, cg_ref, cbeta_ref, cw2_ref, cb2_ref,
                    o_ref, *, batch, seq):
    # Attentive pooling over the sequence + classifier MLP, whole batch at once.
    x = x_ref[...]                                               # (B*S, D) f32
    h = jnp.tanh(_mm(x.astype(MXU_DTYPE), pw1_ref[...]) + pb1_ref[...])
    s = _mm(h.astype(MXU_DTYPE), pw2_ref[...]) + pb2_ref[...]    # (B*S, 1)
    s3 = s.reshape(batch, seq, 1)
    s3 = s3 - jnp.max(s3, axis=1, keepdims=True)
    e = jnp.exp(s3)
    w = e * pl.reciprocal(jnp.sum(e, axis=1, keepdims=True), approx=True)
    x3 = x.reshape(batch, seq, x.shape[1])
    pooled = jnp.sum(x3 * w, axis=1)                             # (B, D)
    c = _mm(pooled.astype(MXU_DTYPE), cw1_ref[...]) + cb1_ref[...]
    c = _layernorm(c, cg_ref[...], cbeta_ref[...])
    c = jnp.maximum(c, 0.0)
    o_ref[...] = _mm(c.astype(MXU_DTYPE), cw2_ref[...]) + cb2_ref[...]   # (B, C)


# --------------------------------- wrappers -----------------------------------

def _const_spec(a):
    # Full-array block with a constant index map -> stays VMEM-resident
    # across grid steps (no re-fetch per step).
    zeros = (0,) * a.ndim
    return pl.BlockSpec(tuple(a.shape), lambda i, _z=zeros: _z)


@functools.lru_cache(maxsize=None)
def _vmem_limit_bytes():
    # Generation-aware budget: v5e/v6e have 128 MiB VMEM, v7x only 64 MiB.
    try:
        cap = int(pltpu.get_tpu_info().vmem_capacity_bytes)
    except Exception:
        cap = 64 * 1024 * 1024
    return min(cap * 3 // 4, 100 * 1024 * 1024)


def _compiler_params(grid_rank):
    return pltpu.CompilerParams(
        dimension_semantics=("parallel",) * grid_rank,
        vmem_limit_bytes=_vmem_limit_bytes())


def _pick_batch_tile(batch, seq, target_rows=256):
    # Pack as many batch rows per grid step as possible (target ~256 MXU rows)
    # while keeping the row-block a multiple of 8 (or the full array).
    divisors = [d for d in range(1, batch + 1) if batch % d == 0]
    valid = [d for d in divisors if (d * seq) % 8 == 0]
    if not valid:
        return batch
    under = [d for d in valid if d * seq <= max(target_rows, seq)]
    return max(under) if under else min(valid)


def _input_projection(x_flat, w, b, pe, batch, seq, tb):
    n, din = x_flat.shape
    d = w.shape[1]
    rows = tb * seq
    kern = functools.partial(in_proj_kernel, tb=tb, seq=seq)
    return pl.pallas_call(
        kern,
        out_shape=jax.ShapeDtypeStruct((n, d), F32),
        grid=(batch // tb,),
        in_specs=[pl.BlockSpec((rows, din), lambda i: (i, 0)),
                  _const_spec(w), _const_spec(b), _const_spec(pe)],
        out_specs=pl.BlockSpec((rows, d), lambda i: (i, 0)),
        compiler_params=_compiler_params(1),
    )(x_flat, w, b, pe)


def _conformer_layer(h, lp, batch, seq, tb, heads):
    n, d = h.shape
    ksize, inner, _ = lp['conv_dw'].shape
    dim_head = lp['wq'].shape[1] // heads
    rows = tb * seq
    weights = [lp[k] for k in LAYER_PARAM_KEYS]
    kern = functools.partial(conformer_layer_kernel, tb=tb, seq=seq,
                             heads=heads, dim_head=dim_head)
    in_specs = [pl.BlockSpec((rows, d), lambda i: (i, 0))]
    in_specs += [_const_spec(w) for w in weights]
    return pl.pallas_call(
        kern,
        out_shape=jax.ShapeDtypeStruct((n, d), F32),
        grid=(batch // tb,),
        in_specs=in_specs,
        out_specs=pl.BlockSpec((rows, d), lambda i: (i, 0)),
        scratch_shapes=[pltpu.VMEM((tb, seq + ksize - 1, inner), F32)],
        input_output_aliases={0: 0},
        compiler_params=_compiler_params(1),
    )(h, *weights)


def _pool_classify(h, p, batch, seq):
    n, d = h.shape
    num_classes = p['cls_w2'].shape[1]
    ws = [p['pool_w1'], p['pool_b1'], p['pool_w2'], p['pool_b2'],
          p['cls_w1'], p['cls_b1'], p['cls_ln_g'], p['cls_ln_b'],
          p['cls_w2'], p['cls_b2']]
    kern = functools.partial(pool_cls_kernel, batch=batch, seq=seq)
    return pl.pallas_call(
        kern,
        out_shape=jax.ShapeDtypeStruct((batch, num_classes), F32),
        grid=(1,),
        in_specs=[pl.BlockSpec((n, d), lambda i: (0, 0))] + [_const_spec(w) for w in ws],
        out_specs=pl.BlockSpec((batch, num_classes), lambda i: (0, 0)),
        compiler_params=_compiler_params(1),
    )(h, *ws)


def streaming_conformer_forward(params, x, *, num_heads):
    batch, seq, din = x.shape
    x_flat = x.astype(F32).reshape(batch * seq, din)
    tb = _pick_batch_tile(batch, seq)
    pe = params['pe'][:seq]                       # (S, D), broadcast in-kernel
    h = _input_projection(x_flat, params['w_in'], params['b_in'], pe, batch, seq, tb)
    # TODO(synk): on v5e/v6e the layer loop could be folded into the grid with a
    # leading L axis and stacked weights to avoid the per-layer HBM round trip.
    for lp in params['layers']:
        h = _conformer_layer(h, lp, batch, seq, tb, num_heads)
    # TODO(synk): Dropout layers are stochastic; implemented eval-mode (identity).
    return _pool_classify(h, params, batch, seq)


# --------------------------------- parameters ---------------------------------

def init_params(key, input_dim, hidden, num_classes, num_layers, num_heads,
                ksize, expansion, max_len=1000):
    keys = iter(jax.random.split(key, 4096))

    def dense(fi, fo, scale=0.05):
        w = (jax.random.normal(next(keys), (fi, fo), F32) * scale).astype(MXU_DTYPE)
        b = jax.random.normal(next(keys), (1, fo), F32) * scale
        return w, b

    ones = lambda n: jnp.ones((1, n), F32)
    zeros = lambda n: jnp.zeros((1, n), F32)

    p = {}
    p['w_in'], p['b_in'] = dense(input_dim, hidden)

    # sinusoidal positional encoding table (added after the input projection)
    pos = np.arange(max_len, dtype=np.float32)[:, None]
    div = np.exp(np.arange(0, hidden, 2, dtype=np.float32) * (-np.log(10000.0) / hidden))
    pe = np.zeros((max_len, hidden), np.float32)
    pe[:, 0::2] = np.sin(pos * div)
    pe[:, 1::2] = np.cos(pos * div)
    p['pe'] = jnp.asarray(pe)

    d_ff = hidden * expansion
    inner_conv = hidden * 2
    dim_head = hidden // num_heads
    inner_attn = num_heads * dim_head
    attn_scale = dim_head ** -0.5
    assert inner_conv % GSIZE == 0

    layers = []
    for _ in range(num_layers):
        lp = {}
        # FF1 (SwiGLU): proj_in split into two (D, d_ff) halves, then proj_out
        lp['ff1_g'], lp['ff1_b'] = ones(hidden), zeros(hidden)
        lp['ff1_wa'], lp['ff1_ba'] = dense(hidden, d_ff)
        lp['ff1_wb'], lp['ff1_bb'] = dense(hidden, d_ff)
        lp['ff1_wo'], lp['ff1_bo'] = dense(d_ff, hidden)
        # Attention: fused head-major projections (D, H*dh); scale folded into q
        lp['attn_g'], lp['attn_b'] = ones(hidden), zeros(hidden)
        wq = jax.random.normal(next(keys), (hidden, inner_attn), F32) * 0.05
        bq = jax.random.normal(next(keys), (1, inner_attn), F32) * 0.05
        lp['wq'] = (wq * attn_scale).astype(MXU_DTYPE)
        lp['bq'] = bq * attn_scale
        lp['wk'], lp['bk'] = dense(hidden, inner_attn)
        lp['wv'], lp['bv'] = dense(hidden, inner_attn)
        lp['wo'], lp['bo'] = dense(inner_attn, hidden)
        # Conv module: pointwise1 split for GLU, grouped depthwise weights packed
        # as per-tap block-diagonal (K, inner, inner) matrices for MXU execution.
        # TODO(synk): for very large inner on v7x prefer the compact (K*8, inner)
        # VPU form to keep the weight footprint small.
        lp['conv_g'], lp['conv_b'] = ones(hidden), zeros(hidden)
        lp['conv_wa'], lp['conv_ba'] = dense(hidden, inner_conv)
        lp['conv_wb'], lp['conv_bb'] = dense(hidden, inner_conv)
        wt = np.asarray(jax.random.normal(next(keys), (inner_conv, GSIZE, ksize), F32)) * 0.05
        wdw = np.zeros((ksize, inner_conv, inner_conv), np.float32)
        for c in range(inner_conv):
            g0 = (c // GSIZE) * GSIZE
            for j in range(GSIZE):
                wdw[:, g0 + j, c] = wt[c, j, :]
        lp['conv_dw'] = jnp.asarray(wdw).astype(MXU_DTYPE)
        lp['conv_dwb'] = jax.random.normal(next(keys), (1, inner_conv), F32) * 0.05
        # BatchNorm1d eval with default running stats (mean=0, var=1, gamma=1, beta=0)
        lp['bn_s'] = jnp.full((1, inner_conv), 1.0 / np.sqrt(1.0 + BN_EPS), F32)
        lp['bn_b'] = jnp.zeros((1, inner_conv), F32)
        lp['conv_w2'], lp['conv_b2'] = dense(inner_conv, hidden)
        # FF2
        lp['ff2_g'], lp['ff2_b'] = ones(hidden), zeros(hidden)
        lp['ff2_wa'], lp['ff2_ba'] = dense(hidden, d_ff)
        lp['ff2_wb'], lp['ff2_bb'] = dense(hidden, d_ff)
        lp['ff2_wo'], lp['ff2_bo'] = dense(d_ff, hidden)
        # final per-block LayerNorm
        lp['norm_g'], lp['norm_b'] = ones(hidden), zeros(hidden)
        layers.append(lp)
    p['layers'] = layers

    # attentive pooling + classifier
    p['pool_w1'], p['pool_b1'] = dense(hidden, hidden)
    p['pool_w2'], p['pool_b2'] = dense(hidden, 1)
    p['cls_w1'], p['cls_b1'] = dense(hidden, hidden * 2)
    p['cls_ln_g'], p['cls_ln_b'] = ones(hidden * 2), zeros(hidden * 2)
    p['cls_w2'], p['cls_b2'] = dense(hidden * 2, num_classes)
    return p


# ----------------------------------- main --------------------------------------

if __name__ == "__main__":
    # Small config consistent with StreamingConformer.forward(): x is [B, S, input_dim]
    B, S = 2, 8
    input_dim, hidden, num_classes = 16, 32, 4
    num_layers, num_heads = 2, 4
    ksize, expansion = 15, 4

    key = jax.random.PRNGKey(0)
    pkey, xkey = jax.random.split(key)
    params = init_params(pkey, input_dim, hidden, num_classes, num_layers,
                         num_heads, ksize, expansion)
    x = jax.random.normal(xkey, (B, S, input_dim), F32)

    fwd = jax.jit(functools.partial(streaming_conformer_forward, num_heads=num_heads))
    logits = jax.block_until_ready(fwd(params, x))

    assert logits.shape == (B, num_classes), logits.shape
    assert bool(jnp.all(jnp.isfinite(logits)))
    print("KERNEL_OK")
</pallas_src>

<mosaic_0001>
module attributes {stable_mosaic.version = 11 : i64} {
  func.func @in_proj_kernel(%arg0: i32, %arg1: memref<16x16xf32, #tpu.memory_space<vmem>>, %arg2: memref<16x32xbf16, #tpu.memory_space<vmem>>, %arg3: memref<1x32xf32, #tpu.memory_space<vmem>>, %arg4: memref<8x32xf32, #tpu.memory_space<vmem>>, %arg5: memref<16x32xf32, #tpu.memory_space<vmem>>) attributes {dimension_semantics = [#tpu.dimension_semantics<parallel>], iteration_bounds = array<i64: 1>, scalar_prefetch = 0 : i64, scratch_operands = 0 : i64, tpu.core_type = #tpu.core_type<tc>, window_params = [{transform_indices = @transform_0, window_bounds = array<i64: 16, 16>}, {pipeline_mode = #tpu.pipeline_mode<synchronous>, transform_indices = @transform_1, window_bounds = array<i64: 16, 32>}, {pipeline_mode = #tpu.pipeline_mode<synchronous>, transform_indices = @transform_2, window_bounds = array<i64: 1, 32>}, {pipeline_mode = #tpu.pipeline_mode<synchronous>, transform_indices = @transform_3, window_bounds = array<i64: 8, 32>}, {transform_indices = @transform_4, window_bounds = array<i64: 16, 32>}]} {
    %c0 = arith.constant 0 : index
    %c0_0 = arith.constant 0 : index
    %0 = vector.load %arg1[%c0, %c0_0] : memref<16x16xf32, #tpu.memory_space<vmem>>, vector<16x16xf32>
    %1 = arith.truncf %0 : vector<16x16xf32> to vector<16x16xbf16>
    %c0_1 = arith.constant 0 : index
    %c0_2 = arith.constant 0 : index
    %2 = vector.load %arg2[%c0_1, %c0_2] : memref<16x32xbf16, #tpu.memory_space<vmem>>, vector<16x32xbf16>
    %cst = arith.constant dense<0.000000e+00> : vector<16x32xf32>
    %3 = tpu.matmul %1, %2, %cst {dimension_numbers = #tpu.dot_dimension_numbers<[1], [0], [0], [1], [0, 0, 1, 1], [], []>} : vector<16x16xbf16>, vector<16x32xbf16>, vector<16x32xf32> -> vector<16x32xf32>
    %c0_3 = arith.constant 0 : index
    %c0_4 = arith.constant 0 : index
    %4 = vector.load %arg3[%c0_3, %c0_4] : memref<1x32xf32, #tpu.memory_space<vmem>>, vector<1x32xf32>
    %5 = vector.broadcast %4 : vector<1x32xf32> to vector<16x32xf32>
    %6 = arith.addf %3, %5 : vector<16x32xf32>
    %7 = vector.shape_cast %6 : vector<16x32xf32> to vector<2x8x32xf32>
    %c0_5 = arith.constant 0 : index
    %c0_6 = arith.constant 0 : index
    %8 = vector.load %arg4[%c0_5, %c0_6] : memref<8x32xf32, #tpu.memory_space<vmem>>, vector<8x32xf32>
    %9 = vector.shape_cast %8 : vector<8x32xf32> to vector<1x8x32xf32>
    %10 = vector.broadcast %9 : vector<1x8x32xf32> to vector<2x8x32xf32>
    %11 = arith.addf %7, %10 : vector<2x8x32xf32>
    %12 = vector.shape_cast %11 : vector<2x8x32xf32> to vector<16x32xf32>
    %c0_7 = arith.constant 0 : index
    %c0_8 = arith.constant 0 : index
    %13 = vector.load %arg5[%c0_7, %c0_8] : memref<16x32xf32, #tpu.memory_space<vmem>>, vector<16x32xf32>
    tpu.vector_store %arg5[%c0_7, %c0_8], %12 {strides = array<i32>} : memref<16x32xf32, #tpu.memory_space<vmem>>, vector<16x32xf32>,
    return
  }
  func.func @transform_0(%arg0: i32) -> (i32, i32) {
    %c0_i32 = arith.constant 0 : i32
    %c0_i32_0 = arith.constant 0 : i32
    return %arg0, %c0_i32 : i32, i32
  }
  func.func @transform_1(%arg0: i32) -> (i32, i32) {
    %c0_i32 = arith.constant 0 : i32
    %c0_i32_0 = arith.constant 0 : i32
    %c0_i32_1 = arith.constant 0 : i32
    return %c0_i32, %c0_i32_0 : i32, i32
  }
  func.func @transform_2(%arg0: i32) -> (i32, i32) {
    %c0_i32 = arith.constant 0 : i32
    %c0_i32_0 = arith.constant 0 : i32
    %c0_i32_1 = arith.constant 0 : i32
    return %c0_i32, %c0_i32_0 : i32, i32
  }
  func.func @transform_3(%arg0: i32) -> (i32, i32) {
    %c0_i32 = arith.constant 0 : i32
    %c0_i32_0 = arith.constant 0 : i32
    %c0_i32_1 = arith.constant 0 : i32
    return %c0_i32, %c0_i32_0 : i32, i32
  }
  func.func @transform_4(%arg0: i32) -> (i32, i32) {
    %c0_i32 = arith.constant 0 : i32
    %c0_i32_0 = arith.constant 0 : i32
    return %arg0, %c0_i32 : i32, i32
  }
}

module attributes {stable_mosaic.version = 11 : i64} {
  func.func @conformer_layer_kernel(%arg0: i32, %arg1: memref<16x32xf32, #tpu.memory_space<vmem>>, %arg2: memref<1x32xf32, #tpu.memory_space<vmem>>, %arg3: memref<1x32xf32, #tpu.memory_space<vmem>>, %arg4: memref<32x128xbf16, #tpu.memory_space<vmem>>, %arg5: memref<1x128xf32, #tpu.memory_space<vmem>>, %arg6: memref<32x128xbf16, #tpu.memory_space<vmem>>, %arg7: memref<1x128xf32, #tpu.memory_space<vmem>>, %arg8: memref<128x32xbf16, #tpu.memory_space<vmem>>, %arg9: memref<1x32xf32, #tpu.memory_space<vmem>>, %arg10: memref<1x32xf32, #tpu.memory_space<vmem>>, %arg11: memref<1x32xf32, #tpu.memory_space<vmem>>, %arg12: memref<32x32xbf16, #tpu.memory_space<vmem>>, %arg13: memref<1x32xf32, #tpu.memory_space<vmem>>, %arg14: memref<32x32xbf16, #tpu.memory_space<vmem>>, %arg15: memref<1x32xf32, #tpu.memory_space<vmem>>, %arg16: memref<32x32xbf16, #tpu.memory_space<vmem>>, %arg17: memref<1x32xf32, #tpu.memory_space<vmem>>, %arg18: memref<32x32xbf16, #tpu.memory_space<vmem>>, %arg19: memref<1x32xf32, #tpu.memory_space<vmem>>, %arg20: memref<1x32xf32, #tpu.memory_space<vmem>>, %arg21: memref<1x32xf32, #tpu.memory_space<vmem>>, %arg22: memref<32x64xbf16, #tpu.memory_space<vmem>>, %arg23: memref<1x64xf32, #tpu.memory_space<vmem>>, %arg24: memref<32x64xbf16, #tpu.memory_space<vmem>>, %arg25: memref<1x64xf32, #tpu.memory_space<vmem>>, %arg26: memref<15x64x64xbf16, #tpu.memory_space<vmem>>, %arg27: memref<1x64xf32, #tpu.memory_space<vmem>>, %arg28: memref<1x64xf32, #tpu.memory_space<vmem>>, %arg29: memref<1x64xf32, #tpu.memory_space<vmem>>, %arg30: memref<64x32xbf16, #tpu.memory_space<vmem>>, %arg31: memref<1x32xf32, #tpu.memory_space<vmem>>, %arg32: memref<1x32xf32, #tpu.memory_space<vmem>>, %arg33: memref<1x32xf32, #tpu.memory_space<vmem>>, %arg34: memref<32x128xbf16, #tpu.memory_space<vmem>>, %arg35: memref<1x128xf32, #tpu.memory_space<vmem>>, %arg36: memref<32x128xbf16, #tpu.memory_space<vmem>>, %arg37: memref<1x128xf32, #tpu.memory_space<vmem>>, %arg38: memref<128x32xbf16, #tpu.memory_space<vmem>>, %arg39: memref<1x32xf32, #tpu.memory_space<vmem>>, %arg40: memref<1x32xf32, #tpu.memory_space<vmem>>, %arg41: memref<1x32xf32, #tpu.memory_space<vmem>>, %arg42: memref<16x32xf32, #tpu.memory_space<vmem>>, %arg43: memref<2x22x64xf32, #tpu.memory_space<vmem>>) attributes {dimension_semantics = [#tpu.dimension_semantics<parallel>], iteration_bounds = array<i64: 1>, scalar_prefetch = 0 : i64, scratch_operands = 1 : i64, tpu.core_type = #tpu.core_type<tc>, window_params = [{transform_indices = @transform_0, window_bounds = array<i64: 16, 32>}, {pipeline_mode = #tpu.pipeline_mode<synchronous>, transform_indices = @transform_1, window_bounds = array<i64: 1, 32>}, {pipeline_mode = #tpu.pipeline_mode<synchronous>, transform_indices = @transform_2, window_bounds = array<i64: 1, 32>}, {pipeline_mode = #tpu.pipeline_mode<synchronous>, transform_indices = @transform_3, window_bounds = array<i64: 32, 128>}, {pipeline_mode = #tpu.pipeline_mode<synchronous>, transform_indices = @transform_4, window_bounds = array<i64: 1, 128>}, {pipeline_mode = #tpu.pipeline_mode<synchronous>, transform_indices = @transform_5, window_bounds = array<i64: 32, 128>}, {pipeline_mode = #tpu.pipeline_mode<synchronous>, transform_indices = @transform_6, window_bounds = array<i64: 1, 128>}, {pipeline_mode = #tpu.pipeline_mode<synchronous>, transform_indices = @transform_7, window_bounds = array<i64: 128, 32>}, {pipeline_mode = #tpu.pipeline_mode<synchronous>, transform_indices = @transform_8, window_bounds = array<i64: 1, 32>}, {pipeline_mode = #tpu.pipeline_mode<synchronous>, transform_indices = @transform_9, window_bounds = array<i64: 1, 32>}, {pipeline_mode = #tpu.pipeline_mode<synchronous>, transform_indices = @transform_10, window_bounds = array<i64: 1, 32>}, {pipeline_mode = #tpu.pipeline_mode<synchronous>, transform_indices = @transform_11, window_bounds = array<i64: 32, 32>}, {pipeline_mode = #tpu.pipeline_mode<synchronous>, transform_indices = @transform_12, window_bounds = array<i64: 1, 32>}, {pipeline_mode = #tpu.pipeline_mode<synchronous>, transform_indices = @transform_13, window_bounds = array<i64: 32, 32>}, {pipeline_mode = #tpu.pipeline_mode<synchronous>, transform_indices = @transform_14, window_bounds = array<i64: 1, 32>}, {pipeline_mode = #tpu.pipeline_mode<synchronous>, transform_indices = @transform_15, window_bounds = array<i64: 32, 32>}, {pipeline_mode = #tpu.pipeline_mode<synchronous>, transform_indices = @transform_16, window_bounds = array<i64: 1, 32>}, {pipeline_mode = #tpu.pipeline_mode<synchronous>, transform_indices = @transform_17, window_bounds = array<i64: 32, 32>}, {pipeline_mode = #tpu.pipeline_mode<synchronous>, transform_indices = @transform_18, window_bounds = array<i64: 1, 32>}, {pipeline_mode = #tpu.pipeline_mode<synchronous>, transform_indices = @transform_19, window_bounds = array<i64: 1, 32>}, {pipeline_mode = #tpu.pipeline_mode<synchronous>, transform_indices = @transform_20, window_bounds = array<i64: 1, 32>}, {pipeline_mode = #tpu.pipeline_mode<synchronous>, transform_indices = @transform_21, window_bounds = array<i64: 32, 64>}, {pipeline_mode = #tpu.pipeline_mode<synchronous>, transform_indices = @transform_22, window_bounds = array<i64: 1, 64>}, {pipeline_mode = #tpu.pipeline_mode<synchronous>, transform_indices = @transform_23, window_bounds = array<i64: 32, 64>}, {pipeline_mode = #tpu.pipeline_mode<synchronous>, transform_indices = @transform_24, window_bounds = array<i64: 1, 64>}, {pipeline_mode = #tpu.pipeline_mode<synchronous>, transform_indices = @transform_25, window_bounds = array<i64: 15, 64, 64>}, {pipeline_mode = #tpu.pipeline_mode<synchronous>, transform_indices = @transform_26, window_bounds = array<i64: 1, 64>}, {pipeline_mode = #tpu.pipeline_mode<synchronous>, transform_indices = @transform_27, window_bounds = array<i64: 1, 64>}, {pipeline_mode = #tpu.pipeline_mode<synchronous>, transform_indices = @transform_28, window_bounds = array<i64: 1, 64>}, {pipeline_mode = #tpu.pipeline_mode<synchronous>, transform_indices = @transform_29, window_bounds = array<i64: 64, 32>}, {pipeline_mode = #tpu.pipeline_mode<synchronous>, transform_indices = @transform_30, window_bounds = array<i64: 1, 32>}, {pipeline_mode = #tpu.pipeline_mode<synchronous>, transform_indices = @transform_31, window_bounds = array<i64: 1, 32>}, {pipeline_mode = #tpu.pipeline_mode<synchronous>, transform_indices = @transform_32, window_bounds = array<i64: 1, 32>}, {pipeline_mode = #tpu.pipeline_mode<synchronous>, transform_indices = @transform_33, window_bounds = array<i64: 32, 128>}, {pipeline_mode = #tpu.pipeline_mode<synchronous>, transform_indices = @transform_34, window_bounds = array<i64: 1, 128>}, {pipeline_mode = #tpu.pipeline_mode<synchronous>, transform_indices = @transform_35, window_bounds = array<i64: 32, 128>}, {pipeline_mode = #tpu.pipeline_mode<synchronous>, transform_indices = @transform_36, window_bounds = array<i64: 1, 128>}, {pipeline_mode = #tpu.pipeline_mode<synchronous>, transform_indices = @transform_37, window_bounds = array<i64: 128, 32>}, {pipeline_mode = #tpu.pipeline_mode<synchronous>, transform_indices = @transform_38, window_bounds = array<i64: 1, 32>}, {pipeline_mode = #tpu.pipeline_mode<synchronous>, transform_indices = @transform_39, window_bounds = array<i64: 1, 32>}, {pipeline_mode = #tpu.pipeline_mode<synchronous>, transform_indices = @transform_40, window_bounds = array<i64: 1, 32>}, {transform_indices = @transform_41, window_bounds = array<i64: 16, 32>}]} {
    %c0 = arith.constant 0 : index
    %c0_0 = arith.constant 0 : index
    %0 = vector.load %arg1[%c0, %c0_0] : memref<16x32xf32, #tpu.memory_space<vmem>>, vector<16x32xf32>
    %c0_1 = arith.constant 0 : index
    %c0_2 = arith.constant 0 : index
    %1 = vector.load %arg2[%c0_1, %c0_2] : memref<1x32xf32, #tpu.memory_space<vmem>>, vector<1x32xf32>
    %c0_3 = arith.constant 0 : index
    %c0_4 = arith.constant 0 : index
    %2 = vector.load %arg3[%c0_3, %c0_4] : memref<1x32xf32, #tpu.memory_space<vmem>>, vector<1x32xf32>
    %c0_5 = arith.constant 0 : index
    %c0_6 = arith.constant 0 : index
    %3 = vector.load %arg4[%c0_5, %c0_6] : memref<32x128xbf16, #tpu.memory_space<vmem>>, vector<32x128xbf16>
    %c0_7 = arith.constant 0 : index
    %c0_8 = arith.constant 0 : index
    %4 = vector.load %arg5[%c0_7, %c0_8] : memref<1x128xf32, #tpu.memory_space<vmem>>, vector<1x128xf32>
    %c0_9 = arith.constant 0 : index
    %c0_10 = arith.constant 0 : index
    %5 = vector.load %arg6[%c0_9, %c0_10] : memref<32x128xbf16, #tpu.memory_space<vmem>>, vector<32x128xbf16>
    %c0_11 = arith.constant 0 : index
    %c0_12 = arith.constant 0 : index
    %6 = vector.load %arg7[%c0_11, %c0_12] : memref<1x128xf32, #tpu.memory_space<vmem>>, vector<1x128xf32>
    %c0_13 = arith.constant 0 : index
    %c0_14 = arith.constant 0 : index
    %7 = vector.load %arg8[%c0_13, %c0_14] : memref<128x32xbf16, #tpu.memory_space<vmem>>, vector<128x32xbf16>
    %c0_15 = arith.constant 0 : index
    %c0_16 = arith.constant 0 : index
    %8 = vector.load %arg9[%c0_15, %c0_16] : memref<1x32xf32, #tpu.memory_space<vmem>>, vector<1x32xf32>
    %cst = arith.constant dense<0.000000e+00> : vector<16xf32>
    %9 = vector.multi_reduction <add>, %0, %cst [1] : vector<16x32xf32> to vector<16xf32>
    %10 = vector.shape_cast %9 : vector<16xf32> to vector<16x1xf32>
    %cst_17 = arith.constant 3.200000e+01 : f32
    %11 = vector.broadcast %cst_17 : f32 to vector<16x1xf32>
    %12 = arith.divf %10, %11 : vector<16x1xf32>
    %13 = vector.broadcast %12 : vector<16x1xf32> to vector<16x32xf32>
    %14 = arith.subf %0, %13 : vector<16x32xf32>
    %15 = arith.mulf %14, %14 : vector<16x32xf32>
    %cst_18 = arith.constant dense<0.000000e+00> : vector<16xf32>
    %16 = vector.multi_reduction <add>, %15, %cst_18 [1] : vector<16x32xf32> to vector<16xf32>
    %17 = vector.shape_cast %16 : vector<16xf32> to vector<16x1xf32>
    %cst_19 = arith.constant 3.200000e+01 : f32
    %18 = vector.broadcast %cst_19 : f32 to vector<16x1xf32>
    %19 = arith.divf %17, %18 : vector<16x1xf32>
    %20 = vector.broadcast %12 : vector<16x1xf32> to vector<16x32xf32>
    %21 = arith.subf %0, %20 : vector<16x32xf32>
    %cst_20 = arith.constant 9.99999974E-6 : f32
    %22 = vector.broadcast %cst_20 : f32 to vector<16x1xf32>
    %23 = arith.addf %19, %22 : vector<16x1xf32>
    %24 = math.rsqrt %23 : vector<16x1xf32>
    %25 = vector.broadcast %24 : vector<16x1xf32> to vector<16x32xf32>
    %26 = arith.mulf %21, %25 : vector<16x32xf32>
    %27 = vector.broadcast %1 : vector<1x32xf32> to vector<16x32xf32>
    %28 = arith.mulf %26, %27 : vector<16x32xf32>
    %29 = vector.broadcast %2 : vector<1x32xf32> to vector<16x32xf32>
    %30 = arith.addf %28, %29 : vector<16x32xf32>
    %31 = arith.truncf %30 : vector<16x32xf32> to vector<16x32xbf16>
    %cst_21 = arith.constant dense<0.000000e+00> : vector<16x128xf32>
    %32 = tpu.matmul %31, %3, %cst_21 {dimension_numbers = #tpu.dot_dimension_numbers<[1], [0], [0], [1], [0, 0, 1, 1], [], []>} : vector<16x32xbf16>, vector<32x128xbf16>, vector<16x128xf32> -> vector<16x128xf32>
    %33 = vector.broadcast %4 : vector<1x128xf32> to vector<16x128xf32>
    %34 = arith.addf %32, %33 : vector<16x128xf32>
    %35 = arith.negf %34 : vector<16x128xf32>
    %36 = math.exp %35 : vector<16x128xf32>
    %cst_22 = arith.constant 1.000000e+00 : f32
    %37 = vector.broadcast %cst_22 : f32 to vector<16x128xf32>
    %38 = arith.addf %37, %36 : vector<16x128xf32>
    %39 = arith.divf %37, %38 : vector<16x128xf32>
    %40 = arith.mulf %34, %39 : vector<16x128xf32>
    %cst_23 = arith.constant dense<0.000000e+00> : vector<16x128xf32>
    %41 = tpu.matmul %31, %5, %cst_23 {dimension_numbers = #tpu.dot_dimension_numbers<[1], [0], [0], [1], [0, 0, 1, 1], [], []>} : vector<16x32xbf16>, vector<32x128xbf16>, vector<16x128xf32> -> vector<16x128xf32>
    %42 = vector.broadcast %6 : vector<1x128xf32> to vector<16x128xf32>
    %43 = arith.addf %41, %42 : vector<16x128xf32>
    %44 = arith.mulf %40, %43 : vector<16x128xf32>
    %45 = arith.truncf %44 : vector<16x128xf32> to vector<16x128xbf16>
    %cst_24 = arith.constant dense<0.000000e+00> : vector<16x32xf32>
    %46 = tpu.matmul %45, %7, %cst_24 {dimension_numbers = #tpu.dot_dimension_numbers<[1], [0], [0], [1], [0, 0, 1, 1], [], []>} : vector<16x128xbf16>, vector<128x32xbf16>, vector<16x32xf32> -> vector<16x32xf32>
    %47 = vector.broadcast %8 : vector<1x32xf32> to vector<16x32xf32>
    %48 = arith.addf %46, %47 : vector<16x32xf32>
    %cst_25 = arith.constant 5.000000e-01 : f32
    %49 = vector.broadcast %cst_25 : f32 to vector<16x32xf32>
    %50 = arith.mulf %49, %48 : vector<16x32xf32>
    %51 = arith.addf %0, %50 : vector<16x32xf32>
    %c0_26 = arith.constant 0 : index
    %c0_27 = arith.constant 0 : index
    %52 = vector.load %arg10[%c0_26, %c0_27] : memref<1x32xf32, #tpu.memory_space<vmem>>, vector<1x32xf32>
    %c0_28 = arith.constant 0 : index
    %c0_29 = arith.constant 0 : index
    %53 = vector.load %arg11[%c0_28, %c0_29] : memref<1x32xf32, #tpu.memory_space<vmem>>, vector<1x32xf32>
    %c0_30 = arith.constant 0 : index
    %c0_31 = arith.constant 0 : index
    %54 = vector.load %arg12[%c0_30, %c0_31] : memref<32x32xbf16, #tpu.memory_space<vmem>>, vector<32x32xbf16>
    %c0_32 = arith.constant 0 : index
    %c0_33 = arith.constant 0 : index
    %55 = vector.load %arg13[%c0_32, %c0_33] : memref<1x32xf32, #tpu.memory_space<vmem>>, vector<1x32xf32>
    %c0_34 = arith.constant 0 : index
    %c0_35 = arith.constant 0 : index
    %56 = vector.load %arg14[%c0_34, %c0_35] : memref<32x32xbf16, #tpu.memory_space<vmem>>, vector<32x32xbf16>
    %c0_36 = arith.constant 0 : index
    %c0_37 = arith.constant 0 : index
    %57 = vector.load %arg15[%c0_36, %c0_37] : memref<1x32xf32, #tpu.memory_space<vmem>>, vector<1x32xf32>
    %c0_38 = arith.constant 0 : index
    %c0_39 = arith.constant 0 : index
    %58 = vector.load %arg16[%c0_38, %c0_39] : memref<32x32xbf16, #tpu.memory_space<vmem>>, vector<32x32xbf16>
    %c0_40 = arith.constant 0 : index
    %c0_41 = arith.constant 0 : index
    %59 = vector.load %arg17[%c0_40, %c0_41] : memref<1x32xf32, #tpu.memory_space<vmem>>, vector<1x32xf32>
    %c0_42 = arith.constant 0 : index
    %c0_43 = arith.constant 0 : index
    %60 = vector.load %arg18[%c0_42, %c0_43] : memref<32x32xbf16, #tpu.memory_space<vmem>>, vector<32x32xbf16>
    %c0_44 = arith.constant 0 : index
    %c0_45 = arith.constant 0 : index
    %61 = vector.load %arg19[%c0_44, %c0_45] : memref<1x32xf32, #tpu.memory_space<vmem>>, vector<1x32xf32>
    %cst_46 = arith.constant dense<0.000000e+00> : vector<16xf32>
    %62 = vector.multi_reduction <add>, %51, %cst_46 [1] : vector<16x32xf32> to vector<16xf32>
    %63 = vector.shape_cast %62 : vector<16xf32> to vector<16x1xf32>
    %cst_47 = arith.constant 3.200000e+01 : f32
    %64 = vector.broadcast %cst_47 : f32 to vector<16x1xf32>
    %65 = arith.divf %63, %64 : vector<16x1xf32>
    %66 = vector.broadcast %65 : vector<16x1xf32> to vector<16x32xf32>
    %67 = arith.subf %51, %66 : vector<16x32xf32>
    %68 = arith.mulf %67, %67 : vector<16x32xf32>
    %cst_48 = arith.constant dense<0.000000e+00> : vector<16xf32>
    %69 = vector.multi_reduction <add>, %68, %cst_48 [1] : vector<16x32xf32> to vector<16xf32>
    %70 = vector.shape_cast %69 : vector<16xf32> to vector<16x1xf32>
    %cst_49 = arith.constant 3.200000e+01 : f32
    %71 = vector.broadcast %cst_49 : f32 to vector<16x1xf32>
    %72 = arith.divf %70, %71 : vector<16x1xf32>
    %73 = vector.broadcast %65 : vector<16x1xf32> to vector<16x32xf32>
    %74 = arith.subf %51, %73 : vector<16x32xf32>
    %cst_50 = arith.constant 9.99999974E-6 : f32
    %75 = vector.broadcast %cst_50 : f32 to vector<16x1xf32>
    %76 = arith.addf %72, %75 : vector<16x1xf32>
    %77 = math.rsqrt %76 : vector<16x1xf32>
    %78 = vector.broadcast %77 : vector<16x1xf32> to vector<16x32xf32>
    %79 = arith.mulf %74, %78 : vector<16x32xf32>
    %80 = vector.broadcast %52 : vector<1x32xf32> to vector<16x32xf32>
    %81 = arith.mulf %79, %80 : vector<16x32xf32>
    %82 = vector.broadcast %53 : vector<1x32xf32> to vector<16x32xf32>
    %83 = arith.addf %81, %82 : vector<16x32xf32>
    %84 = arith.truncf %83 : vector<16x32xf32> to vector<16x32xbf16>
    %cst_51 = arith.constant dense<0.000000e+00> : vector<16x32xf32>
    %85 = tpu.matmul %84, %54, %cst_51 {dimension_numbers = #tpu.dot_dimension_numbers<[1], [0], [0], [1], [0, 0, 1, 1], [], []>} : vector<16x32xbf16>, vector<32x32xbf16>, vector<16x32xf32> -> vector<16x32xf32>
    %86 = vector.broadcast %55 : vector<1x32xf32> to vector<16x32xf32>
    %87 = arith.addf %85, %86 : vector<16x32xf32>
    %88 = vector.shape_cast %87 : vector<16x32xf32> to vector<2x8x32xf32>
    %cst_52 = arith.constant dense<0.000000e+00> : vector<16x32xf32>
    %89 = tpu.matmul %84, %56, %cst_52 {dimension_numbers = #tpu.dot_dimension_numbers<[1], [0], [0], [1], [0, 0, 1, 1], [], []>} : vector<16x32xbf16>, vector<32x32xbf16>, vector<16x32xf32> -> vector<16x32xf32>
    %90 = vector.broadcast %57 : vector<1x32xf32> to vector<16x32xf32>
    %91 = arith.addf %89, %90 : vector<16x32xf32>
    %92 = vector.shape_cast %91 : vector<16x32xf32> to vector<2x8x32xf32>
    %cst_53 = arith.constant dense<0.000000e+00> : vector<16x32xf32>
    %93 = tpu.matmul %84, %58, %cst_53 {dimension_numbers = #tpu.dot_dimension_numbers<[1], [0], [0], [1], [0, 0, 1, 1], [], []>} : vector<16x32xbf16>, vector<32x32xbf16>, vector<16x32xf32> -> vector<16x32xf32>
    %94 = vector.broadcast %59 : vector<1x32xf32> to vector<16x32xf32>
    %95 = arith.addf %93, %94 : vector<16x32xf32>
    %96 = vector.shape_cast %95 : vector<16x32xf32> to vector<2x8x32xf32>
    %97 = vector.extract_strided_slice %88 {offsets = [0, 0, 0], sizes = [2, 8, 8], strides = [1, 1, 1]} : vector<2x8x32xf32> to vector<2x8x8xf32>
    %98 = arith.truncf %97 : vector<2x8x8xf32> to vector<2x8x8xbf16>
    %99 = vector.extract_strided_slice %92 {offsets = [0, 0, 0], sizes = [2, 8, 8], strides = [1, 1, 1]} : vector<2x8x32xf32> to vector<2x8x8xf32>
    %100 = arith.truncf %99 : vector<2x8x8xf32> to vector<2x8x8xbf16>
    %101 = vector.extract_strided_slice %96 {offsets = [0, 0, 0], sizes = [2, 8, 8], strides = [1, 1, 1]} : vector<2x8x32xf32> to vector<2x8x8xf32>
    %102 = arith.truncf %101 : vector<2x8x8xf32> to vector<2x8x8xbf16>
    "tpu.trace_start"() <{level = 10 : i32, message = "bqe,bke->bqk"}> : () -> ()
    %cst_54 = arith.constant dense<0.000000e+00> : vector<2x8x8xf32>
    %103 = tpu.matmul %98, %100, %cst_54 {dimension_numbers = #tpu.dot_dimension_numbers<[2], [2], [1], [1], [0, 0, 0, 1, 1, 1], [0], [0]>} : vector<2x8x8xbf16>, vector<2x8x8xbf16>, vector<2x8x8xf32> -> vector<2x8x8xf32>
    "tpu.trace_stop"() : () -> ()
    %cst_55 = arith.constant dense<0xFF800000> : vector<2x8xf32>
    %104 = vector.multi_reduction <maximumf>, %103, %cst_55 [2] : vector<2x8x8xf32> to vector<2x8xf32>
    %105 = vector.shape_cast %104 : vector<2x8xf32> to vector<2x8x1xf32>
    %106 = vector.broadcast %105 : vector<2x8x1xf32> to vector<2x8x8xf32>
    %107 = arith.subf %103, %106 : vector<2x8x8xf32>
    %108 = math.exp %107 : vector<2x8x8xf32>
    %cst_56 = arith.constant dense<0.000000e+00> : vector<2x8xf32>
    %109 = vector.multi_reduction <add>, %108, %cst_56 [2] : vector<2x8x8xf32> to vector<2x8xf32>
    %110 = vector.shape_cast %109 : vector<2x8xf32> to vector<2x8x1xf32>
    %111 = tpu.reciprocal %110 {approx = true} : vector<2x8x1xf32> -> vector<2x8x1xf32>
    %112 = vector.broadcast %111 : vector<2x8x1xf32> to vector<2x8x8xf32>
    %113 = arith.mulf %108, %112 : vector<2x8x8xf32>
    %114 = arith.truncf %113 : vector<2x8x8xf32> to vector<2x8x8xbf16>
    "tpu.trace_start"() <{level = 10 : i32, message = "bqk,bke->bqe"}> : () -> ()
    %cst_57 = arith.constant dense<0.000000e+00> : vector<2x8x8xf32>
    %115 = tpu.matmul %114, %102, %cst_57 {dimension_numbers = #tpu.dot_dimension_numbers<[2], [1], [1], [2], [0, 0, 0, 1, 1, 2], [0], [0]>} : vector<2x8x8xbf16>, vector<2x8x8xbf16>, vector<2x8x8xf32> -> vector<2x8x8xf32>
    "tpu.trace_stop"() : () -> ()
    %116 = vector.extract_strided_slice %88 {offsets = [0, 0, 8], sizes = [2, 8, 8], strides = [1, 1, 1]} : vector<2x8x32xf32> to vector<2x8x8xf32>
    %117 = arith.truncf %116 : vector<2x8x8xf32> to vector<2x8x8xbf16>
    %118 = vector.extract_strided_slice %92 {offsets = [0, 0, 8], sizes = [2, 8, 8], strides = [1, 1, 1]} : vector<2x8x32xf32> to vector<2x8x8xf32>
    %119 = arith.truncf %118 : vector<2x8x8xf32> to vector<2x8x8xbf16>
    %120 = vector.extract_strided_slice %96 {offsets = [0, 0, 8], sizes = [2, 8, 8], strides = [1, 1, 1]} : vector<2x8x32xf32> to vector<2x8x8xf32>
    %121 = arith.truncf %120 : vector<2x8x8xf32> to vector<2x8x8xbf16>
    "tpu.trace_start"() <{level = 10 : i32, message = "bqe,bke->bqk"}> : () -> ()
    %cst_58 = arith.constant dense<0.000000e+00> : vector<2x8x8xf32>
    %122 = tpu.matmul %117, %119, %cst_58 {dimension_numbers = #tpu.dot_dimension_numbers<[2], [2], [1], [1], [0, 0, 0, 1, 1, 1], [0], [0]>} : vector<2x8x8xbf16>, vector<2x8x8xbf16>, vector<2x8x8xf32> -> vector<2x8x8xf32>
    "tpu.trace_stop"() : () -> ()
    %cst_59 = arith.constant dense<0xFF800000> : vector<2x8xf32>
    %123 = vector.multi_reduction <maximumf>, %122, %cst_59 [2] : vector<2x8x8xf32> to vector<2x8xf32>
    %124 = vector.shape_cast %123 : vector<2x8xf32> to vector<2x8x1xf32>
    %125 = vector.broadcast %124 : vector<2x8x1xf32> to vector<2x8x8xf32>
    %126 = arith.subf %122, %125 : vector<2x8x8xf32>
    %127 = math.exp %126 : vector<2x8x8xf32>
    %cst_60 = arith.constant dense<0.000000e+00> : vector<2x8xf32>
    %128 = vector.multi_reduction <add>, %127, %cst_60 [2] : vector<2x8x8xf32> to vector<2x8xf32>
    %129 = vector.shape_cast %128 : vector<2x8xf32> to vector<2x8x1xf32>
    %130 = tpu.reciprocal %129 {approx = true} : vector<2x8x1xf32> -> vector<2x8x1xf32>
    %131 = vector.broadcast %130 : vector<2x8x1xf32> to vector<2x8x8xf32>
    %132 = arith.mulf %127, %131 : vector<2x8x8xf32>
    %133 = arith.truncf %132 : vector<2x8x8xf32> to vector<2x8x8xbf16>
    "tpu.trace_start"() <{level = 10 : i32, message = "bqk,bke->bqe"}> : () -> ()
    %cst_61 = arith.constant dense<0.000000e+00> : vector<2x8x8xf32>
    %134 = tpu.matmul %133, %121, %cst_61 {dimension_numbers = #tpu.dot_dimension_numbers<[2], [1], [1], [2], [0, 0, 0, 1, 1, 2], [0], [0]>} : vector<2x8x8xbf16>, vector<2x8x8xbf16>, vector<2x8x8xf32> -> vector<2x8x8xf32>
    "tpu.trace_stop"() : () -> ()
    %135 = vector.extract_strided_slice %88 {offsets = [0, 0, 16], sizes = [2, 8, 8], strides = [1, 1, 1]} : vector<2x8x32xf32> to vector<2x8x8xf32>
    %136 = arith.truncf %135 : vector<2x8x8xf32> to vector<2x8x8xbf16>
    %137 = vector.extract_strided_slice %92 {offsets = [0, 0, 16], sizes = [2, 8, 8], strides = [1, 1, 1]} : vector<2x8x32xf32> to vector<2x8x8xf32>
    %138 = arith.truncf %137 : vector<2x8x8xf32> to vector<2x8x8xbf16>
    %139 = vector.extract_strided_slice %96 {offsets = [0, 0, 16], sizes = [2, 8, 8], strides = [1, 1, 1]} : vector<2x8x32xf32> to vector<2x8x8xf32>
    %140 = arith.truncf %139 : vector<2x8x8xf32> to vector<2x8x8xbf16>
    "tpu.trace_start"() <{level = 10 : i32, message = "bqe,bke->bqk"}> : () -> ()
    %cst_62 = arith.constant dense<0.000000e+00> : vector<2x8x8xf32>
    %141 = tpu.matmul %136, %138, %cst_62 {dimension_numbers = #tpu.dot_dimension_numbers<[2], [2], [1], [1], [0, 0, 0, 1, 1, 1], [0], [0]>} : vector<2x8x8xbf16>, vector<2x8x8xbf16>, vector<2x8x8xf32> -> vector<2x8x8xf32>
    "tpu.trace_stop"() : () -> ()
    %cst_63 = arith.constant dense<0xFF800000> : vector<2x8xf32>
    %142 = vector.multi_reduction <maximumf>, %141, %cst_63 [2] : vector<2x8x8xf32> to vector<2x8xf32>
    %143 = vector.shape_cast %142 : vector<2x8xf32> to vector<2x8x1xf32>
    %144 = vector.broadcast %143 : vector<2x8x1xf32> to vector<2x8x8xf32>
    %145 = arith.subf %141, %144 : vector<2x8x8xf32>
    %146 = math.exp %145 : vector<2x8x8xf32>
    %cst_64 = arith.constant dense<0.000000e+00> : vector<2x8xf32>
    %147 = vector.multi_reduction <add>, %146, %cst_64 [2] : vector<2x8x8xf32> to vector<2x8xf32>
    %148 = vector.shape_cast %147 : vector<2x8xf32> to vector<2x8x1xf32>
    %149 = tpu.reciprocal %148 {approx = true} : vector<2x8x1xf32> -> vector<2x8x1xf32>
    %150 = vector.broadcast %149 : vector<2x8x1xf32> to vector<2x8x8xf32>
    %151 = arith.mulf %146, %150 : vector<2x8x8xf32>
    %152 = arith.truncf %151 : vector<2x8x8xf32> to vector<2x8x8xbf16>
    "tpu.trace_start"() <{level = 10 : i32, message = "bqk,bke->bqe"}> : () -> ()
    %cst_65 = arith.constant dense<0.000000e+00> : vector<2x8x8xf32>
    %153 = tpu.matmul %152, %140, %cst_65 {dimension_numbers = #tpu.dot_dimension_numbers<[2], [1], [1], [2], [0, 0, 0, 1, 1, 2], [0], [0]>} : vector<2x8x8xbf16>, vector<2x8x8xbf16>, vector<2x8x8xf32> -> vector<2x8x8xf32>
    "tpu.trace_stop"() : () -> ()
    %154 = vector.extract_strided_slice %88 {offsets = [0, 0, 24], sizes = [2, 8, 8], strides = [1, 1, 1]} : vector<2x8x32xf32> to vector<2x8x8xf32>
    %155 = arith.truncf %154 : vector<2x8x8xf32> to vector<2x8x8xbf16>
    %156 = vector.extract_strided_slice %92 {offsets = [0, 0, 24], sizes = [2, 8, 8], strides = [1, 1, 1]} : vector<2x8x32xf32> to vector<2x8x8xf32>
    %157 = arith.truncf %156 : vector<2x8x8xf32> to vector<2x8x8xbf16>
    %158 = vector.extract_strided_slice %96 {offsets = [0, 0, 24], sizes = [2, 8, 8], strides = [1, 1, 1]} : vector<2x8x32xf32> to vector<2x8x8xf32>
    %159 = arith.truncf %158 : vector<2x8x8xf32> to vector<2x8x8xbf16>
    "tpu.trace_start"() <{level = 10 : i32, message = "bqe,bke->bqk"}> : () -> ()
    %cst_66 = arith.constant dense<0.000000e+00> : vector<2x8x8xf32>
    %160 = tpu.matmul %155, %157, %cst_66 {dimension_numbers = #tpu.dot_dimension_numbers<[2], [2], [1], [1], [0, 0, 0, 1, 1, 1], [0], [0]>} : vector<2x8x8xbf16>, vector<2x8x8xbf16>, vector<2x8x8xf32> -> vector<2x8x8xf32>
    "tpu.trace_stop"() : () -> ()
    %cst_67 = arith.constant dense<0xFF800000> : vector<2x8xf32>
    %161 = vector.multi_reduction <maximumf>, %160, %cst_67 [2] : vector<2x8x8xf32> to vector<2x8xf32>
    %162 = vector.shape_cast %161 : vector<2x8xf32> to vector<2x8x1xf32>
    %163 = vector.broadcast %162 : vector<2x8x1xf32> to vector<2x8x8xf32>
    %164 = arith.subf %160, %163 : vector<2x8x8xf32>
    %165 = math.exp %164 : vector<2x8x8xf32>
    %cst_68 = arith.constant dense<0.000000e+00> : vector<2x8xf32>
    %166 = vector.multi_reduction <add>, %165, %cst_68 [2] : vector<2x8x8xf32> to vector<2x8xf32>
    %167 = vector.shape_cast %166 : vector<2x8xf32> to vector<2x8x1xf32>
    %168 = tpu.reciprocal %167 {approx = true} : vector<2x8x1xf32> -> vector<2x8x1xf32>
    %169 = vector.broadcast %168 : vector<2x8x1xf32> to vector<2x8x8xf32>
    %170 = arith.mulf %165, %169 : vector<2x8x8xf32>
    %171 = arith.truncf %170 : vector<2x8x8xf32> to vector<2x8x8xbf16>
    "tpu.trace_start"() <{level = 10 : i32, message = "bqk,bke->bqe"}> : () -> ()
    %cst_69 = arith.constant dense<0.000000e+00> : vector<2x8x8xf32>
    %172 = tpu.matmul %171, %159, %cst_69 {dimension_numbers = #tpu.dot_dimension_numbers<[2], [1], [1], [2], [0, 0, 0, 1, 1, 2], [0], [0]>} : vector<2x8x8xbf16>, vector<2x8x8xbf16>, vector<2x8x8xf32> -> vector<2x8x8xf32>
    "tpu.trace_stop"() : () -> ()
    %173 = tpu.concatenate %115, %134, %153, %172 in 2 : vector<2x8x8xf32>, vector<2x8x8xf32>, vector<2x8x8xf32>, vector<2x8x8xf32> -> vector<2x8x32xf32>
    %174 = vector.shape_cast %173 : vector<2x8x32xf32> to vector<16x32xf32>
    %175 = arith.truncf %174 : vector<16x32xf32> to vector<16x32xbf16>
    %cst_70 = arith.constant dense<0.000000e+00> : vector<16x32xf32>
    %176 = tpu.matmul %175, %60, %cst_70 {dimension_numbers = #tpu.dot_dimension_numbers<[1], [0], [0], [1], [0, 0, 1, 1], [], []>} : vector<16x32xbf16>, vector<32x32xbf16>, vector<16x32xf32> -> vector<16x32xf32>
    %177 = vector.broadcast %61 : vector<1x32xf32> to vector<16x32xf32>
    %178 = arith.addf %176, %177 : vector<16x32xf32>
    %179 = arith.addf %51, %178 : vector<16x32xf32>
    %c0_71 = arith.constant 0 : index
    %c0_72 = arith.constant 0 : index
    %180 = vector.load %arg20[%c0_71, %c0_72] : memref<1x32xf32, #tpu.memory_space<vmem>>, vector<1x32xf32>
    %c0_73 = arith.constant 0 : index
    %c0_74 = arith.constant 0 : index
    %181 = vector.load %arg21[%c0_73, %c0_74] : memref<1x32xf32, #tpu.memory_space<vmem>>, vector<1x32xf32>
    %c0_75 = arith.constant 0 : index
    %c0_76 = arith.constant 0 : index
    %182 = vector.load %arg22[%c0_75, %c0_76] : memref<32x64xbf16, #tpu.memory_space<vmem>>, vector<32x64xbf16>
    %c0_77 = arith.constant 0 : index
    %c0_78 = arith.constant 0 : index
    %183 = vector.load %arg23[%c0_77, %c0_78] : memref<1x64xf32, #tpu.memory_space<vmem>>, vector<1x64xf32>
    %c0_79 = arith.constant 0 : index
    %c0_80 = arith.constant 0 : index
    %184 = vector.load %arg24[%c0_79, %c0_80] : memref<32x64xbf16, #tpu.memory_space<vmem>>, vector<32x64xbf16>
    %c0_81 = arith.constant 0 : index
    %c0_82 = arith.constant 0 : index
    %185 = vector.load %arg25[%c0_81, %c0_82] : memref<1x64xf32, #tpu.memory_space<vmem>>, vector<1x64xf32>
    %c0_83 = arith.constant 0 : index
    %c0_84 = arith.constant 0 : index
    %186 = vector.load %arg27[%c0_83, %c0_84] : memref<1x64xf32, #tpu.memory_space<vmem>>, vector<1x64xf32>
    %c0_85 = arith.constant 0 : index
    %c0_86 = arith.constant 0 : index
    %187 = vector.load %arg28[%c0_85, %c0_86] : memref<1x64xf32, #tpu.memory_space<vmem>>, vector<1x64xf32>
    %c0_87 = arith.constant 0 : index
    %c0_88 = arith.constant 0 : index
    %188 = vector.load %arg29[%c0_87, %c0_88] : memref<1x64xf32, #tpu.memory_space<vmem>>, vector<1x64xf32>
    %c0_89 = arith.constant 0 : index
    %c0_90 = arith.constant 0 : index
    %189 = vector.load %arg30[%c0_89, %c0_90] : memref<64x32xbf16, #tpu.memory_space<vmem>>, vector<64x32xbf16>
    %c0_91 = arith.constant 0 : index
    %c0_92 = arith.constant 0 : index
    %190 = vector.load %arg31[%c0_91, %c0_92] : memref<1x32xf32, #tpu.memory_space<vmem>>, vector<1x32xf32>
    %cst_93 = arith.constant dense<0.000000e+00> : vector<16xf32>
    %191 = vector.multi_reduction <add>, %179, %cst_93 [1] : vector<16x32xf32> to vector<16xf32>
    %192 = vector.shape_cast %191 : vector<16xf32> to vector<16x1xf32>
    %cst_94 = arith.constant 3.200000e+01 : f32
    %193 = vector.broadcast %cst_94 : f32 to vector<16x1xf32>
    %194 = arith.divf %192, %193 : vector<16x1xf32>
    %195 = vector.broadcast %194 : vector<16x1xf32> to vector<16x32xf32>
    %196 = arith.subf %179, %195 : vector<16x32xf32>
    %197 = arith.mulf %196, %196 : vector<16x32xf32>
    %cst_95 = arith.constant dense<0.000000e+00> : vector<16xf32>
    %198 = vector.multi_reduction <add>, %197, %cst_95 [1] : vector<16x32xf32> to vector<16xf32>
    %199 = vector.shape_cast %198 : vector<16xf32> to vector<16x1xf32>
    %cst_96 = arith.constant 3.200000e+01 : f32
    %200 = vector.broadcast %cst_96 : f32 to vector<16x1xf32>
    %201 = arith.divf %199, %200 : vector<16x1xf32>
    %202 = vector.broadcast %194 : vector<16x1xf32> to vector<16x32xf32>
    %203 = arith.subf %179, %202 : vector<16x32xf32>
    %cst_97 = arith.constant 9.99999974E-6 : f32
    %204 = vector.broadcast %cst_97 : f32 to vector<16x1xf32>
    %205 = arith.addf %201, %204 : vector<16x1xf32>
    %206 = math.rsqrt %205 : vector<16x1xf32>
    %207 = vector.broadcast %206 : vector<16x1xf32> to vector<16x32xf32>
    %208 = arith.mulf %203, %207 : vector<16x32xf32>
    %209 = vector.broadcast %180 : vector<1x32xf32> to vector<16x32xf32>
    %210 = arith.mulf %208, %209 : vector<16x32xf32>
    %211 = vector.broadcast %181 : vector<1x32xf32> to vector<16x32xf32>
    %212 = arith.addf %210, %211 : vector<16x32xf32>
    %213 = arith.truncf %212 : vector<16x32xf32> to vector<16x32xbf16>
    %cst_98 = arith.constant dense<0.000000e+00> : vector<16x64xf32>
    %214 = tpu.matmul %213, %182, %cst_98 {dimension_numbers = #tpu.dot_dimension_numbers<[1], [0], [0], [1], [0, 0, 1, 1], [], []>} : vector<16x32xbf16>, vector<32x64xbf16>, vector<16x64xf32> -> vector<16x64xf32>
    %215 = vector.broadcast %183 : vector<1x64xf32> to vector<16x64xf32>
    %216 = arith.addf %214, %215 : vector<16x64xf32>
    %cst_99 = arith.constant dense<0.000000e+00> : vector<16x64xf32>
    %217 = tpu.matmul %213, %184, %cst_99 {dimension_numbers = #tpu.dot_dimension_numbers<[1], [0], [0], [1], [0, 0, 1, 1], [], []>} : vector<16x32xbf16>, vector<32x64xbf16>, vector<16x64xf32> -> vector<16x64xf32>
    %218 = vector.broadcast %185 : vector<1x64xf32> to vector<16x64xf32>
    %219 = arith.addf %217, %218 : vector<16x64xf32>
    %220 = arith.negf %219 : vector<16x64xf32>
    %221 = math.exp %220 : vector<16x64xf32>
    %cst_100 = arith.constant 1.000000e+00 : f32
    %222 = vector.broadcast %cst_100 : f32 to vector<16x64xf32>
    %223 = arith.addf %222, %221 : vector<16x64xf32>
    %224 = arith.divf %222, %223 : vector<16x64xf32>
    %225 = arith.mulf %216, %224 : vector<16x64xf32>
    %cst_101 = arith.constant 0.000000e+00 : f32
    %226 = vector.broadcast %cst_101 : f32 to vector<2x7x64xf32>
    %c0_102 = arith.constant 0 : index
    %c0_103 = arith.constant 0 : index
    %c0_104 = arith.constant 0 : index
    %227 = vector.load %arg43[%c0_102, %c0_103, %c0_104] : memref<2x22x64xf32, #tpu.memory_space<vmem>>, vector<2x7x64xf32>
    tpu.vector_store %arg43[%c0_102, %c0_103, %c0_104], %226 {strides = array<i32>} : memref<2x22x64xf32, #tpu.memory_space<vmem>>, vector<2x7x64xf32>,
    %cst_105 = arith.constant 0.000000e+00 : f32
    %228 = vector.broadcast %cst_105 : f32 to vector<2x7x64xf32>
    %c0_106 = arith.constant 0 : index
    %c15 = arith.constant 15 : index
    %c0_107 = arith.constant 0 : index
    %229 = vector.load %arg43[%c0_106, %c15, %c0_107] : memref<2x22x64xf32, #tpu.memory_space<vmem>>, vector<2x7x64xf32>
    tpu.vector_store %arg43[%c0_106, %c15, %c0_107], %228 {strides = array<i32>} : memref<2x22x64xf32, #tpu.memory_space<vmem>>, vector<2x7x64xf32>,
    %230 = vector.shape_cast %225 : vector<16x64xf32> to vector<2x8x64xf32>
    %c0_108 = arith.constant 0 : index
    %c7 = arith.constant 7 : index
    %c0_109 = arith.constant 0 : index
    %231 = vector.load %arg43[%c0_108, %c7, %c0_109] : memref<2x22x64xf32, #tpu.memory_space<vmem>>, vector<2x8x64xf32>
    tpu.vector_store %arg43[%c0_108, %c7, %c0_109], %230 {strides = array<i32>} : memref<2x22x64xf32, #tpu.memory_space<vmem>>, vector<2x8x64xf32>,
    %cst_110 = arith.constant 0.000000e+00 : f32
    %232 = vector.broadcast %cst_110 : f32 to vector<16x64xf32>
    %cst_111 = arith.constant 0.000000e+00 : f32
    %233 = vector.broadcast %cst_111 : f32 to vector<16x64xf32>
    %c0_112 = arith.constant 0 : index
    %c0_113 = arith.constant 0 : index
    %c0_114 = arith.constant 0 : index
    %234 = vector.load %arg43[%c0_112, %c0_113, %c0_114] : memref<2x22x64xf32, #tpu.memory_space<vmem>>, vector<2x8x64xf32>
    %235 = vector.shape_cast %234 : vector<2x8x64xf32> to vector<16x64xf32>
    %236 = arith.truncf %235 : vector<16x64xf32> to vector<16x64xbf16>
    %c0_115 = arith.constant 0 : index
    %c0_116 = arith.constant 0 : index
    %c0_117 = arith.constant 0 : index
    %237 = vector.load %arg26[%c0_115, %c0_116, %c0_117] : memref<15x64x64xbf16, #tpu.memory_space<vmem>>, vector<1x64x64xbf16>
    %238 = vector.shape_cast %237 : vector<1x64x64xbf16> to vector<64x64xbf16>
    %cst_118 = arith.constant dense<0.000000e+00> : vector<16x64xf32>
    %239 = tpu.matmul %236, %238, %cst_118 {dimension_numbers = #tpu.dot_dimension_numbers<[1], [0], [0], [1], [0, 0, 1, 1], [], []>} : vector<16x64xbf16>, vector<64x64xbf16>, vector<16x64xf32> -> vector<16x64xf32>
    %240 = arith.addf %232, %239 : vector<16x64xf32>
    %c0_119 = arith.constant 0 : index
    %c1 = arith.constant 1 : index
    %c0_120 = arith.constant 0 : index
    %241 = vector.load %arg43[%c0_119, %c1, %c0_120] : memref<2x22x64xf32, #tpu.memory_space<vmem>>, vector<2x8x64xf32>
    %242 = vector.shape_cast %241 : vector<2x8x64xf32> to vector<16x64xf32>
    %243 = arith.truncf %242 : vector<16x64xf32> to vector<16x64xbf16>
    %c1_121 = arith.constant 1 : index
    %c0_122 = arith.constant 0 : index
    %c0_123 = arith.constant 0 : index
    %244 = vector.load %arg26[%c1_121, %c0_122, %c0_123] : memref<15x64x64xbf16, #tpu.memory_space<vmem>>, vector<1x64x64xbf16>
    %245 = vector.shape_cast %244 : vector<1x64x64xbf16> to vector<64x64xbf16>
    %cst_124 = arith.constant dense<0.000000e+00> : vector<16x64xf32>
    %246 = tpu.matmul %243, %245, %cst_124 {dimension_numbers = #tpu.dot_dimension_numbers<[1], [0], [0], [1], [0, 0, 1, 1], [], []>} : vector<16x64xbf16>, vector<64x64xbf16>, vector<16x64xf32> -> vector<16x64xf32>
    %247 = arith.addf %233, %246 : vector<16x64xf32>
    %c0_125 = arith.constant 0 : index
    %c2 = arith.constant 2 : index
    %c0_126 = arith.constant 0 : index
    %248 = vector.load %arg43[%c0_125, %c2, %c0_126] : memref<2x22x64xf32, #tpu.memory_space<vmem>>, vector<2x8x64xf32>
    %249 = vector.shape_cast %248 : vector<2x8x64xf32> to vector<16x64xf32>
    %250 = arith.truncf %249 : vector<16x64xf32> to vector<16x64xbf16>
    %c2_127 = arith.constant 2 : index
    %c0_128 = arith.constant 0 : index
    %c0_129 = arith.constant 0 : index
    %251 = vector.load %arg26[%c2_127, %c0_128, %c0_129] : memref<15x64x64xbf16, #tpu.memory_space<vmem>>, vector<1x64x64xbf16>
    %252 = vector.shape_cast %251 : vector<1x64x64xbf16> to vector<64x64xbf16>
    %cst_130 = arith.constant dense<0.000000e+00> : vector<16x64xf32>
    %253 = tpu.matmul %250, %252, %cst_130 {dimension_numbers = #tpu.dot_dimension_numbers<[1], [0], [0], [1], [0, 0, 1, 1], [], []>} : vector<16x64xbf16>, vector<64x64xbf16>, vector<16x64xf32> -> vector<16x64xf32>
    %254 = arith.addf %240, %253 : vector<16x64xf32>
    %c0_131 = arith.constant 0 : index
    %c3 = arith.constant 3 : index
    %c0_132 = arith.constant 0 : index
    %255 = vector.load %arg43[%c0_131, %c3, %c0_132] : memref<2x22x64xf32, #tpu.memory_space<vmem>>, vector<2x8x64xf32>
    %256 = vector.shape_cast %255 : vector<2x8x64xf32> to vector<16x64xf32>
    %257 = arith.truncf %256 : vector<16x64xf32> to vector<16x64xbf16>
    %c3_133 = arith.constant 3 : index
    %c0_134 = arith.constant 0 : index
    %c0_135 = arith.constant 0 : index
    %258 = vector.load %arg26[%c3_133, %c0_134, %c0_135] : memref<15x64x64xbf16, #tpu.memory_space<vmem>>, vector<1x64x64xbf16>
    %259 = vector.shape_cast %258 : vector<1x64x64xbf16> to vector<64x64xbf16>
    %cst_136 = arith.constant dense<0.000000e+00> : vector<16x64xf32>
    %260 = tpu.matmul %257, %259, %cst_136 {dimension_numbers = #tpu.dot_dimension_numbers<[1], [0], [0], [1], [0, 0, 1, 1], [], []>} : vector<16x64xbf16>, vector<64x64xbf16>, vector<16x64xf32> -> vector<16x64xf32>
    %261 = arith.addf %247, %260 : vector<16x64xf32>
    %c0_137 = arith.constant 0 : index
    %c4 = arith.constant 4 : index
    %c0_138 = arith.constant 0 : index
    %262 = vector.load %arg43[%c0_137, %c4, %c0_138] : memref<2x22x64xf32, #tpu.memory_space<vmem>>, vector<2x8x64xf32>
    %263 = vector.shape_cast %262 : vector<2x8x64xf32> to vector<16x64xf32>
    %264 = arith.truncf %263 : vector<16x64xf32> to vector<16x64xbf16>
    %c4_139 = arith.constant 4 : index
    %c0_140 = arith.constant 0 : index
    %c0_141 = arith.constant 0 : index
    %265 = vector.load %arg26[%c4_139, %c0_140, %c0_141] : memref<15x64x64xbf16, #tpu.memory_space<vmem>>, vector<1x64x64xbf16>
    %266 = vector.shape_cast %265 : vector<1x64x64xbf16> to vector<64x64xbf16>
    %cst_142 = arith.constant dense<0.000000e+00> : vector<16x64xf32>
    %267 = tpu.matmul %264, %266, %cst_142 {dimension_numbers = #tpu.dot_dimension_numbers<[1], [0], [0], [1], [0, 0, 1, 1], [], []>} : vector<16x64xbf16>, vector<64x64xbf16>, vector<16x64xf32> -> vector<16x64xf32>
    %268 = arith.addf %254, %267 : vector<16x64xf32>
    %c0_143 = arith.constant 0 : index
    %c5 = arith.constant 5 : index
    %c0_144 = arith.constant 0 : index
    %269 = vector.load %arg43[%c0_143, %c5, %c0_144] : memref<2x22x64xf32, #tpu.memory_space<vmem>>, vector<2x8x64xf32>
    %270 = vector.shape_cast %269 : vector<2x8x64xf32> to vector<16x64xf32>
    %271 = arith.truncf %270 : vector<16x64xf32> to vector<16x64xbf16>
    %c5_145 = arith.constant 5 : index
    %c0_146 = arith.constant 0 : index
    %c0_147 = arith.constant 0 : index
    %272 = vector.load %arg26[%c5_145, %c0_146, %c0_147] : memref<15x64x64xbf16, #tpu.memory_space<vmem>>, vector<1x64x64xbf16>
    %273 = vector.shape_cast %272 : vector<1x64x64xbf16> to vector<64x64xbf16>
    %cst_148 = arith.constant dense<0.000000e+00> : vector<16x64xf32>
    %274 = tpu.matmul %271, %273, %cst_148 {dimension_numbers = #tpu.dot_dimension_numbers<[1], [0], [0], [1], [0, 0, 1, 1], [], []>} : vector<16x64xbf16>, vector<64x64xbf16>, vector<16x64xf32> -> vector<16x64xf32>
    %275 = arith.addf %261, %274 : vector<16x64xf32>
    %c0_149 = arith.constant 0 : index
    %c6 = arith.constant 6 : index
    %c0_150 = arith.constant 0 : index
    %276 = vector.load %arg43[%c0_149, %c6, %c0_150] : memref<2x22x64xf32, #tpu.memory_space<vmem>>, vector<2x8x64xf32>
    %277 = vector.shape_cast %276 : vector<2x8x64xf32> to vector<16x64xf32>
    %278 = arith.truncf %277 : vector<16x64xf32> to vector<16x64xbf16>
    %c6_151 = arith.constant 6 : index
    %c0_152 = arith.constant 0 : index
    %c0_153 = arith.constant 0 : index
    %279 = vector.load %arg26[%c6_151, %c0_152, %c0_153] : memref<15x64x64xbf16, #tpu.memory_space<vmem>>, vector<1x64x64xbf16>
    %280 = vector.shape_cast %279 : vector<1x64x64xbf16> to vector<64x64xbf16>
    %cst_154 = arith.constant dense<0.000000e+00> : vector<16x64xf32>
    %281 = tpu.matmul %278, %280, %cst_154 {dimension_numbers = #tpu.dot_dimension_numbers<[1], [0], [0], [1], [0, 0, 1, 1], [], []>} : vector<16x64xbf16>, vector<64x64xbf16>, vector<16x64xf32> -> vector<16x64xf32>
    %282 = arith.addf %268, %281 : vector<16x64xf32>
    %c0_155 = arith.constant 0 : index
    %c7_156 = arith.constant 7 : index
    %c0_157 = arith.constant 0 : index
    %283 = vector.load %arg43[%c0_155, %c7_156, %c0_157] : memref<2x22x64xf32, #tpu.memory_space<vmem>>, vector<2x8x64xf32>
    %284 = vector.shape_cast %283 : vector<2x8x64xf32> to vector<16x64xf32>
    %285 = arith.truncf %284 : vector<16x64xf32> to vector<16x64xbf16>
    %c7_158 = arith.constant 7 : index
    %c0_159 = arith.constant 0 : index
    %c0_160 = arith.constant 0 : index
    %286 = vector.load %arg26[%c7_158, %c0_159, %c0_160] : memref<15x64x64xbf16, #tpu.memory_space<vmem>>, vector<1x64x64xbf16>
    %287 = vector.shape_cast %286 : vector<1x64x64xbf16> to vector<64x64xbf16>
    %cst_161 = arith.constant dense<0.000000e+00> : vector<16x64xf32>
    %288 = tpu.matmul %285, %287, %cst_161 {dimension_numbers = #tpu.dot_dimension_numbers<[1], [0], [0], [1], [0, 0, 1, 1], [], []>} : vector<16x64xbf16>, vector<64x64xbf16>, vector<16x64xf32> -> vector<16x64xf32>
    %289 = arith.addf %275, %288 : vector<16x64xf32>
    %c0_162 = arith.constant 0 : index
    %c8 = arith.constant 8 : index
    %c0_163 = arith.constant 0 : index
    %290 = vector.load %arg43[%c0_162, %c8, %c0_163] : memref<2x22x64xf32, #tpu.memory_space<vmem>>, vector<2x8x64xf32>
    %291 = vector.shape_cast %290 : vector<2x8x64xf32> to vector<16x64xf32>
    %292 = arith.truncf %291 : vector<16x64xf32> to vector<16x64xbf16>
    %c8_164 = arith.constant 8 : index
    %c0_165 = arith.constant 0 : index
    %c0_166 = arith.constant 0 : index
    %293 = vector.load %arg26[%c8_164, %c0_165, %c0_166] : memref<15x64x64xbf16, #tpu.memory_space<vmem>>, vector<1x64x64xbf16>
    %294 = vector.shape_cast %293 : vector<1x64x64xbf16> to vector<64x64xbf16>
    %cst_167 = arith.constant dense<0.000000e+00> : vector<16x64xf32>
    %295 = tpu.matmul %292, %294, %cst_167 {dimension_numbers = #tpu.dot_dimension_numbers<[1], [0], [0], [1], [0, 0, 1, 1], [], []>} : vector<16x64xbf16>, vector<64x64xbf16>, vector<16x64xf32> -> vector<16x64xf32>
    %296 = arith.addf %282, %295 : vector<16x64xf32>
    %c0_168 = arith.constant 0 : index
    %c9 = arith.constant 9 : index
    %c0_169 = arith.constant 0 : index
    %297 = vector.load %arg43[%c0_168, %c9, %c0_169] : memref<2x22x64xf32, #tpu.memory_space<vmem>>, vector<2x8x64xf32>
    %298 = vector.shape_cast %297 : vector<2x8x64xf32> to vector<16x64xf32>
    %299 = arith.truncf %298 : vector<16x64xf32> to vector<16x64xbf16>
    %c9_170 = arith.constant 9 : index
    %c0_171 = arith.constant 0 : index
    %c0_172 = arith.constant 0 : index
    %300 = vector.load %arg26[%c9_170, %c0_171, %c0_172] : memref<15x64x64xbf16, #tpu.memory_space<vmem>>, vector<1x64x64xbf16>
    %301 = vector.shape_cast %300 : vector<1x64x64xbf16> to vector<64x64xbf16>
    %cst_173 = arith.constant dense<0.000000e+00> : vector<16x64xf32>
    %302 = tpu.matmul %299, %301, %cst_173 {dimension_numbers = #tpu.dot_dimension_numbers<[1], [0], [0], [1], [0, 0, 1, 1], [], []>} : vector<16x64xbf16>, vector<64x64xbf16>, vector<16x64xf32> -> vector<16x64xf32>
    %303 = arith.addf %289, %302 : vector<16x64xf32>
    %c0_174 = arith.constant 0 : index
    %c10 = arith.constant 10 : index
    %c0_175 = arith.constant 0 : index
    %304 = vector.load %arg43[%c0_174, %c10, %c0_175] : memref<2x22x64xf32, #tpu.memory_space<vmem>>, vector<2x8x64xf32>
    %305 = vector.shape_cast %304 : vector<2x8x64xf32> to vector<16x64xf32>
    %306 = arith.truncf %305 : vector<16x64xf32> to vector<16x64xbf16>
    %c10_176 = arith.constant 10 : index
    %c0_177 = arith.constant 0 : index
    %c0_178 = arith.constant 0 : index
    %307 = vector.load %arg26[%c10_176, %c0_177, %c0_178] : memref<15x64x64xbf16, #tpu.memory_space<vmem>>, vector<1x64x64xbf16>
    %308 = vector.shape_cast %307 : vector<1x64x64xbf16> to vector<64x64xbf16>
    %cst_179 = arith.constant dense<0.000000e+00> : vector<16x64xf32>
    %309 = tpu.matmul %306, %308, %cst_179 {dimension_numbers = #tpu.dot_dimension_numbers<[1], [0], [0], [1], [0, 0, 1, 1], [], []>} : vector<16x64xbf16>, vector<64x64xbf16>, vector<16x64xf32> -> vector<16x64xf32>
    %310 = arith.addf %296, %309 : vector<16x64xf32>
    %c0_180 = arith.constant 0 : index
    %c11 = arith.constant 11 : index
    %c0_181 = arith.constant 0 : index
    %311 = vector.load %arg43[%c0_180, %c11, %c0_181] : memref<2x22x64xf32, #tpu.memory_space<vmem>>, vector<2x8x64xf32>
    %312 = vector.shape_cast %311 : vector<2x8x64xf32> to vector<16x64xf32>
    %313 = arith.truncf %312 : vector<16x64xf32> to vector<16x64xbf16>
    %c11_182 = arith.constant 11 : index
    %c0_183 = arith.constant 0 : index
    %c0_184 = arith.constant 0 : index
    %314 = vector.load %arg26[%c11_182, %c0_183, %c0_184] : memref<15x64x64xbf16, #tpu.memory_space<vmem>>, vector<1x64x64xbf16>
    %315 = vector.shape_cast %314 : vector<1x64x64xbf16> to vector<64x64xbf16>
    %cst_185 = arith.constant dense<0.000000e+00> : vector<16x64xf32>
    %316 = tpu.matmul %313, %315, %cst_185 {dimension_numbers = #tpu.dot_dimension_numbers<[1], [0], [0], [1], [0, 0, 1, 1], [], []>} : vector<16x64xbf16>, vector<64x64xbf16>, vector<16x64xf32> -> vector<16x64xf32>
    %317 = arith.addf %303, %316 : vector<16x64xf32>
    %c0_186 = arith.constant 0 : index
    %c12 = arith.constant 12 : index
    %c0_187 = arith.constant 0 : index
    %318 = vector.load %arg43[%c0_186, %c12, %c0_187] : memref<2x22x64xf32, #tpu.memory_space<vmem>>, vector<2x8x64xf32>
    %319 = vector.shape_cast %318 : vector<2x8x64xf32> to vector<16x64xf32>
    %320 = arith.truncf %319 : vector<16x64xf32> to vector<16x64xbf16>
    %c12_188 = arith.constant 12 : index
    %c0_189 = arith.constant 0 : index
    %c0_190 = arith.constant 0 : index
    %321 = vector.load %arg26[%c12_188, %c0_189, %c0_190] : memref<15x64x64xbf16, #tpu.memory_space<vmem>>, vector<1x64x64xbf16>
    %322 = vector.shape_cast %321 : vector<1x64x64xbf16> to vector<64x64xbf16>
    %cst_191 = arith.constant dense<0.000000e+00> : vector<16x64xf32>
    %323 = tpu.matmul %320, %322, %cst_191 {dimension_numbers = #tpu.dot_dimension_numbers<[1], [0], [0], [1], [0, 0, 1, 1], [], []>} : vector<16x64xbf16>, vector<64x64xbf16>, vector<16x64xf32> -> vector<16x64xf32>
    %324 = arith.addf %310, %323 : vector<16x64xf32>
    %c0_192 = arith.constant 0 : index
    %c13 = arith.constant 13 : index
    %c0_193 = arith.constant 0 : index
    %325 = vector.load %arg43[%c0_192, %c13, %c0_193] : memref<2x22x64xf32, #tpu.memory_space<vmem>>, vector<2x8x64xf32>
    %326 = vector.shape_cast %325 : vector<2x8x64xf32> to vector<16x64xf32>
    %327 = arith.truncf %326 : vector<16x64xf32> to vector<16x64xbf16>
    %c13_194 = arith.constant 13 : index
    %c0_195 = arith.constant 0 : index
    %c0_196 = arith.constant 0 : index
    %328 = vector.load %arg26[%c13_194, %c0_195, %c0_196] : memref<15x64x64xbf16, #tpu.memory_space<vmem>>, vector<1x64x64xbf16>
    %329 = vector.shape_cast %328 : vector<1x64x64xbf16> to vector<64x64xbf16>
    %cst_197 = arith.constant dense<0.000000e+00> : vector<16x64xf32>
    %330 = tpu.matmul %327, %329, %cst_197 {dimension_numbers = #tpu.dot_dimension_numbers<[1], [0], [0], [1], [0, 0, 1, 1], [], []>} : vector<16x64xbf16>, vector<64x64xbf16>, vector<16x64xf32> -> vector<16x64xf32>
    %331 = arith.addf %317, %330 : vector<16x64xf32>
    %c0_198 = arith.constant 0 : index
    %c14 = arith.constant 14 : index
    %c0_199 = arith.constant 0 : index
    %332 = vector.load %arg43[%c0_198, %c14, %c0_199] : memref<2x22x64xf32, #tpu.memory_space<vmem>>, vector<2x8x64xf32>
    %333 = vector.shape_cast %332 : vector<2x8x64xf32> to vector<16x64xf32>
    %334 = arith.truncf %333 : vector<16x64xf32> to vector<16x64xbf16>
    %c14_200 = arith.constant 14 : index
    %c0_201 = arith.constant 0 : index
    %c0_202 = arith.constant 0 : index
    %335 = vector.load %arg26[%c14_200, %c0_201, %c0_202] : memref<15x64x64xbf16, #tpu.memory_space<vmem>>, vector<1x64x64xbf16>
    %336 = vector.shape_cast %335 : vector<1x64x64xbf16> to vector<64x64xbf16>
    %cst_203 = arith.constant dense<0.000000e+00> : vector<16x64xf32>
    %337 = tpu.matmul %334, %336, %cst_203 {dimension_numbers = #tpu.dot_dimension_numbers<[1], [0], [0], [1], [0, 0, 1, 1], [], []>} : vector<16x64xbf16>, vector<64x64xbf16>, vector<16x64xf32> -> vector<16x64xf32>
    %338 = arith.addf %324, %337 : vector<16x64xf32>
    %339 = arith.addf %338, %331 : vector<16x64xf32>
    %340 = vector.broadcast %186 : vector<1x64xf32> to vector<16x64xf32>
    %341 = arith.addf %339, %340 : vector<16x64xf32>
    %342 = vector.broadcast %187 : vector<1x64xf32> to vector<16x64xf32>
    %343 = arith.mulf %341, %342 : vector<16x64xf32>
    %344 = vector.broadcast %188 : vector<1x64xf32> to vector<16x64xf32>
    %345 = arith.addf %343, %344 : vector<16x64xf32>
    %346 = arith.negf %345 : vector<16x64xf32>
    %347 = math.exp %346 : vector<16x64xf32>
    %cst_204 = arith.constant 1.000000e+00 : f32
    %348 = vector.broadcast %cst_204 : f32 to vector<16x64xf32>
    %349 = arith.addf %348, %347 : vector<16x64xf32>
    %350 = arith.divf %348, %349 : vector<16x64xf32>
    %351 = arith.mulf %345, %350 : vector<16x64xf32>
    %352 = arith.truncf %351 : vector<16x64xf32> to vector<16x64xbf16>
    %cst_205 = arith.constant dense<0.000000e+00> : vector<16x32xf32>
    %353 = tpu.matmul %352, %189, %cst_205 {dimension_numbers = #tpu.dot_dimension_numbers<[1], [0], [0], [1], [0, 0, 1, 1], [], []>} : vector<16x64xbf16>, vector<64x32xbf16>, vector<16x32xf32> -> vector<16x32xf32>
    %354 = vector.broadcast %190 : vector<1x32xf32> to vector<16x32xf32>
    %355 = arith.addf %353, %354 : vector<16x32xf32>
    %356 = arith.addf %179, %355 : vector<16x32xf32>
    %c0_206 = arith.constant 0 : index
    %c0_207 = arith.constant 0 : index
    %357 = vector.load %arg32[%c0_206, %c0_207] : memref<1x32xf32, #tpu.memory_space<vmem>>, vector<1x32xf32>
    %c0_208 = arith.constant 0 : index
    %c0_209 = arith.constant 0 : index
    %358 = vector.load %arg33[%c0_208, %c0_209] : memref<1x32xf32, #tpu.memory_space<vmem>>, vector<1x32xf32>
    %c0_210 = arith.constant 0 : index
    %c0_211 = arith.constant 0 : index
    %359 = vector.load %arg34[%c0_210, %c0_211] : memref<32x128xbf16, #tpu.memory_space<vmem>>, vector<32x128xbf16>
    %c0_212 = arith.constant 0 : index
    %c0_213 = arith.constant 0 : index
    %360 = vector.load %arg35[%c0_212, %c0_213] : memref<1x128xf32, #tpu.memory_space<vmem>>, vector<1x128xf32>
    %c0_214 = arith.constant 0 : index
    %c0_215 = arith.constant 0 : index
    %361 = vector.load %arg36[%c0_214, %c0_215] : memref<32x128xbf16, #tpu.memory_space<vmem>>, vector<32x128xbf16>
    %c0_216 = arith.constant 0 : index
    %c0_217 = arith.constant 0 : index
    %362 = vector.load %arg37[%c0_216, %c0_217] : memref<1x128xf32, #tpu.memory_space<vmem>>, vector<1x128xf32>
    %c0_218 = arith.constant 0 : index
    %c0_219 = arith.constant 0 : index
    %363 = vector.load %arg38[%c0_218, %c0_219] : memref<128x32xbf16, #tpu.memory_space<vmem>>, vector<128x32xbf16>
    %c0_220 = arith.constant 0 : index
    %c0_221 = arith.constant 0 : index
    %364 = vector.load %arg39[%c0_220, %c0_221] : memref<1x32xf32, #tpu.memory_space<vmem>>, vector<1x32xf32>
    %cst_222 = arith.constant dense<0.000000e+00> : vector<16xf32>
    %365 = vector.multi_reduction <add>, %356, %cst_222 [1] : vector<16x32xf32> to vector<16xf32>
    %366 = vector.shape_cast %365 : vector<16xf32> to vector<16x1xf32>
    %cst_223 = arith.constant 3.200000e+01 : f32
    %367 = vector.broadcast %cst_223 : f32 to vector<16x1xf32>
    %368 = arith.divf %366, %367 : vector<16x1xf32>
    %369 = vector.broadcast %368 : vector<16x1xf32> to vector<16x32xf32>
    %370 = arith.subf %356, %369 : vector<16x32xf32>
    %371 = arith.mulf %370, %370 : vector<16x32xf32>
    %cst_224 = arith.constant dense<0.000000e+00> : vector<16xf32>
    %372 = vector.multi_reduction <add>, %371, %cst_224 [1] : vector<16x32xf32> to vector<16xf32>
    %373 = vector.shape_cast %372 : vector<16xf32> to vector<16x1xf32>
    %cst_225 = arith.constant 3.200000e+01 : f32
    %374 = vector.broadcast %cst_225 : f32 to vector<16x1xf32>
    %375 = arith.divf %373, %374 : vector<16x1xf32>
    %376 = vector.broadcast %368 : vector<16x1xf32> to vector<16x32xf32>
    %377 = arith.subf %356, %376 : vector<16x32xf32>
    %cst_226 = arith.constant 9.99999974E-6 : f32
    %378 = vector.broadcast %cst_226 : f32 to vector<16x1xf32>
    %379 = arith.addf %375, %378 : vector<16x1xf32>
    %380 = math.rsqrt %379 : vector<16x1xf32>
    %381 = vector.broadcast %380 : vector<16x1xf32> to vector<16x32xf32>
    %382 = arith.mulf %377, %381 : vector<16x32xf32>
    %383 = vector.broadcast %357 : vector<1x32xf32> to vector<16x32xf32>
    %384 = arith.mulf %382, %383 : vector<16x32xf32>
    %385 = vector.broadcast %358 : vector<1x32xf32> to vector<16x32xf32>
    %386 = arith.addf %384, %385 : vector<16x32xf32>
    %387 = arith.truncf %386 : vector<16x32xf32> to vector<16x32xbf16>
    %cst_227 = arith.constant dense<0.000000e+00> : vector<16x128xf32>
    %388 = tpu.matmul %387, %359, %cst_227 {dimension_numbers = #tpu.dot_dimension_numbers<[1], [0], [0], [1], [0, 0, 1, 1], [], []>} : vector<16x32xbf16>, vector<32x128xbf16>, vector<16x128xf32> -> vector<16x128xf32>
    %389 = vector.broadcast %360 : vector<1x128xf32> to vector<16x128xf32>
    %390 = arith.addf %388, %389 : vector<16x128xf32>
    %391 = arith.negf %390 : vector<16x128xf32>
    %392 = math.exp %391 : vector<16x128xf32>
    %cst_228 = arith.constant 1.000000e+00 : f32
    %393 = vector.broadcast %cst_228 : f32 to vector<16x128xf32>
    %394 = arith.addf %393, %392 : vector<16x128xf32>
    %395 = arith.divf %393, %394 : vector<16x128xf32>
    %396 = arith.mulf %390, %395 : vector<16x128xf32>
    %cst_229 = arith.constant dense<0.000000e+00> : vector<16x128xf32>
    %397 = tpu.matmul %387, %361, %cst_229 {dimension_numbers = #tpu.dot_dimension_numbers<[1], [0], [0], [1], [0, 0, 1, 1], [], []>} : vector<16x32xbf16>, vector<32x128xbf16>, vector<16x128xf32> -> vector<16x128xf32>
    %398 = vector.broadcast %362 : vector<1x128xf32> to vector<16x128xf32>
    %399 = arith.addf %397, %398 : vector<16x128xf32>
    %400 = arith.mulf %396, %399 : vector<16x128xf32>
    %401 = arith.truncf %400 : vector<16x128xf32> to vector<16x128xbf16>
    %cst_230 = arith.constant dense<0.000000e+00> : vector<16x32xf32>
    %402 = tpu.matmul %401, %363, %cst_230 {dimension_numbers = #tpu.dot_dimension_numbers<[1], [0], [0], [1], [0, 0, 1, 1], [], []>} : vector<16x128xbf16>, vector<128x32xbf16>, vector<16x32xf32> -> vector<16x32xf32>
    %403 = vector.broadcast %364 : vector<1x32xf32> to vector<16x32xf32>
    %404 = arith.addf %402, %403 : vector<16x32xf32>
    %cst_231 = arith.constant 5.000000e-01 : f32
    %405 = vector.broadcast %cst_231 : f32 to vector<16x32xf32>
    %406 = arith.mulf %405, %404 : vector<16x32xf32>
    %407 = arith.addf %356, %406 : vector<16x32xf32>
    %c0_232 = arith.constant 0 : index
    %c0_233 = arith.constant 0 : index
    %408 = vector.load %arg40[%c0_232, %c0_233] : memref<1x32xf32, #tpu.memory_space<vmem>>, vector<1x32xf32>
    %c0_234 = arith.constant 0 : index
    %c0_235 = arith.constant 0 : index
    %409 = vector.load %arg41[%c0_234, %c0_235] : memref<1x32xf32, #tpu.memory_space<vmem>>, vector<1x32xf32>
    %cst_236 = arith.constant dense<0.000000e+00> : vector<16xf32>
    %410 = vector.multi_reduction <add>, %407, %cst_236 [1] : vector<16x32xf32> to vector<16xf32>
    %411 = vector.shape_cast %410 : vector<16xf32> to vector<16x1xf32>
    %cst_237 = arith.constant 3.200000e+01 : f32
    %412 = vector.broadcast %cst_237 : f32 to vector<16x1xf32>
    %413 = arith.divf %411, %412 : vector<16x1xf32>
    %414 = vector.broadcast %413 : vector<16x1xf32> to vector<16x32xf32>
    %415 = arith.subf %407, %414 : vector<16x32xf32>
    %416 = arith.mulf %415, %415 : vector<16x32xf32>
    %cst_238 = arith.constant dense<0.000000e+00> : vector<16xf32>
    %417 = vector.multi_reduction <add>, %416, %cst_238 [1] : vector<16x32xf32> to vector<16xf32>
    %418 = vector.shape_cast %417 : vector<16xf32> to vector<16x1xf32>
    %cst_239 = arith.constant 3.200000e+01 : f32
    %419 = vector.broadcast %cst_239 : f32 to vector<16x1xf32>
    %420 = arith.divf %418, %419 : vector<16x1xf32>
    %421 = vector.broadcast %413 : vector<16x1xf32> to vector<16x32xf32>
    %422 = arith.subf %407, %421 : vector<16x32xf32>
    %cst_240 = arith.constant 9.99999974E-6 : f32
    %423 = vector.broadcast %cst_240 : f32 to vector<16x1xf32>
    %424 = arith.addf %420, %423 : vector<16x1xf32>
    %425 = math.rsqrt %424 : vector<16x1xf32>
    %426 = vector.broadcast %425 : vector<16x1xf32> to vector<16x32xf32>
    %427 = arith.mulf %422, %426 : vector<16x32xf32>
    %428 = vector.broadcast %408 : vector<1x32xf32> to vector<16x32xf32>
    %429 = arith.mulf %427, %428 : vector<16x32xf32>
    %430 = vector.broadcast %409 : vector<1x32xf32> to vector<16x32xf32>
    %431 = arith.addf %429, %430 : vector<16x32xf32>
    %c0_241 = arith.constant 0 : index
    %c0_242 = arith.constant 0 : index
    %432 = vector.load %arg42[%c0_241, %c0_242] : memref<16x32xf32, #tpu.memory_space<vmem>>, vector<16x32xf32>
    tpu.vector_store %arg42[%c0_241, %c0_242], %431 {strides = array<i32>} : memref<16x32xf32, #tpu.memory_space<vmem>>, vector<16x32xf32>,
    return
  }
  func.func @transform_0(%arg0: i32) -> (i32, i32) {
    %c0_i32 = arith.constant 0 : i32
    %c0_i32_0 = arith.constant 0 : i32
    return %arg0, %c0_i32 : i32, i32
  }
  func.func @transform_1(%arg0: i32) -> (i32, i32) {
    %c0_i32 = arith.constant 0 : i32
    %c0_i32_0 = arith.constant 0 : i32
    %c0_i32_1 = arith.constant 0 : i32
    return %c0_i32, %c0_i32_0 : i32, i32
  }
  func.func @transform_2(%arg0: i32) -> (i32, i32) {
    %c0_i32 = arith.constant 0 : i32
    %c0_i32_0 = arith.constant 0 : i32
    %c0_i32_1 = arith.constant 0 : i32
    return %c0_i32, %c0_i32_0 : i32, i32
  }
  func.func @transform_3(%arg0: i32) -> (i32, i32) {
    %c0_i32 = arith.constant 0 : i32
    %c0_i32_0 = arith.constant 0 : i32
    %c0_i32_1 = arith.constant 0 : i32
    return %c0_i32, %c0_i32_0 : i32, i32
  }
  func.func @transform_4(%arg0: i32) -> (i32, i32) {
    %c0_i32 = arith.constant 0 : i32
    %c0_i32_0 = arith.constant 0 : i32
    %c0_i32_1 = arith.constant 0 : i32
    return %c0_i32, %c0_i32_0 : i32, i32
  }
  func.func @transform_5(%arg0: i32) -> (i32, i32) {
    %c0_i32 = arith.constant 0 : i32
    %c0_i32_0 = arith.constant 0 : i32
    %c0_i32_1 = arith.constant 0 : i32
    return %c0_i32, %c0_i32_0 : i32, i32
  }
  func.func @transform_6(%arg0: i32) -> (i32, i32) {
    %c0_i32 = arith.constant 0 : i32
    %c0_i32_0 = arith.constant 0 : i32
    %c0_i32_1 = arith.constant 0 : i32
    return %c0_i32, %c0_i32_0 : i32, i32
  }
  func.func @transform_7(%arg0: i32) -> (i32, i32) {
    %c0_i32 = arith.constant 0 : i32
    %c0_i32_0 = arith.constant 0 : i32
    %c0_i32_1 = arith.constant 0 : i32
    return %c0_i32, %c0_i32_0 : i32, i32
  }
  func.func @transform_8(%arg0: i32) -> (i32, i32) {
    %c0_i32 = arith.constant 0 : i32
    %c0_i32_0 = arith.constant 0 : i32
    %c0_i32_1 = arith.constant 0 : i32
    return %c0_i32, %c0_i32_0 : i32, i32
  }
  func.func @transform_9(%arg0: i32) -> (i32, i32) {
    %c0_i32 = arith.constant 0 : i32
    %c0_i32_0 = arith.constant 0 : i32
    %c0_i32_1 = arith.constant 0 : i32
    return %c0_i32, %c0_i32_0 : i32, i32
  }
  func.func @transform_10(%arg0: i32) -> (i32, i32) {
    %c0_i32 = arith.constant 0 : i32
    %c0_i32_0 = arith.constant 0 : i32
    %c0_i32_1 = arith.constant 0 : i32
    return %c0_i32, %c0_i32_0 : i32, i32
  }
  func.func @transform_11(%arg0: i32) -> (i32, i32) {
    %c0_i32 = arith.constant 0 : i32
    %c0_i32_0 = arith.constant 0 : i32
    %c0_i32_1 = arith.constant 0 : i32
    return %c0_i32, %c0_i32_0 : i32, i32
  }
  func.func @transform_12(%arg0: i32) -> (i32, i32) {
    %c0_i32 = arith.constant 0 : i32
    %c0_i32_0 = arith.constant 0 : i32
    %c0_i32_1 = arith.constant 0 : i32
    return %c0_i32, %c0_i32_0 : i32, i32
  }
  func.func @transform_13(%arg0: i32) -> (i32, i32) {
    %c0_i32 = arith.constant 0 : i32
    %c0_i32_0 = arith.constant 0 : i32
    %c0_i32_1 = arith.constant 0 : i32
    return %c0_i32, %c0_i32_0 : i32, i32
  }
  func.func @transform_14(%arg0: i32) -> (i32, i32) {
    %c0_i32 = arith.constant 0 : i32
    %c0_i32_0 = arith.constant 0 : i32
    %c0_i32_1 = arith.constant 0 : i32
    return %c0_i32, %c0_i32_0 : i32, i32
  }
  func.func @transform_15(%arg0: i32) -> (i32, i32) {
    %c0_i32 = arith.constant 0 : i32
    %c0_i32_0 = arith.constant 0 : i32
    %c0_i32_1 = arith.constant 0 : i32
    return %c0_i32, %c0_i32_0 : i32, i32
  }
  func.func @transform_16(%arg0: i32) -> (i32, i32) {
    %c0_i32 = arith.constant 0 : i32
    %c0_i32_0 = arith.constant 0 : i32
    %c0_i32_1 = arith.constant 0 : i32
    return %c0_i32, %c0_i32_0 : i32, i32
  }
  func.func @transform_17(%arg0: i32) -> (i32, i32) {
    %c0_i32 = arith.constant 0 : i32
    %c0_i32_0 = arith.constant 0 : i32
    %c0_i32_1 = arith.constant 0 : i32
    return %c0_i32, %c0_i32_0 : i32, i32
  }
  func.func @transform_18(%arg0: i32) -> (i32, i32) {
    %c0_i32 = arith.constant 0 : i32
    %c0_i32_0 = arith.constant 0 : i32
    %c0_i32_1 = arith.constant 0 : i32
    return %c0_i32, %c0_i32_0 : i32, i32
  }
  func.func @transform_19(%arg0: i32) -> (i32, i32) {
    %c0_i32 = arith.constant 0 : i32
    %c0_i32_0 = arith.constant 0 : i32
    %c0_i32_1 = arith.constant 0 : i32
    return %c0_i32, %c0_i32_0 : i32, i32
  }
  func.func @transform_20(%arg0: i32) -> (i32, i32) {
    %c0_i32 = arith.constant 0 : i32
    %c0_i32_0 = arith.constant 0 : i32
    %c0_i32_1 = arith.constant 0 : i32
    return %c0_i32, %c0_i32_0 : i32, i32
  }
  func.func @transform_21(%arg0: i32) -> (i32, i32) {
    %c0_i32 = arith.constant 0 : i32
    %c0_i32_0 = arith.constant 0 : i32
    %c0_i32_1 = arith.constant 0 : i32
    return %c0_i32, %c0_i32_0 : i32, i32
  }
  func.func @transform_22(%arg0: i32) -> (i32, i32) {
    %c0_i32 = arith.constant 0 : i32
    %c0_i32_0 = arith.constant 0 : i32
    %c0_i32_1 = arith.constant 0 : i32
    return %c0_i32, %c0_i32_0 : i32, i32
  }
  func.func @transform_23(%arg0: i32) -> (i32, i32) {
    %c0_i32 = arith.constant 0 : i32
    %c0_i32_0 = arith.constant 0 : i32
    %c0_i32_1 = arith.constant 0 : i32
    return %c0_i32, %c0_i32_0 : i32, i32
  }
  func.func @transform_24(%arg0: i32) -> (i32, i32) {
    %c0_i32 = arith.constant 0 : i32
    %c0_i32_0 = arith.constant 0 : i32
    %c0_i32_1 = arith.constant 0 : i32
    return %c0_i32, %c0_i32_0 : i32, i32
  }
  func.func @transform_25(%arg0: i32) -> (i32, i32, i32) {
    %c0_i32 = arith.constant 0 : i32
    %c0_i32_0 = arith.constant 0 : i32
    %c0_i32_1 = arith.constant 0 : i32
    %c0_i32_2 = arith.constant 0 : i32
    return %c0_i32, %c0_i32_0, %c0_i32_1 : i32, i32, i32
  }
  func.func @transform_26(%arg0: i32) -> (i32, i32) {
    %c0_i32 = arith.constant 0 : i32
    %c0_i32_0 = arith.constant 0 : i32
    %c0_i32_1 = arith.constant 0 : i32
    return %c0_i32, %c0_i32_0 : i32, i32
  }
  func.func @transform_27(%arg0: i32) -> (i32, i32) {
    %c0_i32 = arith.constant 0 : i32
    %c0_i32_0 = arith.constant 0 : i32
    %c0_i32_1 = arith.constant 0 : i32
    return %c0_i32, %c0_i32_0 : i32, i32
  }
  func.func @transform_28(%arg0: i32) -> (i32, i32) {
    %c0_i32 = arith.constant 0 : i32
    %c0_i32_0 = arith.constant 0 : i32
    %c0_i32_1 = arith.constant 0 : i32
    return %c0_i32, %c0_i32_0 : i32, i32
  }
  func.func @transform_29(%arg0: i32) -> (i32, i32) {
    %c0_i32 = arith.constant 0 : i32
    %c0_i32_0 = arith.constant 0 : i32
    %c0_i32_1 = arith.constant 0 : i32
    return %c0_i32, %c0_i32_0 : i32, i32
  }
  func.func @transform_30(%arg0: i32) -> (i32, i32) {
    %c0_i32 = arith.constant 0 : i32
    %c0_i32_0 = arith.constant 0 : i32
    %c0_i32_1 = arith.constant 0 : i32
    return %c0_i32, %c0_i32_0 : i32, i32
  }
  func.func @transform_31(%arg0: i32) -> (i32, i32) {
    %c0_i32 = arith.constant 0 : i32
    %c0_i32_0 = arith.constant 0 : i32
    %c0_i32_1 = arith.constant 0 : i32
    return %c0_i32, %c0_i32_0 : i32, i32
  }
  func.func @transform_32(%arg0: i32) -> (i32, i32) {
    %c0_i32 = arith.constant 0 : i32
    %c0_i32_0 = arith.constant 0 : i32
    %c0_i32_1 = arith.constant 0 : i32
    return %c0_i32, %c0_i32_0 : i32, i32
  }
  func.func @transform_33(%arg0: i32) -> (i32, i32) {
    %c0_i32 = arith.constant 0 : i32
    %c0_i32_0 = arith.constant 0 : i32
    %c0_i32_1 = arith.constant 0 : i32
    return %c0_i32, %c0_i32_0 : i32, i32
  }
  func.func @transform_34(%arg0: i32) -> (i32, i32) {
    %c0_i32 = arith.constant 0 : i32
    %c0_i32_0 = arith.constant 0 : i32
    %c0_i32_1 = arith.constant 0 : i32
    return %c0_i32, %c0_i32_0 : i32, i32
  }
  func.func @transform_35(%arg0: i32) -> (i32, i32) {
    %c0_i32 = arith.constant 0 : i32
    %c0_i32_0 = arith.constant 0 : i32
    %c0_i32_1 = arith.constant 0 : i32
    return %c0_i32, %c0_i32_0 : i32, i32
  }
  func.func @transform_36(%arg0: i32) -> (i32, i32) {
    %c0_i32 = arith.constant 0 : i32
    %c0_i32_0 = arith.constant 0 : i32
    %c0_i32_1 = arith.constant 0 : i32
    return %c0_i32, %c0_i32_0 : i32, i32
  }
  func.func @transform_37(%arg0: i32) -> (i32, i32) {
    %c0_i32 = arith.constant 0 : i32
    %c0_i32_0 = arith.constant 0 : i32
    %c0_i32_1 = arith.constant 0 : i32
    return %c0_i32, %c0_i32_0 : i32, i32
  }
  func.func @transform_38(%arg0: i32) -> (i32, i32) {
    %c0_i32 = arith.constant 0 : i32
    %c0_i32_0 = arith.constant 0 : i32
    %c0_i32_1 = arith.constant 0 : i32
    return %c0_i32, %c0_i32_0 : i32, i32
  }
  func.func @transform_39(%arg0: i32) -> (i32, i32) {
    %c0_i32 = arith.constant 0 : i32
    %c0_i32_0 = arith.constant 0 : i32
    %c0_i32_1 = arith.constant 0 : i32
    return %c0_i32, %c0_i32_0 : i32, i32
  }
  func.func @transform_40(%arg0: i32) -> (i32, i32) {
    %c0_i32 = arith.constant 0 : i32
    %c0_i32_0 = arith.constant 0 : i32
    %c0_i32_1 = arith.constant 0 : i32
    return %c0_i32, %c0_i32_0 : i32, i32
  }
  func.func @transform_41(%arg0: i32) -> (i32, i32) {
    %c0_i32 = arith.constant 0 : i32
    %c0_i32_0 = arith.constant 0 : i32
    return %arg0, %c0_i32 : i32, i32
  }
}

module attributes {stable_mosaic.version = 11 : i64} {
  func.func @conformer_layer_kernel(%arg0: i32, %arg1: memref<16x32xf32, #tpu.memory_space<vmem>>, %arg2: memref<1x32xf32, #tpu.memory_space<vmem>>, %arg3: memref<1x32xf32, #tpu.memory_space<vmem>>, %arg4: memref<32x128xbf16, #tpu.memory_space<vmem>>, %arg5: memref<1x128xf32, #tpu.memory_space<vmem>>, %arg6: memref<32x128xbf16, #tpu.memory_space<vmem>>, %arg7: memref<1x128xf32, #tpu.memory_space<vmem>>, %arg8: memref<128x32xbf16, #tpu.memory_space<vmem>>, %arg9: memref<1x32xf32, #tpu.memory_space<vmem>>, %arg10: memref<1x32xf32, #tpu.memory_space<vmem>>, %arg11: memref<1x32xf32, #tpu.memory_space<vmem>>, %arg12: memref<32x32xbf16, #tpu.memory_space<vmem>>, %arg13: memref<1x32xf32, #tpu.memory_space<vmem>>, %arg14: memref<32x32xbf16, #tpu.memory_space<vmem>>, %arg15: memref<1x32xf32, #tpu.memory_space<vmem>>, %arg16: memref<32x32xbf16, #tpu.memory_space<vmem>>, %arg17: memref<1x32xf32, #tpu.memory_space<vmem>>, %arg18: memref<32x32xbf16, #tpu.memory_space<vmem>>, %arg19: memref<1x32xf32, #tpu.memory_space<vmem>>, %arg20: memref<1x32xf32, #tpu.memory_space<vmem>>, %arg21: memref<1x32xf32, #tpu.memory_space<vmem>>, %arg22: memref<32x64xbf16, #tpu.memory_space<vmem>>, %arg23: memref<1x64xf32, #tpu.memory_space<vmem>>, %arg24: memref<32x64xbf16, #tpu.memory_space<vmem>>, %arg25: memref<1x64xf32, #tpu.memory_space<vmem>>, %arg26: memref<15x64x64xbf16, #tpu.memory_space<vmem>>, %arg27: memref<1x64xf32, #tpu.memory_space<vmem>>, %arg28: memref<1x64xf32, #tpu.memory_space<vmem>>, %arg29: memref<1x64xf32, #tpu.memory_space<vmem>>, %arg30: memref<64x32xbf16, #tpu.memory_space<vmem>>, %arg31: memref<1x32xf32, #tpu.memory_space<vmem>>, %arg32: memref<1x32xf32, #tpu.memory_space<vmem>>, %arg33: memref<1x32xf32, #tpu.memory_space<vmem>>, %arg34: memref<32x128xbf16, #tpu.memory_space<vmem>>, %arg35: memref<1x128xf32, #tpu.memory_space<vmem>>, %arg36: memref<32x128xbf16, #tpu.memory_space<vmem>>, %arg37: memref<1x128xf32, #tpu.memory_space<vmem>>, %arg38: memref<128x32xbf16, #tpu.memory_space<vmem>>, %arg39: memref<1x32xf32, #tpu.memory_space<vmem>>, %arg40: memref<1x32xf32, #tpu.memory_space<vmem>>, %arg41: memref<1x32xf32, #tpu.memory_space<vmem>>, %arg42: memref<16x32xf32, #tpu.memory_space<vmem>>, %arg43: memref<2x22x64xf32, #tpu.memory_space<vmem>>) attributes {dimension_semantics = [#tpu.dimension_semantics<parallel>], iteration_bounds = array<i64: 1>, scalar_prefetch = 0 : i64, scratch_operands = 1 : i64, tpu.core_type = #tpu.core_type<tc>, window_params = [{transform_indices = @transform_0, window_bounds = array<i64: 16, 32>}, {pipeline_mode = #tpu.pipeline_mode<synchronous>, transform_indices = @transform_1, window_bounds = array<i64: 1, 32>}, {pipeline_mode = #tpu.pipeline_mode<synchronous>, transform_indices = @transform_2, window_bounds = array<i64: 1, 32>}, {pipeline_mode = #tpu.pipeline_mode<synchronous>, transform_indices = @transform_3, window_bounds = array<i64: 32, 128>}, {pipeline_mode = #tpu.pipeline_mode<synchronous>, transform_indices = @transform_4, window_bounds = array<i64: 1, 128>}, {pipeline_mode = #tpu.pipeline_mode<synchronous>, transform_indices = @transform_5, window_bounds = array<i64: 32, 128>}, {pipeline_mode = #tpu.pipeline_mode<synchronous>, transform_indices = @transform_6, window_bounds = array<i64: 1, 128>}, {pipeline_mode = #tpu.pipeline_mode<synchronous>, transform_indices = @transform_7, window_bounds = array<i64: 128, 32>}, {pipeline_mode = #tpu.pipeline_mode<synchronous>, transform_indices = @transform_8, window_bounds = array<i64: 1, 32>}, {pipeline_mode = #tpu.pipeline_mode<synchronous>, transform_indices = @transform_9, window_bounds = array<i64: 1, 32>}, {pipeline_mode = #tpu.pipeline_mode<synchronous>, transform_indices = @transform_10, window_bounds = array<i64: 1, 32>}, {pipeline_mode = #tpu.pipeline_mode<synchronous>, transform_indices = @transform_11, window_bounds = array<i64: 32, 32>}, {pipeline_mode = #tpu.pipeline_mode<synchronous>, transform_indices = @transform_12, window_bounds = array<i64: 1, 32>}, {pipeline_mode = #tpu.pipeline_mode<synchronous>, transform_indices = @transform_13, window_bounds = array<i64: 32, 32>}, {pipeline_mode = #tpu.pipeline_mode<synchronous>, transform_indices = @transform_14, window_bounds = array<i64: 1, 32>}, {pipeline_mode = #tpu.pipeline_mode<synchronous>, transform_indices = @transform_15, window_bounds = array<i64: 32, 32>}, {pipeline_mode = #tpu.pipeline_mode<synchronous>, transform_indices = @transform_16, window_bounds = array<i64: 1, 32>}, {pipeline_mode = #tpu.pipeline_mode<synchronous>, transform_indices = @transform_17, window_bounds = array<i64: 32, 32>}, {pipeline_mode = #tpu.pipeline_mode<synchronous>, transform_indices = @transform_18, window_bounds = array<i64: 1, 32>}, {pipeline_mode = #tpu.pipeline_mode<synchronous>, transform_indices = @transform_19, window_bounds = array<i64: 1, 32>}, {pipeline_mode = #tpu.pipeline_mode<synchronous>, transform_indices = @transform_20, window_bounds = array<i64: 1, 32>}, {pipeline_mode = #tpu.pipeline_mode<synchronous>, transform_indices = @transform_21, window_bounds = array<i64: 32, 64>}, {pipeline_mode = #tpu.pipeline_mode<synchronous>, transform_indices = @transform_22, window_bounds = array<i64: 1, 64>}, {pipeline_mode = #tpu.pipeline_mode<synchronous>, transform_indices = @transform_23, window_bounds = array<i64: 32, 64>}, {pipeline_mode = #tpu.pipeline_mode<synchronous>, transform_indices = @transform_24, window_bounds = array<i64: 1, 64>}, {pipeline_mode = #tpu.pipeline_mode<synchronous>, transform_indices = @transform_25, window_bounds = array<i64: 15, 64, 64>}, {pipeline_mode = #tpu.pipeline_mode<synchronous>, transform_indices = @transform_26, window_bounds = array<i64: 1, 64>}, {pipeline_mode = #tpu.pipeline_mode<synchronous>, transform_indices = @transform_27, window_bounds = array<i64: 1, 64>}, {pipeline_mode = #tpu.pipeline_mode<synchronous>, transform_indices = @transform_28, window_bounds = array<i64: 1, 64>}, {pipeline_mode = #tpu.pipeline_mode<synchronous>, transform_indices = @transform_29, window_bounds = array<i64: 64, 32>}, {pipeline_mode = #tpu.pipeline_mode<synchronous>, transform_indices = @transform_30, window_bounds = array<i64: 1, 32>}, {pipeline_mode = #tpu.pipeline_mode<synchronous>, transform_indices = @transform_31, window_bounds = array<i64: 1, 32>}, {pipeline_mode = #tpu.pipeline_mode<synchronous>, transform_indices = @transform_32, window_bounds = array<i64: 1, 32>}, {pipeline_mode = #tpu.pipeline_mode<synchronous>, transform_indices = @transform_33, window_bounds = array<i64: 32, 128>}, {pipeline_mode = #tpu.pipeline_mode<synchronous>, transform_indices = @transform_34, window_bounds = array<i64: 1, 128>}, {pipeline_mode = #tpu.pipeline_mode<synchronous>, transform_indices = @transform_35, window_bounds = array<i64: 32, 128>}, {pipeline_mode = #tpu.pipeline_mode<synchronous>, transform_indices = @transform_36, window_bounds = array<i64: 1, 128>}, {pipeline_mode = #tpu.pipeline_mode<synchronous>, transform_indices = @transform_37, window_bounds = array<i64: 128, 32>}, {pipeline_mode = #tpu.pipeline_mode<synchronous>, transform_indices = @transform_38, window_bounds = array<i64: 1, 32>}, {pipeline_mode = #tpu.pipeline_mode<synchronous>, transform_indices = @transform_39, window_bounds = array<i64: 1, 32>}, {pipeline_mode = #tpu.pipeline_mode<synchronous>, transform_indices = @transform_40, window_bounds = array<i64: 1, 32>}, {transform_indices = @transform_41, window_bounds = array<i64: 16, 32>}]} {
    %c0 = arith.constant 0 : index
    %c0_0 = arith.constant 0 : index
    %0 = vector.load %arg1[%c0, %c0_0] : memref<16x32xf32, #tpu.memory_space<vmem>>, vector<16x32xf32>
    %c0_1 = arith.constant 0 : index
    %c0_2 = arith.constant 0 : index
    %1 = vector.load %arg2[%c0_1, %c0_2] : memref<1x32xf32, #tpu.memory_space<vmem>>, vector<1x32xf32>
    %c0_3 = arith.constant 0 : index
    %c0_4 = arith.constant 0 : index
    %2 = vector.load %arg3[%c0_3, %c0_4] : memref<1x32xf32, #tpu.memory_space<vmem>>, vector<1x32xf32>
    %c0_5 = arith.constant 0 : index
    %c0_6 = arith.constant 0 : index
    %3 = vector.load %arg4[%c0_5, %c0_6] : memref<32x128xbf16, #tpu.memory_space<vmem>>, vector<32x128xbf16>
    %c0_7 = arith.constant 0 : index
    %c0_8 = arith.constant 0 : index
    %4 = vector.load %arg5[%c0_7, %c0_8] : memref<1x128xf32, #tpu.memory_space<vmem>>, vector<1x128xf32>
    %c0_9 = arith.constant 0 : index
    %c0_10 = arith.constant 0 : index
    %5 = vector.load %arg6[%c0_9, %c0_10] : memref<32x128xbf16, #tpu.memory_space<vmem>>, vector<32x128xbf16>
    %c0_11 = arith.constant 0 : index
    %c0_12 = arith.constant 0 : index
    %6 = vector.load %arg7[%c0_11, %c0_12] : memref<1x128xf32, #tpu.memory_space<vmem>>, vector<1x128xf32>
    %c0_13 = arith.constant 0 : index
    %c0_14 = arith.constant 0 : index
    %7 = vector.load %arg8[%c0_13, %c0_14] : memref<128x32xbf16, #tpu.memory_space<vmem>>, vector<128x32xbf16>
    %c0_15 = arith.constant 0 : index
    %c0_16 = arith.constant 0 : index
    %8 = vector.load %arg9[%c0_15, %c0_16] : memref<1x32xf32, #tpu.memory_space<vmem>>, vector<1x32xf32>
    %cst = arith.constant dense<0.000000e+00> : vector<16xf32>
    %9 = vector.multi_reduction <add>, %0, %cst [1] : vector<16x32xf32> to vector<16xf32>
    %10 = vector.shape_cast %9 : vector<16xf32> to vector<16x1xf32>
    %cst_17 = arith.constant 3.200000e+01 : f32
    %11 = vector.broadcast %cst_17 : f32 to vector<16x1xf32>
    %12 = arith.divf %10, %11 : vector<16x1xf32>
    %13 = vector.broadcast %12 : vector<16x1xf32> to vector<16x32xf32>
    %14 = arith.subf %0, %13 : vector<16x32xf32>
    %15 = arith.mulf %14, %14 : vector<16x32xf32>
    %cst_18 = arith.constant dense<0.000000e+00> : vector<16xf32>
    %16 = vector.multi_reduction <add>, %15, %cst_18 [1] : vector<16x32xf32> to vector<16xf32>
    %17 = vector.shape_cast %16 : vector<16xf32> to vector<16x1xf32>
    %cst_19 = arith.constant 3.200000e+01 : f32
    %18 = vector.broadcast %cst_19 : f32 to vector<16x1xf32>
    %19 = arith.divf %17, %18 : vector<16x1xf32>
    %20 = vector.broadcast %12 : vector<16x1xf32> to vector<16x32xf32>
    %21 = arith.subf %0, %20 : vector<16x32xf32>
    %cst_20 = arith.constant 9.99999974E-6 : f32
    %22 = vector.broadcast %cst_20 : f32 to vector<16x1xf32>
    %23 = arith.addf %19, %22 : vector<16x1xf32>
    %24 = math.rsqrt %23 : vector<16x1xf32>
    %25 = vector.broadcast %24 : vector<16x1xf32> to vector<16x32xf32>
    %26 = arith.mulf %21, %25 : vector<16x32xf32>
    %27 = vector.broadcast %1 : vector<1x32xf32> to vector<16x32xf32>
    %28 = arith.mulf %26, %27 : vector<16x32xf32>
    %29 = vector.broadcast %2 : vector<1x32xf32> to vector<16x32xf32>
    %30 = arith.addf %28, %29 : vector<16x32xf32>
    %31 = arith.truncf %30 : vector<16x32xf32> to vector<16x32xbf16>
    %cst_21 = arith.constant dense<0.000000e+00> : vector<16x128xf32>
    %32 = tpu.matmul %31, %3, %cst_21 {dimension_numbers = #tpu.dot_dimension_numbers<[1], [0], [0], [1], [0, 0, 1, 1], [], []>} : vector<16x32xbf16>, vector<32x128xbf16>, vector<16x128xf32> -> vector<16x128xf32>
    %33 = vector.broadcast %4 : vector<1x128xf32> to vector<16x128xf32>
    %34 = arith.addf %32, %33 : vector<16x128xf32>
    %35 = arith.negf %34 : vector<16x128xf32>
    %36 = math.exp %35 : vector<16x128xf32>
    %cst_22 = arith.constant 1.000000e+00 : f32
    %37 = vector.broadcast %cst_22 : f32 to vector<16x128xf32>
    %38 = arith.addf %37, %36 : vector<16x128xf32>
    %39 = arith.divf %37, %38 : vector<16x128xf32>
    %40 = arith.mulf %34, %39 : vector<16x128xf32>
    %cst_23 = arith.constant dense<0.000000e+00> : vector<16x128xf32>
    %41 = tpu.matmul %31, %5, %cst_23 {dimension_numbers = #tpu.dot_dimension_numbers<[1], [0], [0], [1], [0, 0, 1, 1], [], []>} : vector<16x32xbf16>, vector<32x128xbf16>, vector<16x128xf32> -> vector<16x128xf32>
    %42 = vector.broadcast %6 : vector<1x128xf32> to vector<16x128xf32>
    %43 = arith.addf %41, %42 : vector<16x128xf32>
    %44 = arith.mulf %40, %43 : vector<16x128xf32>
    %45 = arith.truncf %44 : vector<16x128xf32> to vector<16x128xbf16>
    %cst_24 = arith.constant dense<0.000000e+00> : vector<16x32xf32>
    %46 = tpu.matmul %45, %7, %cst_24 {dimension_numbers = #tpu.dot_dimension_numbers<[1], [0], [0], [1], [0, 0, 1, 1], [], []>} : vector<16x128xbf16>, vector<128x32xbf16>, vector<16x32xf32> -> vector<16x32xf32>
    %47 = vector.broadcast %8 : vector<1x32xf32> to vector<16x32xf32>
    %48 = arith.addf %46, %47 : vector<16x32xf32>
    %cst_25 = arith.constant 5.000000e-01 : f32
    %49 = vector.broadcast %cst_25 : f32 to vector<16x32xf32>
    %50 = arith.mulf %49, %48 : vector<16x32xf32>
    %51 = arith.addf %0, %50 : vector<16x32xf32>
    %c0_26 = arith.constant 0 : index
    %c0_27 = arith.constant 0 : index
    %52 = vector.load %arg10[%c0_26, %c0_27] : memref<1x32xf32, #tpu.memory_space<vmem>>, vector<1x32xf32>
    %c0_28 = arith.constant 0 : index
    %c0_29 = arith.constant 0 : index
    %53 = vector.load %arg11[%c0_28, %c0_29] : memref<1x32xf32, #tpu.memory_space<vmem>>, vector<1x32xf32>
    %c0_30 = arith.constant 0 : index
    %c0_31 = arith.constant 0 : index
    %54 = vector.load %arg12[%c0_30, %c0_31] : memref<32x32xbf16, #tpu.memory_space<vmem>>, vector<32x32xbf16>
    %c0_32 = arith.constant 0 : index
    %c0_33 = arith.constant 0 : index
    %55 = vector.load %arg13[%c0_32, %c0_33] : memref<1x32xf32, #tpu.memory_space<vmem>>, vector<1x32xf32>
    %c0_34 = arith.constant 0 : index
    %c0_35 = arith.constant 0 : index
    %56 = vector.load %arg14[%c0_34, %c0_35] : memref<32x32xbf16, #tpu.memory_space<vmem>>, vector<32x32xbf16>
    %c0_36 = arith.constant 0 : index
    %c0_37 = arith.constant 0 : index
    %57 = vector.load %arg15[%c0_36, %c0_37] : memref<1x32xf32, #tpu.memory_space<vmem>>, vector<1x32xf32>
    %c0_38 = arith.constant 0 : index
    %c0_39 = arith.constant 0 : index
    %58 = vector.load %arg16[%c0_38, %c0_39] : memref<32x32xbf16, #tpu.memory_space<vmem>>, vector<32x32xbf16>
    %c0_40 = arith.constant 0 : index
    %c0_41 = arith.constant 0 : index
    %59 = vector.load %arg17[%c0_40, %c0_41] : memref<1x32xf32, #tpu.memory_space<vmem>>, vector<1x32xf32>
    %c0_42 = arith.constant 0 : index
    %c0_43 = arith.constant 0 : index
    %60 = vector.load %arg18[%c0_42, %c0_43] : memref<32x32xbf16, #tpu.memory_space<vmem>>, vector<32x32xbf16>
    %c0_44 = arith.constant 0 : index
    %c0_45 = arith.constant 0 : index
    %61 = vector.load %arg19[%c0_44, %c0_45] : memref<1x32xf32, #tpu.memory_space<vmem>>, vector<1x32xf32>
    %cst_46 = arith.constant dense<0.000000e+00> : vector<16xf32>
    %62 = vector.multi_reduction <add>, %51, %cst_46 [1] : vector<16x32xf32> to vector<16xf32>
    %63 = vector.shape_cast %62 : vector<16xf32> to vector<16x1xf32>
    %cst_47 = arith.constant 3.200000e+01 : f32
    %64 = vector.broadcast %cst_47 : f32 to vector<16x1xf32>
    %65 = arith.divf %63, %64 : vector<16x1xf32>
    %66 = vector.broadcast %65 : vector<16x1xf32> to vector<16x32xf32>
    %67 = arith.subf %51, %66 : vector<16x32xf32>
    %68 = arith.mulf %67, %67 : vector<16x32xf32>
    %cst_48 = arith.constant dense<0.000000e+00> : vector<16xf32>
    %69 = vector.multi_reduction <add>, %68, %cst_48 [1] : vector<16x32xf32> to vector<16xf32>
    %70 = vector.shape_cast %69 : vector<16xf32> to vector<16x1xf32>
    %cst_49 = arith.constant 3.200000e+01 : f32
    %71 = vector.broadcast %cst_49 : f32 to vector<16x1xf32>
    %72 = arith.divf %70, %71 : vector<16x1xf32>
    %73 = vector.broadcast %65 : vector<16x1xf32> to vector<16x32xf32>
    %74 = arith.subf %51, %73 : vector<16x32xf32>
    %cst_50 = arith.constant 9.99999974E-6 : f32
    %75 = vector.broadcast %cst_50 : f32 to vector<16x1xf32>
    %76 = arith.addf %72, %75 : vector<16x1xf32>
    %77 = math.rsqrt %76 : vector<16x1xf32>
    %78 = vector.broadcast %77 : vector<16x1xf32> to vector<16x32xf32>
    %79 = arith.mulf %74, %78 : vector<16x32xf32>
    %80 = vector.broadcast %52 : vector<1x32xf32> to vector<16x32xf32>
    %81 = arith.mulf %79, %80 : vector<16x32xf32>
    %82 = vector.broadcast %53 : vector<1x32xf32> to vector<16x32xf32>
    %83 = arith.addf %81, %82 : vector<16x32xf32>
    %84 = arith.truncf %83 : vector<16x32xf32> to vector<16x32xbf16>
    %cst_51 = arith.constant dense<0.000000e+00> : vector<16x32xf32>
    %85 = tpu.matmul %84, %54, %cst_51 {dimension_numbers = #tpu.dot_dimension_numbers<[1], [0], [0], [1], [0, 0, 1, 1], [], []>} : vector<16x32xbf16>, vector<32x32xbf16>, vector<16x32xf32> -> vector<16x32xf32>
    %86 = vector.broadcast %55 : vector<1x32xf32> to vector<16x32xf32>
    %87 = arith.addf %85, %86 : vector<16x32xf32>
    %88 = vector.shape_cast %87 : vector<16x32xf32> to vector<2x8x32xf32>
    %cst_52 = arith.constant dense<0.000000e+00> : vector<16x32xf32>
    %89 = tpu.matmul %84, %56, %cst_52 {dimension_numbers = #tpu.dot_dimension_numbers<[1], [0], [0], [1], [0, 0, 1, 1], [], []>} : vector<16x32xbf16>, vector<32x32xbf16>, vector<16x32xf32> -> vector<16x32xf32>
    %90 = vector.broadcast %57 : vector<1x32xf32> to vector<16x32xf32>
    %91 = arith.addf %89, %90 : vector<16x32xf32>
    %92 = vector.shape_cast %91 : vector<16x32xf32> to vector<2x8x32xf32>
    %cst_53 = arith.constant dense<0.000000e+00> : vector<16x32xf32>
    %93 = tpu.matmul %84, %58, %cst_53 {dimension_numbers = #tpu.dot_dimension_numbers<[1], [0], [0], [1], [0, 0, 1, 1], [], []>} : vector<16x32xbf16>, vector<32x32xbf16>, vector<16x32xf32> -> vector<16x32xf32>
    %94 = vector.broadcast %59 : vector<1x32xf32> to vector<16x32xf32>
    %95 = arith.addf %93, %94 : vector<16x32xf32>
    %96 = vector.shape_cast %95 : vector<16x32xf32> to vector<2x8x32xf32>
    %97 = vector.extract_strided_slice %88 {offsets = [0, 0, 0], sizes = [2, 8, 8], strides = [1, 1, 1]} : vector<2x8x32xf32> to vector<2x8x8xf32>
    %98 = arith.truncf %97 : vector<2x8x8xf32> to vector<2x8x8xbf16>
    %99 = vector.extract_strided_slice %92 {offsets = [0, 0, 0], sizes = [2, 8, 8], strides = [1, 1, 1]} : vector<2x8x32xf32> to vector<2x8x8xf32>
    %100 = arith.truncf %99 : vector<2x8x8xf32> to vector<2x8x8xbf16>
    %101 = vector.extract_strided_slice %96 {offsets = [0, 0, 0], sizes = [2, 8, 8], strides = [1, 1, 1]} : vector<2x8x32xf32> to vector<2x8x8xf32>
    %102 = arith.truncf %101 : vector<2x8x8xf32> to vector<2x8x8xbf16>
    "tpu.trace_start"() <{level = 10 : i32, message = "bqe,bke->bqk"}> : () -> ()
    %cst_54 = arith.constant dense<0.000000e+00> : vector<2x8x8xf32>
    %103 = tpu.matmul %98, %100, %cst_54 {dimension_numbers = #tpu.dot_dimension_numbers<[2], [2], [1], [1], [0, 0, 0, 1, 1, 1], [0], [0]>} : vector<2x8x8xbf16>, vector<2x8x8xbf16>, vector<2x8x8xf32> -> vector<2x8x8xf32>
    "tpu.trace_stop"() : () -> ()
    %cst_55 = arith.constant dense<0xFF800000> : vector<2x8xf32>
    %104 = vector.multi_reduction <maximumf>, %103, %cst_55 [2] : vector<2x8x8xf32> to vector<2x8xf32>
    %105 = vector.shape_cast %104 : vector<2x8xf32> to vector<2x8x1xf32>
    %106 = vector.broadcast %105 : vector<2x8x1xf32> to vector<2x8x8xf32>
    %107 = arith.subf %103, %106 : vector<2x8x8xf32>
    %108 = math.exp %107 : vector<2x8x8xf32>
    %cst_56 = arith.constant dense<0.000000e+00> : vector<2x8xf32>
    %109 = vector.multi_reduction <add>, %108, %cst_56 [2] : vector<2x8x8xf32> to vector<2x8xf32>
    %110 = vector.shape_cast %109 : vector<2x8xf32> to vector<2x8x1xf32>
    %111 = tpu.reciprocal %110 {approx = true} : vector<2x8x1xf32> -> vector<2x8x1xf32>
    %112 = vector.broadcast %111 : vector<2x8x1xf32> to vector<2x8x8xf32>
    %113 = arith.mulf %108, %112 : vector<2x8x8xf32>
    %114 = arith.truncf %113 : vector<2x8x8xf32> to vector<2x8x8xbf16>
    "tpu.trace_start"() <{level = 10 : i32, message = "bqk,bke->bqe"}> : () -> ()
    %cst_57 = arith.constant dense<0.000000e+00> : vector<2x8x8xf32>
    %115 = tpu.matmul %114, %102, %cst_57 {dimension_numbers = #tpu.dot_dimension_numbers<[2], [1], [1], [2], [0, 0, 0, 1, 1, 2], [0], [0]>} : vector<2x8x8xbf16>, vector<2x8x8xbf16>, vector<2x8x8xf32> -> vector<2x8x8xf32>
    "tpu.trace_stop"() : () -> ()
    %116 = vector.extract_strided_slice %88 {offsets = [0, 0, 8], sizes = [2, 8, 8], strides = [1, 1, 1]} : vector<2x8x32xf32> to vector<2x8x8xf32>
    %117 = arith.truncf %116 : vector<2x8x8xf32> to vector<2x8x8xbf16>
    %118 = vector.extract_strided_slice %92 {offsets = [0, 0, 8], sizes = [2, 8, 8], strides = [1, 1, 1]} : vector<2x8x32xf32> to vector<2x8x8xf32>
    %119 = arith.truncf %118 : vector<2x8x8xf32> to vector<2x8x8xbf16>
    %120 = vector.extract_strided_slice %96 {offsets = [0, 0, 8], sizes = [2, 8, 8], strides = [1, 1, 1]} : vector<2x8x32xf32> to vector<2x8x8xf32>
    %121 = arith.truncf %120 : vector<2x8x8xf32> to vector<2x8x8xbf16>
    "tpu.trace_start"() <{level = 10 : i32, message = "bqe,bke->bqk"}> : () -> ()
    %cst_58 = arith.constant dense<0.000000e+00> : vector<2x8x8xf32>
    %122 = tpu.matmul %117, %119, %cst_58 {dimension_numbers = #tpu.dot_dimension_numbers<[2], [2], [1], [1], [0, 0, 0, 1, 1, 1], [0], [0]>} : vector<2x8x8xbf16>, vector<2x8x8xbf16>, vector<2x8x8xf32> -> vector<2x8x8xf32>
    "tpu.trace_stop"() : () -> ()
    %cst_59 = arith.constant dense<0xFF800000> : vector<2x8xf32>
    %123 = vector.multi_reduction <maximumf>, %122, %cst_59 [2] : vector<2x8x8xf32> to vector<2x8xf32>
    %124 = vector.shape_cast %123 : vector<2x8xf32> to vector<2x8x1xf32>
    %125 = vector.broadcast %124 : vector<2x8x1xf32> to vector<2x8x8xf32>
    %126 = arith.subf %122, %125 : vector<2x8x8xf32>
    %127 = math.exp %126 : vector<2x8x8xf32>
    %cst_60 = arith.constant dense<0.000000e+00> : vector<2x8xf32>
    %128 = vector.multi_reduction <add>, %127, %cst_60 [2] : vector<2x8x8xf32> to vector<2x8xf32>
    %129 = vector.shape_cast %128 : vector<2x8xf32> to vector<2x8x1xf32>
    %130 = tpu.reciprocal %129 {approx = true} : vector<2x8x1xf32> -> vector<2x8x1xf32>
    %131 = vector.broadcast %130 : vector<2x8x1xf32> to vector<2x8x8xf32>
    %132 = arith.mulf %127, %131 : vector<2x8x8xf32>
    %133 = arith.truncf %132 : vector<2x8x8xf32> to vector<2x8x8xbf16>
    "tpu.trace_start"() <{level = 10 : i32, message = "bqk,bke->bqe"}> : () -> ()
    %cst_61 = arith.constant dense<0.000000e+00> : vector<2x8x8xf32>
    %134 = tpu.matmul %133, %121, %cst_61 {dimension_numbers = #tpu.dot_dimension_numbers<[2], [1], [1], [2], [0, 0, 0, 1, 1, 2], [0], [0]>} : vector<2x8x8xbf16>, vector<2x8x8xbf16>, vector<2x8x8xf32> -> vector<2x8x8xf32>
    "tpu.trace_stop"() : () -> ()
    %135 = vector.extract_strided_slice %88 {offsets = [0, 0, 16], sizes = [2, 8, 8], strides = [1, 1, 1]} : vector<2x8x32xf32> to vector<2x8x8xf32>
    %136 = arith.truncf %135 : vector<2x8x8xf32> to vector<2x8x8xbf16>
    %137 = vector.extract_strided_slice %92 {offsets = [0, 0, 16], sizes = [2, 8, 8], strides = [1, 1, 1]} : vector<2x8x32xf32> to vector<2x8x8xf32>
    %138 = arith.truncf %137 : vector<2x8x8xf32> to vector<2x8x8xbf16>
    %139 = vector.extract_strided_slice %96 {offsets = [0, 0, 16], sizes = [2, 8, 8], strides = [1, 1, 1]} : vector<2x8x32xf32> to vector<2x8x8xf32>
    %140 = arith.truncf %139 : vector<2x8x8xf32> to vector<2x8x8xbf16>
    "tpu.trace_start"() <{level = 10 : i32, message = "bqe,bke->bqk"}> : () -> ()
    %cst_62 = arith.constant dense<0.000000e+00> : vector<2x8x8xf32>
    %141 = tpu.matmul %136, %138, %cst_62 {dimension_numbers = #tpu.dot_dimension_numbers<[2], [2], [1], [1], [0, 0, 0, 1, 1, 1], [0], [0]>} : vector<2x8x8xbf16>, vector<2x8x8xbf16>, vector<2x8x8xf32> -> vector<2x8x8xf32>
    "tpu.trace_stop"() : () -> ()
    %cst_63 = arith.constant dense<0xFF800000> : vector<2x8xf32>
    %142 = vector.multi_reduction <maximumf>, %141, %cst_63 [2] : vector<2x8x8xf32> to vector<2x8xf32>
    %143 = vector.shape_cast %142 : vector<2x8xf32> to vector<2x8x1xf32>
    %144 = vector.broadcast %143 : vector<2x8x1xf32> to vector<2x8x8xf32>
    %145 = arith.subf %141, %144 : vector<2x8x8xf32>
    %146 = math.exp %145 : vector<2x8x8xf32>
    %cst_64 = arith.constant dense<0.000000e+00> : vector<2x8xf32>
    %147 = vector.multi_reduction <add>, %146, %cst_64 [2] : vector<2x8x8xf32> to vector<2x8xf32>
    %148 = vector.shape_cast %147 : vector<2x8xf32> to vector<2x8x1xf32>
    %149 = tpu.reciprocal %148 {approx = true} : vector<2x8x1xf32> -> vector<2x8x1xf32>
    %150 = vector.broadcast %149 : vector<2x8x1xf32> to vector<2x8x8xf32>
    %151 = arith.mulf %146, %150 : vector<2x8x8xf32>
    %152 = arith.truncf %151 : vector<2x8x8xf32> to vector<2x8x8xbf16>
    "tpu.trace_start"() <{level = 10 : i32, message = "bqk,bke->bqe"}> : () -> ()
    %cst_65 = arith.constant dense<0.000000e+00> : vector<2x8x8xf32>
    %153 = tpu.matmul %152, %140, %cst_65 {dimension_numbers = #tpu.dot_dimension_numbers<[2], [1], [1], [2], [0, 0, 0, 1, 1, 2], [0], [0]>} : vector<2x8x8xbf16>, vector<2x8x8xbf16>, vector<2x8x8xf32> -> vector<2x8x8xf32>
    "tpu.trace_stop"() : () -> ()
    %154 = vector.extract_strided_slice %88 {offsets = [0, 0, 24], sizes = [2, 8, 8], strides = [1, 1, 1]} : vector<2x8x32xf32> to vector<2x8x8xf32>
    %155 = arith.truncf %154 : vector<2x8x8xf32> to vector<2x8x8xbf16>
    %156 = vector.extract_strided_slice %92 {offsets = [0, 0, 24], sizes = [2, 8, 8], strides = [1, 1, 1]} : vector<2x8x32xf32> to vector<2x8x8xf32>
    %157 = arith.truncf %156 : vector<2x8x8xf32> to vector<2x8x8xbf16>
    %158 = vector.extract_strided_slice %96 {offsets = [0, 0, 24], sizes = [2, 8, 8], strides = [1, 1, 1]} : vector<2x8x32xf32> to vector<2x8x8xf32>
    %159 = arith.truncf %158 : vector<2x8x8xf32> to vector<2x8x8xbf16>
    "tpu.trace_start"() <{level = 10 : i32, message = "bqe,bke->bqk"}> : () -> ()
    %cst_66 = arith.constant dense<0.000000e+00> : vector<2x8x8xf32>
    %160 = tpu.matmul %155, %157, %cst_66 {dimension_numbers = #tpu.dot_dimension_numbers<[2], [2], [1], [1], [0, 0, 0, 1, 1, 1], [0], [0]>} : vector<2x8x8xbf16>, vector<2x8x8xbf16>, vector<2x8x8xf32> -> vector<2x8x8xf32>
    "tpu.trace_stop"() : () -> ()
    %cst_67 = arith.constant dense<0xFF800000> : vector<2x8xf32>
    %161 = vector.multi_reduction <maximumf>, %160, %cst_67 [2] : vector<2x8x8xf32> to vector<2x8xf32>
    %162 = vector.shape_cast %161 : vector<2x8xf32> to vector<2x8x1xf32>
    %163 = vector.broadcast %162 : vector<2x8x1xf32> to vector<2x8x8xf32>
    %164 = arith.subf %160, %163 : vector<2x8x8xf32>
    %165 = math.exp %164 : vector<2x8x8xf32>
    %cst_68 = arith.constant dense<0.000000e+00> : vector<2x8xf32>
    %166 = vector.multi_reduction <add>, %165, %cst_68 [2] : vector<2x8x8xf32> to vector<2x8xf32>
    %167 = vector.shape_cast %166 : vector<2x8xf32> to vector<2x8x1xf32>
    %168 = tpu.reciprocal %167 {approx = true} : vector<2x8x1xf32> -> vector<2x8x1xf32>
    %169 = vector.broadcast %168 : vector<2x8x1xf32> to vector<2x8x8xf32>
    %170 = arith.mulf %165, %169 : vector<2x8x8xf32>
    %171 = arith.truncf %170 : vector<2x8x8xf32> to vector<2x8x8xbf16>
    "tpu.trace_start"() <{level = 10 : i32, message = "bqk,bke->bqe"}> : () -> ()
    %cst_69 = arith.constant dense<0.000000e+00> : vector<2x8x8xf32>
    %172 = tpu.matmul %171, %159, %cst_69 {dimension_numbers = #tpu.dot_dimension_numbers<[2], [1], [1], [2], [0, 0, 0, 1, 1, 2], [0], [0]>} : vector<2x8x8xbf16>, vector<2x8x8xbf16>, vector<2x8x8xf32> -> vector<2x8x8xf32>
    "tpu.trace_stop"() : () -> ()
    %173 = tpu.concatenate %115, %134, %153, %172 in 2 : vector<2x8x8xf32>, vector<2x8x8xf32>, vector<2x8x8xf32>, vector<2x8x8xf32> -> vector<2x8x32xf32>
    %174 = vector.shape_cast %173 : vector<2x8x32xf32> to vector<16x32xf32>
    %175 = arith.truncf %174 : vector<16x32xf32> to vector<16x32xbf16>
    %cst_70 = arith.constant dense<0.000000e+00> : vector<16x32xf32>
    %176 = tpu.matmul %175, %60, %cst_70 {dimension_numbers = #tpu.dot_dimension_numbers<[1], [0], [0], [1], [0, 0, 1, 1], [], []>} : vector<16x32xbf16>, vector<32x32xbf16>, vector<16x32xf32> -> vector<16x32xf32>
    %177 = vector.broadcast %61 : vector<1x32xf32> to vector<16x32xf32>
    %178 = arith.addf %176, %177 : vector<16x32xf32>
    %179 = arith.addf %51, %178 : vector<16x32xf32>
    %c0_71 = arith.constant 0 : index
    %c0_72 = arith.constant 0 : index
    %180 = vector.load %arg20[%c0_71, %c0_72] : memref<1x32xf32, #tpu.memory_space<vmem>>, vector<1x32xf32>
    %c0_73 = arith.constant 0 : index
    %c0_74 = arith.constant 0 : index
    %181 = vector.load %arg21[%c0_73, %c0_74] : memref<1x32xf32, #tpu.memory_space<vmem>>, vector<1x32xf32>
    %c0_75 = arith.constant 0 : index
    %c0_76 = arith.constant 0 : index
    %182 = vector.load %arg22[%c0_75, %c0_76] : memref<32x64xbf16, #tpu.memory_space<vmem>>, vector<32x64xbf16>
    %c0_77 = arith.constant 0 : index
    %c0_78 = arith.constant 0 : index
    %183 = vector.load %arg23[%c0_77, %c0_78] : memref<1x64xf32, #tpu.memory_space<vmem>>, vector<1x64xf32>
    %c0_79 = arith.constant 0 : index
    %c0_80 = arith.constant 0 : index
    %184 = vector.load %arg24[%c0_79, %c0_80] : memref<32x64xbf16, #tpu.memory_space<vmem>>, vector<32x64xbf16>
    %c0_81 = arith.constant 0 : index
    %c0_82 = arith.constant 0 : index
    %185 = vector.load %arg25[%c0_81, %c0_82] : memref<1x64xf32, #tpu.memory_space<vmem>>, vector<1x64xf32>
    %c0_83 = arith.constant 0 : index
    %c0_84 = arith.constant 0 : index
    %186 = vector.load %arg27[%c0_83, %c0_84] : memref<1x64xf32, #tpu.memory_space<vmem>>, vector<1x64xf32>
    %c0_85 = arith.constant 0 : index
    %c0_86 = arith.constant 0 : index
    %187 = vector.load %arg28[%c0_85, %c0_86] : memref<1x64xf32, #tpu.memory_space<vmem>>, vector<1x64xf32>
    %c0_87 = arith.constant 0 : index
    %c0_88 = arith.constant 0 : index
    %188 = vector.load %arg29[%c0_87, %c0_88] : memref<1x64xf32, #tpu.memory_space<vmem>>, vector<1x64xf32>
    %c0_89 = arith.constant 0 : index
    %c0_90 = arith.constant 0 : index
    %189 = vector.load %arg30[%c0_89, %c0_90] : memref<64x32xbf16, #tpu.memory_space<vmem>>, vector<64x32xbf16>
    %c0_91 = arith.constant 0 : index
    %c0_92 = arith.constant 0 : index
    %190 = vector.load %arg31[%c0_91, %c0_92] : memref<1x32xf32, #tpu.memory_space<vmem>>, vector<1x32xf32>
    %cst_93 = arith.constant dense<0.000000e+00> : vector<16xf32>
    %191 = vector.multi_reduction <add>, %179, %cst_93 [1] : vector<16x32xf32> to vector<16xf32>
    %192 = vector.shape_cast %191 : vector<16xf32> to vector<16x1xf32>
    %cst_94 = arith.constant 3.200000e+01 : f32
    %193 = vector.broadcast %cst_94 : f32 to vector<16x1xf32>
    %194 = arith.divf %192, %193 : vector<16x1xf32>
    %195 = vector.broadcast %194 : vector<16x1xf32> to vector<16x32xf32>
    %196 = arith.subf %179, %195 : vector<16x32xf32>
    %197 = arith.mulf %196, %196 : vector<16x32xf32>
    %cst_95 = arith.constant dense<0.000000e+00> : vector<16xf32>
    %198 = vector.multi_reduction <add>, %197, %cst_95 [1] : vector<16x32xf32> to vector<16xf32>
    %199 = vector.shape_cast %198 : vector<16xf32> to vector<16x1xf32>
    %cst_96 = arith.constant 3.200000e+01 : f32
    %200 = vector.broadcast %cst_96 : f32 to vector<16x1xf32>
    %201 = arith.divf %199, %200 : vector<16x1xf32>
    %202 = vector.broadcast %194 : vector<16x1xf32> to vector<16x32xf32>
    %203 = arith.subf %179, %202 : vector<16x32xf32>
    %cst_97 = arith.constant 9.99999974E-6 : f32
    %204 = vector.broadcast %cst_97 : f32 to vector<16x1xf32>
    %205 = arith.addf %201, %204 : vector<16x1xf32>
    %206 = math.rsqrt %205 : vector<16x1xf32>
    %207 = vector.broadcast %206 : vector<16x1xf32> to vector<16x32xf32>
    %208 = arith.mulf %203, %207 : vector<16x32xf32>
    %209 = vector.broadcast %180 : vector<1x32xf32> to vector<16x32xf32>
    %210 = arith.mulf %208, %209 : vector<16x32xf32>
    %211 = vector.broadcast %181 : vector<1x32xf32> to vector<16x32xf32>
    %212 = arith.addf %210, %211 : vector<16x32xf32>
    %213 = arith.truncf %212 : vector<16x32xf32> to vector<16x32xbf16>
    %cst_98 = arith.constant dense<0.000000e+00> : vector<16x64xf32>
    %214 = tpu.matmul %213, %182, %cst_98 {dimension_numbers = #tpu.dot_dimension_numbers<[1], [0], [0], [1], [0, 0, 1, 1], [], []>} : vector<16x32xbf16>, vector<32x64xbf16>, vector<16x64xf32> -> vector<16x64xf32>
    %215 = vector.broadcast %183 : vector<1x64xf32> to vector<16x64xf32>
    %216 = arith.addf %214, %215 : vector<16x64xf32>
    %cst_99 = arith.constant dense<0.000000e+00> : vector<16x64xf32>
    %217 = tpu.matmul %213, %184, %cst_99 {dimension_numbers = #tpu.dot_dimension_numbers<[1], [0], [0], [1], [0, 0, 1, 1], [], []>} : vector<16x32xbf16>, vector<32x64xbf16>, vector<16x64xf32> -> vector<16x64xf32>
    %218 = vector.broadcast %185 : vector<1x64xf32> to vector<16x64xf32>
    %219 = arith.addf %217, %218 : vector<16x64xf32>
    %220 = arith.negf %219 : vector<16x64xf32>
    %221 = math.exp %220 : vector<16x64xf32>
    %cst_100 = arith.constant 1.000000e+00 : f32
    %222 = vector.broadcast %cst_100 : f32 to vector<16x64xf32>
    %223 = arith.addf %222, %221 : vector<16x64xf32>
    %224 = arith.divf %222, %223 : vector<16x64xf32>
    %225 = arith.mulf %216, %224 : vector<16x64xf32>
    %cst_101 = arith.constant 0.000000e+00 : f32
    %226 = vector.broadcast %cst_101 : f32 to vector<2x7x64xf32>
    %c0_102 = arith.constant 0 : index
    %c0_103 = arith.constant 0 : index
    %c0_104 = arith.constant 0 : index
    %227 = vector.load %arg43[%c0_102, %c0_103, %c0_104] : memref<2x22x64xf32, #tpu.memory_space<vmem>>, vector<2x7x64xf32>
    tpu.vector_store %arg43[%c0_102, %c0_103, %c0_104], %226 {strides = array<i32>} : memref<2x22x64xf32, #tpu.memory_space<vmem>>, vector<2x7x64xf32>,
    %cst_105 = arith.constant 0.000000e+00 : f32
    %228 = vector.broadcast %cst_105 : f32 to vector<2x7x64xf32>
    %c0_106 = arith.constant 0 : index
    %c15 = arith.constant 15 : index
    %c0_107 = arith.constant 0 : index
    %229 = vector.load %arg43[%c0_106, %c15, %c0_107] : memref<2x22x64xf32, #tpu.memory_space<vmem>>, vector<2x7x64xf32>
    tpu.vector_store %arg43[%c0_106, %c15, %c0_107], %228 {strides = array<i32>} : memref<2x22x64xf32, #tpu.memory_space<vmem>>, vector<2x7x64xf32>,
    %230 = vector.shape_cast %225 : vector<16x64xf32> to vector<2x8x64xf32>
    %c0_108 = arith.constant 0 : index
    %c7 = arith.constant 7 : index
    %c0_109 = arith.constant 0 : index
    %231 = vector.load %arg43[%c0_108, %c7, %c0_109] : memref<2x22x64xf32, #tpu.memory_space<vmem>>, vector<2x8x64xf32>
    tpu.vector_store %arg43[%c0_108, %c7, %c0_109], %230 {strides = array<i32>} : memref<2x22x64xf32, #tpu.memory_space<vmem>>, vector<2x8x64xf32>,
    %cst_110 = arith.constant 0.000000e+00 : f32
    %232 = vector.broadcast %cst_110 : f32 to vector<16x64xf32>
    %cst_111 = arith.constant 0.000000e+00 : f32
    %233 = vector.broadcast %cst_111 : f32 to vector<16x64xf32>
    %c0_112 = arith.constant 0 : index
    %c0_113 = arith.constant 0 : index
    %c0_114 = arith.constant 0 : index
    %234 = vector.load %arg43[%c0_112, %c0_113, %c0_114] : memref<2x22x64xf32, #tpu.memory_space<vmem>>, vector<2x8x64xf32>
    %235 = vector.shape_cast %234 : vector<2x8x64xf32> to vector<16x64xf32>
    %236 = arith.truncf %235 : vector<16x64xf32> to vector<16x64xbf16>
    %c0_115 = arith.constant 0 : index
    %c0_116 = arith.constant 0 : index
    %c0_117 = arith.constant 0 : index
    %237 = vector.load %arg26[%c0_115, %c0_116, %c0_117] : memref<15x64x64xbf16, #tpu.memory_space<vmem>>, vector<1x64x64xbf16>
    %238 = vector.shape_cast %237 : vector<1x64x64xbf16> to vector<64x64xbf16>
    %cst_118 = arith.constant dense<0.000000e+00> : vector<16x64xf32>
    %239 = tpu.matmul %236, %238, %cst_118 {dimension_numbers = #tpu.dot_dimension_numbers<[1], [0], [0], [1], [0, 0, 1, 1], [], []>} : vector<16x64xbf16>, vector<64x64xbf16>, vector<16x64xf32> -> vector<16x64xf32>
    %240 = arith.addf %232, %239 : vector<16x64xf32>
    %c0_119 = arith.constant 0 : index
    %c1 = arith.constant 1 : index
    %c0_120 = arith.constant 0 : index
    %241 = vector.load %arg43[%c0_119, %c1, %c0_120] : memref<2x22x64xf32, #tpu.memory_space<vmem>>, vector<2x8x64xf32>
    %242 = vector.shape_cast %241 : vector<2x8x64xf32> to vector<16x64xf32>
    %243 = arith.truncf %242 : vector<16x64xf32> to vector<16x64xbf16>
    %c1_121 = arith.constant 1 : index
    %c0_122 = arith.constant 0 : index
    %c0_123 = arith.constant 0 : index
    %244 = vector.load %arg26[%c1_121, %c0_122, %c0_123] : memref<15x64x64xbf16, #tpu.memory_space<vmem>>, vector<1x64x64xbf16>
    %245 = vector.shape_cast %244 : vector<1x64x64xbf16> to vector<64x64xbf16>
    %cst_124 = arith.constant dense<0.000000e+00> : vector<16x64xf32>
    %246 = tpu.matmul %243, %245, %cst_124 {dimension_numbers = #tpu.dot_dimension_numbers<[1], [0], [0], [1], [0, 0, 1, 1], [], []>} : vector<16x64xbf16>, vector<64x64xbf16>, vector<16x64xf32> -> vector<16x64xf32>
    %247 = arith.addf %233, %246 : vector<16x64xf32>
    %c0_125 = arith.constant 0 : index
    %c2 = arith.constant 2 : index
    %c0_126 = arith.constant 0 : index
    %248 = vector.load %arg43[%c0_125, %c2, %c0_126] : memref<2x22x64xf32, #tpu.memory_space<vmem>>, vector<2x8x64xf32>
    %249 = vector.shape_cast %248 : vector<2x8x64xf32> to vector<16x64xf32>
    %250 = arith.truncf %249 : vector<16x64xf32> to vector<16x64xbf16>
    %c2_127 = arith.constant 2 : index
    %c0_128 = arith.constant 0 : index
    %c0_129 = arith.constant 0 : index
    %251 = vector.load %arg26[%c2_127, %c0_128, %c0_129] : memref<15x64x64xbf16, #tpu.memory_space<vmem>>, vector<1x64x64xbf16>
    %252 = vector.shape_cast %251 : vector<1x64x64xbf16> to vector<64x64xbf16>
    %cst_130 = arith.constant dense<0.000000e+00> : vector<16x64xf32>
    %253 = tpu.matmul %250, %252, %cst_130 {dimension_numbers = #tpu.dot_dimension_numbers<[1], [0], [0], [1], [0, 0, 1, 1], [], []>} : vector<16x64xbf16>, vector<64x64xbf16>, vector<16x64xf32> -> vector<16x64xf32>
    %254 = arith.addf %240, %253 : vector<16x64xf32>
    %c0_131 = arith.constant 0 : index
    %c3 = arith.constant 3 : index
    %c0_132 = arith.constant 0 : index
    %255 = vector.load %arg43[%c0_131, %c3, %c0_132] : memref<2x22x64xf32, #tpu.memory_space<vmem>>, vector<2x8x64xf32>
    %256 = vector.shape_cast %255 : vector<2x8x64xf32> to vector<16x64xf32>
    %257 = arith.truncf %256 : vector<16x64xf32> to vector<16x64xbf16>
    %c3_133 = arith.constant 3 : index
    %c0_134 = arith.constant 0 : index
    %c0_135 = arith.constant 0 : index
    %258 = vector.load %arg26[%c3_133, %c0_134, %c0_135] : memref<15x64x64xbf16, #tpu.memory_space<vmem>>, vector<1x64x64xbf16>
    %259 = vector.shape_cast %258 : vector<1x64x64xbf16> to vector<64x64xbf16>
    %cst_136 = arith.constant dense<0.000000e+00> : vector<16x64xf32>
    %260 = tpu.matmul %257, %259, %cst_136 {dimension_numbers = #tpu.dot_dimension_numbers<[1], [0], [0], [1], [0, 0, 1, 1], [], []>} : vector<16x64xbf16>, vector<64x64xbf16>, vector<16x64xf32> -> vector<16x64xf32>
    %261 = arith.addf %247, %260 : vector<16x64xf32>
    %c0_137 = arith.constant 0 : index
    %c4 = arith.constant 4 : index
    %c0_138 = arith.constant 0 : index
    %262 = vector.load %arg43[%c0_137, %c4, %c0_138] : memref<2x22x64xf32, #tpu.memory_space<vmem>>, vector<2x8x64xf32>
    %263 = vector.shape_cast %262 : vector<2x8x64xf32> to vector<16x64xf32>
    %264 = arith.truncf %263 : vector<16x64xf32> to vector<16x64xbf16>
    %c4_139 = arith.constant 4 : index
    %c0_140 = arith.constant 0 : index
    %c0_141 = arith.constant 0 : index
    %265 = vector.load %arg26[%c4_139, %c0_140, %c0_141] : memref<15x64x64xbf16, #tpu.memory_space<vmem>>, vector<1x64x64xbf16>
    %266 = vector.shape_cast %265 : vector<1x64x64xbf16> to vector<64x64xbf16>
    %cst_142 = arith.constant dense<0.000000e+00> : vector<16x64xf32>
    %267 = tpu.matmul %264, %266, %cst_142 {dimension_numbers = #tpu.dot_dimension_numbers<[1], [0], [0], [1], [0, 0, 1, 1], [], []>} : vector<16x64xbf16>, vector<64x64xbf16>, vector<16x64xf32> -> vector<16x64xf32>
    %268 = arith.addf %254, %267 : vector<16x64xf32>
    %c0_143 = arith.constant 0 : index
    %c5 = arith.constant 5 : index
    %c0_144 = arith.constant 0 : index
    %269 = vector.load %arg43[%c0_143, %c5, %c0_144] : memref<2x22x64xf32, #tpu.memory_space<vmem>>, vector<2x8x64xf32>
    %270 = vector.shape_cast %269 : vector<2x8x64xf32> to vector<16x64xf32>
    %271 = arith.truncf %270 : vector<16x64xf32> to vector<16x64xbf16>
    %c5_145 = arith.constant 5 : index
    %c0_146 = arith.constant 0 : index
    %c0_147 = arith.constant 0 : index
    %272 = vector.load %arg26[%c5_145, %c0_146, %c0_147] : memref<15x64x64xbf16, #tpu.memory_space<vmem>>, vector<1x64x64xbf16>
    %273 = vector.shape_cast %272 : vector<1x64x64xbf16> to vector<64x64xbf16>
    %cst_148 = arith.constant dense<0.000000e+00> : vector<16x64xf32>
    %274 = tpu.matmul %271, %273, %cst_148 {dimension_numbers = #tpu.dot_dimension_numbers<[1], [0], [0], [1], [0, 0, 1, 1], [], []>} : vector<16x64xbf16>, vector<64x64xbf16>, vector<16x64xf32> -> vector<16x64xf32>
    %275 = arith.addf %261, %274 : vector<16x64xf32>
    %c0_149 = arith.constant 0 : index
    %c6 = arith.constant 6 : index
    %c0_150 = arith.constant 0 : index
    %276 = vector.load %arg43[%c0_149, %c6, %c0_150] : memref<2x22x64xf32, #tpu.memory_space<vmem>>, vector<2x8x64xf32>
    %277 = vector.shape_cast %276 : vector<2x8x64xf32> to vector<16x64xf32>
    %278 = arith.truncf %277 : vector<16x64xf32> to vector<16x64xbf16>
    %c6_151 = arith.constant 6 : index
    %c0_152 = arith.constant 0 : index
    %c0_153 = arith.constant 0 : index
    %279 = vector.load %arg26[%c6_151, %c0_152, %c0_153] : memref<15x64x64xbf16, #tpu.memory_space<vmem>>, vector<1x64x64xbf16>
    %280 = vector.shape_cast %279 : vector<1x64x64xbf16> to vector<64x64xbf16>
    %cst_154 = arith.constant dense<0.000000e+00> : vector<16x64xf32>
    %281 = tpu.matmul %278, %280, %cst_154 {dimension_numbers = #tpu.dot_dimension_numbers<[1], [0], [0], [1], [0, 0, 1, 1], [], []>} : vector<16x64xbf16>, vector<64x64xbf16>, vector<16x64xf32> -> vector<16x64xf32>
    %282 = arith.addf %268, %281 : vector<16x64xf32>
    %c0_155 = arith.constant 0 : index
    %c7_156 = arith.constant 7 : index
    %c0_157 = arith.constant 0 : index
    %283 = vector.load %arg43[%c0_155, %c7_156, %c0_157] : memref<2x22x64xf32, #tpu.memory_space<vmem>>, vector<2x8x64xf32>
    %284 = vector.shape_cast %283 : vector<2x8x64xf32> to vector<16x64xf32>
    %285 = arith.truncf %284 : vector<16x64xf32> to vector<16x64xbf16>
    %c7_158 = arith.constant 7 : index
    %c0_159 = arith.constant 0 : index
    %c0_160 = arith.constant 0 : index
    %286 = vector.load %arg26[%c7_158, %c0_159, %c0_160] : memref<15x64x64xbf16, #tpu.memory_space<vmem>>, vector<1x64x64xbf16>
    %287 = vector.shape_cast %286 : vector<1x64x64xbf16> to vector<64x64xbf16>
    %cst_161 = arith.constant dense<0.000000e+00> : vector<16x64xf32>
    %288 = tpu.matmul %285, %287, %cst_161 {dimension_numbers = #tpu.dot_dimension_numbers<[1], [0], [0], [1], [0, 0, 1, 1], [], []>} : vector<16x64xbf16>, vector<64x64xbf16>, vector<16x64xf32> -> vector<16x64xf32>
    %289 = arith.addf %275, %288 : vector<16x64xf32>
    %c0_162 = arith.constant 0 : index
    %c8 = arith.constant 8 : index
    %c0_163 = arith.constant 0 : index
    %290 = vector.load %arg43[%c0_162, %c8, %c0_163] : memref<2x22x64xf32, #tpu.memory_space<vmem>>, vector<2x8x64xf32>
    %291 = vector.shape_cast %290 : vector<2x8x64xf32> to vector<16x64xf32>
    %292 = arith.truncf %291 : vector<16x64xf32> to vector<16x64xbf16>
    %c8_164 = arith.constant 8 : index
    %c0_165 = arith.constant 0 : index
    %c0_166 = arith.constant 0 : index
    %293 = vector.load %arg26[%c8_164, %c0_165, %c0_166] : memref<15x64x64xbf16, #tpu.memory_space<vmem>>, vector<1x64x64xbf16>
    %294 = vector.shape_cast %293 : vector<1x64x64xbf16> to vector<64x64xbf16>
    %cst_167 = arith.constant dense<0.000000e+00> : vector<16x64xf32>
    %295 = tpu.matmul %292, %294, %cst_167 {dimension_numbers = #tpu.dot_dimension_numbers<[1], [0], [0], [1], [0, 0, 1, 1], [], []>} : vector<16x64xbf16>, vector<64x64xbf16>, vector<16x64xf32> -> vector<16x64xf32>
    %296 = arith.addf %282, %295 : vector<16x64xf32>
    %c0_168 = arith.constant 0 : index
    %c9 = arith.constant 9 : index
    %c0_169 = arith.constant 0 : index
    %297 = vector.load %arg43[%c0_168, %c9, %c0_169] : memref<2x22x64xf32, #tpu.memory_space<vmem>>, vector<2x8x64xf32>
    %298 = vector.shape_cast %297 : vector<2x8x64xf32> to vector<16x64xf32>
    %299 = arith.truncf %298 : vector<16x64xf32> to vector<16x64xbf16>
    %c9_170 = arith.constant 9 : index
    %c0_171 = arith.constant 0 : index
    %c0_172 = arith.constant 0 : index
    %300 = vector.load %arg26[%c9_170, %c0_171, %c0_172] : memref<15x64x64xbf16, #tpu.memory_space<vmem>>, vector<1x64x64xbf16>
    %301 = vector.shape_cast %300 : vector<1x64x64xbf16> to vector<64x64xbf16>
    %cst_173 = arith.constant dense<0.000000e+00> : vector<16x64xf32>
    %302 = tpu.matmul %299, %301, %cst_173 {dimension_numbers = #tpu.dot_dimension_numbers<[1], [0], [0], [1], [0, 0, 1, 1], [], []>} : vector<16x64xbf16>, vector<64x64xbf16>, vector<16x64xf32> -> vector<16x64xf32>
    %303 = arith.addf %289, %302 : vector<16x64xf32>
    %c0_174 = arith.constant 0 : index
    %c10 = arith.constant 10 : index
    %c0_175 = arith.constant 0 : index
    %304 = vector.load %arg43[%c0_174, %c10, %c0_175] : memref<2x22x64xf32, #tpu.memory_space<vmem>>, vector<2x8x64xf32>
    %305 = vector.shape_cast %304 : vector<2x8x64xf32> to vector<16x64xf32>
    %306 = arith.truncf %305 : vector<16x64xf32> to vector<16x64xbf16>
    %c10_176 = arith.constant 10 : index
    %c0_177 = arith.constant 0 : index
    %c0_178 = arith.constant 0 : index
    %307 = vector.load %arg26[%c10_176, %c0_177, %c0_178] : memref<15x64x64xbf16, #tpu.memory_space<vmem>>, vector<1x64x64xbf16>
    %308 = vector.shape_cast %307 : vector<1x64x64xbf16> to vector<64x64xbf16>
    %cst_179 = arith.constant dense<0.000000e+00> : vector<16x64xf32>
    %309 = tpu.matmul %306, %308, %cst_179 {dimension_numbers = #tpu.dot_dimension_numbers<[1], [0], [0], [1], [0, 0, 1, 1], [], []>} : vector<16x64xbf16>, vector<64x64xbf16>, vector<16x64xf32> -> vector<16x64xf32>
    %310 = arith.addf %296, %309 : vector<16x64xf32>
    %c0_180 = arith.constant 0 : index
    %c11 = arith.constant 11 : index
    %c0_181 = arith.constant 0 : index
    %311 = vector.load %arg43[%c0_180, %c11, %c0_181] : memref<2x22x64xf32, #tpu.memory_space<vmem>>, vector<2x8x64xf32>
    %312 = vector.shape_cast %311 : vector<2x8x64xf32> to vector<16x64xf32>
    %313 = arith.truncf %312 : vector<16x64xf32> to vector<16x64xbf16>
    %c11_182 = arith.constant 11 : index
    %c0_183 = arith.constant 0 : index
    %c0_184 = arith.constant 0 : index
    %314 = vector.load %arg26[%c11_182, %c0_183, %c0_184] : memref<15x64x64xbf16, #tpu.memory_space<vmem>>, vector<1x64x64xbf16>
    %315 = vector.shape_cast %314 : vector<1x64x64xbf16> to vector<64x64xbf16>
    %cst_185 = arith.constant dense<0.000000e+00> : vector<16x64xf32>
    %316 = tpu.matmul %313, %315, %cst_185 {dimension_numbers = #tpu.dot_dimension_numbers<[1], [0], [0], [1], [0, 0, 1, 1], [], []>} : vector<16x64xbf16>, vector<64x64xbf16>, vector<16x64xf32> -> vector<16x64xf32>
    %317 = arith.addf %303, %316 : vector<16x64xf32>
    %c0_186 = arith.constant 0 : index
    %c12 = arith.constant 12 : index
    %c0_187 = arith.constant 0 : index
    %318 = vector.load %arg43[%c0_186, %c12, %c0_187] : memref<2x22x64xf32, #tpu.memory_space<vmem>>, vector<2x8x64xf32>
    %319 = vector.shape_cast %318 : vector<2x8x64xf32> to vector<16x64xf32>
    %320 = arith.truncf %319 : vector<16x64xf32> to vector<16x64xbf16>
    %c12_188 = arith.constant 12 : index
    %c0_189 = arith.constant 0 : index
    %c0_190 = arith.constant 0 : index
    %321 = vector.load %arg26[%c12_188, %c0_189, %c0_190] : memref<15x64x64xbf16, #tpu.memory_space<vmem>>, vector<1x64x64xbf16>
    %322 = vector.shape_cast %321 : vector<1x64x64xbf16> to vector<64x64xbf16>
    %cst_191 = arith.constant dense<0.000000e+00> : vector<16x64xf32>
    %323 = tpu.matmul %320, %322, %cst_191 {dimension_numbers = #tpu.dot_dimension_numbers<[1], [0], [0], [1], [0, 0, 1, 1], [], []>} : vector<16x64xbf16>, vector<64x64xbf16>, vector<16x64xf32> -> vector<16x64xf32>
    %324 = arith.addf %310, %323 : vector<16x64xf32>
    %c0_192 = arith.constant 0 : index
    %c13 = arith.constant 13 : index
    %c0_193 = arith.constant 0 : index
    %325 = vector.load %arg43[%c0_192, %c13, %c0_193] : memref<2x22x64xf32, #tpu.memory_space<vmem>>, vector<2x8x64xf32>
    %326 = vector.shape_cast %325 : vector<2x8x64xf32> to vector<16x64xf32>
    %327 = arith.truncf %326 : vector<16x64xf32> to vector<16x64xbf16>
    %c13_194 = arith.constant 13 : index
    %c0_195 = arith.constant 0 : index
    %c0_196 = arith.constant 0 : index
    %328 = vector.load %arg26[%c13_194, %c0_195, %c0_196] : memref<15x64x64xbf16, #tpu.memory_space<vmem>>, vector<1x64x64xbf16>
    %329 = vector.shape_cast %328 : vector<1x64x64xbf16> to vector<64x64xbf16>
    %cst_197 = arith.constant dense<0.000000e+00> : vector<16x64xf32>
    %330 = tpu.matmul %327, %329, %cst_197 {dimension_numbers = #tpu.dot_dimension_numbers<[1], [0], [0], [1], [0, 0, 1, 1], [], []>} : vector<16x64xbf16>, vector<64x64xbf16>, vector<16x64xf32> -> vector<16x64xf32>
    %331 = arith.addf %317, %330 : vector<16x64xf32>
    %c0_198 = arith.constant 0 : index
    %c14 = arith.constant 14 : index
    %c0_199 = arith.constant 0 : index
    %332 = vector.load %arg43[%c0_198, %c14, %c0_199] : memref<2x22x64xf32, #tpu.memory_space<vmem>>, vector<2x8x64xf32>
    %333 = vector.shape_cast %332 : vector<2x8x64xf32> to vector<16x64xf32>
    %334 = arith.truncf %333 : vector<16x64xf32> to vector<16x64xbf16>
    %c14_200 = arith.constant 14 : index
    %c0_201 = arith.constant 0 : index
    %c0_202 = arith.constant 0 : index
    %335 = vector.load %arg26[%c14_200, %c0_201, %c0_202] : memref<15x64x64xbf16, #tpu.memory_space<vmem>>, vector<1x64x64xbf16>
    %336 = vector.shape_cast %335 : vector<1x64x64xbf16> to vector<64x64xbf16>
    %cst_203 = arith.constant dense<0.000000e+00> : vector<16x64xf32>
    %337 = tpu.matmul %334, %336, %cst_203 {dimension_numbers = #tpu.dot_dimension_numbers<[1], [0], [0], [1], [0, 0, 1, 1], [], []>} : vector<16x64xbf16>, vector<64x64xbf16>, vector<16x64xf32> -> vector<16x64xf32>
    %338 = arith.addf %324, %337 : vector<16x64xf32>
    %339 = arith.addf %338, %331 : vector<16x64xf32>
    %340 = vector.broadcast %186 : vector<1x64xf32> to vector<16x64xf32>
    %341 = arith.addf %339, %340 : vector<16x64xf32>
    %342 = vector.broadcast %187 : vector<1x64xf32> to vector<16x64xf32>
    %343 = arith.mulf %341, %342 : vector<16x64xf32>
    %344 = vector.broadcast %188 : vector<1x64xf32> to vector<16x64xf32>
    %345 = arith.addf %343, %344 : vector<16x64xf32>
    %346 = arith.negf %345 : vector<16x64xf32>
    %347 = math.exp %346 : vector<16x64xf32>
    %cst_204 = arith.constant 1.000000e+00 : f32
    %348 = vector.broadcast %cst_204 : f32 to vector<16x64xf32>
    %349 = arith.addf %348, %347 : vector<16x64xf32>
    %350 = arith.divf %348, %349 : vector<16x64xf32>
    %351 = arith.mulf %345, %350 : vector<16x64xf32>
    %352 = arith.truncf %351 : vector<16x64xf32> to vector<16x64xbf16>
    %cst_205 = arith.constant dense<0.000000e+00> : vector<16x32xf32>
    %353 = tpu.matmul %352, %189, %cst_205 {dimension_numbers = #tpu.dot_dimension_numbers<[1], [0], [0], [1], [0, 0, 1, 1], [], []>} : vector<16x64xbf16>, vector<64x32xbf16>, vector<16x32xf32> -> vector<16x32xf32>
    %354 = vector.broadcast %190 : vector<1x32xf32> to vector<16x32xf32>
    %355 = arith.addf %353, %354 : vector<16x32xf32>
    %356 = arith.addf %179, %355 : vector<16x32xf32>
    %c0_206 = arith.constant 0 : index
    %c0_207 = arith.constant 0 : index
    %357 = vector.load %arg32[%c0_206, %c0_207] : memref<1x32xf32, #tpu.memory_space<vmem>>, vector<1x32xf32>
    %c0_208 = arith.constant 0 : index
    %c0_209 = arith.constant 0 : index
    %358 = vector.load %arg33[%c0_208, %c0_209] : memref<1x32xf32, #tpu.memory_space<vmem>>, vector<1x32xf32>
    %c0_210 = arith.constant 0 : index
    %c0_211 = arith.constant 0 : index
    %359 = vector.load %arg34[%c0_210, %c0_211] : memref<32x128xbf16, #tpu.memory_space<vmem>>, vector<32x128xbf16>
    %c0_212 = arith.constant 0 : index
    %c0_213 = arith.constant 0 : index
    %360 = vector.load %arg35[%c0_212, %c0_213] : memref<1x128xf32, #tpu.memory_space<vmem>>, vector<1x128xf32>
    %c0_214 = arith.constant 0 : index
    %c0_215 = arith.constant 0 : index
    %361 = vector.load %arg36[%c0_214, %c0_215] : memref<32x128xbf16, #tpu.memory_space<vmem>>, vector<32x128xbf16>
    %c0_216 = arith.constant 0 : index
    %c0_217 = arith.constant 0 : index
    %362 = vector.load %arg37[%c0_216, %c0_217] : memref<1x128xf32, #tpu.memory_space<vmem>>, vector<1x128xf32>
    %c0_218 = arith.constant 0 : index
    %c0_219 = arith.constant 0 : index
    %363 = vector.load %arg38[%c0_218, %c0_219] : memref<128x32xbf16, #tpu.memory_space<vmem>>, vector<128x32xbf16>
    %c0_220 = arith.constant 0 : index
    %c0_221 = arith.constant 0 : index
    %364 = vector.load %arg39[%c0_220, %c0_221] : memref<1x32xf32, #tpu.memory_space<vmem>>, vector<1x32xf32>
    %cst_222 = arith.constant dense<0.000000e+00> : vector<16xf32>
    %365 = vector.multi_reduction <add>, %356, %cst_222 [1] : vector<16x32xf32> to vector<16xf32>
    %366 = vector.shape_cast %365 : vector<16xf32> to vector<16x1xf32>
    %cst_223 = arith.constant 3.200000e+01 : f32
    %367 = vector.broadcast %cst_223 : f32 to vector<16x1xf32>
    %368 = arith.divf %366, %367 : vector<16x1xf32>
    %369 = vector.broadcast %368 : vector<16x1xf32> to vector<16x32xf32>
    %370 = arith.subf %356, %369 : vector<16x32xf32>
    %371 = arith.mulf %370, %370 : vector<16x32xf32>
    %cst_224 = arith.constant dense<0.000000e+00> : vector<16xf32>
    %372 = vector.multi_reduction <add>, %371, %cst_224 [1] : vector<16x32xf32> to vector<16xf32>
    %373 = vector.shape_cast %372 : vector<16xf32> to vector<16x1xf32>
    %cst_225 = arith.constant 3.200000e+01 : f32
    %374 = vector.broadcast %cst_225 : f32 to vector<16x1xf32>
    %375 = arith.divf %373, %374 : vector<16x1xf32>
    %376 = vector.broadcast %368 : vector<16x1xf32> to vector<16x32xf32>
    %377 = arith.subf %356, %376 : vector<16x32xf32>
    %cst_226 = arith.constant 9.99999974E-6 : f32
    %378 = vector.broadcast %cst_226 : f32 to vector<16x1xf32>
    %379 = arith.addf %375, %378 : vector<16x1xf32>
    %380 = math.rsqrt %379 : vector<16x1xf32>
    %381 = vector.broadcast %380 : vector<16x1xf32> to vector<16x32xf32>
    %382 = arith.mulf %377, %381 : vector<16x32xf32>
    %383 = vector.broadcast %357 : vector<1x32xf32> to vector<16x32xf32>
    %384 = arith.mulf %382, %383 : vector<16x32xf32>
    %385 = vector.broadcast %358 : vector<1x32xf32> to vector<16x32xf32>
    %386 = arith.addf %384, %385 : vector<16x32xf32>
    %387 = arith.truncf %386 : vector<16x32xf32> to vector<16x32xbf16>
    %cst_227 = arith.constant dense<0.000000e+00> : vector<16x128xf32>
    %388 = tpu.matmul %387, %359, %cst_227 {dimension_numbers = #tpu.dot_dimension_numbers<[1], [0], [0], [1], [0, 0, 1, 1], [], []>} : vector<16x32xbf16>, vector<32x128xbf16>, vector<16x128xf32> -> vector<16x128xf32>
    %389 = vector.broadcast %360 : vector<1x128xf32> to vector<16x128xf32>
    %390 = arith.addf %388, %389 : vector<16x128xf32>
    %391 = arith.negf %390 : vector<16x128xf32>
    %392 = math.exp %391 : vector<16x128xf32>
    %cst_228 = arith.constant 1.000000e+00 : f32
    %393 = vector.broadcast %cst_228 : f32 to vector<16x128xf32>
    %394 = arith.addf %393, %392 : vector<16x128xf32>
    %395 = arith.divf %393, %394 : vector<16x128xf32>
    %396 = arith.mulf %390, %395 : vector<16x128xf32>
    %cst_229 = arith.constant dense<0.000000e+00> : vector<16x128xf32>
    %397 = tpu.matmul %387, %361, %cst_229 {dimension_numbers = #tpu.dot_dimension_numbers<[1], [0], [0], [1], [0, 0, 1, 1], [], []>} : vector<16x32xbf16>, vector<32x128xbf16>, vector<16x128xf32> -> vector<16x128xf32>
    %398 = vector.broadcast %362 : vector<1x128xf32> to vector<16x128xf32>
    %399 = arith.addf %397, %398 : vector<16x128xf32>
    %400 = arith.mulf %396, %399 : vector<16x128xf32>
    %401 = arith.truncf %400 : vector<16x128xf32> to vector<16x128xbf16>
    %cst_230 = arith.constant dense<0.000000e+00> : vector<16x32xf32>
    %402 = tpu.matmul %401, %363, %cst_230 {dimension_numbers = #tpu.dot_dimension_numbers<[1], [0], [0], [1], [0, 0, 1, 1], [], []>} : vector<16x128xbf16>, vector<128x32xbf16>, vector<16x32xf32> -> vector<16x32xf32>
    %403 = vector.broadcast %364 : vector<1x32xf32> to vector<16x32xf32>
    %404 = arith.addf %402, %403 : vector<16x32xf32>
    %cst_231 = arith.constant 5.000000e-01 : f32
    %405 = vector.broadcast %cst_231 : f32 to vector<16x32xf32>
    %406 = arith.mulf %405, %404 : vector<16x32xf32>
    %407 = arith.addf %356, %406 : vector<16x32xf32>
    %c0_232 = arith.constant 0 : index
    %c0_233 = arith.constant 0 : index
    %408 = vector.load %arg40[%c0_232, %c0_233] : memref<1x32xf32, #tpu.memory_space<vmem>>, vector<1x32xf32>
    %c0_234 = arith.constant 0 : index
    %c0_235 = arith.constant 0 : index
    %409 = vector.load %arg41[%c0_234, %c0_235] : memref<1x32xf32, #tpu.memory_space<vmem>>, vector<1x32xf32>
    %cst_236 = arith.constant dense<0.000000e+00> : vector<16xf32>
    %410 = vector.multi_reduction <add>, %407, %cst_236 [1] : vector<16x32xf32> to vector<16xf32>
    %411 = vector.shape_cast %410 : vector<16xf32> to vector<16x1xf32>
    %cst_237 = arith.constant 3.200000e+01 : f32
    %412 = vector.broadcast %cst_237 : f32 to vector<16x1xf32>
    %413 = arith.divf %411, %412 : vector<16x1xf32>
    %414 = vector.broadcast %413 : vector<16x1xf32> to vector<16x32xf32>
    %415 = arith.subf %407, %414 : vector<16x32xf32>
    %416 = arith.mulf %415, %415 : vector<16x32xf32>
    %cst_238 = arith.constant dense<0.000000e+00> : vector<16xf32>
    %417 = vector.multi_reduction <add>, %416, %cst_238 [1] : vector<16x32xf32> to vector<16xf32>
    %418 = vector.shape_cast %417 : vector<16xf32> to vector<16x1xf32>
    %cst_239 = arith.constant 3.200000e+01 : f32
    %419 = vector.broadcast %cst_239 : f32 to vector<16x1xf32>
    %420 = arith.divf %418, %419 : vector<16x1xf32>
    %421 = vector.broadcast %413 : vector<16x1xf32> to vector<16x32xf32>
    %422 = arith.subf %407, %421 : vector<16x32xf32>
    %cst_240 = arith.constant 9.99999974E-6 : f32
    %423 = vector.broadcast %cst_240 : f32 to vector<16x1xf32>
    %424 = arith.addf %420, %423 : vector<16x1xf32>
    %425 = math.rsqrt %424 : vector<16x1xf32>
    %426 = vector.broadcast %425 : vector<16x1xf32> to vector<16x32xf32>
    %427 = arith.mulf %422, %426 : vector<16x32xf32>
    %428 = vector.broadcast %408 : vector<1x32xf32> to vector<16x32xf32>
    %429 = arith.mulf %427, %428 : vector<16x32xf32>
    %430 = vector.broadcast %409 : vector<1x32xf32> to vector<16x32xf32>
    %431 = arith.addf %429, %430 : vector<16x32xf32>
    %c0_241 = arith.constant 0 : index
    %c0_242 = arith.constant 0 : index
    %432 = vector.load %arg42[%c0_241, %c0_242] : memref<16x32xf32, #tpu.memory_space<vmem>>, vector<16x32xf32>
    tpu.vector_store %arg42[%c0_241, %c0_242], %431 {strides = array<i32>} : memref<16x32xf32, #tpu.memory_space<vmem>>, vector<16x32xf32>,
    return
  }
  func.func @transform_0(%arg0: i32) -> (i32, i32) {
    %c0_i32 = arith.constant 0 : i32
    %c0_i32_0 = arith.constant 0 : i32
    return %arg0, %c0_i32 : i32, i32
  }
  func.func @transform_1(%arg0: i32) -> (i32, i32) {
    %c0_i32 = arith.constant 0 : i32
    %c0_i32_0 = arith.constant 0 : i32
    %c0_i32_1 = arith.constant 0 : i32
    return %c0_i32, %c0_i32_0 : i32, i32
  }
  func.func @transform_2(%arg0: i32) -> (i32, i32) {
    %c0_i32 = arith.constant 0 : i32
    %c0_i32_0 = arith.constant 0 : i32
    %c0_i32_1 = arith.constant 0 : i32
    return %c0_i32, %c0_i32_0 : i32, i32
  }
  func.func @transform_3(%arg0: i32) -> (i32, i32) {
    %c0_i32 = arith.constant 0 : i32
    %c0_i32_0 = arith.constant 0 : i32
    %c0_i32_1 = arith.constant 0 : i32
    return %c0_i32, %c0_i32_0 : i32, i32
  }
  func.func @transform_4(%arg0: i32) -> (i32, i32) {
    %c0_i32 = arith.constant 0 : i32
    %c0_i32_0 = arith.constant 0 : i32
    %c0_i32_1 = arith.constant 0 : i32
    return %c0_i32, %c0_i32_0 : i32, i32
  }
  func.func @transform_5(%arg0: i32) -> (i32, i32) {
    %c0_i32 = arith.constant 0 : i32
    %c0_i32_0 = arith.constant 0 : i32
    %c0_i32_1 = arith.constant 0 : i32
    return %c0_i32, %c0_i32_0 : i32, i32
  }
  func.func @transform_6(%arg0: i32) -> (i32, i32) {
    %c0_i32 = arith.constant 0 : i32
    %c0_i32_0 = arith.constant 0 : i32
    %c0_i32_1 = arith.constant 0 : i32
    return %c0_i32, %c0_i32_0 : i32, i32
  }
  func.func @transform_7(%arg0: i32) -> (i32, i32) {
    %c0_i32 = arith.constant 0 : i32
    %c0_i32_0 = arith.constant 0 : i32
    %c0_i32_1 = arith.constant 0 : i32
    return %c0_i32, %c0_i32_0 : i32, i32
  }
  func.func @transform_8(%arg0: i32) -> (i32, i32) {
    %c0_i32 = arith.constant 0 : i32
    %c0_i32_0 = arith.constant 0 : i32
    %c0_i32_1 = arith.constant 0 : i32
    return %c0_i32, %c0_i32_0 : i32, i32
  }
  func.func @transform_9(%arg0: i32) -> (i32, i32) {
    %c0_i32 = arith.constant 0 : i32
    %c0_i32_0 = arith.constant 0 : i32
    %c0_i32_1 = arith.constant 0 : i32
    return %c0_i32, %c0_i32_0 : i32, i32
  }
  func.func @transform_10(%arg0: i32) -> (i32, i32) {
    %c0_i32 = arith.constant 0 : i32
    %c0_i32_0 = arith.constant 0 : i32
    %c0_i32_1 = arith.constant 0 : i32
    return %c0_i32, %c0_i32_0 : i32, i32
  }
  func.func @transform_11(%arg0: i32) -> (i32, i32) {
    %c0_i32 = arith.constant 0 : i32
    %c0_i32_0 = arith.constant 0 : i32
    %c0_i32_1 = arith.constant 0 : i32
    return %c0_i32, %c0_i32_0 : i32, i32
  }
  func.func @transform_12(%arg0: i32) -> (i32, i32) {
    %c0_i32 = arith.constant 0 : i32
    %c0_i32_0 = arith.constant 0 : i32
    %c0_i32_1 = arith.constant 0 : i32
    return %c0_i32, %c0_i32_0 : i32, i32
  }
  func.func @transform_13(%arg0: i32) -> (i32, i32) {
    %c0_i32 = arith.constant 0 : i32
    %c0_i32_0 = arith.constant 0 : i32
    %c0_i32_1 = arith.constant 0 : i32
    return %c0_i32, %c0_i32_0 : i32, i32
  }
  func.func @transform_14(%arg0: i32) -> (i32, i32) {
    %c0_i32 = arith.constant 0 : i32
    %c0_i32_0 = arith.constant 0 : i32
    %c0_i32_1 = arith.constant 0 : i32
    return %c0_i32, %c0_i32_0 : i32, i32
  }
  func.func @transform_15(%arg0: i32) -> (i32, i32) {
    %c0_i32 = arith.constant 0 : i32
    %c0_i32_0 = arith.constant 0 : i32
    %c0_i32_1 = arith.constant 0 : i32
    return %c0_i32, %c0_i32_0 : i32, i32
  }
  func.func @transform_16(%arg0: i32) -> (i32, i32) {
    %c0_i32 = arith.constant 0 : i32
    %c0_i32_0 = arith.constant 0 : i32
    %c0_i32_1 = arith.constant 0 : i32
    return %c0_i32, %c0_i32_0 : i32, i32
  }
  func.func @transform_17(%arg0: i32) -> (i32, i32) {
    %c0_i32 = arith.constant 0 : i32
    %c0_i32_0 = arith.constant 0 : i32
    %c0_i32_1 = arith.constant 0 : i32
    return %c0_i32, %c0_i32_0 : i32, i32
  }
  func.func @transform_18(%arg0: i32) -> (i32, i32) {
    %c0_i32 = arith.constant 0 : i32
    %c0_i32_0 = arith.constant 0 : i32
    %c0_i32_1 = arith.constant 0 : i32
    return %c0_i32, %c0_i32_0 : i32, i32
  }
  func.func @transform_19(%arg0: i32) -> (i32, i32) {
    %c0_i32 = arith.constant 0 : i32
    %c0_i32_0 = arith.constant 0 : i32
    %c0_i32_1 = arith.constant 0 : i32
    return %c0_i32, %c0_i32_0 : i32, i32
  }
  func.func @transform_20(%arg0: i32) -> (i32, i32) {
    %c0_i32 = arith.constant 0 : i32
    %c0_i32_0 = arith.constant 0 : i32
    %c0_i32_1 = arith.constant 0 : i32
    return %c0_i32, %c0_i32_0 : i32, i32
  }
  func.func @transform_21(%arg0: i32) -> (i32, i32) {
    %c0_i32 = arith.constant 0 : i32
    %c0_i32_0 = arith.constant 0 : i32
    %c0_i32_1 = arith.constant 0 : i32
    return %c0_i32, %c0_i32_0 : i32, i32
  }
  func.func @transform_22(%arg0: i32) -> (i32, i32) {
    %c0_i32 = arith.constant 0 : i32
    %c0_i32_0 = arith.constant 0 : i32
    %c0_i32_1 = arith.constant 0 : i32
    return %c0_i32, %c0_i32_0 : i32, i32
  }
  func.func @transform_23(%arg0: i32) -> (i32, i32) {
    %c0_i32 = arith.constant 0 : i32
    %c0_i32_0 = arith.constant 0 : i32
    %c0_i32_1 = arith.constant 0 : i32
    return %c0_i32, %c0_i32_0 : i32, i32
  }
  func.func @transform_24(%arg0: i32) -> (i32, i32) {
    %c0_i32 = arith.constant 0 : i32
    %c0_i32_0 = arith.constant 0 : i32
    %c0_i32_1 = arith.constant 0 : i32
    return %c0_i32, %c0_i32_0 : i32, i32
  }
  func.func @transform_25(%arg0: i32) -> (i32, i32, i32) {
    %c0_i32 = arith.constant 0 : i32
    %c0_i32_0 = arith.constant 0 : i32
    %c0_i32_1 = arith.constant 0 : i32
    %c0_i32_2 = arith.constant 0 : i32
    return %c0_i32, %c0_i32_0, %c0_i32_1 : i32, i32, i32
  }
  func.func @transform_26(%arg0: i32) -> (i32, i32) {
    %c0_i32 = arith.constant 0 : i32
    %c0_i32_0 = arith.constant 0 : i32
    %c0_i32_1 = arith.constant 0 : i32
    return %c0_i32, %c0_i32_0 : i32, i32
  }
  func.func @transform_27(%arg0: i32) -> (i32, i32) {
    %c0_i32 = arith.constant 0 : i32
    %c0_i32_0 = arith.constant 0 : i32
    %c0_i32_1 = arith.constant 0 : i32
    return %c0_i32, %c0_i32_0 : i32, i32
  }
  func.func @transform_28(%arg0: i32) -> (i32, i32) {
    %c0_i32 = arith.constant 0 : i32
    %c0_i32_0 = arith.constant 0 : i32
    %c0_i32_1 = arith.constant 0 : i32
    return %c0_i32, %c0_i32_0 : i32, i32
  }
  func.func @transform_29(%arg0: i32) -> (i32, i32) {
    %c0_i32 = arith.constant 0 : i32
    %c0_i32_0 = arith.constant 0 : i32
    %c0_i32_1 = arith.constant 0 : i32
    return %c0_i32, %c0_i32_0 : i32, i32
  }
  func.func @transform_30(%arg0: i32) -> (i32, i32) {
    %c0_i32 = arith.constant 0 : i32
    %c0_i32_0 = arith.constant 0 : i32
    %c0_i32_1 = arith.constant 0 : i32
    return %c0_i32, %c0_i32_0 : i32, i32
  }
  func.func @transform_31(%arg0: i32) -> (i32, i32) {
    %c0_i32 = arith.constant 0 : i32
    %c0_i32_0 = arith.constant 0 : i32
    %c0_i32_1 = arith.constant 0 : i32
    return %c0_i32, %c0_i32_0 : i32, i32
  }
  func.func @transform_32(%arg0: i32) -> (i32, i32) {
    %c0_i32 = arith.constant 0 : i32
    %c0_i32_0 = arith.constant 0 : i32
    %c0_i32_1 = arith.constant 0 : i32
    return %c0_i32, %c0_i32_0 : i32, i32
  }
  func.func @transform_33(%arg0: i32) -> (i32, i32) {
    %c0_i32 = arith.constant 0 : i32
    %c0_i32_0 = arith.constant 0 : i32
    %c0_i32_1 = arith.constant 0 : i32
    return %c0_i32, %c0_i32_0 : i32, i32
  }
  func.func @transform_34(%arg0: i32) -> (i32, i32) {
    %c0_i32 = arith.constant 0 : i32
    %c0_i32_0 = arith.constant 0 : i32
    %c0_i32_1 = arith.constant 0 : i32
    return %c0_i32, %c0_i32_0 : i32, i32
  }
  func.func @transform_35(%arg0: i32) -> (i32, i32) {
    %c0_i32 = arith.constant 0 : i32
    %c0_i32_0 = arith.constant 0 : i32
    %c0_i32_1 = arith.constant 0 : i32
    return %c0_i32, %c0_i32_0 : i32, i32
  }
  func.func @transform_36(%arg0: i32) -> (i32, i32) {
    %c0_i32 = arith.constant 0 : i32
    %c0_i32_0 = arith.constant 0 : i32
    %c0_i32_1 = arith.constant 0 : i32
    return %c0_i32, %c0_i32_0 : i32, i32
  }
  func.func @transform_37(%arg0: i32) -> (i32, i32) {
    %c0_i32 = arith.constant 0 : i32
    %c0_i32_0 = arith.constant 0 : i32
    %c0_i32_1 = arith.constant 0 : i32
    return %c0_i32, %c0_i32_0 : i32, i32
  }
  func.func @transform_38(%arg0: i32) -> (i32, i32) {
    %c0_i32 = arith.constant 0 : i32
    %c0_i32_0 = arith.constant 0 : i32
    %c0_i32_1 = arith.constant 0 : i32
    return %c0_i32, %c0_i32_0 : i32, i32
  }
  func.func @transform_39(%arg0: i32) -> (i32, i32) {
    %c0_i32 = arith.constant 0 : i32
    %c0_i32_0 = arith.constant 0 : i32
    %c0_i32_1 = arith.constant 0 : i32
    return %c0_i32, %c0_i32_0 : i32, i32
  }
  func.func @transform_40(%arg0: i32) -> (i32, i32) {
    %c0_i32 = arith.constant 0 : i32
    %c0_i32_0 = arith.constant 0 : i32
    %c0_i32_1 = arith.constant 0 : i32
    return %c0_i32, %c0_i32_0 : i32, i32
  }
  func.func @transform_41(%arg0: i32) -> (i32, i32) {
    %c0_i32 = arith.constant 0 : i32
    %c0_i32_0 = arith.constant 0 : i32
    return %arg0, %c0_i32 : i32, i32
  }
}

module attributes {stable_mosaic.version = 11 : i64} {
  func.func @pool_cls_kernel(%arg0: i32, %arg1: memref<16x32xf32, #tpu.memory_space<vmem>>, %arg2: memref<32x32xbf16, #tpu.memory_space<vmem>>, %arg3: memref<1x32xf32, #tpu.memory_space<vmem>>, %arg4: memref<32x1xbf16, #tpu.memory_space<vmem>>, %arg5: memref<1x1xf32, #tpu.memory_space<vmem>>, %arg6: memref<32x64xbf16, #tpu.memory_space<vmem>>, %arg7: memref<1x64xf32, #tpu.memory_space<vmem>>, %arg8: memref<1x64xf32, #tpu.memory_space<vmem>>, %arg9: memref<1x64xf32, #tpu.memory_space<vmem>>, %arg10: memref<64x4xbf16, #tpu.memory_space<vmem>>, %arg11: memref<1x4xf32, #tpu.memory_space<vmem>>, %arg12: memref<2x4xf32, #tpu.memory_space<vmem>>) attributes {dimension_semantics = [#tpu.dimension_semantics<parallel>], iteration_bounds = array<i64: 1>, scalar_prefetch = 0 : i64, scratch_operands = 0 : i64, tpu.core_type = #tpu.core_type<tc>, window_params = [{pipeline_mode = #tpu.pipeline_mode<synchronous>, transform_indices = @transform_0, window_bounds = array<i64: 16, 32>}, {pipeline_mode = #tpu.pipeline_mode<synchronous>, transform_indices = @transform_1, window_bounds = array<i64: 32, 32>}, {pipeline_mode = #tpu.pipeline_mode<synchronous>, transform_indices = @transform_2, window_bounds = array<i64: 1, 32>}, {pipeline_mode = #tpu.pipeline_mode<synchronous>, transform_indices = @transform_3, window_bounds = array<i64: 32, 1>}, {pipeline_mode = #tpu.pipeline_mode<synchronous>, transform_indices = @transform_4, window_bounds = array<i64: 1, 1>}, {pipeline_mode = #tpu.pipeline_mode<synchronous>, transform_indices = @transform_5, window_bounds = array<i64: 32, 64>}, {pipeline_mode = #tpu.pipeline_mode<synchronous>, transform_indices = @transform_6, window_bounds = array<i64: 1, 64>}, {pipeline_mode = #tpu.pipeline_mode<synchronous>, transform_indices = @transform_7, window_bounds = array<i64: 1, 64>}, {pipeline_mode = #tpu.pipeline_mode<synchronous>, transform_indices = @transform_8, window_bounds = array<i64: 1, 64>}, {pipeline_mode = #tpu.pipeline_mode<synchronous>, transform_indices = @transform_9, window_bounds = array<i64: 64, 4>}, {pipeline_mode = #tpu.pipeline_mode<synchronous>, transform_indices = @transform_10, window_bounds = array<i64: 1, 4>}, {pipeline_mode = #tpu.pipeline_mode<synchronous>, transform_indices = @transform_11, window_bounds = array<i64: 2, 4>}]} {
    %c0 = arith.constant 0 : index
    %c0_0 = arith.constant 0 : index
    %0 = vector.load %arg1[%c0, %c0_0] : memref<16x32xf32, #tpu.memory_space<vmem>>, vector<16x32xf32>
    %1 = arith.truncf %0 : vector<16x32xf32> to vector<16x32xbf16>
    %c0_1 = arith.constant 0 : index
    %c0_2 = arith.constant 0 : index
    %2 = vector.load %arg2[%c0_1, %c0_2] : memref<32x32xbf16, #tpu.memory_space<vmem>>, vector<32x32xbf16>
    %cst = arith.constant dense<0.000000e+00> : vector<16x32xf32>
    %3 = tpu.matmul %1, %2, %cst {dimension_numbers = #tpu.dot_dimension_numbers<[1], [0], [0], [1], [0, 0, 1, 1], [], []>} : vector<16x32xbf16>, vector<32x32xbf16>, vector<16x32xf32> -> vector<16x32xf32>
    %c0_3 = arith.constant 0 : index
    %c0_4 = arith.constant 0 : index
    %4 = vector.load %arg3[%c0_3, %c0_4] : memref<1x32xf32, #tpu.memory_space<vmem>>, vector<1x32xf32>
    %5 = vector.broadcast %4 : vector<1x32xf32> to vector<16x32xf32>
    %6 = arith.addf %3, %5 : vector<16x32xf32>
    %7 = math.tanh %6 : vector<16x32xf32>
    %8 = arith.truncf %7 : vector<16x32xf32> to vector<16x32xbf16>
    %c0_5 = arith.constant 0 : index
    %c0_6 = arith.constant 0 : index
    %9 = vector.load %arg4[%c0_5, %c0_6] : memref<32x1xbf16, #tpu.memory_space<vmem>>, vector<32x1xbf16>
    %cst_7 = arith.constant dense<0.000000e+00> : vector<16x1xf32>
    %10 = tpu.matmul %8, %9, %cst_7 {dimension_numbers = #tpu.dot_dimension_numbers<[1], [0], [0], [1], [0, 0, 1, 1], [], []>} : vector<16x32xbf16>, vector<32x1xbf16>, vector<16x1xf32> -> vector<16x1xf32>
    %c0_8 = arith.constant 0 : index
    %c0_9 = arith.constant 0 : index
    %11 = vector.load %arg5[%c0_8, %c0_9] : memref<1x1xf32, #tpu.memory_space<vmem>>, vector<1x1xf32>
    %12 = vector.broadcast %11 : vector<1x1xf32> to vector<16x1xf32>
    %13 = arith.addf %10, %12 : vector<16x1xf32>
    %14 = vector.shape_cast %13 : vector<16x1xf32> to vector<2x8x1xf32>
    %cst_10 = arith.constant dense<0xFF800000> : vector<2x1xf32>
    %15 = vector.multi_reduction <maximumf>, %14, %cst_10 [1] : vector<2x8x1xf32> to vector<2x1xf32>
    %16 = vector.shape_cast %15 : vector<2x1xf32> to vector<2x1x1xf32>
    %17 = vector.broadcast %16 : vector<2x1x1xf32> to vector<2x8x1xf32>
    %18 = arith.subf %14, %17 : vector<2x8x1xf32>
    %19 = math.exp %18 : vector<2x8x1xf32>
    %cst_11 = arith.constant dense<0.000000e+00> : vector<2x1xf32>
    %20 = vector.multi_reduction <add>, %19, %cst_11 [1] : vector<2x8x1xf32> to vector<2x1xf32>
    %21 = vector.shape_cast %20 : vector<2x1xf32> to vector<2x1x1xf32>
    %22 = tpu.reciprocal %21 {approx = true} : vector<2x1x1xf32> -> vector<2x1x1xf32>
    %23 = vector.broadcast %22 : vector<2x1x1xf32> to vector<2x8x1xf32>
    %24 = arith.mulf %19, %23 : vector<2x8x1xf32>
    %25 = vector.shape_cast %0 : vector<16x32xf32> to vector<2x8x32xf32>
    %26 = vector.broadcast %24 : vector<2x8x1xf32> to vector<2x8x32xf32>
    %27 = arith.mulf %25, %26 : vector<2x8x32xf32>
    %cst_12 = arith.constant dense<0.000000e+00> : vector<2x32xf32>
    %28 = vector.multi_reduction <add>, %27, %cst_12 [1] : vector<2x8x32xf32> to vector<2x32xf32>
    %29 = arith.truncf %28 : vector<2x32xf32> to vector<2x32xbf16>
    %c0_13 = arith.constant 0 : index
    %c0_14 = arith.constant 0 : index
    %30 = vector.load %arg6[%c0_13, %c0_14] : memref<32x64xbf16, #tpu.memory_space<vmem>>, vector<32x64xbf16>
    %cst_15 = arith.constant dense<0.000000e+00> : vector<2x64xf32>
    %31 = tpu.matmul %29, %30, %cst_15 {dimension_numbers = #tpu.dot_dimension_numbers<[1], [0], [0], [1], [0, 0, 1, 1], [], []>} : vector<2x32xbf16>, vector<32x64xbf16>, vector<2x64xf32> -> vector<2x64xf32>
    %c0_16 = arith.constant 0 : index
    %c0_17 = arith.constant 0 : index
    %32 = vector.load %arg7[%c0_16, %c0_17] : memref<1x64xf32, #tpu.memory_space<vmem>>, vector<1x64xf32>
    %33 = vector.broadcast %32 : vector<1x64xf32> to vector<2x64xf32>
    %34 = arith.addf %31, %33 : vector<2x64xf32>
    %c0_18 = arith.constant 0 : index
    %c0_19 = arith.constant 0 : index
    %35 = vector.load %arg8[%c0_18, %c0_19] : memref<1x64xf32, #tpu.memory_space<vmem>>, vector<1x64xf32>
    %c0_20 = arith.constant 0 : index
    %c0_21 = arith.constant 0 : index
    %36 = vector.load %arg9[%c0_20, %c0_21] : memref<1x64xf32, #tpu.memory_space<vmem>>, vector<1x64xf32>
    %cst_22 = arith.constant dense<0.000000e+00> : vector<2xf32>
    %37 = vector.multi_reduction <add>, %34, %cst_22 [1] : vector<2x64xf32> to vector<2xf32>
    %38 = vector.shape_cast %37 : vector<2xf32> to vector<2x1xf32>
    %cst_23 = arith.constant 6.400000e+01 : f32
    %39 = vector.broadcast %cst_23 : f32 to vector<2x1xf32>
    %40 = arith.divf %38, %39 : vector<2x1xf32>
    %41 = vector.broadcast %40 : vector<2x1xf32> to vector<2x64xf32>
    %42 = arith.subf %34, %41 : vector<2x64xf32>
    %43 = arith.mulf %42, %42 : vector<2x64xf32>
    %cst_24 = arith.constant dense<0.000000e+00> : vector<2xf32>
    %44 = vector.multi_reduction <add>, %43, %cst_24 [1] : vector<2x64xf32> to vector<2xf32>
    %45 = vector.shape_cast %44 : vector<2xf32> to vector<2x1xf32>
    %cst_25 = arith.constant 6.400000e+01 : f32
    %46 = vector.broadcast %cst_25 : f32 to vector<2x1xf32>
    %47 = arith.divf %45, %46 : vector<2x1xf32>
    %48 = vector.broadcast %40 : vector<2x1xf32> to vector<2x64xf32>
    %49 = arith.subf %34, %48 : vector<2x64xf32>
    %cst_26 = arith.constant 9.99999974E-6 : f32
    %50 = vector.broadcast %cst_26 : f32 to vector<2x1xf32>
    %51 = arith.addf %47, %50 : vector<2x1xf32>
    %52 = math.rsqrt %51 : vector<2x1xf32>
    %53 = vector.broadcast %52 : vector<2x1xf32> to vector<2x64xf32>
    %54 = arith.mulf %49, %53 : vector<2x64xf32>
    %55 = vector.broadcast %35 : vector<1x64xf32> to vector<2x64xf32>
    %56 = arith.mulf %54, %55 : vector<2x64xf32>
    %57 = vector.broadcast %36 : vector<1x64xf32> to vector<2x64xf32>
    %58 = arith.addf %56, %57 : vector<2x64xf32>
    %cst_27 = arith.constant 0.000000e+00 : f32
    %59 = vector.broadcast %cst_27 : f32 to vector<2x64xf32>
    %60 = arith.maximumf %58, %59 : vector<2x64xf32>
    %61 = arith.truncf %60 : vector<2x64xf32> to vector<2x64xbf16>
    %c0_28 = arith.constant 0 : index
    %c0_29 = arith.constant 0 : index
    %62 = vector.load %arg10[%c0_28, %c0_29] : memref<64x4xbf16, #tpu.memory_space<vmem>>, vector<64x4xbf16>
    %cst_30 = arith.constant dense<0.000000e+00> : vector<2x4xf32>
    %63 = tpu.matmul %61, %62, %cst_30 {dimension_numbers = #tpu.dot_dimension_numbers<[1], [0], [0], [1], [0, 0, 1, 1], [], []>} : vector<2x64xbf16>, vector<64x4xbf16>, vector<2x4xf32> -> vector<2x4xf32>
    %c0_31 = arith.constant 0 : index
    %c0_32 = arith.constant 0 : index
    %64 = vector.load %arg11[%c0_31, %c0_32] : memref<1x4xf32, #tpu.memory_space<vmem>>, vector<1x4xf32>
    %65 = vector.broadcast %64 : vector<1x4xf32> to vector<2x4xf32>
    %66 = arith.addf %63, %65 : vector<2x4xf32>
    %c0_33 = arith.constant 0 : index
    %c0_34 = arith.constant 0 : index
    %67 = vector.load %arg12[%c0_33, %c0_34] : memref<2x4xf32, #tpu.memory_space<vmem>>, vector<2x4xf32>
    tpu.vector_store %arg12[%c0_33, %c0_34], %66 {strides = array<i32>} : memref<2x4xf32, #tpu.memory_space<vmem>>, vector<2x4xf32>,
    return
  }
  func.func @transform_0(%arg0: i32) -> (i32, i32) {
    %c0_i32 = arith.constant 0 : i32
    %c0_i32_0 = arith.constant 0 : i32
    %c0_i32_1 = arith.constant 0 : i32
    return %c0_i32, %c0_i32_0 : i32, i32
  }
  func.func @transform_1(%arg0: i32) -> (i32, i32) {
    %c0_i32 = arith.constant 0 : i32
    %c0_i32_0 = arith.constant 0 : i32
    %c0_i32_1 = arith.constant 0 : i32
    return %c0_i32, %c0_i32_0 : i32, i32
  }
  func.func @transform_2(%arg0: i32) -> (i32, i32) {
    %c0_i32 = arith.constant 0 : i32
    %c0_i32_0 = arith.constant 0 : i32
    %c0_i32_1 = arith.constant 0 : i32
    return %c0_i32, %c0_i32_0 : i32, i32
  }
  func.func @transform_3(%arg0: i32) -> (i32, i32) {
    %c0_i32 = arith.constant 0 : i32
    %c0_i32_0 = arith.constant 0 : i32
    %c0_i32_1 = arith.constant 0 : i32
    return %c0_i32, %c0_i32_0 : i32, i32
  }
  func.func @transform_4(%arg0: i32) -> (i32, i32) {
    %c0_i32 = arith.constant 0 : i32
    %c0_i32_0 = arith.constant 0 : i32
    %c0_i32_1 = arith.constant 0 : i32
    return %c0_i32, %c0_i32_0 : i32, i32
  }
  func.func @transform_5(%arg0: i32) -> (i32, i32) {
    %c0_i32 = arith.constant 0 : i32
    %c0_i32_0 = arith.constant 0 : i32
    %c0_i32_1 = arith.constant 0 : i32
    return %c0_i32, %c0_i32_0 : i32, i32
  }
  func.func @transform_6(%arg0: i32) -> (i32, i32) {
    %c0_i32 = arith.constant 0 : i32
    %c0_i32_0 = arith.constant 0 : i32
    %c0_i32_1 = arith.constant 0 : i32
    return %c0_i32, %c0_i32_0 : i32, i32
  }
  func.func @transform_7(%arg0: i32) -> (i32, i32) {
    %c0_i32 = arith.constant 0 : i32
    %c0_i32_0 = arith.constant 0 : i32
    %c0_i32_1 = arith.constant 0 : i32
    return %c0_i32, %c0_i32_0 : i32, i32
  }
  func.func @transform_8(%arg0: i32) -> (i32, i32) {
    %c0_i32 = arith.constant 0 : i32
    %c0_i32_0 = arith.constant 0 : i32
    %c0_i32_1 = arith.constant 0 : i32
    return %c0_i32, %c0_i32_0 : i32, i32
  }
  func.func @transform_9(%arg0: i32) -> (i32, i32) {
    %c0_i32 = arith.constant 0 : i32
    %c0_i32_0 = arith.constant 0 : i32
    %c0_i32_1 = arith.constant 0 : i32
    return %c0_i32, %c0_i32_0 : i32, i32
  }
  func.func @transform_10(%arg0: i32) -> (i32, i32) {
    %c0_i32 = arith.constant 0 : i32
    %c0_i32_0 = arith.constant 0 : i32
    %c0_i32_1 = arith.constant 0 : i32
    return %c0_i32, %c0_i32_0 : i32, i32
  }
  func.func @transform_11(%arg0: i32) -> (i32, i32) {
    %c0_i32 = arith.constant 0 : i32
    %c0_i32_0 = arith.constant 0 : i32
    %c0_i32_1 = arith.constant 0 : i32
    return %c0_i32, %c0_i32_0 : i32, i32
  }
}

</mosaic_0001>

<llo_original>
// kernel: streaming_conformer_forward.4
$region0: #{streaming_conformer_forward.4}
  #allocation0 [shape = 'u32[]', space=smem, size = 0x4, offset = 0x4, fixed_abs, tag = 'smem constant byte address 0x4 - core index']
  #allocation1 [shape = 'u32[72,128]{1,0:T(1,128)}', space=vmem, size = 0x9000, scoped, tag = 'internal scratch']
  %s0 = inlined_call_operand.vmem [shape: f32[16,16], index: 0, kind: input, shape index: {}]
  %s1 = inlined_call_operand.vmem [shape: bf16[16,32], index: 1, kind: input, shape index: {}]
  %s2 = inlined_call_operand.vmem [shape: f32[1,32], index: 2, kind: input, shape index: {}]
  %s3 = inlined_call_operand.vmem [shape: f32[8,32], index: 3, kind: input, shape index: {}]
  %s4 = inlined_call_operand.vmem [shape: f32[16,32], index: 4, kind: output, shape index: {}]
  %s5 = sld [smem:[#allocation0]]
  $region26: #{streaming_conformer_forward.4} parent=0
    _
  %s7 = ssub.s32 1, %s5
  %s8 = scalar_select 0, %s7, %s5
  // Predicated region
  $region2: #{streaming_conformer_forward.4} parent=0 // pred_check
    _
  $region3: #{streaming_conformer_forward.4} parent=0 // pred_check_branch
    %10 = sbr.rel (0) target = $region5
  $region4: #{streaming_conformer_forward.4} parent=0 // pred_region
    _
  $region5: #{streaming_conformer_forward.4} parent=0 // pred_fallthru
    _
  // Predicated region
  $region6: #{streaming_conformer_forward.4} parent=0 // pred_check
    _
  $region7: #{streaming_conformer_forward.4} parent=0 // pred_check_branch
    %12 = sbr.rel (0) target = $region9
  $region8: #{streaming_conformer_forward.4} parent=0 // pred_region
    _
  $region9: #{streaming_conformer_forward.4} parent=0 // pred_fallthru
    _
  // Predicated region
  $region10: #{streaming_conformer_forward.4} parent=0 // pred_check
    _
  $region11: #{streaming_conformer_forward.4} parent=0 // pred_check_branch
    %14 = sbr.rel (0) target = $region13
  $region12: #{streaming_conformer_forward.4} parent=0 // pred_region
    _
  $region13: #{streaming_conformer_forward.4} parent=0 // pred_fallthru
    _
  // Predicated region
  $region14: #{streaming_conformer_forward.4} parent=0 // pred_check
    _
  $region15: #{streaming_conformer_forward.4} parent=0 // pred_check_branch
    %16 = sbr.rel (0) target = $region17
  $region16: #{streaming_conformer_forward.4} parent=0 // pred_region
    _
  $region17: #{streaming_conformer_forward.4} parent=0 // pred_fallthru
    _
  %v18 = vld [vmem:[%s0] sm:$0xff]
  %v19 = vld [vmem:[%s0 + $0x8] sm:$0xff]
  %v20 = vpack.c.bf16 %v19, %v18
  %v21 = vld [vmem:[%s1] sm:$0xf]
  %v22 = vld [vmem:[%s1 + $0x4] sm:$0xf]
  %v23 = vld [vmem:[%s2] sm:$0x1]
  %v25 = vperm.slane %v23, 0
  %v29 = vunpack.c.l.b16 %v21
  %v30 = vunpack.c.l.b16 %v22
  %v31 = vpack.c.b16 %v30, %v29
  %vm33 = vcmask 130048
  %v35 = vsel %vm33, %v20, 0
  %37 = vmatpush.bf16.msra.mxu0 0
  %38 = vmatpush.bf16.msra.mxu0 0
  %39 = vmatpush.bf16.msra.mxu0 0
  %40 = vmatpush.bf16.msra.mxu0 0
  %41 = vmatpush.bf16.msra.mxu0 0
  %42 = vmatpush.bf16.msra.mxu0 0
  %43 = vmatpush.bf16.msra.mxu0 0
  %44 = vmatpush.bf16.msra.mxu0 %v31
  %45 = vmatmul.bf16.gmra.mxu0 %v35
  %v46 = vpop.f32.mrf.mxu0
  %v47 = vadd.f32 %v25, %v46
  %v48 = vpop.f32.mrf.mxu0
  %v49 = vadd.f32 %v25, %v48
  %50 = vdwg.mxu0
  %v51 = vld [vmem:[%s3] sm:$0xff]
  %v52 = vadd.f32 %v47, %v51
  %v53 = vadd.f32 %v49, %v51
  %vm54 = vcmask 261120
  %55 = vst.msk [vmem:[%s4] sm:$0xff] %vm54, %v52
  %56 = vst.msk [vmem:[%s4 + $0x8] sm:$0xff] %vm54, %v53
  // Predicated region
  $region18: #{streaming_conformer_forward.4} parent=0 // pred_check
    _
  $region19: #{streaming_conformer_forward.4} parent=0 // pred_check_branch
    %58 = sbr.rel (0) target = $region21
  $region20: #{streaming_conformer_forward.4} parent=0 // pred_region
    _
  $region21: #{streaming_conformer_forward.4} parent=0 // pred_fallthru
    _
  // Predicated region
  $region22: #{streaming_conformer_forward.4} parent=0 // pred_check
    _
  $region23: #{streaming_conformer_forward.4} parent=0 // pred_check_branch
    %60 = sbr.rel (0) target = $region25
  $region24: #{streaming_conformer_forward.4} parent=0 // pred_region
    _
  $region25: #{streaming_conformer_forward.4} parent=0 // pred_fallthru
    _

// kernel: streaming_conformer_forward.7
$region0: #{streaming_conformer_forward.7}
  #allocation0 [shape = 'u32[]', space=smem, size = 0x4, offset = 0x4, fixed_abs, tag = 'smem constant byte address 0x4 - core index']
  #allocation1 [shape = 'u32[72,128]{1,0:T(1,128)}', space=vmem, size = 0x9000, scoped, tag = 'internal scratch']
  #allocation2 [shape = 'f32[1,1]{1,0:T(1,128)S(1)}', space=vmem, size = 0x200, scoped, tag = 'scoped memory for streaming_conformer_forward.7']
  %s0 = inlined_call_operand.vmem [shape: f32[16,32], index: 0, kind: input, shape index: {}]
  %s1 = inlined_call_operand.vmem [shape: bf16[32,32], index: 1, kind: input, shape index: {}]
  %s2 = inlined_call_operand.vmem [shape: f32[1,32], index: 2, kind: input, shape index: {}]
  %s3 = inlined_call_operand.vmem [shape: bf16[32,1], index: 3, kind: input, shape index: {}]
  %s4 = inlined_call_operand.<no memory space> [shape: f32[1,1], index: 4, kind: input, shape index: {}]
  %s5 = inlined_call_operand.vmem [shape: bf16[32,64], index: 5, kind: input, shape index: {}]
  %s6 = inlined_call_operand.vmem [shape: f32[1,64], index: 6, kind: input, shape index: {}]
  %s7 = inlined_call_operand.vmem [shape: f32[1,64], index: 7, kind: input, shape index: {}]
  %s8 = inlined_call_operand.vmem [shape: f32[1,64], index: 8, kind: input, shape index: {}]
  %s9 = inlined_call_operand.vmem [shape: bf16[64,4], index: 9, kind: input, shape index: {}]
  %s10 = inlined_call_operand.vmem [shape: f32[1,4], index: 10, kind: input, shape index: {}]
  %s11 = inlined_call_operand.hbm [shape: f32[2,4], index: 11, kind: output, shape index: {}]
  %s12 = sld [smem:[#allocation0]]
  $region54: #{streaming_conformer_forward.7} parent=0
    _
  %s14 = ssub.s32 1, %s12
  %s15 = scalar_select 0, %s14, %s12
  %v16 = vstv %s4
  %17 = vst [vmem:[#allocation2] sm:$0x1] %v16
  $region1: #{streaming_conformer_forward.7} parent=0
    #allocation3 [shape = 'u8[1024]{0}', space=vmem, size = 0x400, scoped, tag = 'output window, operand 0, single buffered']
    #allocation4 [shape = 's32[1]{0}', space=sflag, size = 0x4, scoped, tag = 'scoped memory for streaming_conformer_forward.7']
    %18 = vsyncpa [#allocation4], 0
    // Predicated region
    $region2: #{streaming_conformer_forward.7} parent=1 // pred_check
      _
    $region3: #{streaming_conformer_forward.7} parent=1 // pred_check_branch
      %20 = sbr.rel (0) target = $region5
    $region4: #{streaming_conformer_forward.7} parent=1 // pred_region
      _
    $region5: #{streaming_conformer_forward.7} parent=1 // pred_fallthru
      _
    // Predicated region
    $region6: #{streaming_conformer_forward.7} parent=1 // pred_check
      _
    $region7: #{streaming_conformer_forward.7} parent=1 // pred_check_branch
      %22 = sbr.rel (0) target = $region9
    $region8: #{streaming_conformer_forward.7} parent=1 // pred_region
      _
    $region9: #{streaming_conformer_forward.7} parent=1 // pred_fallthru
      _
    // Predicated region
    $region10: #{streaming_conformer_forward.7} parent=1 // pred_check
      _
    $region11: #{streaming_conformer_forward.7} parent=1 // pred_check_branch
      %24 = sbr.rel (0) target = $region13
    $region12: #{streaming_conformer_forward.7} parent=1 // pred_region
      _
    $region13: #{streaming_conformer_forward.7} parent=1 // pred_fallthru
      _
    // Predicated region
    $region14: #{streaming_conformer_forward.7} parent=1 // pred_check
      _
    $region15: #{streaming_conformer_forward.7} parent=1 // pred_check_branch
      %26 = sbr.rel (0) target = $region17
    $region16: #{streaming_conformer_forward.7} parent=1 // pred_region
      _
    $region17: #{streaming_conformer_forward.7} parent=1 // pred_fallthru
      _
    // Predicated region
    $region18: #{streaming_conformer_forward.7} parent=1 // pred_check
      _
    $region19: #{streaming_conformer_forward.7} parent=1 // pred_check_branch
      %28 = sbr.rel (0) target = $region21
    $region20: #{streaming_conformer_forward.7} parent=1 // pred_region
      _
    $region21: #{streaming_conformer_forward.7} parent=1 // pred_fallthru
      _
    // Predicated region
    $region22: #{streaming_conformer_forward.7} parent=1 // pred_check
      _
    $region23: #{streaming_conformer_forward.7} parent=1 // pred_check_branch
      %30 = sbr.rel (0) target = $region25
    $region24: #{streaming_conformer_forward.7} parent=1 // pred_region
      _
    $region25: #{streaming_conformer_forward.7} parent=1 // pred_fallthru
      _
    // Predicated region
    $region26: #{streaming_conformer_forward.7} parent=1 // pred_check
      _
    $region27: #{streaming_conformer_forward.7} parent=1 // pred_check_branch
      %32 = sbr.rel (0) target = $region29
    $region28: #{streaming_conformer_forward.7} parent=1 // pred_region
      _
    $region29: #{streaming_conformer_forward.7} parent=1 // pred_fallthru
      _
    // Predicated region
    $region30: #{streaming_conformer_forward.7} parent=1 // pred_check
      _
    $region31: #{streaming_conformer_forward.7} parent=1 // pred_check_branch
      %34 = sbr.rel (0) target = $region33
    $region32: #{streaming_conformer_forward.7} parent=1 // pred_region
      _
    $region33: #{streaming_conformer_forward.7} parent=1 // pred_fallthru
      _
    // Predicated region
    $region34: #{streaming_conformer_forward.7} parent=1 // pred_check
      _
    $region35: #{streaming_conformer_forward.7} parent=1 // pred_check_branch
      %36 = sbr.rel (0) target = $region37
    $region36: #{streaming_conformer_forward.7} parent=1 // pred_region
      _
    $region37: #{streaming_conformer_forward.7} parent=1 // pred_fallthru
      _
    // Predicated region
    $region38: #{streaming_conformer_forward.7} parent=1 // pred_check
      _
    $region39: #{streaming_conformer_forward.7} parent=1 // pred_check_branch
      %38 = sbr.rel (0) target = $region41
    $region40: #{streaming_conformer_forward.7} parent=1 // pred_region
      _
    $region41: #{streaming_conformer_forward.7} parent=1 // pred_fallthru
      _
    // Predicated region
    $region42: #{streaming_conformer_forward.7} parent=1 // pred_check
      _
    $region43: #{streaming_conformer_forward.7} parent=1 // pred_check_branch
      %40 = sbr.rel (0) target = $region45
    $region44: #{streaming_conformer_forward.7} parent=1 // pred_region
      _
    $region45: #{streaming_conformer_forward.7} parent=1 // pred_fallthru
      _
    %v42 = vld [vmem:[%s0] sm:$0xff]
    %v43 = vld [vmem:[%s0 + $0x8] sm:$0xff]
    %v44 = vpack.c.bf16 %v43, %v42
    %v45 = vld [vmem:[%s1] sm:$0xf]
    %v46 = vld [vmem:[%s1 + $0x4] sm:$0xf]
    %v47 = vld [vmem:[%s1 + $0x8] sm:$0xf]
    %v48 = vld [vmem:[%s1 + $0xc] sm:$0xf]
    %v49 = vld [vmem:[%s2] sm:$0x1]
    %v51 = vperm.slane %v49, 0
    %v57 = vunpack.c.l.b16 %v45
    %v58 = vunpack.c.l.b16 %v46
    %v59 = vunpack.c.l.b16 %v47
    %v60 = vunpack.c.l.b16 %v48
    %v61 = vpack.c.b16 %v58, %v57
    %v62 = vpack.c.b16 %v60, %v59
    %vm65 = vcmask 261120
    %v67 = vsel %vm65, %v44, 0
    %69 = vmatpush.bf16.msra.mxu0 0
    %70 = vmatpush.bf16.msra.mxu0 0
    %71 = vmatpush.bf16.msra.mxu0 0
    %72 = vmatpush.bf16.msra.mxu0 0
    %73 = vmatpush.bf16.msra.mxu0 0
    %74 = vmatpush.bf16.msra.mxu0 0
    %75 = vmatpush.bf16.msra.mxu0 %v62
    %76 = vmatpush.bf16.msra.mxu0 %v61
    %77 = vmatmul.bf16.gmra.mxu0 %v67
    %v78 = vpop.f32.mrf.mxu0
    %v79 = vadd.f32 %v51, %v78
    %v80 = vpop.f32.mrf.mxu0
    %v81 = vadd.f32 %v51, %v80
    %82 = vdwg.mxu0
    %v83 = vtanh.pop %v79
    %v84 = vtanh.pop %v81
    %v85 = vpack.c.bf16 %v84, %v83
    %v86 = vld [vmem:[%s3] sm:$0xf]
    %v87 = vld [vmem:[%s3 + $0x4] sm:$0xf]
    %v88 = vld [vmem:[%s3 + $0x8] sm:$0xf]
    %v89 = vld [vmem:[%s3 + $0xc] sm:$0xf]
    %v90 = vld [vmem:[#allocation2] sm:$0x1]
    %v92 = vperm.slane %v90, 0
    %v98 = vunpack.c.l.b16 %v86
    %v99 = vunpack.c.l.b16 %v87
    %v100 = vunpack.c.l.b16 %v88
    %v101 = vunpack.c.l.b16 %v89
    %v102 = vpack.c.b16 %v99, %v98
    %v103 = vpack.c.b16 %v101, %v100
    %v107 = vsel %vm65, %v85, 0
    %109 = vmatpush.bf16.msra.mxu0 0
    %110 = vmatpush.bf16.msra.mxu0 0
    %111 = vmatpush.bf16.msra.mxu0 0
    %112 = vmatpush.bf16.msra.mxu0 0
    %113 = vmatpush.bf16.msra.mxu0 0
    %114 = vmatpush.bf16.msra.mxu0 0
    %115 = vmatpush.bf16.msra.mxu0 %v103
    %116 = vmatpush.bf16.msra.mxu0 %v102
    %117 = vmatmul.bf16.gmra.mxu0 %v107
    %v118 = vpop.f32.mrf.mxu0
    %v119 = vadd.f32 %v92, %v118
    %v120 = vpop.f32.mrf.mxu0
    %v121 = vadd.f32 %v92, %v120
    %122 = vdwg.mxu0
    %vm123 = vcmask 7168
    %v124 = vsel %vm123, %v119, -inf
    %v125 = vrot.slane %v124, 4
    %v126 = vmax.f32 %v124, %v125
    %v127 = vrot.slane %v126, 2
    %v128 = vmax.f32 %v126, %v127
    %v129 = vrot.slane %v128, 1
    %v130 = vmax.f32 %v128, %v129
    %v131 = vsel %vm123, %v121, -inf
    %v132 = vrot.slane %v131, 4
    %v133 = vmax.f32 %v131, %v132
    %v134 = vrot.slane %v133, 2
    %v135 = vmax.f32 %v133, %v134
    %v136 = vrot.slane %v135, 1
    %v137 = vmax.f32 %v135, %v136
    %v138 = vsub.f32 %v119, %v130
    %v139 = vsub.f32 %v121, %v137
    %v140 = vmul.f32 %v138, 1.442695
    %v141 = vpow.pop %v140
    %v142 = vmul.f32 %v139, 1.442695
    %v143 = vpow.pop %v142
    %v144 = vsel %vm123, %v141, 0.0
    %v145 = vrot.slane %v144, 4
    %v146 = vadd.f32 %v144, %v145
    %v147 = vrot.slane %v146, 2
    %v148 = vadd.f32 %v146, %v147
    %v149 = vrot.slane %v148, 1
    %v150 = vadd.f32 %v148, %v149
    %v151 = vsel %vm123, %v143, 0.0
    %v152 = vrot.slane %v151, 4
    %v153 = vadd.f32 %v151, %v152
    %v154 = vrot.slane %v153, 2
    %v155 = vadd.f32 %v153, %v154
    %v156 = vrot.slane %v155, 1
    %v157 = vadd.f32 %v155, %v156
    %v158 = vrcp.pop %v150
    %v159 = vrcp.pop %v157
    %v160 = vmul.f32 %v141, %v158
    %v161 = vmul.f32 %v143, %v159
    %163 = vset.pattern.permute.xlu0 0
    %164 = vperm.xlu0 %163, %v160
    %v165 = vpop.permute.xlu0 %164
    %168 = vset.pattern.permute.xlu0 0
    %169 = vperm.xlu0 %168, %v161
    %v170 = vpop.permute.xlu0 %169
    %v172 = vmul.f32 %v42, %v165
    %v173 = vmul.f32 %v43, %v170
    %v174 = vsel %vm65, %v172, 0.0
    %v175 = vrot.slane %v174, 4
    %v176 = vadd.f32 %v174, %v175
    %v177 = vrot.slane %v176, 2
    %v178 = vadd.f32 %v176, %v177
    %v179 = vrot.slane %v178, 1
    %v180 = vadd.f32 %v178, %v179
    %v181 = vsel %vm65, %v173, 0.0
    %v182 = vrot.slane %v181, 4
    %v183 = vadd.f32 %v181, %v182
    %v184 = vrot.slane %v183, 2
    %v185 = vadd.f32 %v183, %v184
    %v186 = vrot.slane %v185, 1
    %v187 = vadd.f32 %v185, %v186
    %v188 = vpack.c.bf16 %v180, %v180
    %v189 = vpack.c.bf16 %v187, %v187
    %v190 = vld [vmem:[%s5] sm:$0xf]
    %v191 = vld [vmem:[%s5 + $0x4] sm:$0xf]
    %v192 = vld [vmem:[%s5 + $0x8] sm:$0xf]
    %v193 = vld [vmem:[%s5 + $0xc] sm:$0xf]
    %v194 = vld [vmem:[%s6] sm:$0x1]
    %v196 = vperm.slane %v194, 0
    %v200 = vunpack.c.l.b16 %v188
    %v201 = vunpack.c.l.b16 %v189
    %vm202 = vcmask 1041409
    %v203 = vsel %vm202, %v201, %v200
    %v204 = vpack.c.b16 %v203, %v203
    %v209 = vunpack.c.l.b16 %v190
    %v210 = vunpack.c.l.b16 %v191
    %v211 = vunpack.c.l.b16 %v192
    %v212 = vunpack.c.l.b16 %v193
    %v213 = vpack.c.b16 %v210, %v209
    %v214 = vpack.c.b16 %v212, %v211
    %v218 = vsel %vm65, %v204, 0
    %220 = vmatpush.bf16.msra.mxu0 0
    %221 = vmatpush.bf16.msra.mxu0 0
    %222 = vmatpush.bf16.msra.mxu0 0
    %223 = vmatpush.bf16.msra.mxu0 0
    %224 = vmatpush.bf16.msra.mxu0 0
    %225 = vmatpush.bf16.msra.mxu0 0
    %226 = vmatpush.bf16.msra.mxu0 %v214
    %227 = vmatpush.bf16.msra.mxu0 %v213
    %228 = vmatmul.bf16.gmra.mxu0 %v218
    %v229 = vpop.f32.mrf.mxu0
    %v230 = vadd.f32 %v196, %v229
    %v231 = vpop.f32.mrf.mxu0
    %232 = vdwg.mxu0
    %v233 = vld [vmem:[%s7] sm:$0x1]
    %v234 = vld [vmem:[%s8] sm:$0x1]
    %vm235 = vcmask 517120
    %v236 = vsel %vm235, %v230, 0.0
    %237 = vadd.xlane.f32.xlu0 %v236
    %v238 = vpop.xlane.xlu0 %237
    %v239 = vrcp.pop 64.0
    %v240 = vmul.f32 64.0, %v239
    %v241 = vsub.f32 1.0, %v240
    %v242 = vmul.f32 %v239, %v241
    %v243 = vadd.f32 %v239, %v242
    %vm244 = vweird.f32 %v239
    %v245 = vsel %vm244, %v239, %v243
    %v246 = vmul.f32 %v238, %v245
    %v247 = vsub.f32 %v230, %v246
    %v248 = vmul.f32 %v247, %v247
    %v249 = vsel %vm235, %v248, 0.0
    %250 = vadd.xlane.f32.xlu0 %v249
    %v251 = vpop.xlane.xlu0 %250
    %v252 = vmul.f32 %v251, %v245
    %v253 = vadd.f32 %v252, 1e-05
    %v254 = vrsqrt.pop %v253
    %v255 = vmul.f32 %v254, %v253
    %v256 = vmul.f32 %v255, %v254
    %v257 = vmul.f32 0.5, %v256
    %v258 = vsub.f32 1.5, %v257
    %v259 = vmul.f32 %v254, %v258
    %vm260 = vweird.f32 %v253
    %vm261 = vweird.f32 %v254
    %vm262 = vmor %vm260, %vm261
    %v263 = vsel %vm262, %v254, %v259
    %v264 = vmul.f32 %v247, %v263
    %v266 = vperm.slane %v233, 0
    %v268 = vmul.f32 %v264, %v266
    %v270 = vperm.slane %v234, 0
    %v272 = vadd.f32 %v268, %v270
    %v273 = vmax.f32 %v272, 0.0
    %v274 = vpack.c.bf16 %v273, %v273
    %v275 = vld [vmem:[%s9] sm:$0xf]
    %v276 = vld [vmem:[%s9 + $0x4] sm:$0xf]
    %v277 = vld [vmem:[%s9 + $0x8] sm:$0xf]
    %v278 = vld [vmem:[%s9 + $0xc] sm:$0xf]
    %v279 = vld [vmem:[%s9 + $0x10] sm:$0xf]
    %v280 = vld [vmem:[%s9 + $0x14] sm:$0xf]
    %v281 = vld [vmem:[%s9 + $0x18] sm:$0xf]
    %v282 = vld [vmem:[%s9 + $0x1c] sm:$0xf]
    %v283 = vld [vmem:[%s10] sm:$0x1]
    %v285 = vperm.slane %v283, 0
    %v295 = vunpack.c.l.b16 %v275
    %v296 = vunpack.c.l.b16 %v276
    %v297 = vunpack.c.l.b16 %v277
    %v298 = vunpack.c.l.b16 %v278
    %v299 = vunpack.c.l.b16 %v279
    %v300 = vunpack.c.l.b16 %v280
    %v301 = vunpack.c.l.b16 %v281
    %v302 = vunpack.c.l.b16 %v282
    %v303 = vpack.c.b16 %v296, %v295
    %v304 = vpack.c.b16 %v298, %v297
    %v305 = vpack.c.b16 %v300, %v299
    %v306 = vpack.c.b16 %v302, %v301
    %vm311 = vcmask 523264
    %v313 = vsel %vm311, %v274, 0
    %315 = vmatpush.bf16.msra.mxu0 0
    %316 = vmatpush.bf16.msra.mxu0 0
    %317 = vmatpush.bf16.msra.mxu0 0
    %318 = vmatpush.bf16.msra.mxu0 0
    %319 = vmatpush.bf16.msra.mxu0 %v306
    %320 = vmatpush.bf16.msra.mxu0 %v305
    %321 = vmatpush.bf16.msra.mxu0 %v304
    %322 = vmatpush.bf16.msra.mxu0 %v303
    %323 = vmatmul.bf16.gmra.mxu0 %v313
    %v324 = vpop.f32.mrf.mxu0
    %v325 = vadd.f32 %v285, %v324
    %v326 = vpop.f32.mrf.mxu0
    %327 = vdwg.mxu0
    %vm328 = vcmask 25600
    %329 = vst.msk [vmem:[#allocation3] sm:$0x3] %vm328, %v325
    // Predicated region
    $region46: #{streaming_conformer_forward.7} parent=1 // pred_check
      _
    $region47: #{streaming_conformer_forward.7} parent=1 // pred_check_branch
      %331 = sbr.rel (0) target = $region49
    $region48: #{streaming_conformer_forward.7} parent=1 // pred_region
      %333 = vsyncadd [#allocation4], 0
      %s335 = sshll.u32 [#allocation3], 4
      %s336 = int_to_ptr.vmem [resolvable:$true] %s335
      %s337 = sshll.u32 %s11, 4
      %s338 = int_to_ptr.hbm [resolvable:$true] %s337
      %340 = dma.vmem_to_hbm [thread:$0]  %s336, 32, %s338, [#allocation4]
    $region49: #{streaming_conformer_forward.7} parent=1 // pred_fallthru
      _
    // Predicated region
    $region50: #{streaming_conformer_forward.7} parent=1 // pred_check
      _
    $region51: #{streaming_conformer_forward.7} parent=1 // pred_check_branch
      %342 = sbr.rel (0) target = $region53
    $region52: #{streaming_conformer_forward.7} parent=1 // pred_region
      %344 = dma.done [#allocation4], 32
    $region53: #{streaming_conformer_forward.7} parent=1 // pred_fallthru
      _
    %345 = vsyncpa [#allocation4], 1

// kernel: streaming_conformer_forward.6
$region0: #{streaming_conformer_forward.6}
  #allocation0 [shape = 'u32[]', space=smem, size = 0x4, offset = 0x4, fixed_abs, tag = 'smem constant byte address 0x4 - core index']
  #allocation1 [shape = 'u32[72,128]{1,0:T(1,128)}', space=vmem, size = 0x9000, scoped, tag = 'internal scratch']
  #allocation2 [shape = 'f32[2,22,64]{2,1,0:T(8,128)}', space=vmem, size = 0x6000, scoped, tag = 'scratch operand']
  %s0 = inlined_call_operand.smem [shape: u32[42], index: -1, kind: input, shape index: {}]
  %s1 = sld [smem:[%s0]]
  %s2 = scalar_lea.smem %s0, 1
  %s3 = sld [smem:[%s2]]
  %s4 = scalar_lea.smem %s0, 2
  %s5 = sld [smem:[%s4]]
  %s6 = scalar_lea.smem %s0, 3
  %s7 = sld [smem:[%s6]]
  %s8 = scalar_lea.smem %s0, 4
  %s9 = sld [smem:[%s8]]
  %s10 = scalar_lea.smem %s0, 5
  %s11 = sld [smem:[%s10]]
  %s12 = scalar_lea.smem %s0, 6
  %s13 = sld [smem:[%s12]]
  %s14 = scalar_lea.smem %s0, 7
  %s15 = sld [smem:[%s14]]
  %s16 = scalar_lea.smem %s0, 8
  %s17 = sld [smem:[%s16]]
  %s18 = scalar_lea.smem %s0, 9
  %s19 = sld [smem:[%s18]]
  %s20 = scalar_lea.smem %s0, 10
  %s21 = sld [smem:[%s20]]
  %s22 = scalar_lea.smem %s0, 11
  %s23 = sld [smem:[%s22]]
  %s24 = scalar_lea.smem %s0, 12
  %s25 = sld [smem:[%s24]]
  %s26 = scalar_lea.smem %s0, 13
  %s27 = sld [smem:[%s26]]
  %s28 = scalar_lea.smem %s0, 14
  %s29 = sld [smem:[%s28]]
  %s30 = scalar_lea.smem %s0, 15
  %s31 = sld [smem:[%s30]]
  %s32 = scalar_lea.smem %s0, 16
  %s33 = sld [smem:[%s32]]
  %s34 = scalar_lea.smem %s0, 17
  %s35 = sld [smem:[%s34]]
  %s36 = scalar_lea.smem %s0, 18
  %s37 = sld [smem:[%s36]]
  %s38 = scalar_lea.smem %s0, 19
  %s39 = sld [smem:[%s38]]
  %s40 = scalar_lea.smem %s0, 20
  %s41 = sld [smem:[%s40]]
  %s42 = scalar_lea.smem %s0, 21
  %s43 = sld [smem:[%s42]]
  %s44 = scalar_lea.smem %s0, 22
  %s45 = sld [smem:[%s44]]
  %s46 = scalar_lea.smem %s0, 23
  %s47 = sld [smem:[%s46]]
  %s48 = scalar_lea.smem %s0, 24
  %s49 = sld [smem:[%s48]]
  %s50 = scalar_lea.smem %s0, 25
  %s51 = sld [smem:[%s50]]
  %s52 = scalar_lea.smem %s0, 26
  %s53 = sld [smem:[%s52]]
  %s54 = scalar_lea.smem %s0, 27
  %s55 = sld [smem:[%s54]]
  %s56 = scalar_lea.smem %s0, 28
  %s57 = sld [smem:[%s56]]
  %s58 = scalar_lea.smem %s0, 29
  %s59 = sld [smem:[%s58]]
  %s60 = scalar_lea.smem %s0, 30
  %s61 = sld [smem:[%s60]]
  %s62 = scalar_lea.smem %s0, 31
  %s63 = sld [smem:[%s62]]
  %s64 = scalar_lea.smem %s0, 32
  %s65 = sld [smem:[%s64]]
  %s66 = scalar_lea.smem %s0, 33
  %s67 = sld [smem:[%s66]]
  %s68 = scalar_lea.smem %s0, 34
  %s69 = sld [smem:[%s68]]
  %s70 = scalar_lea.smem %s0, 35
  %s71 = sld [smem:[%s70]]
  %s72 = scalar_lea.smem %s0, 36
  %s73 = sld [smem:[%s72]]
  %s74 = scalar_lea.smem %s0, 37
  %s75 = sld [smem:[%s74]]
  %s76 = scalar_lea.smem %s0, 38
  %s77 = sld [smem:[%s76]]
  %s78 = scalar_lea.smem %s0, 39
  %s79 = sld [smem:[%s78]]
  %s80 = scalar_lea.smem %s0, 40
  %s81 = sld [smem:[%s80]]
  %s82 = scalar_lea.smem %s0, 41
  %s83 = sld [smem:[%s82]]
  %s84 = sld [smem:[#allocation0]]
  $region226: #{streaming_conformer_forward.6} parent=0
    _
  %s86 = ssub.s32 1, %s84
  %s87 = scalar_select 0, %s86, %s84
  $region1: #{streaming_conformer_forward.6} parent=0
    #allocation3 [shape = 'u8[512]{0}', space=vmem, size = 0x400, scoped, tag = 'input window, operand 24, single buffered']
    #allocation4 [shape = 's32[1]{0}', space=sflag, size = 0x4, scoped, tag = 'scoped memory for streaming_conformer_forward.6']
    #allocation5 [shape = 'u8[245760]{0}', space=vmem, size = 0x3c000, scoped, tag = 'input window, operand 25, single buffered']
    #allocation6 [shape = 's32[1]{0}', space=sflag, size = 0x4, scoped, tag = 'scoped memory for streaming_conformer_forward.6']
    #allocation7 [shape = 'u8[512]{0}', space=vmem, size = 0x400, scoped, tag = 'input window, operand 26, single buffered']
    #allocation8 [shape = 'u8[512]{0}', space=vmem, size = 0x400, scoped, tag = 'input window, operand 27, single buffered']
    #allocation9 [shape = 's32[1]{0}', space=sflag, size = 0x4, scoped, tag = 'scoped memory for streaming_conformer_forward.6']
    #allocation10 [shape = 'u8[512]{0}', space=vmem, size = 0x400, scoped, tag = 'input window, operand 28, single buffered']
    #allocation11 [shape = 'u8[512]{0}', space=vmem, size = 0x400, scoped, tag = 'input window, operand 30, single buffered']
    #allocation12 [shape = 's32[1]{0}', space=sflag, size = 0x4, scoped, tag = 'scoped memory for streaming_conformer_forward.6']
    #allocation13 [shape = 'u8[512]{0}', space=vmem, size = 0x400, scoped, tag = 'input window, operand 31, single buffered']
    #allocation14 [shape = 'u8[512]{0}', space=vmem, size = 0x400, scoped, tag = 'input window, operand 32, single buffered']
    #allocation15 [shape = 's32[1]{0}', space=sflag, size = 0x4, scoped, tag = 'scoped memory for streaming_conformer_forward.6']
    #allocation16 [shape = 'u8[512]{0}', space=vmem, size = 0x400, scoped, tag = 'input window, operand 34, single buffered']
    #allocation17 [shape = 'u8[512]{0}', space=vmem, size = 0x400, scoped, tag = 'input window, operand 36, single buffered']
    #allocation18 [shape = 's32[1]{0}', space=sflag, size = 0x4, scoped, tag = 'scoped memory for streaming_conformer_forward.6']
    #allocation19 [shape = 'u8[512]{0}', space=vmem, size = 0x400, scoped, tag = 'input window, operand 38, single buffered']
    #allocation20 [shape = 'u8[512]{0}', space=vmem, size = 0x400, scoped, tag = 'input window, operand 39, single buffered']
    #allocation21 [shape = 's32[1]{0}', space=sflag, size = 0x4, scoped, tag = 'scoped memory for streaming_conformer_forward.6']
    #allocation22 [shape = 'u8[512]{0}', space=vmem, size = 0x400, scoped, tag = 'input window, operand 40, single buffered']
    %88 = vsyncpa [#allocation4], 0
    %89 = vsyncpa [#allocation6], 0
    %90 = vsyncpa [#allocation9], 0
    %91 = vsyncpa [#allocation12], 0
    %92 = vsyncpa [#allocation15], 0
    %93 = vsyncpa [#allocation18], 0
    %94 = vsyncpa [#allocation21], 0
    // Predicated region
    $region2: #{streaming_conformer_forward.6} parent=1 // pred_check
      _
    $region3: #{streaming_conformer_forward.6} parent=1 // pred_check_branch
      %96 = sbr.rel (0) target = $region5
    $region4: #{streaming_conformer_forward.6} parent=1 // pred_region
      _
    $region5: #{streaming_conformer_forward.6} parent=1 // pred_fallthru
      _
    // Predicated region
    $region6: #{streaming_conformer_forward.6} parent=1 // pred_check
      _
    $region7: #{streaming_conformer_forward.6} parent=1 // pred_check_branch
      %98 = sbr.rel (0) target = $region9
    $region8: #{streaming_conformer_forward.6} parent=1 // pred_region
      _
    $region9: #{streaming_conformer_forward.6} parent=1 // pred_fallthru
      _
    // Predicated region
    $region10: #{streaming_conformer_forward.6} parent=1 // pred_check
      _
    $region11: #{streaming_conformer_forward.6} parent=1 // pred_check_branch
      %100 = sbr.rel (0) target = $region13
    $region12: #{streaming_conformer_forward.6} parent=1 // pred_region
      _
    $region13: #{streaming_conformer_forward.6} parent=1 // pred_fallthru
      _
    // Predicated region
    $region14: #{streaming_conformer_forward.6} parent=1 // pred_check
      _
    $region15: #{streaming_conformer_forward.6} parent=1 // pred_check_branch
      %102 = sbr.rel (0) target = $region17
    $region16: #{streaming_conformer_forward.6} parent=1 // pred_region
      _
    $region17: #{streaming_conformer_forward.6} parent=1 // pred_fallthru
      _
    // Predicated region
    $region18: #{streaming_conformer_forward.6} parent=1 // pred_check
      _
    $region19: #{streaming_conformer_forward.6} parent=1 // pred_check_branch
      %104 = sbr.rel (0) target = $region21
    $region20: #{streaming_conformer_forward.6} parent=1 // pred_region
      _
    $region21: #{streaming_conformer_forward.6} parent=1 // pred_fallthru
      _
    // Predicated region
    $region22: #{streaming_conformer_forward.6} parent=1 // pred_check
      _
    $region23: #{streaming_conformer_forward.6} parent=1 // pred_check_branch
      %106 = sbr.rel (0) target = $region25
    $region24: #{streaming_conformer_forward.6} parent=1 // pred_region
      _
    $region25: #{streaming_conformer_forward.6} parent=1 // pred_fallthru
      _
    // Predicated region
    $region26: #{streaming_conformer_forward.6} parent=1 // pred_check
      _
    $region27: #{streaming_conformer_forward.6} parent=1 // pred_check_branch
      %108 = sbr.rel (0) target = $region29
    $region28: #{streaming_conformer_forward.6} parent=1 // pred_region
      _
    $region29: #{streaming_conformer_forward.6} parent=1 // pred_fallthru
      _
    // Predicated region
    $region30: #{streaming_conformer_forward.6} parent=1 // pred_check
      _
    $region31: #{streaming_conformer_forward.6} parent=1 // pred_check_branch
      %110 = sbr.rel (0) target = $region33
    $region32: #{streaming_conformer_forward.6} parent=1 // pred_region
      _
    $region33: #{streaming_conformer_forward.6} parent=1 // pred_fallthru
      _
    // Predicated region
    $region34: #{streaming_conformer_forward.6} parent=1 // pred_check
      _
    $region35: #{streaming_conformer_forward.6} parent=1 // pred_check_branch
      %112 = sbr.rel (0) target = $region37
    $region36: #{streaming_conformer_forward.6} parent=1 // pred_region
      _
    $region37: #{streaming_conformer_forward.6} parent=1 // pred_fallthru
      _
    // Predicated region
    $region38: #{streaming_conformer_forward.6} parent=1 // pred_check
      _
    $region39: #{streaming_conformer_forward.6} parent=1 // pred_check_branch
      %114 = sbr.rel (0) target = $region41
    $region40: #{streaming_conformer_forward.6} parent=1 // pred_region
      _
    $region41: #{streaming_conformer_forward.6} parent=1 // pred_fallthru
      _
    // Predicated region
    $region42: #{streaming_conformer_forward.6} parent=1 // pred_check
      _
    $region43: #{streaming_conformer_forward.6} parent=1 // pred_check_branch
      %116 = sbr.rel (0) target = $region45
    $region44: #{streaming_conformer_forward.6} parent=1 // pred_region
      _
    $region45: #{streaming_conformer_forward.6} parent=1 // pred_fallthru
      _
    // Predicated region
    $region46: #{streaming_conformer_forward.6} parent=1 // pred_check
      _
    $region47: #{streaming_conformer_forward.6} parent=1 // pred_check_branch
      %118 = sbr.rel (0) target = $region49
    $region48: #{streaming_conformer_forward.6} parent=1 // pred_region
      _
    $region49: #{streaming_conformer_forward.6} parent=1 // pred_fallthru
      _
    // Predicated region
    $region50: #{streaming_conformer_forward.6} parent=1 // pred_check
      _
    $region51: #{streaming_conformer_forward.6} parent=1 // pred_check_branch
      %120 = sbr.rel (0) target = $region53
    $region52: #{streaming_conformer_forward.6} parent=1 // pred_region
      _
    $region53: #{streaming_conformer_forward.6} parent=1 // pred_fallthru
      _
    // Predicated region
    $region54: #{streaming_conformer_forward.6} parent=1 // pred_check
      _
    $region55: #{streaming_conformer_forward.6} parent=1 // pred_check_branch
      %122 = sbr.rel (0) target = $region57
    $region56: #{streaming_conformer_forward.6} parent=1 // pred_region
      _
    $region57: #{streaming_conformer_forward.6} parent=1 // pred_fallthru
      _
    // Predicated region
    $region58: #{streaming_conformer_forward.6} parent=1 // pred_check
      _
    $region59: #{streaming_conformer_forward.6} parent=1 // pred_check_branch
      %124 = sbr.rel (0) target = $region61
    $region60: #{streaming_conformer_forward.6} parent=1 // pred_region
      _
    $region61: #{streaming_conformer_forward.6} parent=1 // pred_fallthru
      _
    // Predicated region
    $region62: #{streaming_conformer_forward.6} parent=1 // pred_check
      _
    $region63: #{streaming_conformer_forward.6} parent=1 // pred_check_branch
      %126 = sbr.rel (0) target = $region65
    $region64: #{streaming_conformer_forward.6} parent=1 // pred_region
      _
    $region65: #{streaming_conformer_forward.6} parent=1 // pred_fallthru
      _
    // Predicated region
    $region66: #{streaming_conformer_forward.6} parent=1 // pred_check
      _
    $region67: #{streaming_conformer_forward.6} parent=1 // pred_check_branch
      %128 = sbr.rel (0) target = $region69
    $region68: #{streaming_conformer_forward.6} parent=1 // pred_region
      _
    $region69: #{streaming_conformer_forward.6} parent=1 // pred_fallthru
      _
    // Predicated region
    $region70: #{streaming_conformer_forward.6} parent=1 // pred_check
      _
    $region71: #{streaming_conformer_forward.6} parent=1 // pred_check_branch
      %130 = sbr.rel (0) target = $region73
    $region72: #{streaming_conformer_forward.6} parent=1 // pred_region
      _
    $region73: #{streaming_conformer_forward.6} parent=1 // pred_fallthru
      _
    // Predicated region
    $region74: #{streaming_conformer_forward.6} parent=1 // pred_check
      _
    $region75: #{streaming_conformer_forward.6} parent=1 // pred_check_branch
      %132 = sbr.rel (0) target = $region77
    $region76: #{streaming_conformer_forward.6} parent=1 // pred_region
      _
    $region77: #{streaming_conformer_forward.6} parent=1 // pred_fallthru
      _
    // Predicated region
    $region78: #{streaming_conformer_forward.6} parent=1 // pred_check
      _
    $region79: #{streaming_conformer_forward.6} parent=1 // pred_check_branch
      %134 = sbr.rel (0) target = $region81
    $region80: #{streaming_conformer_forward.6} parent=1 // pred_region
      _
    $region81: #{streaming_conformer_forward.6} parent=1 // pred_fallthru
      _
    // Predicated region
    $region82: #{streaming_conformer_forward.6} parent=1 // pred_check
      _
    $region83: #{streaming_conformer_forward.6} parent=1 // pred_check_branch
      %136 = sbr.rel (0) target = $region85
    $region84: #{streaming_conformer_forward.6} parent=1 // pred_region
      _
    $region85: #{streaming_conformer_forward.6} parent=1 // pred_fallthru
      _
    // Predicated region
    $region86: #{streaming_conformer_forward.6} parent=1 // pred_check
      _
    $region87: #{streaming_conformer_forward.6} parent=1 // pred_check_branch
      %138 = sbr.rel (0) target = $region89
    $region88: #{streaming_conformer_forward.6} parent=1 // pred_region
      _
    $region89: #{streaming_conformer_forward.6} parent=1 // pred_fallthru
      _
    // Predicated region
    $region90: #{streaming_conformer_forward.6} parent=1 // pred_check
      _
    $region91: #{streaming_conformer_forward.6} parent=1 // pred_check_branch
      %140 = sbr.rel (0) target = $region93
    $region92: #{streaming_conformer_forward.6} parent=1 // pred_region
      _
    $region93: #{streaming_conformer_forward.6} parent=1 // pred_fallthru
      _
    // Predicated region
    $region94: #{streaming_conformer_forward.6} parent=1 // pred_check
      _
    $region95: #{streaming_conformer_forward.6} parent=1 // pred_check_branch
      %142 = sbr.rel (0) target = $region97
    $region96: #{streaming_conformer_forward.6} parent=1 // pred_region
      _
    $region97: #{streaming_conformer_forward.6} parent=1 // pred_fallthru
      _
    // Predicated region
    $region98: #{streaming_conformer_forward.6} parent=1 // pred_check
      _
    $region99: #{streaming_conformer_forward.6} parent=1 // pred_check_branch
      %144 = sbr.rel (0) target = $region101
    $region100: #{streaming_conformer_forward.6} parent=1 // pred_region
      %146 = vsyncadd [#allocation4], 0
      %s148 = sshll.u32 %s49, 4
      %s149 = int_to_ptr.hbm [resolvable:$true] %s148
      %s150 = sshll.u32 [#allocation3], 4
      %s151 = int_to_ptr.vmem [resolvable:$true] %s150
      %153 = dma.hbm_to_vmem [thread:$0]  %s149, 16, %s151, [#allocation4]
    $region101: #{streaming_conformer_forward.6} parent=1 // pred_fallthru
      _
    // Predicated region
    $region102: #{streaming_conformer_forward.6} parent=1 // pred_check
      _
    $region103: #{streaming_conformer_forward.6} parent=1 // pred_check_branch
      %155 = sbr.rel (0) target = $region105
    $region104: #{streaming_conformer_forward.6} parent=1 // pred_region
      %157 = vsyncadd [#allocation6], 0
      %s158 = sshll.u32 %s51, 4
      %s159 = int_to_ptr.hbm [resolvable:$true] %s158
      %s160 = sshll.u32 [#allocation5], 4
      %s161 = int_to_ptr.vmem [resolvable:$true] %s160
      %166 = dma.hbm_to_vmem [thread:$0]  %s159, 7680, %s161, [#allocation6], 64, 64, 4
    $region105: #{streaming_conformer_forward.6} parent=1 // pred_fallthru
      _
    // Predicated region
    $region106: #{streaming_conformer_forward.6} parent=1 // pred_check
      _
    $region107: #{streaming_conformer_forward.6} parent=1 // pred_check_branch
      %168 = sbr.rel (0) target = $region109
    $region108: #{streaming_conformer_forward.6} parent=1 // pred_region
      %170 = vsyncadd [#allocation6], 0
      %s172 = sshll.u32 %s53, 4
      %s173 = int_to_ptr.hbm [resolvable:$true] %s172
      %s174 = sshll.u32 [#allocation7], 4
      %s175 = int_to_ptr.vmem [resolvable:$true] %s174
      %177 = dma.hbm_to_vmem [thread:$0]  %s173, 16, %s175, [#allocation6]
    $region109: #{streaming_conformer_forward.6} parent=1 // pred_fallthru
      _
    // Predicated region
    $region110: #{streaming_conformer_forward.6} parent=1 // pred_check
      _
    $region111: #{streaming_conformer_forward.6} parent=1 // pred_check_branch
      %179 = sbr.rel (0) target = $region113
    $region112: #{streaming_conformer_forward.6} parent=1 // pred_region
      %181 = vsyncadd [#allocation9], 0
      %s183 = sshll.u32 %s55, 4
      %s184 = int_to_ptr.hbm [resolvable:$true] %s183
      %s185 = sshll.u32 [#allocation8], 4
      %s186 = int_to_ptr.vmem [resolvable:$true] %s185
      %188 = dma.hbm_to_vmem [thread:$0]  %s184, 16, %s186, [#allocation9]
    $region113: #{streaming_conformer_forward.6} parent=1 // pred_fallthru
      _
    // Predicated region
    $region114: #{streaming_conformer_forward.6} parent=1 // pred_check
      _
    $region115: #{streaming_conformer_forward.6} parent=1 // pred_check_branch
      %190 = sbr.rel (0) target = $region117
    $region116: #{streaming_conformer_forward.6} parent=1 // pred_region
      %192 = vsyncadd [#allocation9], 0
      %s194 = sshll.u32 %s57, 4
      %s195 = int_to_ptr.hbm [resolvable:$true] %s194
      %s196 = sshll.u32 [#allocation10], 4
      %s197 = int_to_ptr.vmem [resolvable:$true] %s196
      %199 = dma.hbm_to_vmem [thread:$0]  %s195, 16, %s197, [#allocation9]
    $region117: #{streaming_conformer_forward.6} parent=1 // pred_fallthru
      _
    // Predicated region
    $region118: #{streaming_conformer_forward.6} parent=1 // pred_check
      _
    $region119: #{streaming_conformer_forward.6} parent=1 // pred_check_branch
      %201 = sbr.rel (0) target = $region121
    $region120: #{streaming_conformer_forward.6} parent=1 // pred_region
      _
    $region121: #{streaming_conformer_forward.6} parent=1 // pred_fallthru
      _
    // Predicated region
    $region122: #{streaming_conformer_forward.6} parent=1 // pred_check
      _
    $region123: #{streaming_conformer_forward.6} parent=1 // pred_check_branch
      %203 = sbr.rel (0) target = $region125
    $region124: #{streaming_conformer_forward.6} parent=1 // pred_region
      %205 = vsyncadd [#allocation12], 0
      %s207 = sshll.u32 %s61, 4
      %s208 = int_to_ptr.hbm [resolvable:$true] %s207
      %s209 = sshll.u32 [#allocation11], 4
      %s210 = int_to_ptr.vmem [resolvable:$true] %s209
      %212 = dma.hbm_to_vmem [thread:$0]  %s208, 16, %s210, [#allocation12]
    $region125: #{streaming_conformer_forward.6} parent=1 // pred_fallthru
      _
    // Predicated region
    $region126: #{streaming_conformer_forward.6} parent=1 // pred_check
      _
    $region127: #{streaming_conformer_forward.6} parent=1 // pred_check_branch
      %214 = sbr.rel (0) target = $region129
    $region128: #{streaming_conformer_forward.6} parent=1 // pred_region
      %216 = vsyncadd [#allocation12], 0
      %s218 = sshll.u32 %s63, 4
      %s219 = int_to_ptr.hbm [resolvable:$true] %s218
      %s220 = sshll.u32 [#allocation13], 4
      %s221 = int_to_ptr.vmem [resolvable:$true] %s220
      %223 = dma.hbm_to_vmem [thread:$0]  %s219, 16, %s221, [#allocation12]
    $region129: #{streaming_conformer_forward.6} parent=1 // pred_fallthru
      _
    // Predicated region
    $region130: #{streaming_conformer_forward.6} parent=1 // pred_check
      _
    $region131: #{streaming_conformer_forward.6} parent=1 // pred_check_branch
      %225 = sbr.rel (0) target = $region133
    $region132: #{streaming_conformer_forward.6} parent=1 // pred_region
      %227 = vsyncadd [#allocation15], 0
      %s229 = sshll.u32 %s65, 4
      %s230 = int_to_ptr.hbm [resolvable:$true] %s229
      %s231 = sshll.u32 [#allocation14], 4
      %s232 = int_to_ptr.vmem [resolvable:$true] %s231
      %234 = dma.hbm_to_vmem [thread:$0]  %s230, 16, %s232, [#allocation15]
    $region133: #{streaming_conformer_forward.6} parent=1 // pred_fallthru
      _
    // Predicated region
    $region134: #{streaming_conformer_forward.6} parent=1 // pred_check
      _
    $region135: #{streaming_conformer_forward.6} parent=1 // pred_check_branch
      %236 = sbr.rel (0) target = $region137
    $region136: #{streaming_conformer_forward.6} parent=1 // pred_region
      _
    $region137: #{streaming_conformer_forward.6} parent=1 // pred_fallthru
      _
    // Predicated region
    $region138: #{streaming_conformer_forward.6} parent=1 // pred_check
      _
    $region139: #{streaming_conformer_forward.6} parent=1 // pred_check_branch
      %238 = sbr.rel (0) target = $region141
    $region140: #{streaming_conformer_forward.6} parent=1 // pred_region
      %240 = vsyncadd [#allocation15], 0
      %s242 = sshll.u32 %s69, 4
      %s243 = int_to_ptr.hbm [resolvable:$true] %s242
      %s244 = sshll.u32 [#allocation16], 4
      %s245 = int_to_ptr.vmem [resolvable:$true] %s244
      %247 = dma.hbm_to_vmem [thread:$0]  %s243, 16, %s245, [#allocation15]
    $region141: #{streaming_conformer_forward.6} parent=1 // pred_fallthru
      _
    // Predicated region
    $region142: #{streaming_conformer_forward.6} parent=1 // pred_check
      _
    $region143: #{streaming_conformer_forward.6} parent=1 // pred_check_branch
      %249 = sbr.rel (0) target = $region145
    $region144: #{streaming_conformer_forward.6} parent=1 // pred_region
      _
    $region145: #{streaming_conformer_forward.6} parent=1 // pred_fallthru
      _
    // Predicated region
    $region146: #{streaming_conformer_forward.6} parent=1 // pred_check
      _
    $region147: #{streaming_conformer_forward.6} parent=1 // pred_check_branch
      %251 = sbr.rel (0) target = $region149
    $region148: #{streaming_conformer_forward.6} parent=1 // pred_region
      %253 = vsyncadd [#allocation18], 0
      %s255 = sshll.u32 %s73, 4
      %s256 = int_to_ptr.hbm [resolvable:$true] %s255
      %s257 = sshll.u32 [#allocation17], 4
      %s258 = int_to_ptr.vmem [resolvable:$true] %s257
      %260 = dma.hbm_to_vmem [thread:$0]  %s256, 16, %s258, [#allocation18]
    $region149: #{streaming_conformer_forward.6} parent=1 // pred_fallthru
      _
    // Predicated region
    $region150: #{streaming_conformer_forward.6} parent=1 // pred_check
      _
    $region151: #{streaming_conformer_forward.6} parent=1 // pred_check_branch
      %262 = sbr.rel (0) target = $region153
    $region152: #{streaming_conformer_forward.6} parent=1 // pred_region
      _
    $region153: #{streaming_conformer_forward.6} parent=1 // pred_fallthru
      _
    // Predicated region
    $region154: #{streaming_conformer_forward.6} parent=1 // pred_check
      _
    $region155: #{streaming_conformer_forward.6} parent=1 // pred_check_branch
      %264 = sbr.rel (0) target = $region157
    $region156: #{streaming_conformer_forward.6} parent=1 // pred_region
      %266 = vsyncadd [#allocation18], 0
      %s268 = sshll.u32 %s77, 4
      %s269 = int_to_ptr.hbm [resolvable:$true] %s268
      %s270 = sshll.u32 [#allocation19], 4
      %s271 = int_to_ptr.vmem [resolvable:$true] %s270
      %273 = dma.hbm_to_vmem [thread:$0]  %s269, 16, %s271, [#allocation18]
    $region157: #{streaming_conformer_forward.6} parent=1 // pred_fallthru
      _
    // Predicated region
    $region158: #{streaming_conformer_forward.6} parent=1 // pred_check
      _
    $region159: #{streaming_conformer_forward.6} parent=1 // pred_check_branch
      %275 = sbr.rel (0) target = $region161
    $region160: #{streaming_conformer_forward.6} parent=1 // pred_region
      %277 = vsyncadd [#allocation21], 0
      %s279 = sshll.u32 %s79, 4
      %s280 = int_to_ptr.hbm [resolvable:$true] %s279
      %s281 = sshll.u32 [#allocation20], 4
      %s282 = int_to_ptr.vmem [resolvable:$true] %s281
      %284 = dma.hbm_to_vmem [thread:$0]  %s280, 16, %s282, [#allocation21]
    $region161: #{streaming_conformer_forward.6} parent=1 // pred_fallthru
      _
    // Predicated region
    $region162: #{streaming_conformer_forward.6} parent=1 // pred_check
      _
    $region163: #{streaming_conformer_forward.6} parent=1 // pred_check_branch
      %286 = sbr.rel (0) target = $region165
    $region164: #{streaming_conformer_forward.6} parent=1 // pred_region
      %288 = vsyncadd [#allocation21], 0
      %s290 = sshll.u32 %s81, 4
      %s291 = int_to_ptr.hbm [resolvable:$true] %s290
      %s292 = sshll.u32 [#allocation22], 4
      %s293 = int_to_ptr.vmem [resolvable:$true] %s292
      %295 = dma.hbm_to_vmem [thread:$0]  %s291, 16, %s293, [#allocation21]
    $region165: #{streaming_conformer_forward.6} parent=1 // pred_fallthru
      _
    // Predicated region
    $region166: #{streaming_conformer_forward.6} parent=1 // pred_check
      _
    $region167: #{streaming_conformer_forward.6} parent=1 // pred_check_branch
      %297 = sbr.rel (0) target = $region169
    $region168: #{streaming_conformer_forward.6} parent=1 // pred_region
      %299 = dma.done [#allocation4], 16
    $region169: #{streaming_conformer_forward.6} parent=1 // pred_fallthru
      _
    // Predicated region
    $region170: #{streaming_conformer_forward.6} parent=1 // pred_check
      _
    $region171: #{streaming_conformer_forward.6} parent=1 // pred_check_branch
      %301 = sbr.rel (0) target = $region173
    $region172: #{streaming_conformer_forward.6} parent=1 // pred_region
      %303 = dma.done [#allocation6], 7680
    $region173: #{streaming_conformer_forward.6} parent=1 // pred_fallthru
      _
    // Predicated region
    $region174: #{streaming_conformer_forward.6} parent=1 // pred_check
      _
    $region175: #{streaming_conformer_forward.6} parent=1 // pred_check_branch
      %305 = sbr.rel (0) target = $region177
    $region176: #{streaming_conformer_forward.6} parent=1 // pred_region
      %307 = dma.done [#allocation6], 16
    $region177: #{streaming_conformer_forward.6} parent=1 // pred_fallthru
      _
    // Predicated region
    $region178: #{streaming_conformer_forward.6} parent=1 // pred_check
      _
    $region179: #{streaming_conformer_forward.6} parent=1 // pred_check_branch
      %309 = sbr.rel (0) target = $region181
    $region180: #{streaming_conformer_forward.6} parent=1 // pred_region
      %311 = dma.done [#allocation9], 16
    $region181: #{streaming_conformer_forward.6} parent=1 // pred_fallthru
      _
    // Predicated region
    $region182: #{streaming_conformer_forward.6} parent=1 // pred_check
      _
    $region183: #{streaming_conformer_forward.6} parent=1 // pred_check_branch
      %313 = sbr.rel (0) target = $region185
    $region184: #{streaming_conformer_forward.6} parent=1 // pred_region
      %315 = dma.done [#allocation9], 16
    $region185: #{streaming_conformer_forward.6} parent=1 // pred_fallthru
      _
    // Predicated region
    $region186: #{streaming_conformer_forward.6} parent=1 // pred_check
      _
    $region187: #{streaming_conformer_forward.6} parent=1 // pred_check_branch
      %317 = sbr.rel (0) target = $region189
    $region188: #{streaming_conformer_forward.6} parent=1 // pred_region
      %319 = dma.done [#allocation12], 16
    $region189: #{streaming_conformer_forward.6} parent=1 // pred_fallthru
      _
    // Predicated region
    $region190: #{streaming_conformer_forward.6} parent=1 // pred_check
      _
    $region191: #{streaming_conformer_forward.6} parent=1 // pred_check_branch
      %321 = sbr.rel (0) target = $region193
    $region192: #{streaming_conformer_forward.6} parent=1 // pred_region
      %323 = dma.done [#allocation12], 16
    $region193: #{streaming_conformer_forward.6} parent=1 // pred_fallthru
      _
    // Predicated region
    $region194: #{streaming_conformer_forward.6} parent=1 // pred_check
      _
    $region195: #{streaming_conformer_forward.6} parent=1 // pred_check_branch
      %325 = sbr.rel (0) target = $region197
    $region196: #{streaming_conformer_forward.6} parent=1 // pred_region
      %327 = dma.done [#allocation15], 16
    $region197: #{streaming_conformer_forward.6} parent=1 // pred_fallthru
      _
    // Predicated region
    $region198: #{streaming_conformer_forward.6} parent=1 // pred_check
      _
    $region199: #{streaming_conformer_forward.6} parent=1 // pred_check_branch
      %329 = sbr.rel (0) target = $region201
    $region200: #{streaming_conformer_forward.6} parent=1 // pred_region
      %331 = dma.done [#allocation15], 16
    $region201: #{streaming_conformer_forward.6} parent=1 // pred_fallthru
      _
    // Predicated region
    $region202: #{streaming_conformer_forward.6} parent=1 // pred_check
      _
    $region203: #{streaming_conformer_forward.6} parent=1 // pred_check_branch
      %333 = sbr.rel (0) target = $region205
    $region204: #{streaming_conformer_forward.6} parent=1 // pred_region
      %335 = dma.done [#allocation18], 16
    $region205: #{streaming_conformer_forward.6} parent=1 // pred_fallthru
      _
    // Predicated region
    $region206: #{streaming_conformer_forward.6} parent=1 // pred_check
      _
    $region207: #{streaming_conformer_forward.6} parent=1 // pred_check_branch
      %337 = sbr.rel (0) target = $region209
    $region208: #{streaming_conformer_forward.6} parent=1 // pred_region
      %339 = dma.done [#allocation18], 16
    $region209: #{streaming_conformer_forward.6} parent=1 // pred_fallthru
      _
    // Predicated region
    $region210: #{streaming_conformer_forward.6} parent=1 // pred_check
      _
    $region211: #{streaming_conformer_forward.6} parent=1 // pred_check_branch
      %341 = sbr.rel (0) target = $region213
    $region212: #{streaming_conformer_forward.6} parent=1 // pred_region
      %343 = dma.done [#allocation21], 16
    $region213: #{streaming_conformer_forward.6} parent=1 // pred_fallthru
      _
    // Predicated region
    $region214: #{streaming_conformer_forward.6} parent=1 // pred_check
      _
    $region215: #{streaming_conformer_forward.6} parent=1 // pred_check_branch
      %345 = sbr.rel (0) target = $region217
    $region216: #{streaming_conformer_forward.6} parent=1 // pred_region
      %347 = dma.done [#allocation21], 16
    $region217: #{streaming_conformer_forward.6} parent=1 // pred_fallthru
      _
    %v349 = vld [vmem:[%s1] sm:$0xff]
    %v350 = vld [vmem:[%s1 + $0x8] sm:$0xff]
    %v351 = vld [vmem:[%s3] sm:$0x1]
    %v352 = vld [vmem:[%s5] sm:$0x1]
    %v353 = vld [vmem:[%s7] sm:$0xf]
    %v354 = vld [vmem:[%s7 + $0x4] sm:$0xf]
    %v355 = vld [vmem:[%s7 + $0x8] sm:$0xf]
    %v356 = vld [vmem:[%s7 + $0xc] sm:$0xf]
    %v357 = vld [vmem:[%s9] sm:$0x1]
    %v358 = vld [vmem:[%s11] sm:$0xf]
    %v359 = vld [vmem:[%s11 + $0x4] sm:$0xf]
    %v360 = vld [vmem:[%s11 + $0x8] sm:$0xf]
    %v361 = vld [vmem:[%s11 + $0xc] sm:$0xf]
    %v362 = vld [vmem:[%s13] sm:$0x1]
    %v363 = vld [vmem:[%s15] sm:$0xf]
    %v364 = vld [vmem:[%s15 + $0x4] sm:$0xf]
    %v365 = vld [vmem:[%s15 + $0x8] sm:$0xf]
    %v366 = vld [vmem:[%s15 + $0xc] sm:$0xf]
    %v367 = vld [vmem:[%s15 + $0x10] sm:$0xf]
    %v368 = vld [vmem:[%s15 + $0x14] sm:$0xf]
    %v369 = vld [vmem:[%s15 + $0x18] sm:$0xf]
    %v370 = vld [vmem:[%s15 + $0x1c] sm:$0xf]
    %v371 = vld [vmem:[%s15 + $0x20] sm:$0xf]
    %v372 = vld [vmem:[%s15 + $0x24] sm:$0xf]
    %v373 = vld [vmem:[%s15 + $0x28] sm:$0xf]
    %v374 = vld [vmem:[%s15 + $0x2c] sm:$0xf]
    %v375 = vld [vmem:[%s15 + $0x30] sm:$0xf]
    %v376 = vld [vmem:[%s15 + $0x34] sm:$0xf]
    %v377 = vld [vmem:[%s15 + $0x38] sm:$0xf]
    %v378 = vld [vmem:[%s15 + $0x3c] sm:$0xf]
    %v379 = vld [vmem:[%s17] sm:$0x1]
    %vm380 = vcmask 261120
    %v381 = vsel %vm380, %v349, 0.0
    %382 = vadd.xlane.f32.xlu0 %v381
    %v383 = vpop.xlane.xlu0 %382
    %v384 = vsel %vm380, %v350, 0.0
    %385 = vadd.xlane.f32.xlu0 %v384
    %v386 = vpop.xlane.xlu0 %385
    %v387 = vrcp.pop 32.0
    %v388 = vmul.f32 32.0, %v387
    %v389 = vsub.f32 1.0, %v388
    %v390 = vmul.f32 %v387, %v389
    %v391 = vadd.f32 %v387, %v390
    %vm392 = vweird.f32 %v387
    %v393 = vsel %vm392, %v387, %v391
    %v394 = vmul.f32 %v383, %v393
    %v395 = vmul.f32 %v386, %v393
    %v396 = vsub.f32 %v349, %v394
    %v397 = vsub.f32 %v350, %v395
    %v398 = vmul.f32 %v396, %v396
    %v399 = vmul.f32 %v397, %v397
    %v400 = vsel %vm380, %v398, 0.0
    %401 = vadd.xlane.f32.xlu0 %v400
    %v402 = vpop.xlane.xlu0 %401
    %v403 = vsel %vm380, %v399, 0.0
    %404 = vadd.xlane.f32.xlu0 %v403
    %v405 = vpop.xlane.xlu0 %404
    %v406 = vmul.f32 %v402, %v393
    %v407 = vmul.f32 %v405, %v393
    %v408 = vadd.f32 %v406, 1e-05
    %v409 = vadd.f32 %v407, 1e-05
    %v410 = vrsqrt.pop %v408
    %v411 = vmul.f32 %v410, %v408
    %v412 = vmul.f32 %v411, %v410
    %v413 = vmul.f32 0.5, %v412
    %v414 = vsub.f32 1.5, %v413
    %v415 = vmul.f32 %v410, %v414
    %vm416 = vweird.f32 %v408
    %vm417 = vweird.f32 %v410
    %vm418 = vmor %vm416, %vm417
    %v419 = vsel %vm418, %v410, %v415
    %v420 = vrsqrt.pop %v409
    %v421 = vmul.f32 %v420, %v409
    %v422 = vmul.f32 %v421, %v420
    %v423 = vmul.f32 0.5, %v422
    %v424 = vsub.f32 1.5, %v423
    %v425 = vmul.f32 %v420, %v424
    %vm426 = vweird.f32 %v409
    %vm427 = vweird.f32 %v420
    %vm428 = vmor %vm426, %vm427
    %v429 = vsel %vm428, %v420, %v425
    %v430 = vmul.f32 %v396, %v419
    %v431 = vmul.f32 %v397, %v429
    %v433 = vperm.slane %v351, 0
    %v435 = vmul.f32 %v430, %v433
    %v436 = vmul.f32 %v431, %v433
    %v438 = vperm.slane %v352, 0
    %v440 = vadd.f32 %v435, %v438
    %v441 = vadd.f32 %v436, %v438
    %v442 = vpack.c.bf16 %v441, %v440
    %v444 = vperm.slane %v357, 0
    %v450 = vunpack.c.l.b16 %v353
    %v451 = vunpack.c.l.b16 %v354
    %v452 = vunpack.c.l.b16 %v355
    %v453 = vunpack.c.l.b16 %v356
    %v454 = vpack.c.b16 %v451, %v450
    %v455 = vpack.c.b16 %v453, %v452
    %v459 = vsel %vm380, %v442, 0
    %461 = vmatpush.bf16.msra.mxu0 0
    %462 = vmatpush.bf16.msra.mxu0 0
    %463 = vmatpush.bf16.msra.mxu0 0
    %464 = vmatpush.bf16.msra.mxu0 0
    %465 = vmatpush.bf16.msra.mxu0 0
    %466 = vmatpush.bf16.msra.mxu0 0
    %467 = vmatpush.bf16.msra.mxu0 %v455
    %468 = vmatpush.bf16.msra.mxu0 %v454
    %469 = vmatmul.bf16.gmra.mxu0 %v459
    %v470 = vpop.f32.mrf.mxu0
    %v471 = vadd.f32 %v444, %v470
    %v472 = vpop.f32.mrf.mxu0
    %v473 = vadd.f32 %v444, %v472
    %474 = vdwg.mxu0
    %v475 = vxor.u32 %v471, 2147483648
    %v476 = vxor.u32 %v473, 2147483648
    %v477 = vmul.f32 %v475, 1.442695
    %v478 = vpow.pop %v477
    %v479 = vmul.f32 %v476, 1.442695
    %v480 = vpow.pop %v479
    %v481 = vadd.f32 %v478, 1.0
    %v482 = vadd.f32 %v480, 1.0
    %v483 = vrcp.pop %v481
    %v484 = vmul.f32 %v481, %v483
    %v485 = vsub.f32 1.0, %v484
    %v486 = vmul.f32 %v483, %v485
    %v487 = vadd.f32 %v483, %v486
    %vm488 = vweird.f32 %v481
    %vm489 = vweird.f32 %v483
    %vm490 = vmor %vm488, %vm489
    %v491 = vsel %vm490, %v483, %v487
    %v492 = vand.u32 2147483647, %v481
    %vm493 = vcmp.eq.f32.partialorder %v492, 8.507059e+37
    %v494 = vand.u32 %v481, 2147483648
    %v495 = vor.u32 1.1754944e-38, %v494
    %v496 = vsel %vm493, %v495, %v491
    %v497 = vmul.f32 1.0, %v496
    %v498 = vrcp.pop %v482
    %v499 = vmul.f32 %v482, %v498
    %v500 = vsub.f32 1.0, %v499
    %v501 = vmul.f32 %v498, %v500
    %v502 = vadd.f32 %v498, %v501
    %vm503 = vweird.f32 %v482
    %vm504 = vweird.f32 %v498
    %vm505 = vmor %vm503, %vm504
    %v506 = vsel %vm505, %v498, %v502
    %v507 = vand.u32 2147483647, %v482
    %vm508 = vcmp.eq.f32.partialorder %v507, 8.507059e+37
    %v509 = vand.u32 %v482, 2147483648
    %v510 = vor.u32 1.1754944e-38, %v509
    %v511 = vsel %vm508, %v510, %v506
    %v512 = vmul.f32 1.0, %v511
    %v513 = vmul.f32 %v471, %v497
    %v514 = vmul.f32 %v473, %v512
    %v516 = vperm.slane %v362, 0
    %v522 = vunpack.c.l.b16 %v358
    %v523 = vunpack.c.l.b16 %v359
    %v524 = vunpack.c.l.b16 %v360
    %v525 = vunpack.c.l.b16 %v361
    %v526 = vpack.c.b16 %v523, %v522
    %v527 = vpack.c.b16 %v525, %v524
    %530 = vmatpush.bf16.msra.mxu0 0
    %531 = vmatpush.bf16.msra.mxu0 0
    %532 = vmatpush.bf16.msra.mxu0 0
    %533 = vmatpush.bf16.msra.mxu0 0
    %534 = vmatpush.bf16.msra.mxu0 0
    %535 = vmatpush.bf16.msra.mxu0 0
    %536 = vmatpush.bf16.msra.mxu0 %v527
    %537 = vmatpush.bf16.msra.mxu0 %v526
    %538 = vmatmul.bf16.gmra.mxu0 %v459
    %v539 = vpop.f32.mrf.mxu0
    %v540 = vadd.f32 %v516, %v539
    %v541 = vpop.f32.mrf.mxu0
    %v542 = vadd.f32 %v516, %v541
    %543 = vdwg.mxu0
    %v544 = vmul.f32 %v513, %v540
    %v545 = vmul.f32 %v514, %v542
    %v546 = vpack.c.bf16 %v545, %v544
    %v548 = vperm.slane %v379, 0
    %v566 = vunpack.c.l.b16 %v363
    %v567 = vunpack.c.l.b16 %v364
    %v568 = vunpack.c.l.b16 %v365
    %v569 = vunpack.c.l.b16 %v366
    %v570 = vunpack.c.l.b16 %v367
    %v571 = vunpack.c.l.b16 %v368
    %v572 = vunpack.c.l.b16 %v369
    %v573 = vunpack.c.l.b16 %v370
    %v574 = vunpack.c.l.b16 %v371
    %v575 = vunpack.c.l.b16 %v372
    %v576 = vunpack.c.l.b16 %v373
    %v577 = vunpack.c.l.b16 %v374
    %v578 = vunpack.c.l.b16 %v375
    %v579 = vunpack.c.l.b16 %v376
    %v580 = vunpack.c.l.b16 %v377
    %v581 = vunpack.c.l.b16 %v378
    %v582 = vpack.c.b16 %v567, %v566
    %v583 = vpack.c.b16 %v569, %v568
    %v584 = vpack.c.b16 %v571, %v570
    %v585 = vpack.c.b16 %v573, %v572
    %v586 = vpack.c.b16 %v575, %v574
    %v587 = vpack.c.b16 %v577, %v576
    %v588 = vpack.c.b16 %v579, %v578
    %v589 = vpack.c.b16 %v581, %v580
    %598 = vmatpush.bf16.msra.mxu0 %v589
    %599 = vmatpush.bf16.msra.mxu0 %v588
    %600 = vmatpush.bf16.msra.mxu0 %v587
    %601 = vmatpush.bf16.msra.mxu0 %v586
    %602 = vmatpush.bf16.msra.mxu0 %v585
    %603 = vmatpush.bf16.msra.mxu0 %v584
    %604 = vmatpush.bf16.msra.mxu0 %v583
    %605 = vmatpush.bf16.msra.mxu0 %v582
    %606 = vmatmul.bf16.gmra.mxu0 %v546
    %v607 = vpop.f32.mrf.mxu0
    %v608 = vadd.f32 %v548, %v607
    %v609 = vpop.f32.mrf.mxu0
    %v610 = vadd.f32 %v548, %v609
    %611 = vdwg.mxu0
    %v612 = vmul.f32 %v608, 0.5
    %v613 = vmul.f32 %v610, 0.5
    %v614 = vadd.f32 %v349, %v612
    %v615 = vadd.f32 %v350, %v613
    %v616 = vld [vmem:[%s19] sm:$0x1]
    %v617 = vld [vmem:[%s21] sm:$0x1]
    %v618 = vld [vmem:[%s23] sm:$0xf]
    %v619 = vld [vmem:[%s23 + $0x4] sm:$0xf]
    %v620 = vld [vmem:[%s23 + $0x8] sm:$0xf]
    %v621 = vld [vmem:[%s23 + $0xc] sm:$0xf]
    %v622 = vld [vmem:[%s25] sm:$0x1]
    %v623 = vld [vmem:[%s27] sm:$0xf]
    %v624 = vld [vmem:[%s27 + $0x4] sm:$0xf]
    %v625 = vld [vmem:[%s27 + $0x8] sm:$0xf]
    %v626 = vld [vmem:[%s27 + $0xc] sm:$0xf]
    %v627 = vld [vmem:[%s29] sm:$0x1]
    %v628 = vld [vmem:[%s31] sm:$0xf]
    %v629 = vld [vmem:[%s31 + $0x4] sm:$0xf]
    %v630 = vld [vmem:[%s31 + $0x8] sm:$0xf]
    %v631 = vld [vmem:[%s31 + $0xc] sm:$0xf]
    %v632 = vld [vmem:[%s33] sm:$0x1]
    %v633 = vld [vmem:[%s35] sm:$0xf]
    %v634 = vld [vmem:[%s35 + $0x4] sm:$0xf]
    %v635 = vld [vmem:[%s35 + $0x8] sm:$0xf]
    %v636 = vld [vmem:[%s35 + $0xc] sm:$0xf]
    %v637 = vld [vmem:[%s37] sm:$0x1]
    %v638 = vsel %vm380, %v614, 0.0
    %639 = vadd.xlane.f32.xlu0 %v638
    %v640 = vpop.xlane.xlu0 %639
    %v641 = vsel %vm380, %v615, 0.0
    %642 = vadd.xlane.f32.xlu0 %v641
    %v643 = vpop.xlane.xlu0 %642
    %v644 = vmul.f32 %v640, %v393
    %v645 = vmul.f32 %v643, %v393
    %v646 = vsub.f32 %v614, %v644
    %v647 = vsub.f32 %v615, %v645
    %v648 = vmul.f32 %v646, %v646
    %v649 = vmul.f32 %v647, %v647
    %v650 = vsel %vm380, %v648, 0.0
    %651 = vadd.xlane.f32.xlu0 %v650
    %v652 = vpop.xlane.xlu0 %651
    %v653 = vsel %vm380, %v649, 0.0
    %654 = vadd.xlane.f32.xlu0 %v653
    %v655 = vpop.xlane.xlu0 %654
    %v656 = vmul.f32 %v652, %v393
    %v657 = vmul.f32 %v655, %v393
    %v658 = vadd.f32 %v656, 1e-05
    %v659 = vadd.f32 %v657, 1e-05
    %v660 = vrsqrt.pop %v658
    %v661 = vmul.f32 %v660, %v658
    %v662 = vmul.f32 %v661, %v660
    %v663 = vmul.f32 0.5, %v662
    %v664 = vsub.f32 1.5, %v663
    %v665 = vmul.f32 %v660, %v664
    %vm666 = vweird.f32 %v658
    %vm667 = vweird.f32 %v660
    %vm668 = vmor %vm666, %vm667
    %v669 = vsel %vm668, %v660, %v665
    %v670 = vrsqrt.pop %v659
    %v671 = vmul.f32 %v670, %v659
    %v672 = vmul.f32 %v671, %v670
    %v673 = vmul.f32 0.5, %v672
    %v674 = vsub.f32 1.5, %v673
    %v675 = vmul.f32 %v670, %v674
    %vm676 = vweird.f32 %v659
    %vm677 = vweird.f32 %v670
    %vm678 = vmor %vm676, %vm677
    %v679 = vsel %vm678, %v670, %v675
    %v680 = vmul.f32 %v646, %v669
    %v681 = vmul.f32 %v647, %v679
    %v683 = vperm.slane %v616, 0
    %v685 = vmul.f32 %v680, %v683
    %v686 = vmul.f32 %v681, %v683
    %v688 = vperm.slane %v617, 0
    %v690 = vadd.f32 %v685, %v688
    %v691 = vadd.f32 %v686, %v688
    %v692 = vpack.c.bf16 %v691, %v690
    %v694 = vperm.slane %v622, 0
    %v700 = vunpack.c.l.b16 %v618
    %v701 = vunpack.c.l.b16 %v619
    %v702 = vunpack.c.l.b16 %v620
    %v703 = vunpack.c.l.b16 %v621
    %v704 = vpack.c.b16 %v701, %v700
    %v705 = vpack.c.b16 %v703, %v702
    %v709 = vsel %vm380, %v692, 0
    %711 = vmatpush.bf16.msra.mxu0 0
    %712 = vmatpush.bf16.msra.mxu0 0
    %713 = vmatpush.bf16.msra.mxu0 0
    %714 = vmatpush.bf16.msra.mxu0 0
    %715 = vmatpush.bf16.msra.mxu0 0
    %716 = vmatpush.bf16.msra.mxu0 0
    %717 = vmatpush.bf16.msra.mxu0 %v705
    %718 = vmatpush.bf16.msra.mxu0 %v704
    %719 = vmatmul.bf16.gmra.mxu0 %v709
    %v720 = vpop.f32.mrf.mxu0
    %v721 = vadd.f32 %v694, %v720
    %v722 = vpop.f32.mrf.mxu0
    %v723 = vadd.f32 %v694, %v722
    %724 = vdwg.mxu0
    %v726 = vperm.slane %v627, 0
    %v732 = vunpack.c.l.b16 %v623
    %v733 = vunpack.c.l.b16 %v624
    %v734 = vunpack.c.l.b16 %v625
    %v735 = vunpack.c.l.b16 %v626
    %v736 = vpack.c.b16 %v733, %v732
    %v737 = vpack.c.b16 %v735, %v734
    %740 = vmatpush.bf16.msra.mxu0 0
    %741 = vmatpush.bf16.msra.mxu0 0
    %742 = vmatpush.bf16.msra.mxu0 0
    %743 = vmatpush.bf16.msra.mxu0 0
    %744 = vmatpush.bf16.msra.mxu0 0
    %745 = vmatpush.bf16.msra.mxu0 0
    %746 = vmatpush.bf16.msra.mxu0 %v737
    %747 = vmatpush.bf16.msra.mxu0 %v736
    %748 = vmatmul.bf16.gmra.mxu0 %v709
    %v749 = vpop.f32.mrf.mxu0
    %v750 = vadd.f32 %v726, %v749
    %v751 = vpop.f32.mrf.mxu0
    %v752 = vadd.f32 %v726, %v751
    %753 = vdwg.mxu0
    %v755 = vperm.slane %v632, 0
    %v761 = vunpack.c.l.b16 %v628
    %v762 = vunpack.c.l.b16 %v629
    %v763 = vunpack.c.l.b16 %v630
    %v764 = vunpack.c.l.b16 %v631
    %v765 = vpack.c.b16 %v762, %v761
    %v766 = vpack.c.b16 %v764, %v763
    %769 = vmatpush.bf16.msra.mxu0 0
    %770 = vmatpush.bf16.msra.mxu0 0
    %771 = vmatpush.bf16.msra.mxu0 0
    %772 = vmatpush.bf16.msra.mxu0 0
    %773 = vmatpush.bf16.msra.mxu0 0
    %774 = vmatpush.bf16.msra.mxu0 0
    %775 = vmatpush.bf16.msra.mxu0 %v766
    %776 = vmatpush.bf16.msra.mxu0 %v765
    %777 = vmatmul.bf16.gmra.mxu0 %v709
    %v778 = vpop.f32.mrf.mxu0
    %v779 = vadd.f32 %v755, %v778
    %v780 = vpop.f32.mrf.mxu0
    %v781 = vadd.f32 %v755, %v780
    %782 = vdwg.mxu0
    %v783 = vpack.c.bf16 %v721, %v721
    %v784 = vpack.c.bf16 %v723, %v723
    %v785 = vpack.c.bf16 %v750, %v750
    %v786 = vpack.c.bf16 %v752, %v752
    %v787 = vpack.c.bf16 %v779, %v779
    %v788 = vpack.c.bf16 %v781, %v781
    %vm789 = vcmask 64512
    %v791 = vsel %vm789, %v783, 0
    %v794 = vsel %vm789, %v785, 0
    %796 = vmatpush.bf16.xpose.msra.mxu0 0
    %797 = vmatpush.bf16.xpose.msra.mxu0 0
    %798 = vmatpush.bf16.xpose.msra.mxu0 0
    %799 = vmatpush.bf16.xpose.msra.mxu0 0
    %800 = vmatpush.bf16.xpose.msra.mxu0 0
    %801 = vmatpush.bf16.xpose.msra.mxu0 0
    %802 = vmatpush.bf16.xpose.msra.mxu0 0
    %803 = vmatpush.bf16.xpose.msra.mxu0 %v794
    %804 = vmatmul.bf16.gmra.mxu0 %v791
    %v805 = vpop.f32.mrf.mxu0
    %v806 = vadd.f32 0.0, %v805
    %v807 = vpop.f32.mrf.mxu0
    %808 = vdwg.mxu0
    %v810 = vsel %vm789, %v784, 0
    %v813 = vsel %vm789, %v786, 0
    %815 = vmatpush.bf16.xpose.msra.mxu0 0
    %816 = vmatpush.bf16.xpose.msra.mxu0 0
    %817 = vmatpush.bf16.xpose.msra.mxu0 0
    %818 = vmatpush.bf16.xpose.msra.mxu0 0
    %819 = vmatpush.bf16.xpose.msra.mxu0 0
    %820 = vmatpush.bf16.xpose.msra.mxu0 0
    %821 = vmatpush.bf16.xpose.msra.mxu0 0
    %822 = vmatpush.bf16.xpose.msra.mxu0 %v813
    %823 = vmatmul.bf16.gmra.mxu0 %v810
    %v824 = vpop.f32.mrf.mxu0
    %v825 = vadd.f32 0.0, %v824
    %v826 = vpop.f32.mrf.mxu0
    %827 = vdwg.mxu0
    %v828 = vsel %vm789, %v806, -inf
    %829 = vmax.xlane.f32.xlu0 %v828
    %v830 = vpop.xlane.xlu0 %829
    %v831 = vsel %vm789, %v825, -inf
    %832 = vmax.xlane.f32.xlu0 %v831
    %v833 = vpop.xlane.xlu0 %832
    %v834 = vsub.f32 %v806, %v830
    %v835 = vsub.f32 %v825, %v833
    %v836 = vmul.f32 %v834, 1.442695
    %v837 = vpow.pop %v836
    %v838 = vmul.f32 %v835, 1.442695
    %v839 = vpow.pop %v838
    %v840 = vsel %vm789, %v837, 0.0
    %841 = vadd.xlane.f32.xlu0 %v840
    %v842 = vpop.xlane.xlu0 %841
    %v843 = vsel %vm789, %v839, 0.0
    %844 = vadd.xlane.f32.xlu0 %v843
    %v845 = vpop.xlane.xlu0 %844
    %v846 = vrcp.pop %v842
    %v847 = vrcp.pop %v845
    %v848 = vmul.f32 %v837, %v846
    %v849 = vmul.f32 %v839, %v847
    %v850 = vpack.c.bf16 %v848, %v848
    %v851 = vpack.c.bf16 %v849, %v849
    %v853 = vsel %vm789, %v850, 0
    %vm855 = vcmask 1043456
    %v857 = vsel %vm855, %v787, 0
    %859 = vmatpush.bf16.msra.mxu0 0
    %860 = vmatpush.bf16.msra.mxu0 0
    %861 = vmatpush.bf16.msra.mxu0 0
    %862 = vmatpush.bf16.msra.mxu0 0
    %863 = vmatpush.bf16.msra.mxu0 0
    %864 = vmatpush.bf16.msra.mxu0 0
    %865 = vmatpush.bf16.msra.mxu0 0
    %866 = vmatpush.bf16.msra.mxu0 %v857
    %867 = vmatmul.bf16.gmra.mxu0 %v853
    %v868 = vpop.f32.mrf.mxu0
    %v869 = vadd.f32 0.0, %v868
    %v870 = vpop.f32.mrf.mxu0
    %871 = vdwg.mxu0
    %v873 = vsel %vm789, %v851, 0
    %v876 = vsel %vm855, %v788, 0
    %878 = vmatpush.bf16.msra.mxu0 0
    %879 = vmatpush.bf16.msra.mxu0 0
    %880 = vmatpush.bf16.msra.mxu0 0
    %881 = vmatpush.bf16.msra.mxu0 0
    %882 = vmatpush.bf16.msra.mxu0 0
    %883 = vmatpush.bf16.msra.mxu0 0
    %884 = vmatpush.bf16.msra.mxu0 0
    %885 = vmatpush.bf16.msra.mxu0 %v876
    %886 = vmatmul.bf16.gmra.mxu0 %v873
    %v887 = vpop.f32.mrf.mxu0
    %v888 = vadd.f32 0.0, %v887
    %v889 = vpop.f32.mrf.mxu0
    %890 = vdwg.mxu0
    %v892 = vunpack.c.l.b16 %v783
    %v893 = vpack.c.b16 %v892, %v892
    %894 = vrot.lane.b32.xlu0 %v893, 120
    %v895 = vpop.permute.xlu0 %894
    %v897 = vunpack.c.l.b16 %v785
    %v898 = vpack.c.b16 %v897, %v897
    %899 = vrot.lane.b32.xlu0 %v898, 120
    %v900 = vpop.permute.xlu0 %899
    %v902 = vsel %vm789, %v895, 0
    %v905 = vsel %vm789, %v900, 0
    %907 = vmatpush.bf16.xpose.msra.mxu0 0
    %908 = vmatpush.bf16.xpose.msra.mxu0 0
    %909 = vmatpush.bf16.xpose.msra.mxu0 0
    %910 = vmatpush.bf16.xpose.msra.mxu0 0
    %911 = vmatpush.bf16.xpose.msra.mxu0 0
    %912 = vmatpush.bf16.xpose.msra.mxu0 0
    %913 = vmatpush.bf16.xpose.msra.mxu0 0
    %914 = vmatpush.bf16.xpose.msra.mxu0 %v905
    %915 = vmatmul.bf16.gmra.mxu0 %v902
    %v916 = vpop.f32.mrf.mxu0
    %v917 = vadd.f32 0.0, %v916
    %v918 = vpop.f32.mrf.mxu0
    %919 = vdwg.mxu0
    %v921 = vunpack.c.l.b16 %v784
    %v922 = vpack.c.b16 %v921, %v921
    %923 = vrot.lane.b32.xlu0 %v922, 120
    %v924 = vpop.permute.xlu0 %923
    %v926 = vunpack.c.l.b16 %v786
    %v927 = vpack.c.b16 %v926, %v926
    %928 = vrot.lane.b32.xlu0 %v927, 120
    %v929 = vpop.permute.xlu0 %928
    %v931 = vsel %vm789, %v924, 0
    %v934 = vsel %vm789, %v929, 0
    %936 = vmatpush.bf16.xpose.msra.mxu0 0
    %937 = vmatpush.bf16.xpose.msra.mxu0 0
    %938 = vmatpush.bf16.xpose.msra.mxu0 0
    %939 = vmatpush.bf16.xpose.msra.mxu0 0
    %940 = vmatpush.bf16.xpose.msra.mxu0 0
    %941 = vmatpush.bf16.xpose.msra.mxu0 0
    %942 = vmatpush.bf16.xpose.msra.mxu0 0
    %943 = vmatpush.bf16.xpose.msra.mxu0 %v934
    %944 = vmatmul.bf16.gmra.mxu0 %v931
    %v945 = vpop.f32.mrf.mxu0
    %v946 = vadd.f32 0.0, %v945
    %v947 = vpop.f32.mrf.mxu0
    %948 = vdwg.mxu0
    %v949 = vsel %vm789, %v917, -inf
    %950 = vmax.xlane.f32.xlu0 %v949
    %v951 = vpop.xlane.xlu0 %950
    %v952 = vsel %vm789, %v946, -inf
    %953 = vmax.xlane.f32.xlu0 %v952
    %v954 = vpop.xlane.xlu0 %953
    %v955 = vsub.f32 %v917, %v951
    %v956 = vsub.f32 %v946, %v954
    %v957 = vmul.f32 %v955, 1.442695
    %v958 = vpow.pop %v957
    %v959 = vmul.f32 %v956, 1.442695
    %v960 = vpow.pop %v959
    %v961 = vsel %vm789, %v958, 0.0
    %962 = vadd.xlane.f32.xlu0 %v961
    %v963 = vpop.xlane.xlu0 %962
    %v964 = vsel %vm789, %v960, 0.0
    %965 = vadd.xlane.f32.xlu0 %v964
    %v966 = vpop.xlane.xlu0 %965
    %v967 = vrcp.pop %v963
    %v968 = vrcp.pop %v966
    %v969 = vmul.f32 %v958, %v967
    %v970 = vmul.f32 %v960, %v968
    %v971 = vpack.c.bf16 %v969, %v969
    %v972 = vpack.c.bf16 %v970, %v970
    %v974 = vunpack.c.l.b16 %v787
    %v975 = vpack.c.b16 %v974, %v974
    %976 = vrot.lane.b32.xlu0 %v975, 120
    %v977 = vpop.permute.xlu0 %976
    %v979 = vsel %vm789, %v971, 0
    %v982 = vsel %vm855, %v977, 0
    %984 = vmatpush.bf16.msra.mxu0 0
    %985 = vmatpush.bf16.msra.mxu0 0
    %986 = vmatpush.bf16.msra.mxu0 0
    %987 = vmatpush.bf16.msra.mxu0 0
    %988 = vmatpush.bf16.msra.mxu0 0
    %989 = vmatpush.bf16.msra.mxu0 0
    %990 = vmatpush.bf16.msra.mxu0 0
    %991 = vmatpush.bf16.msra.mxu0 %v982
    %992 = vmatmul.bf16.gmra.mxu0 %v979
    %v993 = vpop.f32.mrf.mxu0
    %v994 = vadd.f32 0.0, %v993
    %v995 = vpop.f32.mrf.mxu0
    %996 = vdwg.mxu0
    %v998 = vunpack.c.l.b16 %v788
    %v999 = vpack.c.b16 %v998, %v998
    %1000 = vrot.lane.b32.xlu0 %v999, 120
    %v1001 = vpop.permute.xlu0 %1000
    %v1003 = vsel %vm789, %v972, 0
    %v1006 = vsel %vm855, %v1001, 0
    %1008 = vmatpush.bf16.msra.mxu0 0
    %1009 = vmatpush.bf16.msra.mxu0 0
    %1010 = vmatpush.bf16.msra.mxu0 0
    %1011 = vmatpush.bf16.msra.mxu0 0
    %1012 = vmatpush.bf16.msra.mxu0 0
    %1013 = vmatpush.bf16.msra.mxu0 0
    %1014 = vmatpush.bf16.msra.mxu0 0
    %1015 = vmatpush.bf16.msra.mxu0 %v1006
    %1016 = vmatmul.bf16.gmra.mxu0 %v1003
    %v1017 = vpop.f32.mrf.mxu0
    %v1018 = vadd.f32 0.0, %v1017
    %v1019 = vpop.f32.mrf.mxu0
    %1020 = vdwg.mxu0
    %1021 = vrot.lane.b32.xlu0 %v893, 112
    %v1022 = vpop.permute.xlu0 %1021
    %1023 = vrot.lane.b32.xlu0 %v898, 112
    %v1024 = vpop.permute.xlu0 %1023
    %v1026 = vsel %vm789, %v1022, 0
    %v1029 = vsel %vm789, %v1024, 0
    %1031 = vmatpush.bf16.xpose.msra.mxu0 0
    %1032 = vmatpush.bf16.xpose.msra.mxu0 0
    %1033 = vmatpush.bf16.xpose.msra.mxu0 0
    %1034 = vmatpush.bf16.xpose.msra.mxu0 0
    %1035 = vmatpush.bf16.xpose.msra.mxu0 0
    %1036 = vmatpush.bf16.xpose.msra.mxu0 0
    %1037 = vmatpush.bf16.xpose.msra.mxu0 0
    %1038 = vmatpush.bf16.xpose.msra.mxu0 %v1029
    %1039 = vmatmul.bf16.gmra.mxu0 %v1026
    %v1040 = vpop.f32.mrf.mxu0
    %v1041 = vadd.f32 0.0, %v1040
    %v1042 = vpop.f32.mrf.mxu0
    %1043 = vdwg.mxu0
    %1044 = vrot.lane.b32.xlu0 %v922, 112
    %v1045 = vpop.permute.xlu0 %1044
    %1046 = vrot.lane.b32.xlu0 %v927, 112
    %v1047 = vpop.permute.xlu0 %1046
    %v1049 = vsel %vm789, %v1045, 0
    %v1052 = vsel %vm789, %v1047, 0
    %1054 = vmatpush.bf16.xpose.msra.mxu0 0
    %1055 = vmatpush.bf16.xpose.msra.mxu0 0
    %1056 = vmatpush.bf16.xpose.msra.mxu0 0
    %1057 = vmatpush.bf16.xpose.msra.mxu0 0
    %1058 = vmatpush.bf16.xpose.msra.mxu0 0
    %1059 = vmatpush.bf16.xpose.msra.mxu0 0
    %1060 = vmatpush.bf16.xpose.msra.mxu0 0
    %1061 = vmatpush.bf16.xpose.msra.mxu0 %v1052
    %1062 = vmatmul.bf16.gmra.mxu0 %v1049
    %v1063 = vpop.f32.mrf.mxu0
    %v1064 = vadd.f32 0.0, %v1063
    %v1065 = vpop.f32.mrf.mxu0
    %1066 = vdwg.mxu0
    %v1067 = vsel %vm789, %v1041, -inf
    %1068 = vmax.xlane.f32.xlu0 %v1067
    %v1069 = vpop.xlane.xlu0 %1068
    %v1070 = vsel %vm789, %v1064, -inf
    %1071 = vmax.xlane.f32.xlu0 %v1070
    %v1072 = vpop.xlane.xlu0 %1071
    %v1073 = vsub.f32 %v1041, %v1069
    %v1074 = vsub.f32 %v1064, %v1072
    %v1075 = vmul.f32 %v1073, 1.442695
    %v1076 = vpow.pop %v1075
    %v1077 = vmul.f32 %v1074, 1.442695
    %v1078 = vpow.pop %v1077
    %v1079 = vsel %vm789, %v1076, 0.0
    %1080 = vadd.xlane.f32.xlu0 %v1079
    %v1081 = vpop.xlane.xlu0 %1080
    %v1082 = vsel %vm789, %v1078, 0.0
    %1083 = vadd.xlane.f32.xlu0 %v1082
    %v1084 = vpop.xlane.xlu0 %1083
    %v1085 = vrcp.pop %v1081
    %v1086 = vrcp.pop %v1084
    %v1087 = vmul.f32 %v1076, %v1085
    %v1088 = vmul.f32 %v1078, %v1086
    %v1089 = vpack.c.bf16 %v1087, %v1087
    %v1090 = vpack.c.bf16 %v1088, %v1088
    %1091 = vrot.lane.b32.xlu0 %v975, 112
    %v1092 = vpop.permute.xlu0 %1091
    %v1094 = vsel %vm789, %v1089, 0
    %v1097 = vsel %vm855, %v1092, 0
    %1099 = vmatpush.bf16.msra.mxu0 0
    %1100 = vmatpush.bf16.msra.mxu0 0
    %1101 = vmatpush.bf16.msra.mxu0 0
    %1102 = vmatpush.bf16.msra.mxu0 0
    %1103 = vmatpush.bf16.msra.mxu0 0
    %1104 = vmatpush.bf16.msra.mxu0 0
    %1105 = vmatpush.bf16.msra.mxu0 0
    %1106 = vmatpush.bf16.msra.mxu0 %v1097
    %1107 = vmatmul.bf16.gmra.mxu0 %v1094
    %v1108 = vpop.f32.mrf.mxu0
    %v1109 = vadd.f32 0.0, %v1108
    %v1110 = vpop.f32.mrf.mxu0
    %1111 = vdwg.mxu0
    %1112 = vrot.lane.b32.xlu0 %v999, 112
    %v1113 = vpop.permute.xlu0 %1112
    %v1115 = vsel %vm789, %v1090, 0
    %v1118 = vsel %vm855, %v1113, 0
    %1120 = vmatpush.bf16.msra.mxu0 0
    %1121 = vmatpush.bf16.msra.mxu0 0
    %1122 = vmatpush.bf16.msra.mxu0 0
    %1123 = vmatpush.bf16.msra.mxu0 0
    %1124 = vmatpush.bf16.msra.mxu0 0
    %1125 = vmatpush.bf16.msra.mxu0 0
    %1126 = vmatpush.bf16.msra.mxu0 0
    %1127 = vmatpush.bf16.msra.mxu0 %v1118
    %1128 = vmatmul.bf16.gmra.mxu0 %v1115
    %v1129 = vpop.f32.mrf.mxu0
    %v1130 = vadd.f32 0.0, %v1129
    %v1131 = vpop.f32.mrf.mxu0
    %1132 = vdwg.mxu0
    %1133 = vrot.lane.b32.xlu0 %v893, 104
    %v1134 = vpop.permute.xlu0 %1133
    %1135 = vrot.lane.b32.xlu0 %v898, 104
    %v1136 = vpop.permute.xlu0 %1135
    %v1138 = vsel %vm789, %v1134, 0
    %v1141 = vsel %vm789, %v1136, 0
    %1143 = vmatpush.bf16.xpose.msra.mxu0 0
    %1144 = vmatpush.bf16.xpose.msra.mxu0 0
    %1145 = vmatpush.bf16.xpose.msra.mxu0 0
    %1146 = vmatpush.bf16.xpose.msra.mxu0 0
    %1147 = vmatpush.bf16.xpose.msra.mxu0 0
    %1148 = vmatpush.bf16.xpose.msra.mxu0 0
    %1149 = vmatpush.bf16.xpose.msra.mxu0 0
    %1150 = vmatpush.bf16.xpose.msra.mxu0 %v1141
    %1151 = vmatmul.bf16.gmra.mxu0 %v1138
    %v1152 = vpop.f32.mrf.mxu0
    %v1153 = vadd.f32 0.0, %v1152
    %v1154 = vpop.f32.mrf.mxu0
    %1155 = vdwg.mxu0
    %1156 = vrot.lane.b32.xlu0 %v922, 104
    %v1157 = vpop.permute.xlu0 %1156
    %1158 = vrot.lane.b32.xlu0 %v927, 104
    %v1159 = vpop.permute.xlu0 %1158
    %v1161 = vsel %vm789, %v1157, 0
    %v1164 = vsel %vm789, %v1159, 0
    %1166 = vmatpush.bf16.xpose.msra.mxu0 0
    %1167 = vmatpush.bf16.xpose.msra.mxu0 0
    %1168 = vmatpush.bf16.xpose.msra.mxu0 0
    %1169 = vmatpush.bf16.xpose.msra.mxu0 0
    %1170 = vmatpush.bf16.xpose.msra.mxu0 0
    %1171 = vmatpush.bf16.xpose.msra.mxu0 0
    %1172 = vmatpush.bf16.xpose.msra.mxu0 0
    %1173 = vmatpush.bf16.xpose.msra.mxu0 %v1164
    %1174 = vmatmul.bf16.gmra.mxu0 %v1161
    %v1175 = vpop.f32.mrf.mxu0
    %v1176 = vadd.f32 0.0, %v1175
    %v1177 = vpop.f32.mrf.mxu0
    %1178 = vdwg.mxu0
    %v1179 = vsel %vm789, %v1153, -inf
    %1180 = vmax.xlane.f32.xlu0 %v1179
    %v1181 = vpop.xlane.xlu0 %1180
    %v1182 = vsel %vm789, %v1176, -inf
    %1183 = vmax.xlane.f32.xlu0 %v1182
    %v1184 = vpop.xlane.xlu0 %1183
    %v1185 = vsub.f32 %v1153, %v1181
    %v1186 = vsub.f32 %v1176, %v1184
    %v1187 = vmul.f32 %v1185, 1.442695
    %v1188 = vpow.pop %v1187
    %v1189 = vmul.f32 %v1186, 1.442695
    %v1190 = vpow.pop %v1189
    %v1191 = vsel %vm789, %v1188, 0.0
    %1192 = vadd.xlane.f32.xlu0 %v1191
    %v1193 = vpop.xlane.xlu0 %1192
    %v1194 = vsel %vm789, %v1190, 0.0
    %1195 = vadd.xlane.f32.xlu0 %v1194
    %v1196 = vpop.xlane.xlu0 %1195
    %v1197 = vrcp.pop %v1193
    %v1198 = vrcp.pop %v1196
    %v1199 = vmul.f32 %v1188, %v1197
    %v1200 = vmul.f32 %v1190, %v1198
    %v1201 = vpack.c.bf16 %v1199, %v1199
    %v1202 = vpack.c.bf16 %v1200, %v1200
    %1203 = vrot.lane.b32.xlu0 %v975, 104
    %v1204 = vpop.permute.xlu0 %1203
    %v1206 = vsel %vm789, %v1201, 0
    %v1209 = vsel %vm855, %v1204, 0
    %1211 = vmatpush.bf16.msra.mxu0 0
    %1212 = vmatpush.bf16.msra.mxu0 0
    %1213 = vmatpush.bf16.msra.mxu0 0
    %1214 = vmatpush.bf16.msra.mxu0 0
    %1215 = vmatpush.bf16.msra.mxu0 0
    %1216 = vmatpush.bf16.msra.mxu0 0
    %1217 = vmatpush.bf16.msra.mxu0 0
    %1218 = vmatpush.bf16.msra.mxu0 %v1209
    %1219 = vmatmul.bf16.gmra.mxu0 %v1206
    %v1220 = vpop.f32.mrf.mxu0
    %v1221 = vadd.f32 0.0, %v1220
    %v1222 = vpop.f32.mrf.mxu0
    %1223 = vdwg.mxu0
    %1224 = vrot.lane.b32.xlu0 %v999, 104
    %v1225 = vpop.permute.xlu0 %1224
    %v1227 = vsel %vm789, %v1202, 0
    %v1230 = vsel %vm855, %v1225, 0
    %1232 = vmatpush.bf16.msra.mxu0 0
    %1233 = vmatpush.bf16.msra.mxu0 0
    %1234 = vmatpush.bf16.msra.mxu0 0
    %1235 = vmatpush.bf16.msra.mxu0 0
    %1236 = vmatpush.bf16.msra.mxu0 0
    %1237 = vmatpush.bf16.msra.mxu0 0
    %1238 = vmatpush.bf16.msra.mxu0 0
    %1239 = vmatpush.bf16.msra.mxu0 %v1230
    %1240 = vmatmul.bf16.gmra.mxu0 %v1227
    %v1241 = vpop.f32.mrf.mxu0
    %v1242 = vadd.f32 0.0, %v1241
    %v1243 = vpop.f32.mrf.mxu0
    %1244 = vdwg.mxu0
    %1247 = vrot.lane.b32.xlu0 %v994, 8
    %v1248 = vpop.permute.xlu0 %1247
    %1249 = vrot.lane.b32.xlu0 %v1018, 8
    %v1250 = vpop.permute.xlu0 %1249
    %1255 = vrot.lane.b32.xlu0 %v1109, 16
    %v1256 = vpop.permute.xlu0 %1255
    %1257 = vrot.lane.b32.xlu0 %v1130, 16
    %v1258 = vpop.permute.xlu0 %1257
    %1263 = vrot.lane.b32.xlu0 %v1221, 24
    %v1264 = vpop.permute.xlu0 %1263
    %1265 = vrot.lane.b32.xlu0 %v1242, 24
    %v1266 = vpop.permute.xlu0 %1265
    %v1269 = vsel %vm789, %v869, %v1248
    %v1270 = vsel %vm789, %v888, %v1250
    %vm1271 = vcmask 130048
    %v1272 = vsel %vm1271, %v1269, %v1256
    %v1273 = vsel %vm1271, %v1270, %v1258
    %vm1274 = vcmask 195584
    %v1275 = vsel %vm1274, %v1272, %v1264
    %v1276 = vsel %vm1274, %v1273, %v1266
    %v1277 = vpack.c.bf16 %v1276, %v1275
    %v1279 = vperm.slane %v637, 0
    %v1285 = vunpack.c.l.b16 %v633
    %v1286 = vunpack.c.l.b16 %v634
    %v1287 = vunpack.c.l.b16 %v635
    %v1288 = vunpack.c.l.b16 %v636
    %v1289 = vpack.c.b16 %v1286, %v1285
    %v1290 = vpack.c.b16 %v1288, %v1287
    %v1294 = vsel %vm380, %v1277, 0
    %1296 = vmatpush.bf16.msra.mxu0 0
    %1297 = vmatpush.bf16.msra.mxu0 0
    %1298 = vmatpush.bf16.msra.mxu0 0
    %1299 = vmatpush.bf16.msra.mxu0 0
    %1300 = vmatpush.bf16.msra.mxu0 0
    %1301 = vmatpush.bf16.msra.mxu0 0
    %1302 = vmatpush.bf16.msra.mxu0 %v1290
    %1303 = vmatpush.bf16.msra.mxu0 %v1289
    %1304 = vmatmul.bf16.gmra.mxu0 %v1294
    %v1305 = vpop.f32.mrf.mxu0
    %v1306 = vadd.f32 %v1279, %v1305
    %v1307 = vpop.f32.mrf.mxu0
    %v1308 = vadd.f32 %v1279, %v1307
    %1309 = vdwg.mxu0
    %v1310 = vadd.f32 %v614, %v1306
    %v1311 = vadd.f32 %v615, %v1308
    %v1312 = vld [vmem:[%s39] sm:$0x1]
    %v1313 = vld [vmem:[%s41] sm:$0x1]
    %v1314 = vld [vmem:[%s43] sm:$0xf]
    %v1315 = vld [vmem:[%s43 + $0x4] sm:$0xf]
    %v1316 = vld [vmem:[%s43 + $0x8] sm:$0xf]
    %v1317 = vld [vmem:[%s43 + $0xc] sm:$0xf]
    %v1318 = vld [vmem:[%s45] sm:$0x1]
    %v1319 = vld [vmem:[%s47] sm:$0xf]
    %v1320 = vld [vmem:[%s47 + $0x4] sm:$0xf]
    %v1321 = vld [vmem:[%s47 + $0x8] sm:$0xf]
    %v1322 = vld [vmem:[%s47 + $0xc] sm:$0xf]
    %v1323 = vld [vmem:[#allocation3] sm:$0x1]
    %v1324 = vld [vmem:[#allocation7] sm:$0x1]
    %v1325 = vld [vmem:[#allocation8] sm:$0x1]
    %v1326 = vld [vmem:[#allocation10] sm:$0x1]
    %v1327 = vld [vmem:[%s59] sm:$0xf]
    %v1328 = vld [vmem:[%s59 + $0x4] sm:$0xf]
    %v1329 = vld [vmem:[%s59 + $0x8] sm:$0xf]
    %v1330 = vld [vmem:[%s59 + $0xc] sm:$0xf]
    %v1331 = vld [vmem:[%s59 + $0x10] sm:$0xf]
    %v1332 = vld [vmem:[%s59 + $0x14] sm:$0xf]
    %v1333 = vld [vmem:[%s59 + $0x18] sm:$0xf]
    %v1334 = vld [vmem:[%s59 + $0x1c] sm:$0xf]
    %v1335 = vld [vmem:[#allocation11] sm:$0x1]
    %v1336 = vsel %vm380, %v1310, 0.0
    %1337 = vadd.xlane.f32.xlu0 %v1336
    %v1338 = vpop.xlane.xlu0 %1337
    %v1339 = vsel %vm380, %v1311, 0.0
    %1340 = vadd.xlane.f32.xlu0 %v1339
    %v1341 = vpop.xlane.xlu0 %1340
    %v1342 = vmul.f32 %v1338, %v393
    %v1343 = vmul.f32 %v1341, %v393
    %v1344 = vsub.f32 %v1310, %v1342
    %v1345 = vsub.f32 %v1311, %v1343
    %v1346 = vmul.f32 %v1344, %v1344
    %v1347 = vmul.f32 %v1345, %v1345
    %v1348 = vsel %vm380, %v1346, 0.0
    %1349 = vadd.xlane.f32.xlu0 %v1348
    %v1350 = vpop.xlane.xlu0 %1349
    %v1351 = vsel %vm380, %v1347, 0.0
    %1352 = vadd.xlane.f32.xlu0 %v1351
    %v1353 = vpop.xlane.xlu0 %1352
    %v1354 = vmul.f32 %v1350, %v393
    %v1355 = vmul.f32 %v1353, %v393
    %v1356 = vadd.f32 %v1354, 1e-05
    %v1357 = vadd.f32 %v1355, 1e-05
    %v1358 = vrsqrt.pop %v1356
    %v1359 = vmul.f32 %v1358, %v1356
    %v1360 = vmul.f32 %v1359, %v1358
    %v1361 = vmul.f32 0.5, %v1360
    %v1362 = vsub.f32 1.5, %v1361
    %v1363 = vmul.f32 %v1358, %v1362
    %vm1364 = vweird.f32 %v1356
    %vm1365 = vweird.f32 %v1358
    %vm1366 = vmor %vm1364, %vm1365
    %v1367 = vsel %vm1366, %v1358, %v1363
    %v1368 = vrsqrt.pop %v1357
    %v1369 = vmul.f32 %v1368, %v1357
    %v1370 = vmul.f32 %v1369, %v1368
    %v1371 = vmul.f32 0.5, %v1370
    %v1372 = vsub.f32 1.5, %v1371
    %v1373 = vmul.f32 %v1368, %v1372
    %vm1374 = vweird.f32 %v1357
    %vm1375 = vweird.f32 %v1368
    %vm1376 = vmor %vm1374, %vm1375
    %v1377 = vsel %vm1376, %v1368, %v1373
    %v1378 = vmul.f32 %v1344, %v1367
    %v1379 = vmul.f32 %v1345, %v1377
    %v1381 = vperm.slane %v1312, 0
    %v1383 = vmul.f32 %v1378, %v1381
    %v1384 = vmul.f32 %v1379, %v1381
    %v1386 = vperm.slane %v1313, 0
    %v1388 = vadd.f32 %v1383, %v1386
    %v1389 = vadd.f32 %v1384, %v1386
    %v1390 = vpack.c.bf16 %v1389, %v1388
    %v1392 = vperm.slane %v1318, 0
    %v1398 = vunpack.c.l.b16 %v1314
    %v1399 = vunpack.c.l.b16 %v1315
    %v1400 = vunpack.c.l.b16 %v1316
    %v1401 = vunpack.c.l.b16 %v1317
    %v1402 = vpack.c.b16 %v1399, %v1398
    %v1403 = vpack.c.b16 %v1401, %v1400
    %v1407 = vsel %vm380, %v1390, 0
    %1409 = vmatpush.bf16.msra.mxu0 0
    %1410 = vmatpush.bf16.msra.mxu0 0
    %1411 = vmatpush.bf16.msra.mxu0 0
    %1412 = vmatpush.bf16.msra.mxu0 0
    %1413 = vmatpush.bf16.msra.mxu0 0
    %1414 = vmatpush.bf16.msra.mxu0 0
    %1415 = vmatpush.bf16.msra.mxu0 %v1403
    %1416 = vmatpush.bf16.msra.mxu0 %v1402
    %1417 = vmatmul.bf16.gmra.mxu0 %v1407
    %v1418 = vpop.f32.mrf.mxu0
    %v1419 = vadd.f32 %v1392, %v1418
    %v1420 = vpop.f32.mrf.mxu0
    %v1421 = vadd.f32 %v1392, %v1420
    %1422 = vdwg.mxu0
    %v1424 = vperm.slane %v1323, 0
    %v1430 = vunpack.c.l.b16 %v1319
    %v1431 = vunpack.c.l.b16 %v1320
    %v1432 = vunpack.c.l.b16 %v1321
    %v1433 = vunpack.c.l.b16 %v1322
    %v1434 = vpack.c.b16 %v1431, %v1430
    %v1435 = vpack.c.b16 %v1433, %v1432
    %1438 = vmatpush.bf16.msra.mxu0 0
    %1439 = vmatpush.bf16.msra.mxu0 0
    %1440 = vmatpush.bf16.msra.mxu0 0
    %1441 = vmatpush.bf16.msra.mxu0 0
    %1442 = vmatpush.bf16.msra.mxu0 0
    %1443 = vmatpush.bf16.msra.mxu0 0
    %1444 = vmatpush.bf16.msra.mxu0 %v1435
    %1445 = vmatpush.bf16.msra.mxu0 %v1434
    %1446 = vmatmul.bf16.gmra.mxu0 %v1407
    %v1447 = vpop.f32.mrf.mxu0
    %v1448 = vadd.f32 %v1424, %v1447
    %v1449 = vpop.f32.mrf.mxu0
    %v1450 = vadd.f32 %v1424, %v1449
    %1451 = vdwg.mxu0
    %v1452 = vxor.u32 %v1448, 2147483648
    %v1453 = vxor.u32 %v1450, 2147483648
    %v1454 = vmul.f32 %v1452, 1.442695
    %v1455 = vpow.pop %v1454
    %v1456 = vmul.f32 %v1453, 1.442695
    %v1457 = vpow.pop %v1456
    %v1458 = vadd.f32 %v1455, 1.0
    %v1459 = vadd.f32 %v1457, 1.0
    %v1460 = vrcp.pop %v1458
    %v1461 = vmul.f32 %v1458, %v1460
    %v1462 = vsub.f32 1.0, %v1461
    %v1463 = vmul.f32 %v1460, %v1462
    %v1464 = vadd.f32 %v1460, %v1463
    %vm1465 = vweird.f32 %v1458
    %vm1466 = vweird.f32 %v1460
    %vm1467 = vmor %vm1465, %vm1466
    %v1468 = vsel %vm1467, %v1460, %v1464
    %v1469 = vand.u32 2147483647, %v1458
    %vm1470 = vcmp.eq.f32.partialorder %v1469, 8.507059e+37
    %v1471 = vand.u32 %v1458, 2147483648
    %v1472 = vor.u32 1.1754944e-38, %v1471
    %v1473 = vsel %vm1470, %v1472, %v1468
    %v1474 = vmul.f32 1.0, %v1473
    %v1475 = vrcp.pop %v1459
    %v1476 = vmul.f32 %v1459, %v1475
    %v1477 = vsub.f32 1.0, %v1476
    %v1478 = vmul.f32 %v1475, %v1477
    %v1479 = vadd.f32 %v1475, %v1478
    %vm1480 = vweird.f32 %v1459
    %vm1481 = vweird.f32 %v1475
    %vm1482 = vmor %vm1480, %vm1481
    %v1483 = vsel %vm1482, %v1475, %v1479
    %v1484 = vand.u32 2147483647, %v1459
    %vm1485 = vcmp.eq.f32.partialorder %v1484, 8.507059e+37
    %v1486 = vand.u32 %v1459, 2147483648
    %v1487 = vor.u32 1.1754944e-38, %v1486
    %v1488 = vsel %vm1485, %v1487, %v1483
    %v1489 = vmul.f32 1.0, %v1488
    %v1490 = vmul.f32 %v1419, %v1474
    %v1491 = vmul.f32 %v1421, %v1489
    %vm1492 = vcmask 522240
    %1493 = vst.msk [vmem:[#allocation2] sm:$0x7f] %vm1492, 0.0
    %1494 = vst.msk [vmem:[#allocation2 + $0x18] sm:$0x7f] %vm1492, 0.0
    %1495 = vst.msk [vmem:[#allocation2 + $0xf] sm:$0x7f] %vm1492, 0.0
    %1496 = vst.msk [vmem:[#allocation2 + $0x27] sm:$0x7f] %vm1492, 0.0
    %vm1497 = vcmask 523264
    %1498 = vst.msk [vmem:[#allocation2 + $0x7] sm:$0xff] %vm1497, %v1490
    %1499 = vst.msk [vmem:[#allocation2 + $0x1f] sm:$0xff] %vm1497, %v1491
    %v1500 = vld [vmem:[#allocation2] sm:$0xff]
    %v1501 = vld [vmem:[#allocation2 + $0x18] sm:$0xff]
    %v1502 = vpack.c.bf16 %v1501, %v1500
    %v1503 = vld [vmem:[#allocation5] sm:$0xf]
    %v1504 = vld [vmem:[#allocation5 + $0x4] sm:$0xf]
    %v1505 = vld [vmem:[#allocation5 + $0x8] sm:$0xf]
    %v1506 = vld [vmem:[#allocation5 + $0xc] sm:$0xf]
    %v1507 = vld [vmem:[#allocation5 + $0x10] sm:$0xf]
    %v1508 = vld [vmem:[#allocation5 + $0x14] sm:$0xf]
    %v1509 = vld [vmem:[#allocation5 + $0x18] sm:$0xf]
    %v1510 = vld [vmem:[#allocation5 + $0x1c] sm:$0xf]
    %v1511 = vld [vmem:[#allocation2 + $0x1] sm:$0xff]
    %v1512 = vld [vmem:[#allocation2 + $0x19] sm:$0xff]
    %v1513 = vpack.c.bf16 %v1512, %v1511
    %s1514 = scalar_lea.vmem [#allocation5], 32
    %v1515 = vld [vmem:[%s1514] sm:$0xf]
    %v1516 = vld [vmem:[%s1514 + $0x4] sm:$0xf]
    %v1517 = vld [vmem:[%s1514 + $0x8] sm:$0xf]
    %v1518 = vld [vmem:[%s1514 + $0xc] sm:$0xf]
    %v1519 = vld [vmem:[%s1514 + $0x10] sm:$0xf]
    %v1520 = vld [vmem:[%s1514 + $0x14] sm:$0xf]
    %v1521 = vld [vmem:[%s1514 + $0x18] sm:$0xf]
    %v1522 = vld [vmem:[%s1514 + $0x1c] sm:$0xf]
    %v1523 = vld [vmem:[#allocation2 + $0x2] sm:$0xff]
    %v1524 = vld [vmem:[#allocation2 + $0x1a] sm:$0xff]
    %v1525 = vpack.c.bf16 %v1524, %v1523
    %s1526 = scalar_lea.vmem [#allocation5], 64
    %v1527 = vld [vmem:[%s1526] sm:$0xf]
    %v1528 = vld [vmem:[%s1526 + $0x4] sm:$0xf]
    %v1529 = vld [vmem:[%s1526 + $0x8] sm:$0xf]
    %v1530 = vld [vmem:[%s1526 + $0xc] sm:$0xf]
    %v1531 = vld [vmem:[%s1526 + $0x10] sm:$0xf]
    %v1532 = vld [vmem:[%s1526 + $0x14] sm:$0xf]
    %v1533 = vld [vmem:[%s1526 + $0x18] sm:$0xf]
    %v1534 = vld [vmem:[%s1526 + $0x1c] sm:$0xf]
    %v1543 = vunpack.c.l.b16 %v1527
    %v1544 = vunpack.c.l.b16 %v1528
    %v1545 = vunpack.c.l.b16 %v1529
    %v1546 = vunpack.c.l.b16 %v1530
    %v1547 = vunpack.c.l.b16 %v1531
    %v1548 = vunpack.c.l.b16 %v1532
    %v1549 = vunpack.c.l.b16 %v1533
    %v1550 = vunpack.c.l.b16 %v1534
    %v1551 = vpack.c.b16 %v1544, %v1543
    %v1552 = vpack.c.b16 %v1546, %v1545
    %v1553 = vpack.c.b16 %v1548, %v1547
    %v1554 = vpack.c.b16 %v1550, %v1549
    %v1560 = vsel %vm1497, %v1525, 0
    %1562 = vmatpush.bf16.msra.mxu0 0
    %1563 = vmatpush.bf16.msra.mxu0 0
    %1564 = vmatpush.bf16.msra.mxu0 0
    %1565 = vmatpush.bf16.msra.mxu0 0
    %1566 = vmatpush.bf16.msra.mxu0 %v1554
    %1567 = vmatpush.bf16.msra.mxu0 %v1553
    %1568 = vmatpush.bf16.msra.mxu0 %v1552
    %1569 = vmatpush.bf16.msra.mxu0 %v1551
    %1570 = vmatmul.bf16.gmra.mxu0 %v1560
    %v1571 = vpop.f32.mrf.mxu0
    %v1572 = vadd.f32 0.0, %v1571
    %v1573 = vpop.f32.mrf.mxu0
    %v1574 = vadd.f32 0.0, %v1573
    %1575 = vdwg.mxu0
    %v1584 = vunpack.c.l.b16 %v1503
    %v1585 = vunpack.c.l.b16 %v1504
    %v1586 = vunpack.c.l.b16 %v1505
    %v1587 = vunpack.c.l.b16 %v1506
    %v1588 = vunpack.c.l.b16 %v1507
    %v1589 = vunpack.c.l.b16 %v1508
    %v1590 = vunpack.c.l.b16 %v1509
    %v1591 = vunpack.c.l.b16 %v1510
    %v1592 = vpack.c.b16 %v1585, %v1584
    %v1593 = vpack.c.b16 %v1587, %v1586
    %v1594 = vpack.c.b16 %v1589, %v1588
    %v1595 = vpack.c.b16 %v1591, %v1590
    %v1601 = vsel %vm1497, %v1502, 0
    %1603 = vmatpush.bf16.msra.mxu0 0
    %1604 = vmatpush.bf16.msra.mxu0 0
    %1605 = vmatpush.bf16.msra.mxu0 0
    %1606 = vmatpush.bf16.msra.mxu0 0
    %1607 = vmatpush.bf16.msra.mxu0 %v1595
    %1608 = vmatpush.bf16.msra.mxu0 %v1594
    %1609 = vmatpush.bf16.msra.mxu0 %v1593
    %1610 = vmatpush.bf16.msra.mxu0 %v1592
    %1611 = vmatmul.bf16.gmra.mxu0 %v1601
    %v1612 = vpop.f32.mrf.mxu0
    %v1613 = vadd.f32 %v1572, %v1612
    %v1614 = vpop.f32.mrf.mxu0
    %v1615 = vadd.f32 %v1574, %v1614
    %1616 = vdwg.mxu0
    %v1617 = vld [vmem:[#allocation2 + $0x3] sm:$0xff]
    %v1618 = vld [vmem:[#allocation2 + $0x1b] sm:$0xff]
    %v1619 = vpack.c.bf16 %v1618, %v1617
    %s1620 = scalar_lea.vmem [#allocation5], 96
    %v1621 = vld [vmem:[%s1620] sm:$0xf]
    %v1622 = vld [vmem:[%s1620 + $0x4] sm:$0xf]
    %v1623 = vld [vmem:[%s1620 + $0x8] sm:$0xf]
    %v1624 = vld [vmem:[%s1620 + $0xc] sm:$0xf]
    %v1625 = vld [vmem:[%s1620 + $0x10] sm:$0xf]
    %v1626 = vld [vmem:[%s1620 + $0x14] sm:$0xf]
    %v1627 = vld [vmem:[%s1620 + $0x18] sm:$0xf]
    %v1628 = vld [vmem:[%s1620 + $0x1c] sm:$0xf]
    %v1637 = vunpack.c.l.b16 %v1621
    %v1638 = vunpack.c.l.b16 %v1622
    %v1639 = vunpack.c.l.b16 %v1623
    %v1640 = vunpack.c.l.b16 %v1624
    %v1641 = vunpack.c.l.b16 %v1625
    %v1642 = vunpack.c.l.b16 %v1626
    %v1643 = vunpack.c.l.b16 %v1627
    %v1644 = vunpack.c.l.b16 %v1628
    %v1645 = vpack.c.b16 %v1638, %v1637
    %v1646 = vpack.c.b16 %v1640, %v1639
    %v1647 = vpack.c.b16 %v1642, %v1641
    %v1648 = vpack.c.b16 %v1644, %v1643
    %v1654 = vsel %vm1497, %v1619, 0
    %1656 = vmatpush.bf16.msra.mxu0 0
    %1657 = vmatpush.bf16.msra.mxu0 0
    %1658 = vmatpush.bf16.msra.mxu0 0
    %1659 = vmatpush.bf16.msra.mxu0 0
    %1660 = vmatpush.bf16.msra.mxu0 %v1648
    %1661 = vmatpush.bf16.msra.mxu0 %v1647
    %1662 = vmatpush.bf16.msra.mxu0 %v1646
    %1663 = vmatpush.bf16.msra.mxu0 %v1645
    %1664 = vmatmul.bf16.gmra.mxu0 %v1654
    %v1665 = vpop.f32.mrf.mxu0
    %v1666 = vadd.f32 0.0, %v1665
    %v1667 = vpop.f32.mrf.mxu0
    %v1668 = vadd.f32 0.0, %v1667
    %1669 = vdwg.mxu0
    %v1678 = vunpack.c.l.b16 %v1515
    %v1679 = vunpack.c.l.b16 %v1516
    %v1680 = vunpack.c.l.b16 %v1517
    %v1681 = vunpack.c.l.b16 %v1518
    %v1682 = vunpack.c.l.b16 %v1519
    %v1683 = vunpack.c.l.b16 %v1520
    %v1684 = vunpack.c.l.b16 %v1521
    %v1685 = vunpack.c.l.b16 %v1522
    %v1686 = vpack.c.b16 %v1679, %v1678
    %v1687 = vpack.c.b16 %v1681, %v1680
    %v1688 = vpack.c.b16 %v1683, %v1682
    %v1689 = vpack.c.b16 %v1685, %v1684
    %v1695 = vsel %vm1497, %v1513, 0
    %1697 = vmatpush.bf16.msra.mxu0 0
    %1698 = vmatpush.bf16.msra.mxu0 0
    %1699 = vmatpush.bf16.msra.mxu0 0
    %1700 = vmatpush.bf16.msra.mxu0 0
    %1701 = vmatpush.bf16.msra.mxu0 %v1689
    %1702 = vmatpush.bf16.msra.mxu0 %v1688
    %1703 = vmatpush.bf16.msra.mxu0 %v1687
    %1704 = vmatpush.bf16.msra.mxu0 %v1686
    %1705 = vmatmul.bf16.gmra.mxu0 %v1695
    %v1706 = vpop.f32.mrf.mxu0
    %v1707 = vadd.f32 %v1666, %v1706
    %v1708 = vpop.f32.mrf.mxu0
    %v1709 = vadd.f32 %v1668, %v1708
    %1710 = vdwg.mxu0
    %v1711 = vld [vmem:[#allocation2 + $0x4] sm:$0xff]
    %v1712 = vld [vmem:[#allocation2 + $0x1c] sm:$0xff]
    %v1713 = vpack.c.bf16 %v1712, %v1711
    %s1714 = scalar_lea.vmem [#allocation5], 128
    %v1715 = vld [vmem:[%s1714] sm:$0xf]
    %v1716 = vld [vmem:[%s1714 + $0x4] sm:$0xf]
    %v1717 = vld [vmem:[%s1714 + $0x8] sm:$0xf]
    %v1718 = vld [vmem:[%s1714 + $0xc] sm:$0xf]
    %v1719 = vld [vmem:[%s1714 + $0x10] sm:$0xf]
    %v1720 = vld [vmem:[%s1714 + $0x14] sm:$0xf]
    %v1721 = vld [vmem:[%s1714 + $0x18] sm:$0xf]
    %v1722 = vld [vmem:[%s1714 + $0x1c] sm:$0xf]
    %v1731 = vunpack.c.l.b16 %v1715
    %v1732 = vunpack.c.l.b16 %v1716
    %v1733 = vunpack.c.l.b16 %v1717
    %v1734 = vunpack.c.l.b16 %v1718
    %v1735 = vunpack.c.l.b16 %v1719
    %v1736 = vunpack.c.l.b16 %v1720
    %v1737 = vunpack.c.l.b16 %v1721
    %v1738 = vunpack.c.l.b16 %v1722
    %v1739 = vpack.c.b16 %v1732, %v1731
    %v1740 = vpack.c.b16 %v1734, %v1733
    %v1741 = vpack.c.b16 %v1736, %v1735
    %v1742 = vpack.c.b16 %v1738, %v1737
    %v1748 = vsel %vm1497, %v1713, 0
    %1750 = vmatpush.bf16.msra.mxu0 0
    %1751 = vmatpush.bf16.msra.mxu0 0
    %1752 = vmatpush.bf16.msra.mxu0 0
    %1753 = vmatpush.bf16.msra.mxu0 0
    %1754 = vmatpush.bf16.msra.mxu0 %v1742
    %1755 = vmatpush.bf16.msra.mxu0 %v1741
    %1756 = vmatpush.bf16.msra.mxu0 %v1740
    %1757 = vmatpush.bf16.msra.mxu0 %v1739
    %1758 = vmatmul.bf16.gmra.mxu0 %v1748
    %v1759 = vpop.f32.mrf.mxu0
    %v1760 = vadd.f32 0.0, %v1759
    %v1761 = vpop.f32.mrf.mxu0
    %v1762 = vadd.f32 0.0, %v1761
    %1763 = vdwg.mxu0
    %v1764 = vadd.f32 %v1613, %v1760
    %v1765 = vadd.f32 %v1615, %v1762
    %v1766 = vld [vmem:[#allocation2 + $0x5] sm:$0xff]
    %v1767 = vld [vmem:[#allocation2 + $0x1d] sm:$0xff]
    %v1768 = vpack.c.bf16 %v1767, %v1766
    %s1769 = scalar_lea.vmem [#allocation5], 160
    %v1770 = vld [vmem:[%s1769] sm:$0xf]
    %v1771 = vld [vmem:[%s1769 + $0x4] sm:$0xf]
    %v1772 = vld [vmem:[%s1769 + $0x8] sm:$0xf]
    %v1773 = vld [vmem:[%s1769 + $0xc] sm:$0xf]
    %v1774 = vld [vmem:[%s1769 + $0x10] sm:$0xf]
    %v1775 = vld [vmem:[%s1769 + $0x14] sm:$0xf]
    %v1776 = vld [vmem:[%s1769 + $0x18] sm:$0xf]
    %v1777 = vld [vmem:[%s1769 + $0x1c] sm:$0xf]
    %v1786 = vunpack.c.l.b16 %v1770
    %v1787 = vunpack.c.l.b16 %v1771
    %v1788 = vunpack.c.l.b16 %v1772
    %v1789 = vunpack.c.l.b16 %v1773
    %v1790 = vunpack.c.l.b16 %v1774
    %v1791 = vunpack.c.l.b16 %v1775
    %v1792 = vunpack.c.l.b16 %v1776
    %v1793 = vunpack.c.l.b16 %v1777
    %v1794 = vpack.c.b16 %v1787, %v1786
    %v1795 = vpack.c.b16 %v1789, %v1788
    %v1796 = vpack.c.b16 %v1791, %v1790
    %v1797 = vpack.c.b16 %v1793, %v1792
    %v1803 = vsel %vm1497, %v1768, 0
    %1805 = vmatpush.bf16.msra.mxu0 0
    %1806 = vmatpush.bf16.msra.mxu0 0
    %1807 = vmatpush.bf16.msra.mxu0 0
    %1808 = vmatpush.bf16.msra.mxu0 0
    %1809 = vmatpush.bf16.msra.mxu0 %v1797
    %1810 = vmatpush.bf16.msra.mxu0 %v1796
    %1811 = vmatpush.bf16.msra.mxu0 %v1795
    %1812 = vmatpush.bf16.msra.mxu0 %v1794
    %1813 = vmatmul.bf16.gmra.mxu0 %v1803
    %v1814 = vpop.f32.mrf.mxu0
    %v1815 = vadd.f32 0.0, %v1814
    %v1816 = vpop.f32.mrf.mxu0
    %v1817 = vadd.f32 0.0, %v1816
    %1818 = vdwg.mxu0
    %v1819 = vadd.f32 %v1707, %v1815
    %v1820 = vadd.f32 %v1709, %v1817
    %v1821 = vld [vmem:[#allocation2 + $0x6] sm:$0xff]
    %v1822 = vld [vmem:[#allocation2 + $0x1e] sm:$0xff]
    %v1823 = vpack.c.bf16 %v1822, %v1821
    %s1824 = scalar_lea.vmem [#allocation5], 192
    %v1825 = vld [vmem:[%s1824] sm:$0xf]
    %v1826 = vld [vmem:[%s1824 + $0x4] sm:$0xf]
    %v1827 = vld [vmem:[%s1824 + $0x8] sm:$0xf]
    %v1828 = vld [vmem:[%s1824 + $0xc] sm:$0xf]
    %v1829 = vld [vmem:[%s1824 + $0x10] sm:$0xf]
    %v1830 = vld [vmem:[%s1824 + $0x14] sm:$0xf]
    %v1831 = vld [vmem:[%s1824 + $0x18] sm:$0xf]
    %v1832 = vld [vmem:[%s1824 + $0x1c] sm:$0xf]
    %v1841 = vunpack.c.l.b16 %v1825
    %v1842 = vunpack.c.l.b16 %v1826
    %v1843 = vunpack.c.l.b16 %v1827
    %v1844 = vunpack.c.l.b16 %v1828
    %v1845 = vunpack.c.l.b16 %v1829
    %v1846 = vunpack.c.l.b16 %v1830
    %v1847 = vunpack.c.l.b16 %v1831
    %v1848 = vunpack.c.l.b16 %v1832
    %v1849 = vpack.c.b16 %v1842, %v1841
    %v1850 = vpack.c.b16 %v1844, %v1843
    %v1851 = vpack.c.b16 %v1846, %v1845
    %v1852 = vpack.c.b16 %v1848, %v1847
    %v1858 = vsel %vm1497, %v1823, 0
    %1860 = vmatpush.bf16.msra.mxu0 0
    %1861 = vmatpush.bf16.msra.mxu0 0
    %1862 = vmatpush.bf16.msra.mxu0 0
    %1863 = vmatpush.bf16.msra.mxu0 0
    %1864 = vmatpush.bf16.msra.mxu0 %v1852
    %1865 = vmatpush.bf16.msra.mxu0 %v1851
    %1866 = vmatpush.bf16.msra.mxu0 %v1850
    %1867 = vmatpush.bf16.msra.mxu0 %v1849
    %1868 = vmatmul.bf16.gmra.mxu0 %v1858
    %v1869 = vpop.f32.mrf.mxu0
    %v1870 = vadd.f32 0.0, %v1869
    %v1871 = vpop.f32.mrf.mxu0
    %v1872 = vadd.f32 0.0, %v1871
    %1873 = vdwg.mxu0
    %v1874 = vadd.f32 %v1764, %v1870
    %v1875 = vadd.f32 %v1765, %v1872
    %v1876 = vld [vmem:[#allocation2 + $0x7] sm:$0xff]
    %v1877 = vld [vmem:[#allocation2 + $0x1f] sm:$0xff]
    %v1878 = vpack.c.bf16 %v1877, %v1876
    %s1879 = scalar_lea.vmem [#allocation5], 224
    %v1880 = vld [vmem:[%s1879] sm:$0xf]
    %v1881 = vld [vmem:[%s1879 + $0x4] sm:$0xf]
    %v1882 = vld [vmem:[%s1879 + $0x8] sm:$0xf]
    %v1883 = vld [vmem:[%s1879 + $0xc] sm:$0xf]
    %v1884 = vld [vmem:[%s1879 + $0x10] sm:$0xf]
    %v1885 = vld [vmem:[%s1879 + $0x14] sm:$0xf]
    %v1886 = vld [vmem:[%s1879 + $0x18] sm:$0xf]
    %v1887 = vld [vmem:[%s1879 + $0x1c] sm:$0xf]
    %v1896 = vunpack.c.l.b16 %v1880
    %v1897 = vunpack.c.l.b16 %v1881
    %v1898 = vunpack.c.l.b16 %v1882
    %v1899 = vunpack.c.l.b16 %v1883
    %v1900 = vunpack.c.l.b16 %v1884
    %v1901 = vunpack.c.l.b16 %v1885
    %v1902 = vunpack.c.l.b16 %v1886
    %v1903 = vunpack.c.l.b16 %v1887
    %v1904 = vpack.c.b16 %v1897, %v1896
    %v1905 = vpack.c.b16 %v1899, %v1898
    %v1906 = vpack.c.b16 %v1901, %v1900
    %v1907 = vpack.c.b16 %v1903, %v1902
    %v1913 = vsel %vm1497, %v1878, 0
    %1915 = vmatpush.bf16.msra.mxu0 0
    %1916 = vmatpush.bf16.msra.mxu0 0
    %1917 = vmatpush.bf16.msra.mxu0 0
    %1918 = vmatpush.bf16.msra.mxu0 0
    %1919 = vmatpush.bf16.msra.mxu0 %v1907
    %1920 = vmatpush.bf16.msra.mxu0 %v1906
    %1921 = vmatpush.bf16.msra.mxu0 %v1905
    %1922 = vmatpush.bf16.msra.mxu0 %v1904
    %1923 = vmatmul.bf16.gmra.mxu0 %v1913
    %v1924 = vpop.f32.mrf.mxu0
    %v1925 = vadd.f32 0.0, %v1924
    %v1926 = vpop.f32.mrf.mxu0
    %v1927 = vadd.f32 0.0, %v1926
    %1928 = vdwg.mxu0
    %v1929 = vadd.f32 %v1819, %v1925
    %v1930 = vadd.f32 %v1820, %v1927
    %v1931 = vld [vmem:[#allocation2 + $0x8] sm:$0xff]
    %v1932 = vld [vmem:[#allocation2 + $0x20] sm:$0xff]
    %v1933 = vpack.c.bf16 %v1932, %v1931
    %s1934 = scalar_lea.vmem [#allocation5], 256
    %v1935 = vld [vmem:[%s1934] sm:$0xf]
    %v1936 = vld [vmem:[%s1934 + $0x4] sm:$0xf]
    %v1937 = vld [vmem:[%s1934 + $0x8] sm:$0xf]
    %v1938 = vld [vmem:[%s1934 + $0xc] sm:$0xf]
    %v1939 = vld [vmem:[%s1934 + $0x10] sm:$0xf]
    %v1940 = vld [vmem:[%s1934 + $0x14] sm:$0xf]
    %v1941 = vld [vmem:[%s1934 + $0x18] sm:$0xf]
    %v1942 = vld [vmem:[%s1934 + $0x1c] sm:$0xf]
    %v1951 = vunpack.c.l.b16 %v1935
    %v1952 = vunpack.c.l.b16 %v1936
    %v1953 = vunpack.c.l.b16 %v1937
    %v1954 = vunpack.c.l.b16 %v1938
    %v1955 = vunpack.c.l.b16 %v1939
    %v1956 = vunpack.c.l.b16 %v1940
    %v1957 = vunpack.c.l.b16 %v1941
    %v1958 = vunpack.c.l.b16 %v1942
    %v1959 = vpack.c.b16 %v1952, %v1951
    %v1960 = vpack.c.b16 %v1954, %v1953
    %v1961 = vpack.c.b16 %v1956, %v1955
    %v1962 = vpack.c.b16 %v1958, %v1957
    %v1968 = vsel %vm1497, %v1933, 0
    %1970 = vmatpush.bf16.msra.mxu0 0
    %1971 = vmatpush.bf16.msra.mxu0 0
    %1972 = vmatpush.bf16.msra.mxu0 0
    %1973 = vmatpush.bf16.msra.mxu0 0
    %1974 = vmatpush.bf16.msra.mxu0 %v1962
    %1975 = vmatpush.bf16.msra.mxu0 %v1961
    %1976 = vmatpush.bf16.msra.mxu0 %v1960
    %1977 = vmatpush.bf16.msra.mxu0 %v1959
    %1978 = vmatmul.bf16.gmra.mxu0 %v1968
    %v1979 = vpop.f32.mrf.mxu0
    %v1980 = vadd.f32 0.0, %v1979
    %v1981 = vpop.f32.mrf.mxu0
    %v1982 = vadd.f32 0.0, %v1981
    %1983 = vdwg.mxu0
    %v1984 = vadd.f32 %v1874, %v1980
    %v1985 = vadd.f32 %v1875, %v1982
    %v1986 = vld [vmem:[#allocation2 + $0x9] sm:$0xff]
    %v1987 = vld [vmem:[#allocation2 + $0x21] sm:$0xff]
    %v1988 = vpack.c.bf16 %v1987, %v1986
    %s1989 = scalar_lea.vmem [#allocation5], 288
    %v1990 = vld [vmem:[%s1989] sm:$0xf]
    %v1991 = vld [vmem:[%s1989 + $0x4] sm:$0xf]
    %v1992 = vld [vmem:[%s1989 + $0x8] sm:$0xf]
    %v1993 = vld [vmem:[%s1989 + $0xc] sm:$0xf]
    %v1994 = vld [vmem:[%s1989 + $0x10] sm:$0xf]
    %v1995 = vld [vmem:[%s1989 + $0x14] sm:$0xf]
    %v1996 = vld [vmem:[%s1989 + $0x18] sm:$0xf]
    %v1997 = vld [vmem:[%s1989 + $0x1c] sm:$0xf]
    %v2006 = vunpack.c.l.b16 %v1990
    %v2007 = vunpack.c.l.b16 %v1991
    %v2008 = vunpack.c.l.b16 %v1992
    %v2009 = vunpack.c.l.b16 %v1993
    %v2010 = vunpack.c.l.b16 %v1994
    %v2011 = vunpack.c.l.b16 %v1995
    %v2012 = vunpack.c.l.b16 %v1996
    %v2013 = vunpack.c.l.b16 %v1997
    %v2014 = vpack.c.b16 %v2007, %v2006
    %v2015 = vpack.c.b16 %v2009, %v2008
    %v2016 = vpack.c.b16 %v2011, %v2010
    %v2017 = vpack.c.b16 %v2013, %v2012
    %v2023 = vsel %vm1497, %v1988, 0
    %2025 = vmatpush.bf16.msra.mxu0 0
    %2026 = vmatpush.bf16.msra.mxu0 0
    %2027 = vmatpush.bf16.msra.mxu0 0
    %2028 = vmatpush.bf16.msra.mxu0 0
    %2029 = vmatpush.bf16.msra.mxu0 %v2017
    %2030 = vmatpush.bf16.msra.mxu0 %v2016
    %2031 = vmatpush.bf16.msra.mxu0 %v2015
    %2032 = vmatpush.bf16.msra.mxu0 %v2014
    %2033 = vmatmul.bf16.gmra.mxu0 %v2023
    %v2034 = vpop.f32.mrf.mxu0
    %v2035 = vadd.f32 0.0, %v2034
    %v2036 = vpop.f32.mrf.mxu0
    %v2037 = vadd.f32 0.0, %v2036
    %2038 = vdwg.mxu0
    %v2039 = vadd.f32 %v1929, %v2035
    %v2040 = vadd.f32 %v1930, %v2037
    %v2041 = vld [vmem:[#allocation2 + $0xa] sm:$0xff]
    %v2042 = vld [vmem:[#allocation2 + $0x22] sm:$0xff]
    %v2043 = vpack.c.bf16 %v2042, %v2041
    %s2044 = scalar_lea.vmem [#allocation5], 320
    %v2045 = vld [vmem:[%s2044] sm:$0xf]
    %v2046 = vld [vmem:[%s2044 + $0x4] sm:$0xf]
    %v2047 = vld [vmem:[%s2044 + $0x8] sm:$0xf]
    %v2048 = vld [vmem:[%s2044 + $0xc] sm:$0xf]
    %v2049 = vld [vmem:[%s2044 + $0x10] sm:$0xf]
    %v2050 = vld [vmem:[%s2044 + $0x14] sm:$0xf]
    %v2051 = vld [vmem:[%s2044 + $0x18] sm:$0xf]
    %v2052 = vld [vmem:[%s2044 + $0x1c] sm:$0xf]
    %v2061 = vunpack.c.l.b16 %v2045
    %v2062 = vunpack.c.l.b16 %v2046
    %v2063 = vunpack.c.l.b16 %v2047
    %v2064 = vunpack.c.l.b16 %v2048
    %v2065 = vunpack.c.l.b16 %v2049
    %v2066 = vunpack.c.l.b16 %v2050
    %v2067 = vunpack.c.l.b16 %v2051
    %v2068 = vunpack.c.l.b16 %v2052
    %v2069 = vpack.c.b16 %v2062, %v2061
    %v2070 = vpack.c.b16 %v2064, %v2063
    %v2071 = vpack.c.b16 %v2066, %v2065
    %v2072 = vpack.c.b16 %v2068, %v2067
    %v2078 = vsel %vm1497, %v2043, 0
    %2080 = vmatpush.bf16.msra.mxu0 0
    %2081 = vmatpush.bf16.msra.mxu0 0
    %2082 = vmatpush.bf16.msra.mxu0 0
    %2083 = vmatpush.bf16.msra.mxu0 0
    %2084 = vmatpush.bf16.msra.mxu0 %v2072
    %2085 = vmatpush.bf16.msra.mxu0 %v2071
    %2086 = vmatpush.bf16.msra.mxu0 %v2070
    %2087 = vmatpush.bf16.msra.mxu0 %v2069
    %2088 = vmatmul.bf16.gmra.mxu0 %v2078
    %v2089 = vpop.f32.mrf.mxu0
    %v2090 = vadd.f32 0.0, %v2089
    %v2091 = vpop.f32.mrf.mxu0
    %v2092 = vadd.f32 0.0, %v2091
    %2093 = vdwg.mxu0
    %v2094 = vadd.f32 %v1984, %v2090
    %v2095 = vadd.f32 %v1985, %v2092
    %v2096 = vld [vmem:[#allocation2 + $0xb] sm:$0xff]
    %v2097 = vld [vmem:[#allocation2 + $0x23] sm:$0xff]
    %v2098 = vpack.c.bf16 %v2097, %v2096
    %s2099 = scalar_lea.vmem [#allocation5], 352
    %v2100 = vld [vmem:[%s2099] sm:$0xf]
    %v2101 = vld [vmem:[%s2099 + $0x4] sm:$0xf]
    %v2102 = vld [vmem:[%s2099 + $0x8] sm:$0xf]
    %v2103 = vld [vmem:[%s2099 + $0xc] sm:$0xf]
    %v2104 = vld [vmem:[%s2099 + $0x10] sm:$0xf]
    %v2105 = vld [vmem:[%s2099 + $0x14] sm:$0xf]
    %v2106 = vld [vmem:[%s2099 + $0x18] sm:$0xf]
    %v2107 = vld [vmem:[%s2099 + $0x1c] sm:$0xf]
    %v2116 = vunpack.c.l.b16 %v2100
    %v2117 = vunpack.c.l.b16 %v2101
    %v2118 = vunpack.c.l.b16 %v2102
    %v2119 = vunpack.c.l.b16 %v2103
    %v2120 = vunpack.c.l.b16 %v2104
    %v2121 = vunpack.c.l.b16 %v2105
    %v2122 = vunpack.c.l.b16 %v2106
    %v2123 = vunpack.c.l.b16 %v2107
    %v2124 = vpack.c.b16 %v2117, %v2116
    %v2125 = vpack.c.b16 %v2119, %v2118
    %v2126 = vpack.c.b16 %v2121, %v2120
    %v2127 = vpack.c.b16 %v2123, %v2122
    %v2133 = vsel %vm1497, %v2098, 0
    %2135 = vmatpush.bf16.msra.mxu0 0
    %2136 = vmatpush.bf16.msra.mxu0 0
    %2137 = vmatpush.bf16.msra.mxu0 0
    %2138 = vmatpush.bf16.msra.mxu0 0
    %2139 = vmatpush.bf16.msra.mxu0 %v2127
    %2140 = vmatpush.bf16.msra.mxu0 %v2126
    %2141 = vmatpush.bf16.msra.mxu0 %v2125
    %2142 = vmatpush.bf16.msra.mxu0 %v2124
    %2143 = vmatmul.bf16.gmra.mxu0 %v2133
    %v2144 = vpop.f32.mrf.mxu0
    %v2145 = vadd.f32 0.0, %v2144
    %v2146 = vpop.f32.mrf.mxu0
    %v2147 = vadd.f32 0.0, %v2146
    %2148 = vdwg.mxu0
    %v2149 = vadd.f32 %v2039, %v2145
    %v2150 = vadd.f32 %v2040, %v2147
    %v2151 = vld [vmem:[#allocation2 + $0xc] sm:$0xff]
    %v2152 = vld [vmem:[#allocation2 + $0x24] sm:$0xff]
    %v2153 = vpack.c.bf16 %v2152, %v2151
    %s2154 = scalar_lea.vmem [#allocation5], 384
    %v2155 = vld [vmem:[%s2154] sm:$0xf]
    %v2156 = vld [vmem:[%s2154 + $0x4] sm:$0xf]
    %v2157 = vld [vmem:[%s2154 + $0x8] sm:$0xf]
    %v2158 = vld [vmem:[%s2154 + $0xc] sm:$0xf]
    %v2159 = vld [vmem:[%s2154 + $0x10] sm:$0xf]
    %v2160 = vld [vmem:[%s2154 + $0x14] sm:$0xf]
    %v2161 = vld [vmem:[%s2154 + $0x18] sm:$0xf]
    %v2162 = vld [vmem:[%s2154 + $0x1c] sm:$0xf]
    %v2171 = vunpack.c.l.b16 %v2155
    %v2172 = vunpack.c.l.b16 %v2156
    %v2173 = vunpack.c.l.b16 %v2157
    %v2174 = vunpack.c.l.b16 %v2158
    %v2175 = vunpack.c.l.b16 %v2159
    %v2176 = vunpack.c.l.b16 %v2160
    %v2177 = vunpack.c.l.b16 %v2161
    %v2178 = vunpack.c.l.b16 %v2162
    %v2179 = vpack.c.b16 %v2172, %v2171
    %v2180 = vpack.c.b16 %v2174, %v2173
    %v2181 = vpack.c.b16 %v2176, %v2175
    %v2182 = vpack.c.b16 %v2178, %v2177
    %v2188 = vsel %vm1497, %v2153, 0
    %2190 = vmatpush.bf16.msra.mxu0 0
    %2191 = vmatpush.bf16.msra.mxu0 0
    %2192 = vmatpush.bf16.msra.mxu0 0
    %2193 = vmatpush.bf16.msra.mxu0 0
    %2194 = vmatpush.bf16.msra.mxu0 %v2182
    %2195 = vmatpush.bf16.msra.mxu0 %v2181
    %2196 = vmatpush.bf16.msra.mxu0 %v2180
    %2197 = vmatpush.bf16.msra.mxu0 %v2179
    %2198 = vmatmul.bf16.gmra.mxu0 %v2188
    %v2199 = vpop.f32.mrf.mxu0
    %v2200 = vadd.f32 0.0, %v2199
    %v2201 = vpop.f32.mrf.mxu0
    %v2202 = vadd.f32 0.0, %v2201
    %2203 = vdwg.mxu0
    %v2204 = vadd.f32 %v2094, %v2200
    %v2205 = vadd.f32 %v2095, %v2202
    %v2206 = vld [vmem:[#allocation2 + $0xd] sm:$0xff]
    %v2207 = vld [vmem:[#allocation2 + $0x25] sm:$0xff]
    %v2208 = vpack.c.bf16 %v2207, %v2206
    %s2209 = scalar_lea.vmem [#allocation5], 416
    %v2210 = vld [vmem:[%s2209] sm:$0xf]
    %v2211 = vld [vmem:[%s2209 + $0x4] sm:$0xf]
    %v2212 = vld [vmem:[%s2209 + $0x8] sm:$0xf]
    %v2213 = vld [vmem:[%s2209 + $0xc] sm:$0xf]
    %v2214 = vld [vmem:[%s2209 + $0x10] sm:$0xf]
    %v2215 = vld [vmem:[%s2209 + $0x14] sm:$0xf]
    %v2216 = vld [vmem:[%s2209 + $0x18] sm:$0xf]
    %v2217 = vld [vmem:[%s2209 + $0x1c] sm:$0xf]
    %v2226 = vunpack.c.l.b16 %v2210
    %v2227 = vunpack.c.l.b16 %v2211
    %v2228 = vunpack.c.l.b16 %v2212
    %v2229 = vunpack.c.l.b16 %v2213
    %v2230 = vunpack.c.l.b16 %v2214
    %v2231 = vunpack.c.l.b16 %v2215
    %v2232 = vunpack.c.l.b16 %v2216
    %v2233 = vunpack.c.l.b16 %v2217
    %v2234 = vpack.c.b16 %v2227, %v2226
    %v2235 = vpack.c.b16 %v2229, %v2228
    %v2236 = vpack.c.b16 %v2231, %v2230
    %v2237 = vpack.c.b16 %v2233, %v2232
    %v2243 = vsel %vm1497, %v2208, 0
    %2245 = vmatpush.bf16.msra.mxu0 0
    %2246 = vmatpush.bf16.msra.mxu0 0
    %2247 = vmatpush.bf16.msra.mxu0 0
    %2248 = vmatpush.bf16.msra.mxu0 0
    %2249 = vmatpush.bf16.msra.mxu0 %v2237
    %2250 = vmatpush.bf16.msra.mxu0 %v2236
    %2251 = vmatpush.bf16.msra.mxu0 %v2235
    %2252 = vmatpush.bf16.msra.mxu0 %v2234
    %2253 = vmatmul.bf16.gmra.mxu0 %v2243
    %v2254 = vpop.f32.mrf.mxu0
    %v2255 = vadd.f32 0.0, %v2254
    %v2256 = vpop.f32.mrf.mxu0
    %v2257 = vadd.f32 0.0, %v2256
    %2258 = vdwg.mxu0
    %v2259 = vadd.f32 %v2149, %v2255
    %v2260 = vadd.f32 %v2150, %v2257
    %v2261 = vld [vmem:[#allocation2 + $0xe] sm:$0xff]
    %v2262 = vld [vmem:[#allocation2 + $0x26] sm:$0xff]
    %v2263 = vpack.c.bf16 %v2262, %v2261
    %s2264 = scalar_lea.vmem [#allocation5], 448
    %v2265 = vld [vmem:[%s2264] sm:$0xf]
    %v2266 = vld [vmem:[%s2264 + $0x4] sm:$0xf]
    %v2267 = vld [vmem:[%s2264 + $0x8] sm:$0xf]
    %v2268 = vld [vmem:[%s2264 + $0xc] sm:$0xf]
    %v2269 = vld [vmem:[%s2264 + $0x10] sm:$0xf]
    %v2270 = vld [vmem:[%s2264 + $0x14] sm:$0xf]
    %v2271 = vld [vmem:[%s2264 + $0x18] sm:$0xf]
    %v2272 = vld [vmem:[%s2264 + $0x1c] sm:$0xf]
    %v2281 = vunpack.c.l.b16 %v2265
    %v2282 = vunpack.c.l.b16 %v2266
    %v2283 = vunpack.c.l.b16 %v2267
    %v2284 = vunpack.c.l.b16 %v2268
    %v2285 = vunpack.c.l.b16 %v2269
    %v2286 = vunpack.c.l.b16 %v2270
    %v2287 = vunpack.c.l.b16 %v2271
    %v2288 = vunpack.c.l.b16 %v2272
    %v2289 = vpack.c.b16 %v2282, %v2281
    %v2290 = vpack.c.b16 %v2284, %v2283
    %v2291 = vpack.c.b16 %v2286, %v2285
    %v2292 = vpack.c.b16 %v2288, %v2287
    %v2298 = vsel %vm1497, %v2263, 0
    %2300 = vmatpush.bf16.msra.mxu0 0
    %2301 = vmatpush.bf16.msra.mxu0 0
    %2302 = vmatpush.bf16.msra.mxu0 0
    %2303 = vmatpush.bf16.msra.mxu0 0
    %2304 = vmatpush.bf16.msra.mxu0 %v2292
    %2305 = vmatpush.bf16.msra.mxu0 %v2291
    %2306 = vmatpush.bf16.msra.mxu0 %v2290
    %2307 = vmatpush.bf16.msra.mxu0 %v2289
    %2308 = vmatmul.bf16.gmra.mxu0 %v2298
    %v2309 = vpop.f32.mrf.mxu0
    %v2310 = vadd.f32 0.0, %v2309
    %v2311 = vpop.f32.mrf.mxu0
    %v2312 = vadd.f32 0.0, %v2311
    %2313 = vdwg.mxu0
    %v2314 = vadd.f32 %v2204, %v2310
    %v2315 = vadd.f32 %v2205, %v2312
    %v2316 = vadd.f32 %v2314, %v2259
    %v2317 = vadd.f32 %v2315, %v2260
    %v2319 = vperm.slane %v1324, 0
    %v2321 = vadd.f32 %v2316, %v2319
    %v2322 = vadd.f32 %v2317, %v2319
    %v2324 = vperm.slane %v1325, 0
    %v2326 = vmul.f32 %v2321, %v2324
    %v2327 = vmul.f32 %v2322, %v2324
    %v2329 = vperm.slane %v1326, 0
    %v2331 = vadd.f32 %v2326, %v2329
    %v2332 = vadd.f32 %v2327, %v2329
    %v2333 = vxor.u32 %v2331, 2147483648
    %v2334 = vxor.u32 %v2332, 2147483648
    %v2335 = vmul.f32 %v2333, 1.442695
    %v2336 = vpow.pop %v2335
    %v2337 = vmul.f32 %v2334, 1.442695
    %v2338 = vpow.pop %v2337
    %v2339 = vadd.f32 %v2336, 1.0
    %v2340 = vadd.f32 %v2338, 1.0
    %v2341 = vrcp.pop %v2339
    %v2342 = vmul.f32 %v2339, %v2341
    %v2343 = vsub.f32 1.0, %v2342
    %v2344 = vmul.f32 %v2341, %v2343
    %v2345 = vadd.f32 %v2341, %v2344
    %vm2346 = vweird.f32 %v2339
    %vm2347 = vweird.f32 %v2341
    %vm2348 = vmor %vm2346, %vm2347
    %v2349 = vsel %vm2348, %v2341, %v2345
    %v2350 = vand.u32 2147483647, %v2339
    %vm2351 = vcmp.eq.f32.partialorder %v2350, 8.507059e+37
    %v2352 = vand.u32 %v2339, 2147483648
    %v2353 = vor.u32 1.1754944e-38, %v2352
    %v2354 = vsel %vm2351, %v2353, %v2349
    %v2355 = vmul.f32 1.0, %v2354
    %v2356 = vrcp.pop %v2340
    %v2357 = vmul.f32 %v2340, %v2356
    %v2358 = vsub.f32 1.0, %v2357
    %v2359 = vmul.f32 %v2356, %v2358
    %v2360 = vadd.f32 %v2356, %v2359
    %vm2361 = vweird.f32 %v2340
    %vm2362 = vweird.f32 %v2356
    %vm2363 = vmor %vm2361, %vm2362
    %v2364 = vsel %vm2363, %v2356, %v2360
    %v2365 = vand.u32 2147483647, %v2340
    %vm2366 = vcmp.eq.f32.partialorder %v2365, 8.507059e+37
    %v2367 = vand.u32 %v2340, 2147483648
    %v2368 = vor.u32 1.1754944e-38, %v2367
    %v2369 = vsel %vm2366, %v2368, %v2364
    %v2370 = vmul.f32 1.0, %v2369
    %v2371 = vmul.f32 %v2331, %v2355
    %v2372 = vmul.f32 %v2332, %v2370
    %v2373 = vpack.c.bf16 %v2372, %v2371
    %v2375 = vperm.slane %v1335, 0
    %v2385 = vunpack.c.l.b16 %v1327
    %v2386 = vunpack.c.l.b16 %v1328
    %v2387 = vunpack.c.l.b16 %v1329
    %v2388 = vunpack.c.l.b16 %v1330
    %v2389 = vunpack.c.l.b16 %v1331
    %v2390 = vunpack.c.l.b16 %v1332
    %v2391 = vunpack.c.l.b16 %v1333
    %v2392 = vunpack.c.l.b16 %v1334
    %v2393 = vpack.c.b16 %v2386, %v2385
    %v2394 = vpack.c.b16 %v2388, %v2387
    %v2395 = vpack.c.b16 %v2390, %v2389
    %v2396 = vpack.c.b16 %v2392, %v2391
    %v2402 = vsel %vm1497, %v2373, 0
    %2404 = vmatpush.bf16.msra.mxu0 0
    %2405 = vmatpush.bf16.msra.mxu0 0
    %2406 = vmatpush.bf16.msra.mxu0 0
    %2407 = vmatpush.bf16.msra.mxu0 0
    %2408 = vmatpush.bf16.msra.mxu0 %v2396
    %2409 = vmatpush.bf16.msra.mxu0 %v2395
    %2410 = vmatpush.bf16.msra.mxu0 %v2394
    %2411 = vmatpush.bf16.msra.mxu0 %v2393
    %2412 = vmatmul.bf16.gmra.mxu0 %v2402
    %v2413 = vpop.f32.mrf.mxu0
    %v2414 = vadd.f32 %v2375, %v2413
    %v2415 = vpop.f32.mrf.mxu0
    %v2416 = vadd.f32 %v2375, %v2415
    %2417 = vdwg.mxu0
    %v2418 = vadd.f32 %v1310, %v2414
    %v2419 = vadd.f32 %v1311, %v2416
    %v2420 = vld [vmem:[#allocation13] sm:$0x1]
    %v2421 = vld [vmem:[#allocation14] sm:$0x1]
    %v2422 = vld [vmem:[%s67] sm:$0xf]
    %v2423 = vld [vmem:[%s67 + $0x4] sm:$0xf]
    %v2424 = vld [vmem:[%s67 + $0x8] sm:$0xf]
    %v2425 = vld [vmem:[%s67 + $0xc] sm:$0xf]
    %v2426 = vld [vmem:[#allocation16] sm:$0x1]
    %v2427 = vld [vmem:[%s71] sm:$0xf]
    %v2428 = vld [vmem:[%s71 + $0x4] sm:$0xf]
    %v2429 = vld [vmem:[%s71 + $0x8] sm:$0xf]
    %v2430 = vld [vmem:[%s71 + $0xc] sm:$0xf]
    %v2431 = vld [vmem:[#allocation17] sm:$0x1]
    %v2432 = vld [vmem:[%s75] sm:$0xf]
    %v2433 = vld [vmem:[%s75 + $0x4] sm:$0xf]
    %v2434 = vld [vmem:[%s75 + $0x8] sm:$0xf]
    %v2435 = vld [vmem:[%s75 + $0xc] sm:$0xf]
    %v2436 = vld [vmem:[%s75 + $0x10] sm:$0xf]
    %v2437 = vld [vmem:[%s75 + $0x14] sm:$0xf]
    %v2438 = vld [vmem:[%s75 + $0x18] sm:$0xf]
    %v2439 = vld [vmem:[%s75 + $0x1c] sm:$0xf]
    %v2440 = vld [vmem:[%s75 + $0x20] sm:$0xf]
    %v2441 = vld [vmem:[%s75 + $0x24] sm:$0xf]
    %v2442 = vld [vmem:[%s75 + $0x28] sm:$0xf]
    %v2443 = vld [vmem:[%s75 + $0x2c] sm:$0xf]
    %v2444 = vld [vmem:[%s75 + $0x30] sm:$0xf]
    %v2445 = vld [vmem:[%s75 + $0x34] sm:$0xf]
    %v2446 = vld [vmem:[%s75 + $0x38] sm:$0xf]
    %v2447 = vld [vmem:[%s75 + $0x3c] sm:$0xf]
    %v2448 = vld [vmem:[#allocation19] sm:$0x1]
    %v2449 = vsel %vm380, %v2418, 0.0
    %2450 = vadd.xlane.f32.xlu0 %v2449
    %v2451 = vpop.xlane.xlu0 %2450
    %v2452 = vsel %vm380, %v2419, 0.0
    %2453 = vadd.xlane.f32.xlu0 %v2452
    %v2454 = vpop.xlane.xlu0 %2453
    %v2455 = vmul.f32 %v2451, %v393
    %v2456 = vmul.f32 %v2454, %v393
    %v2457 = vsub.f32 %v2418, %v2455
    %v2458 = vsub.f32 %v2419, %v2456
    %v2459 = vmul.f32 %v2457, %v2457
    %v2460 = vmul.f32 %v2458, %v2458
    %v2461 = vsel %vm380, %v2459, 0.0
    %2462 = vadd.xlane.f32.xlu0 %v2461
    %v2463 = vpop.xlane.xlu0 %2462
    %v2464 = vsel %vm380, %v2460, 0.0
    %2465 = vadd.xlane.f32.xlu0 %v2464
    %v2466 = vpop.xlane.xlu0 %2465
    %v2467 = vmul.f32 %v2463, %v393
    %v2468 = vmul.f32 %v2466, %v393
    %v2469 = vadd.f32 %v2467, 1e-05
    %v2470 = vadd.f32 %v2468, 1e-05
    %v2471 = vrsqrt.pop %v2469
    %v2472 = vmul.f32 %v2471, %v2469
    %v2473 = vmul.f32 %v2472, %v2471
    %v2474 = vmul.f32 0.5, %v2473
    %v2475 = vsub.f32 1.5, %v2474
    %v2476 = vmul.f32 %v2471, %v2475
    %vm2477 = vweird.f32 %v2469
    %vm2478 = vweird.f32 %v2471
    %vm2479 = vmor %vm2477, %vm2478
    %v2480 = vsel %vm2479, %v2471, %v2476
    %v2481 = vrsqrt.pop %v2470
    %v2482 = vmul.f32 %v2481, %v2470
    %v2483 = vmul.f32 %v2482, %v2481
    %v2484 = vmul.f32 0.5, %v2483
    %v2485 = vsub.f32 1.5, %v2484
    %v2486 = vmul.f32 %v2481, %v2485
    %vm2487 = vweird.f32 %v2470
    %vm2488 = vweird.f32 %v2481
    %vm2489 = vmor %vm2487, %vm2488
    %v2490 = vsel %vm2489, %v2481, %v2486
    %v2491 = vmul.f32 %v2457, %v2480
    %v2492 = vmul.f32 %v2458, %v2490
    %v2494 = vperm.slane %v2420, 0
    %v2496 = vmul.f32 %v2491, %v2494
    %v2497 = vmul.f32 %v2492, %v2494
    %v2499 = vperm.slane %v2421, 0
    %v2501 = vadd.f32 %v2496, %v2499
    %v2502 = vadd.f32 %v2497, %v2499
    %v2503 = vpack.c.bf16 %v2502, %v2501
    %v2505 = vperm.slane %v2426, 0
    %v2511 = vunpack.c.l.b16 %v2422
    %v2512 = vunpack.c.l.b16 %v2423
    %v2513 = vunpack.c.l.b16 %v2424
    %v2514 = vunpack.c.l.b16 %v2425
    %v2515 = vpack.c.b16 %v2512, %v2511
    %v2516 = vpack.c.b16 %v2514, %v2513
    %v2520 = vsel %vm380, %v2503, 0
    %2522 = vmatpush.bf16.msra.mxu0 0
    %2523 = vmatpush.bf16.msra.mxu0 0
    %2524 = vmatpush.bf16.msra.mxu0 0
    %2525 = vmatpush.bf16.msra.mxu0 0
    %2526 = vmatpush.bf16.msra.mxu0 0
    %2527 = vmatpush.bf16.msra.mxu0 0
    %2528 = vmatpush.bf16.msra.mxu0 %v2516
    %2529 = vmatpush.bf16.msra.mxu0 %v2515
    %2530 = vmatmul.bf16.gmra.mxu0 %v2520
    %v2531 = vpop.f32.mrf.mxu0
    %v2532 = vadd.f32 %v2505, %v2531
    %v2533 = vpop.f32.mrf.mxu0
    %v2534 = vadd.f32 %v2505, %v2533
    %2535 = vdwg.mxu0
    %v2536 = vxor.u32 %v2532, 2147483648
    %v2537 = vxor.u32 %v2534, 2147483648
    %v2538 = vmul.f32 %v2536, 1.442695
    %v2539 = vpow.pop %v2538
    %v2540 = vmul.f32 %v2537, 1.442695
    %v2541 = vpow.pop %v2540
    %v2542 = vadd.f32 %v2539, 1.0
    %v2543 = vadd.f32 %v2541, 1.0
    %v2544 = vrcp.pop %v2542
    %v2545 = vmul.f32 %v2542, %v2544
    %v2546 = vsub.f32 1.0, %v2545
    %v2547 = vmul.f32 %v2544, %v2546
    %v2548 = vadd.f32 %v2544, %v2547
    %vm2549 = vweird.f32 %v2542
    %vm2550 = vweird.f32 %v2544
    %vm2551 = vmor %vm2549, %vm2550
    %v2552 = vsel %vm2551, %v2544, %v2548
    %v2553 = vand.u32 2147483647, %v2542
    %vm2554 = vcmp.eq.f32.partialorder %v2553, 8.507059e+37
    %v2555 = vand.u32 %v2542, 2147483648
    %v2556 = vor.u32 1.1754944e-38, %v2555
    %v2557 = vsel %vm2554, %v2556, %v2552
    %v2558 = vmul.f32 1.0, %v2557
    %v2559 = vrcp.pop %v2543
    %v2560 = vmul.f32 %v2543, %v2559
    %v2561 = vsub.f32 1.0, %v2560
    %v2562 = vmul.f32 %v2559, %v2561
    %v2563 = vadd.f32 %v2559, %v2562
    %vm2564 = vweird.f32 %v2543
    %vm2565 = vweird.f32 %v2559
    %vm2566 = vmor %vm2564, %vm2565
    %v2567 = vsel %vm2566, %v2559, %v2563
    %v2568 = vand.u32 2147483647, %v2543
    %vm2569 = vcmp.eq.f32.partialorder %v2568, 8.507059e+37
    %v2570 = vand.u32 %v2543, 2147483648
    %v2571 = vor.u32 1.1754944e-38, %v2570
    %v2572 = vsel %vm2569, %v2571, %v2567
    %v2573 = vmul.f32 1.0, %v2572
    %v2574 = vmul.f32 %v2532, %v2558
    %v2575 = vmul.f32 %v2534, %v2573
    %v2577 = vperm.slane %v2431, 0
    %v2583 = vunpack.c.l.b16 %v2427
    %v2584 = vunpack.c.l.b16 %v2428
    %v2585 = vunpack.c.l.b16 %v2429
    %v2586 = vunpack.c.l.b16 %v2430
    %v2587 = vpack.c.b16 %v2584, %v2583
    %v2588 = vpack.c.b16 %v2586, %v2585
    %2591 = vmatpush.bf16.msra.mxu0 0
    %2592 = vmatpush.bf16.msra.mxu0 0
    %2593 = vmatpush.bf16.msra.mxu0 0
    %2594 = vmatpush.bf16.msra.mxu0 0
    %2595 = vmatpush.bf16.msra.mxu0 0
    %2596 = vmatpush.bf16.msra.mxu0 0
    %2597 = vmatpush.bf16.msra.mxu0 %v2588
    %2598 = vmatpush.bf16.msra.mxu0 %v2587
    %2599 = vmatmul.bf16.gmra.mxu0 %v2520
    %v2600 = vpop.f32.mrf.mxu0
    %v2601 = vadd.f32 %v2577, %v2600
    %v2602 = vpop.f32.mrf.mxu0
    %v2603 = vadd.f32 %v2577, %v2602
    %2604 = vdwg.mxu0
    %v2605 = vmul.f32 %v2574, %v2601
    %v2606 = vmul.f32 %v2575, %v2603
    %v2607 = vpack.c.bf16 %v2606, %v2605
    %v2609 = vperm.slane %v2448, 0
    %v2627 = vunpack.c.l.b16 %v2432
    %v2628 = vunpack.c.l.b16 %v2433
    %v2629 = vunpack.c.l.b16 %v2434
    %v2630 = vunpack.c.l.b16 %v2435
    %v2631 = vunpack.c.l.b16 %v2436
    %v2632 = vunpack.c.l.b16 %v2437
    %v2633 = vunpack.c.l.b16 %v2438
    %v2634 = vunpack.c.l.b16 %v2439
    %v2635 = vunpack.c.l.b16 %v2440
    %v2636 = vunpack.c.l.b16 %v2441
    %v2637 = vunpack.c.l.b16 %v2442
    %v2638 = vunpack.c.l.b16 %v2443
    %v2639 = vunpack.c.l.b16 %v2444
    %v2640 = vunpack.c.l.b16 %v2445
    %v2641 = vunpack.c.l.b16 %v2446
    %v2642 = vunpack.c.l.b16 %v2447
    %v2643 = vpack.c.b16 %v2628, %v2627
    %v2644 = vpack.c.b16 %v2630, %v2629
    %v2645 = vpack.c.b16 %v2632, %v2631
    %v2646 = vpack.c.b16 %v2634, %v2633
    %v2647 = vpack.c.b16 %v2636, %v2635
    %v2648 = vpack.c.b16 %v2638, %v2637
    %v2649 = vpack.c.b16 %v2640, %v2639
    %v2650 = vpack.c.b16 %v2642, %v2641
    %2659 = vmatpush.bf16.msra.mxu0 %v2650
    %2660 = vmatpush.bf16.msra.mxu0 %v2649
    %2661 = vmatpush.bf16.msra.mxu0 %v2648
    %2662 = vmatpush.bf16.msra.mxu0 %v2647
    %2663 = vmatpush.bf16.msra.mxu0 %v2646
    %2664 = vmatpush.bf16.msra.mxu0 %v2645
    %2665 = vmatpush.bf16.msra.mxu0 %v2644
    %2666 = vmatpush.bf16.msra.mxu0 %v2643
    %2667 = vmatmul.bf16.gmra.mxu0 %v2607
    %v2668 = vpop.f32.mrf.mxu0
    %v2669 = vadd.f32 %v2609, %v2668
    %v2670 = vpop.f32.mrf.mxu0
    %v2671 = vadd.f32 %v2609, %v2670
    %2672 = vdwg.mxu0
    %v2673 = vmul.f32 %v2669, 0.5
    %v2674 = vmul.f32 %v2671, 0.5
    %v2675 = vadd.f32 %v2418, %v2673
    %v2676 = vadd.f32 %v2419, %v2674
    %v2677 = vld [vmem:[#allocation20] sm:$0x1]
    %v2678 = vld [vmem:[#allocation22] sm:$0x1]
    %v2679 = vsel %vm380, %v2675, 0.0
    %2680 = vadd.xlane.f32.xlu0 %v2679
    %v2681 = vpop.xlane.xlu0 %2680
    %v2682 = vsel %vm380, %v2676, 0.0
    %2683 = vadd.xlane.f32.xlu0 %v2682
    %v2684 = vpop.xlane.xlu0 %2683
    %v2685 = vmul.f32 %v2681, %v393
    %v2686 = vmul.f32 %v2684, %v393
    %v2687 = vsub.f32 %v2675, %v2685
    %v2688 = vsub.f32 %v2676, %v2686
    %v2689 = vmul.f32 %v2687, %v2687
    %v2690 = vmul.f32 %v2688, %v2688
    %v2691 = vsel %vm380, %v2689, 0.0
    %2692 = vadd.xlane.f32.xlu0 %v2691
    %v2693 = vpop.xlane.xlu0 %2692
    %v2694 = vsel %vm380, %v2690, 0.0
    %2695 = vadd.xlane.f32.xlu0 %v2694
    %v2696 = vpop.xlane.xlu0 %2695
    %v2697 = vmul.f32 %v2693, %v393
    %v2698 = vmul.f32 %v2696, %v393
    %v2699 = vadd.f32 %v2697, 1e-05
    %v2700 = vadd.f32 %v2698, 1e-05
    %v2701 = vrsqrt.pop %v2699
    %v2702 = vmul.f32 %v2701, %v2699
    %v2703 = vmul.f32 %v2702, %v2701
    %v2704 = vmul.f32 0.5, %v2703
    %v2705 = vsub.f32 1.5, %v2704
    %v2706 = vmul.f32 %v2701, %v2705
    %vm2707 = vweird.f32 %v2699
    %vm2708 = vweird.f32 %v2701
    %vm2709 = vmor %vm2707, %vm2708
    %v2710 = vsel %vm2709, %v2701, %v2706
    %v2711 = vrsqrt.pop %v2700
    %v2712 = vmul.f32 %v2711, %v2700
    %v2713 = vmul.f32 %v2712, %v2711
    %v2714 = vmul.f32 0.5, %v2713
    %v2715 = vsub.f32 1.5, %v2714
    %v2716 = vmul.f32 %v2711, %v2715
    %vm2717 = vweird.f32 %v2700
    %vm2718 = vweird.f32 %v2711
    %vm2719 = vmor %vm2717, %vm2718
    %v2720 = vsel %vm2719, %v2711, %v2716
    %v2721 = vmul.f32 %v2687, %v2710
    %v2722 = vmul.f32 %v2688, %v2720
    %v2724 = vperm.slane %v2677, 0
    %v2726 = vmul.f32 %v2721, %v2724
    %v2727 = vmul.f32 %v2722, %v2724
    %v2729 = vperm.slane %v2678, 0
    %v2731 = vadd.f32 %v2726, %v2729
    %v2732 = vadd.f32 %v2727, %v2729
    %2733 = vst.msk [vmem:[%s83] sm:$0xff] %vm380, %v2731
    %2734 = vst.msk [vmem:[%s83 + $0x8] sm:$0xff] %vm380, %v2732
    // Predicated region
    $region218: #{streaming_conformer_forward.6} parent=1 // pred_check
      _
    $region219: #{streaming_conformer_forward.6} parent=1 // pred_check_branch
      %2736 = sbr.rel (0) target = $region221
    $region220: #{streaming_conformer_forward.6} parent=1 // pred_region
      _
    $region221: #{streaming_conformer_forward.6} parent=1 // pred_fallthru
      _
    // Predicated region
    $region222: #{streaming_conformer_forward.6} parent=1 // pred_check
      _
    $region223: #{streaming_conformer_forward.6} parent=1 // pred_check_branch
      %2738 = sbr.rel (0) target = $region225
    $region224: #{streaming_conformer_forward.6} parent=1 // pred_region
      _
    $region225: #{streaming_conformer_forward.6} parent=1 // pred_fallthru
      _
    %2739 = vsyncpa [#allocation4], 1
    %2740 = vsyncpa [#allocation6], 1
    %2741 = vsyncpa [#allocation9], 1
    %2742 = vsyncpa [#allocation12], 1
    %2743 = vsyncpa [#allocation15], 1
    %2744 = vsyncpa [#allocation18], 1
    %2745 = vsyncpa [#allocation21], 1

// kernel: streaming_conformer_forward.5
$region0: #{streaming_conformer_forward.5}
  #allocation0 [shape = 'u32[]', space=smem, size = 0x4, offset = 0x4, fixed_abs, tag = 'smem constant byte address 0x4 - core index']
  #allocation1 [shape = 'u32[72,128]{1,0:T(1,128)}', space=vmem, size = 0x9000, scoped, tag = 'internal scratch']
  #allocation2 [shape = 'f32[2,22,64]{2,1,0:T(8,128)}', space=vmem, size = 0x6000, scoped, tag = 'scratch operand']
  %s0 = inlined_call_operand.smem [shape: u32[42], index: -1, kind: input, shape index: {}]
  %s1 = sld [smem:[%s0]]
  %s2 = scalar_lea.smem %s0, 1
  %s3 = sld [smem:[%s2]]
  %s4 = scalar_lea.smem %s0, 2
  %s5 = sld [smem:[%s4]]
  %s6 = scalar_lea.smem %s0, 3
  %s7 = sld [smem:[%s6]]
  %s8 = scalar_lea.smem %s0, 4
  %s9 = sld [smem:[%s8]]
  %s10 = scalar_lea.smem %s0, 5
  %s11 = sld [smem:[%s10]]
  %s12 = scalar_lea.smem %s0, 6
  %s13 = sld [smem:[%s12]]
  %s14 = scalar_lea.smem %s0, 7
  %s15 = sld [smem:[%s14]]
  %s16 = scalar_lea.smem %s0, 8
  %s17 = sld [smem:[%s16]]
  %s18 = scalar_lea.smem %s0, 9
  %s19 = sld [smem:[%s18]]
  %s20 = scalar_lea.smem %s0, 10
  %s21 = sld [smem:[%s20]]
  %s22 = scalar_lea.smem %s0, 11
  %s23 = sld [smem:[%s22]]
  %s24 = scalar_lea.smem %s0, 12
  %s25 = sld [smem:[%s24]]
  %s26 = scalar_lea.smem %s0, 13
  %s27 = sld [smem:[%s26]]
  %s28 = scalar_lea.smem %s0, 14
  %s29 = sld [smem:[%s28]]
  %s30 = scalar_lea.smem %s0, 15
  %s31 = sld [smem:[%s30]]
  %s32 = scalar_lea.smem %s0, 16
  %s33 = sld [smem:[%s32]]
  %s34 = scalar_lea.smem %s0, 17
  %s35 = sld [smem:[%s34]]
  %s36 = scalar_lea.smem %s0, 18
  %s37 = sld [smem:[%s36]]
  %s38 = scalar_lea.smem %s0, 19
  %s39 = sld [smem:[%s38]]
  %s40 = scalar_lea.smem %s0, 20
  %s41 = sld [smem:[%s40]]
  %s42 = scalar_lea.smem %s0, 21
  %s43 = sld [smem:[%s42]]
  %s44 = scalar_lea.smem %s0, 22
  %s45 = sld [smem:[%s44]]
  %s46 = scalar_lea.smem %s0, 23
  %s47 = sld [smem:[%s46]]
  %s48 = scalar_lea.smem %s0, 24
  %s49 = sld [smem:[%s48]]
  %s50 = scalar_lea.smem %s0, 25
  %s51 = sld [smem:[%s50]]
  %s52 = scalar_lea.smem %s0, 26
  %s53 = sld [smem:[%s52]]
  %s54 = scalar_lea.smem %s0, 27
  %s55 = sld [smem:[%s54]]
  %s56 = scalar_lea.smem %s0, 28
  %s57 = sld [smem:[%s56]]
  %s58 = scalar_lea.smem %s0, 29
  %s59 = sld [smem:[%s58]]
  %s60 = scalar_lea.smem %s0, 30
  %s61 = sld [smem:[%s60]]
  %s62 = scalar_lea.smem %s0, 31
  %s63 = sld [smem:[%s62]]
  %s64 = scalar_lea.smem %s0, 32
  %s65 = sld [smem:[%s64]]
  %s66 = scalar_lea.smem %s0, 33
  %s67 = sld [smem:[%s66]]
  %s68 = scalar_lea.smem %s0, 34
  %s69 = sld [smem:[%s68]]
  %s70 = scalar_lea.smem %s0, 35
  %s71 = sld [smem:[%s70]]
  %s72 = scalar_lea.smem %s0, 36
  %s73 = sld [smem:[%s72]]
  %s74 = scalar_lea.smem %s0, 37
  %s75 = sld [smem:[%s74]]
  %s76 = scalar_lea.smem %s0, 38
  %s77 = sld [smem:[%s76]]
  %s78 = scalar_lea.smem %s0, 39
  %s79 = sld [smem:[%s78]]
  %s80 = scalar_lea.smem %s0, 40
  %s81 = sld [smem:[%s80]]
  %s82 = scalar_lea.smem %s0, 41
  %s83 = sld [smem:[%s82]]
  %s84 = sld [smem:[#allocation0]]
  $region194: #{streaming_conformer_forward.5} parent=0
    _
  %s86 = ssub.s32 1, %s84
  %s87 = scalar_select 0, %s86, %s84
  $region1: #{streaming_conformer_forward.5} parent=0
    #allocation3 [shape = 'u8[245760]{0}', space=vmem, size = 0x3c000, scoped, tag = 'input window, operand 25, single buffered']
    #allocation4 [shape = 's32[1]{0}', space=sflag, size = 0x4, scoped, tag = 'scoped memory for streaming_conformer_forward.5']
    #allocation5 [shape = 'u8[512]{0}', space=vmem, size = 0x400, scoped, tag = 'input window, operand 36, single buffered']
    #allocation6 [shape = 's32[1]{0}', space=sflag, size = 0x4, scoped, tag = 'scoped memory for streaming_conformer_forward.5']
    #allocation7 [shape = 'u8[512]{0}', space=vmem, size = 0x400, scoped, tag = 'input window, operand 38, single buffered']
    #allocation8 [shape = 'u8[512]{0}', space=vmem, size = 0x400, scoped, tag = 'input window, operand 39, single buffered']
    #allocation9 [shape = 's32[1]{0}', space=sflag, size = 0x4, scoped, tag = 'scoped memory for streaming_conformer_forward.5']
    #allocation10 [shape = 'u8[512]{0}', space=vmem, size = 0x400, scoped, tag = 'input window, operand 40, single buffered']
    %88 = vsyncpa [#allocation4], 0
    %89 = vsyncpa [#allocation6], 0
    %90 = vsyncpa [#allocation9], 0
    // Predicated region
    $region2: #{streaming_conformer_forward.5} parent=1 // pred_check
      _
    $region3: #{streaming_conformer_forward.5} parent=1 // pred_check_branch
      %92 = sbr.rel (0) target = $region5
    $region4: #{streaming_conformer_forward.5} parent=1 // pred_region
      _
    $region5: #{streaming_conformer_forward.5} parent=1 // pred_fallthru
      _
    // Predicated region
    $region6: #{streaming_conformer_forward.5} parent=1 // pred_check
      _
    $region7: #{streaming_conformer_forward.5} parent=1 // pred_check_branch
      %94 = sbr.rel (0) target = $region9
    $region8: #{streaming_conformer_forward.5} parent=1 // pred_region
      _
    $region9: #{streaming_conformer_forward.5} parent=1 // pred_fallthru
      _
    // Predicated region
    $region10: #{streaming_conformer_forward.5} parent=1 // pred_check
      _
    $region11: #{streaming_conformer_forward.5} parent=1 // pred_check_branch
      %96 = sbr.rel (0) target = $region13
    $region12: #{streaming_conformer_forward.5} parent=1 // pred_region
      _
    $region13: #{streaming_conformer_forward.5} parent=1 // pred_fallthru
      _
    // Predicated region
    $region14: #{streaming_conformer_forward.5} parent=1 // pred_check
      _
    $region15: #{streaming_conformer_forward.5} parent=1 // pred_check_branch
      %98 = sbr.rel (0) target = $region17
    $region16: #{streaming_conformer_forward.5} parent=1 // pred_region
      _
    $region17: #{streaming_conformer_forward.5} parent=1 // pred_fallthru
      _
    // Predicated region
    $region18: #{streaming_conformer_forward.5} parent=1 // pred_check
      _
    $region19: #{streaming_conformer_forward.5} parent=1 // pred_check_branch
      %100 = sbr.rel (0) target = $region21
    $region20: #{streaming_conformer_forward.5} parent=1 // pred_region
      _
    $region21: #{streaming_conformer_forward.5} parent=1 // pred_fallthru
      _
    // Predicated region
    $region22: #{streaming_conformer_forward.5} parent=1 // pred_check
      _
    $region23: #{streaming_conformer_forward.5} parent=1 // pred_check_branch
      %102 = sbr.rel (0) target = $region25
    $region24: #{streaming_conformer_forward.5} parent=1 // pred_region
      _
    $region25: #{streaming_conformer_forward.5} parent=1 // pred_fallthru
      _
    // Predicated region
    $region26: #{streaming_conformer_forward.5} parent=1 // pred_check
      _
    $region27: #{streaming_conformer_forward.5} parent=1 // pred_check_branch
      %104 = sbr.rel (0) target = $region29
    $region28: #{streaming_conformer_forward.5} parent=1 // pred_region
      _
    $region29: #{streaming_conformer_forward.5} parent=1 // pred_fallthru
      _
    // Predicated region
    $region30: #{streaming_conformer_forward.5} parent=1 // pred_check
      _
    $region31: #{streaming_conformer_forward.5} parent=1 // pred_check_branch
      %106 = sbr.rel (0) target = $region33
    $region32: #{streaming_conformer_forward.5} parent=1 // pred_region
      _
    $region33: #{streaming_conformer_forward.5} parent=1 // pred_fallthru
      _
    // Predicated region
    $region34: #{streaming_conformer_forward.5} parent=1 // pred_check
      _
    $region35: #{streaming_conformer_forward.5} parent=1 // pred_check_branch
      %108 = sbr.rel (0) target = $region37
    $region36: #{streaming_conformer_forward.5} parent=1 // pred_region
      _
    $region37: #{streaming_conformer_forward.5} parent=1 // pred_fallthru
      _
    // Predicated region
    $region38: #{streaming_conformer_forward.5} parent=1 // pred_check
      _
    $region39: #{streaming_conformer_forward.5} parent=1 // pred_check_branch
      %110 = sbr.rel (0) target = $region41
    $region40: #{streaming_conformer_forward.5} parent=1 // pred_region
      _
    $region41: #{streaming_conformer_forward.5} parent=1 // pred_fallthru
      _
    // Predicated region
    $region42: #{streaming_conformer_forward.5} parent=1 // pred_check
      _
    $region43: #{streaming_conformer_forward.5} parent=1 // pred_check_branch
      %112 = sbr.rel (0) target = $region45
    $region44: #{streaming_conformer_forward.5} parent=1 // pred_region
      _
    $region45: #{streaming_conformer_forward.5} parent=1 // pred_fallthru
      _
    // Predicated region
    $region46: #{streaming_conformer_forward.5} parent=1 // pred_check
      _
    $region47: #{streaming_conformer_forward.5} parent=1 // pred_check_branch
      %114 = sbr.rel (0) target = $region49
    $region48: #{streaming_conformer_forward.5} parent=1 // pred_region
      _
    $region49: #{streaming_conformer_forward.5} parent=1 // pred_fallthru
      _
    // Predicated region
    $region50: #{streaming_conformer_forward.5} parent=1 // pred_check
      _
    $region51: #{streaming_conformer_forward.5} parent=1 // pred_check_branch
      %116 = sbr.rel (0) target = $region53
    $region52: #{streaming_conformer_forward.5} parent=1 // pred_region
      _
    $region53: #{streaming_conformer_forward.5} parent=1 // pred_fallthru
      _
    // Predicated region
    $region54: #{streaming_conformer_forward.5} parent=1 // pred_check
      _
    $region55: #{streaming_conformer_forward.5} parent=1 // pred_check_branch
      %118 = sbr.rel (0) target = $region57
    $region56: #{streaming_conformer_forward.5} parent=1 // pred_region
      _
    $region57: #{streaming_conformer_forward.5} parent=1 // pred_fallthru
      _
    // Predicated region
    $region58: #{streaming_conformer_forward.5} parent=1 // pred_check
      _
    $region59: #{streaming_conformer_forward.5} parent=1 // pred_check_branch
      %120 = sbr.rel (0) target = $region61
    $region60: #{streaming_conformer_forward.5} parent=1 // pred_region
      _
    $region61: #{streaming_conformer_forward.5} parent=1 // pred_fallthru
      _
    // Predicated region
    $region62: #{streaming_conformer_forward.5} parent=1 // pred_check
      _
    $region63: #{streaming_conformer_forward.5} parent=1 // pred_check_branch
      %122 = sbr.rel (0) target = $region65
    $region64: #{streaming_conformer_forward.5} parent=1 // pred_region
      _
    $region65: #{streaming_conformer_forward.5} parent=1 // pred_fallthru
      _
    // Predicated region
    $region66: #{streaming_conformer_forward.5} parent=1 // pred_check
      _
    $region67: #{streaming_conformer_forward.5} parent=1 // pred_check_branch
      %124 = sbr.rel (0) target = $region69
    $region68: #{streaming_conformer_forward.5} parent=1 // pred_region
      _
    $region69: #{streaming_conformer_forward.5} parent=1 // pred_fallthru
      _
    // Predicated region
    $region70: #{streaming_conformer_forward.5} parent=1 // pred_check
      _
    $region71: #{streaming_conformer_forward.5} parent=1 // pred_check_branch
      %126 = sbr.rel (0) target = $region73
    $region72: #{streaming_conformer_forward.5} parent=1 // pred_region
      _
    $region73: #{streaming_conformer_forward.5} parent=1 // pred_fallthru
      _
    // Predicated region
    $region74: #{streaming_conformer_forward.5} parent=1 // pred_check
      _
    $region75: #{streaming_conformer_forward.5} parent=1 // pred_check_branch
      %128 = sbr.rel (0) target = $region77
    $region76: #{streaming_conformer_forward.5} parent=1 // pred_region
      _
    $region77: #{streaming_conformer_forward.5} parent=1 // pred_fallthru
      _
    // Predicated region
    $region78: #{streaming_conformer_forward.5} parent=1 // pred_check
      _
    $region79: #{streaming_conformer_forward.5} parent=1 // pred_check_branch
      %130 = sbr.rel (0) target = $region81
    $region80: #{streaming_conformer_forward.5} parent=1 // pred_region
      _
    $region81: #{streaming_conformer_forward.5} parent=1 // pred_fallthru
      _
    // Predicated region
    $region82: #{streaming_conformer_forward.5} parent=1 // pred_check
      _
    $region83: #{streaming_conformer_forward.5} parent=1 // pred_check_branch
      %132 = sbr.rel (0) target = $region85
    $region84: #{streaming_conformer_forward.5} parent=1 // pred_region
      _
    $region85: #{streaming_conformer_forward.5} parent=1 // pred_fallthru
      _
    // Predicated region
    $region86: #{streaming_conformer_forward.5} parent=1 // pred_check
      _
    $region87: #{streaming_conformer_forward.5} parent=1 // pred_check_branch
      %134 = sbr.rel (0) target = $region89
    $region88: #{streaming_conformer_forward.5} parent=1 // pred_region
      _
    $region89: #{streaming_conformer_forward.5} parent=1 // pred_fallthru
      _
    // Predicated region
    $region90: #{streaming_conformer_forward.5} parent=1 // pred_check
      _
    $region91: #{streaming_conformer_forward.5} parent=1 // pred_check_branch
      %136 = sbr.rel (0) target = $region93
    $region92: #{streaming_conformer_forward.5} parent=1 // pred_region
      _
    $region93: #{streaming_conformer_forward.5} parent=1 // pred_fallthru
      _
    // Predicated region
    $region94: #{streaming_conformer_forward.5} parent=1 // pred_check
      _
    $region95: #{streaming_conformer_forward.5} parent=1 // pred_check_branch
      %138 = sbr.rel (0) target = $region97
    $region96: #{streaming_conformer_forward.5} parent=1 // pred_region
      _
    $region97: #{streaming_conformer_forward.5} parent=1 // pred_fallthru
      _
    // Predicated region
    $region98: #{streaming_conformer_forward.5} parent=1 // pred_check
      _
    $region99: #{streaming_conformer_forward.5} parent=1 // pred_check_branch
      %140 = sbr.rel (0) target = $region101
    $region100: #{streaming_conformer_forward.5} parent=1 // pred_region
      _
    $region101: #{streaming_conformer_forward.5} parent=1 // pred_fallthru
      _
    // Predicated region
    $region102: #{streaming_conformer_forward.5} parent=1 // pred_check
      _
    $region103: #{streaming_conformer_forward.5} parent=1 // pred_check_branch
      %142 = sbr.rel (0) target = $region105
    $region104: #{streaming_conformer_forward.5} parent=1 // pred_region
      %144 = vsyncadd [#allocation4], 0
      %s145 = sshll.u32 %s51, 4
      %s146 = int_to_ptr.hbm [resolvable:$true] %s145
      %s147 = sshll.u32 [#allocation3], 4
      %s148 = int_to_ptr.vmem [resolvable:$true] %s147
      %153 = dma.hbm_to_vmem [thread:$0]  %s146, 7680, %s148, [#allocation4], 64, 64, 4
    $region105: #{streaming_conformer_forward.5} parent=1 // pred_fallthru
      _
    // Predicated region
    $region106: #{streaming_conformer_forward.5} parent=1 // pred_check
      _
    $region107: #{streaming_conformer_forward.5} parent=1 // pred_check_branch
      %155 = sbr.rel (0) target = $region109
    $region108: #{streaming_conformer_forward.5} parent=1 // pred_region
      _
    $region109: #{streaming_conformer_forward.5} parent=1 // pred_fallthru
      _
    // Predicated region
    $region110: #{streaming_conformer_forward.5} parent=1 // pred_check
      _
    $region111: #{streaming_conformer_forward.5} parent=1 // pred_check_branch
      %157 = sbr.rel (0) target = $region113
    $region112: #{streaming_conformer_forward.5} parent=1 // pred_region
      _
    $region113: #{streaming_conformer_forward.5} parent=1 // pred_fallthru
      _
    // Predicated region
    $region114: #{streaming_conformer_forward.5} parent=1 // pred_check
      _
    $region115: #{streaming_conformer_forward.5} parent=1 // pred_check_branch
      %159 = sbr.rel (0) target = $region117
    $region116: #{streaming_conformer_forward.5} parent=1 // pred_region
      _
    $region117: #{streaming_conformer_forward.5} parent=1 // pred_fallthru
      _
    // Predicated region
    $region118: #{streaming_conformer_forward.5} parent=1 // pred_check
      _
    $region119: #{streaming_conformer_forward.5} parent=1 // pred_check_branch
      %161 = sbr.rel (0) target = $region121
    $region120: #{streaming_conformer_forward.5} parent=1 // pred_region
      _
    $region121: #{streaming_conformer_forward.5} parent=1 // pred_fallthru
      _
    // Predicated region
    $region122: #{streaming_conformer_forward.5} parent=1 // pred_check
      _
    $region123: #{streaming_conformer_forward.5} parent=1 // pred_check_branch
      %163 = sbr.rel (0) target = $region125
    $region124: #{streaming_conformer_forward.5} parent=1 // pred_region
      _
    $region125: #{streaming_conformer_forward.5} parent=1 // pred_fallthru
      _
    // Predicated region
    $region126: #{streaming_conformer_forward.5} parent=1 // pred_check
      _
    $region127: #{streaming_conformer_forward.5} parent=1 // pred_check_branch
      %165 = sbr.rel (0) target = $region129
    $region128: #{streaming_conformer_forward.5} parent=1 // pred_region
      _
    $region129: #{streaming_conformer_forward.5} parent=1 // pred_fallthru
      _
    // Predicated region
    $region130: #{streaming_conformer_forward.5} parent=1 // pred_check
      _
    $region131: #{streaming_conformer_forward.5} parent=1 // pred_check_branch
      %167 = sbr.rel (0) target = $region133
    $region132: #{streaming_conformer_forward.5} parent=1 // pred_region
      _
    $region133: #{streaming_conformer_forward.5} parent=1 // pred_fallthru
      _
    // Predicated region
    $region134: #{streaming_conformer_forward.5} parent=1 // pred_check
      _
    $region135: #{streaming_conformer_forward.5} parent=1 // pred_check_branch
      %169 = sbr.rel (0) target = $region137
    $region136: #{streaming_conformer_forward.5} parent=1 // pred_region
      _
    $region137: #{streaming_conformer_forward.5} parent=1 // pred_fallthru
      _
    // Predicated region
    $region138: #{streaming_conformer_forward.5} parent=1 // pred_check
      _
    $region139: #{streaming_conformer_forward.5} parent=1 // pred_check_branch
      %171 = sbr.rel (0) target = $region141
    $region140: #{streaming_conformer_forward.5} parent=1 // pred_region
      _
    $region141: #{streaming_conformer_forward.5} parent=1 // pred_fallthru
      _
    // Predicated region
    $region142: #{streaming_conformer_forward.5} parent=1 // pred_check
      _
    $region143: #{streaming_conformer_forward.5} parent=1 // pred_check_branch
      %173 = sbr.rel (0) target = $region145
    $region144: #{streaming_conformer_forward.5} parent=1 // pred_region
      _
    $region145: #{streaming_conformer_forward.5} parent=1 // pred_fallthru
      _
    // Predicated region
    $region146: #{streaming_conformer_forward.5} parent=1 // pred_check
      _
    $region147: #{streaming_conformer_forward.5} parent=1 // pred_check_branch
      %175 = sbr.rel (0) target = $region149
    $region148: #{streaming_conformer_forward.5} parent=1 // pred_region
      %177 = vsyncadd [#allocation6], 0
      %s179 = sshll.u32 %s73, 4
      %s180 = int_to_ptr.hbm [resolvable:$true] %s179
      %s181 = sshll.u32 [#allocation5], 4
      %s182 = int_to_ptr.vmem [resolvable:$true] %s181
      %184 = dma.hbm_to_vmem [thread:$0]  %s180, 16, %s182, [#allocation6]
    $region149: #{streaming_conformer_forward.5} parent=1 // pred_fallthru
      _
    // Predicated region
    $region150: #{streaming_conformer_forward.5} parent=1 // pred_check
      _
    $region151: #{streaming_conformer_forward.5} parent=1 // pred_check_branch
      %186 = sbr.rel (0) target = $region153
    $region152: #{streaming_conformer_forward.5} parent=1 // pred_region
      _
    $region153: #{streaming_conformer_forward.5} parent=1 // pred_fallthru
      _
    // Predicated region
    $region154: #{streaming_conformer_forward.5} parent=1 // pred_check
      _
    $region155: #{streaming_conformer_forward.5} parent=1 // pred_check_branch
      %188 = sbr.rel (0) target = $region157
    $region156: #{streaming_conformer_forward.5} parent=1 // pred_region
      %190 = vsyncadd [#allocation6], 0
      %s192 = sshll.u32 %s77, 4
      %s193 = int_to_ptr.hbm [resolvable:$true] %s192
      %s194 = sshll.u32 [#allocation7], 4
      %s195 = int_to_ptr.vmem [resolvable:$true] %s194
      %197 = dma.hbm_to_vmem [thread:$0]  %s193, 16, %s195, [#allocation6]
    $region157: #{streaming_conformer_forward.5} parent=1 // pred_fallthru
      _
    // Predicated region
    $region158: #{streaming_conformer_forward.5} parent=1 // pred_check
      _
    $region159: #{streaming_conformer_forward.5} parent=1 // pred_check_branch
      %199 = sbr.rel (0) target = $region161
    $region160: #{streaming_conformer_forward.5} parent=1 // pred_region
      %201 = vsyncadd [#allocation9], 0
      %s203 = sshll.u32 %s79, 4
      %s204 = int_to_ptr.hbm [resolvable:$true] %s203
      %s205 = sshll.u32 [#allocation8], 4
      %s206 = int_to_ptr.vmem [resolvable:$true] %s205
      %208 = dma.hbm_to_vmem [thread:$0]  %s204, 16, %s206, [#allocation9]
    $region161: #{streaming_conformer_forward.5} parent=1 // pred_fallthru
      _
    // Predicated region
    $region162: #{streaming_conformer_forward.5} parent=1 // pred_check
      _
    $region163: #{streaming_conformer_forward.5} parent=1 // pred_check_branch
      %210 = sbr.rel (0) target = $region165
    $region164: #{streaming_conformer_forward.5} parent=1 // pred_region
      %212 = vsyncadd [#allocation9], 0
      %s214 = sshll.u32 %s81, 4
      %s215 = int_to_ptr.hbm [resolvable:$true] %s214
      %s216 = sshll.u32 [#allocation10], 4
      %s217 = int_to_ptr.vmem [resolvable:$true] %s216
      %219 = dma.hbm_to_vmem [thread:$0]  %s215, 16, %s217, [#allocation9]
    $region165: #{streaming_conformer_forward.5} parent=1 // pred_fallthru
      _
    // Predicated region
    $region166: #{streaming_conformer_forward.5} parent=1 // pred_check
      _
    $region167: #{streaming_conformer_forward.5} parent=1 // pred_check_branch
      %221 = sbr.rel (0) target = $region169
    $region168: #{streaming_conformer_forward.5} parent=1 // pred_region
      %223 = dma.done [#allocation4], 7680
    $region169: #{streaming_conformer_forward.5} parent=1 // pred_fallthru
      _
    // Predicated region
    $region170: #{streaming_conformer_forward.5} parent=1 // pred_check
      _
    $region171: #{streaming_conformer_forward.5} parent=1 // pred_check_branch
      %225 = sbr.rel (0) target = $region173
    $region172: #{streaming_conformer_forward.5} parent=1 // pred_region
      %227 = dma.done [#allocation6], 16
    $region173: #{streaming_conformer_forward.5} parent=1 // pred_fallthru
      _
    // Predicated region
    $region174: #{streaming_conformer_forward.5} parent=1 // pred_check
      _
    $region175: #{streaming_conformer_forward.5} parent=1 // pred_check_branch
      %229 = sbr.rel (0) target = $region177
    $region176: #{streaming_conformer_forward.5} parent=1 // pred_region
      %231 = dma.done [#allocation6], 16
    $region177: #{streaming_conformer_forward.5} parent=1 // pred_fallthru
      _
    // Predicated region
    $region178: #{streaming_conformer_forward.5} parent=1 // pred_check
      _
    $region179: #{streaming_conformer_forward.5} parent=1 // pred_check_branch
      %233 = sbr.rel (0) target = $region181
    $region180: #{streaming_conformer_forward.5} parent=1 // pred_region
      %235 = dma.done [#allocation9], 16
    $region181: #{streaming_conformer_forward.5} parent=1 // pred_fallthru
      _
    // Predicated region
    $region182: #{streaming_conformer_forward.5} parent=1 // pred_check
      _
    $region183: #{streaming_conformer_forward.5} parent=1 // pred_check_branch
      %237 = sbr.rel (0) target = $region185
    $region184: #{streaming_conformer_forward.5} parent=1 // pred_region
      %239 = dma.done [#allocation9], 16
    $region185: #{streaming_conformer_forward.5} parent=1 // pred_fallthru
      _
    %v241 = vld [vmem:[%s1] sm:$0xff]
    %v242 = vld [vmem:[%s1 + $0x8] sm:$0xff]
    %v243 = vld [vmem:[%s3] sm:$0x1]
    %v244 = vld [vmem:[%s5] sm:$0x1]
    %v245 = vld [vmem:[%s7] sm:$0xf]
    %v246 = vld [vmem:[%s7 + $0x4] sm:$0xf]
    %v247 = vld [vmem:[%s7 + $0x8] sm:$0xf]
    %v248 = vld [vmem:[%s7 + $0xc] sm:$0xf]
    %v249 = vld [vmem:[%s9] sm:$0x1]
    %v250 = vld [vmem:[%s11] sm:$0xf]
    %v251 = vld [vmem:[%s11 + $0x4] sm:$0xf]
    %v252 = vld [vmem:[%s11 + $0x8] sm:$0xf]
    %v253 = vld [vmem:[%s11 + $0xc] sm:$0xf]
    %v254 = vld [vmem:[%s13] sm:$0x1]
    %v255 = vld [vmem:[%s15] sm:$0xf]
    %v256 = vld [vmem:[%s15 + $0x4] sm:$0xf]
    %v257 = vld [vmem:[%s15 + $0x8] sm:$0xf]
    %v258 = vld [vmem:[%s15 + $0xc] sm:$0xf]
    %v259 = vld [vmem:[%s15 + $0x10] sm:$0xf]
    %v260 = vld [vmem:[%s15 + $0x14] sm:$0xf]
    %v261 = vld [vmem:[%s15 + $0x18] sm:$0xf]
    %v262 = vld [vmem:[%s15 + $0x1c] sm:$0xf]
    %v263 = vld [vmem:[%s15 + $0x20] sm:$0xf]
    %v264 = vld [vmem:[%s15 + $0x24] sm:$0xf]
    %v265 = vld [vmem:[%s15 + $0x28] sm:$0xf]
    %v266 = vld [vmem:[%s15 + $0x2c] sm:$0xf]
    %v267 = vld [vmem:[%s15 + $0x30] sm:$0xf]
    %v268 = vld [vmem:[%s15 + $0x34] sm:$0xf]
    %v269 = vld [vmem:[%s15 + $0x38] sm:$0xf]
    %v270 = vld [vmem:[%s15 + $0x3c] sm:$0xf]
    %v271 = vld [vmem:[%s17] sm:$0x1]
    %vm272 = vcmask 261120
    %v273 = vsel %vm272, %v241, 0.0
    %274 = vadd.xlane.f32.xlu0 %v273
    %v275 = vpop.xlane.xlu0 %274
    %v276 = vsel %vm272, %v242, 0.0
    %277 = vadd.xlane.f32.xlu0 %v276
    %v278 = vpop.xlane.xlu0 %277
    %v279 = vrcp.pop 32.0
    %v280 = vmul.f32 32.0, %v279
    %v281 = vsub.f32 1.0, %v280
    %v282 = vmul.f32 %v279, %v281
    %v283 = vadd.f32 %v279, %v282
    %vm284 = vweird.f32 %v279
    %v285 = vsel %vm284, %v279, %v283
    %v286 = vmul.f32 %v275, %v285
    %v287 = vmul.f32 %v278, %v285
    %v288 = vsub.f32 %v241, %v286
    %v289 = vsub.f32 %v242, %v287
    %v290 = vmul.f32 %v288, %v288
    %v291 = vmul.f32 %v289, %v289
    %v292 = vsel %vm272, %v290, 0.0
    %293 = vadd.xlane.f32.xlu0 %v292
    %v294 = vpop.xlane.xlu0 %293
    %v295 = vsel %vm272, %v291, 0.0
    %296 = vadd.xlane.f32.xlu0 %v295
    %v297 = vpop.xlane.xlu0 %296
    %v298 = vmul.f32 %v294, %v285
    %v299 = vmul.f32 %v297, %v285
    %v300 = vadd.f32 %v298, 1e-05
    %v301 = vadd.f32 %v299, 1e-05
    %v302 = vrsqrt.pop %v300
    %v303 = vmul.f32 %v302, %v300
    %v304 = vmul.f32 %v303, %v302
    %v305 = vmul.f32 0.5, %v304
    %v306 = vsub.f32 1.5, %v305
    %v307 = vmul.f32 %v302, %v306
    %vm308 = vweird.f32 %v300
    %vm309 = vweird.f32 %v302
    %vm310 = vmor %vm308, %vm309
    %v311 = vsel %vm310, %v302, %v307
    %v312 = vrsqrt.pop %v301
    %v313 = vmul.f32 %v312, %v301
    %v314 = vmul.f32 %v313, %v312
    %v315 = vmul.f32 0.5, %v314
    %v316 = vsub.f32 1.5, %v315
    %v317 = vmul.f32 %v312, %v316
    %vm318 = vweird.f32 %v301
    %vm319 = vweird.f32 %v312
    %vm320 = vmor %vm318, %vm319
    %v321 = vsel %vm320, %v312, %v317
    %v322 = vmul.f32 %v288, %v311
    %v323 = vmul.f32 %v289, %v321
    %v325 = vperm.slane %v243, 0
    %v327 = vmul.f32 %v322, %v325
    %v328 = vmul.f32 %v323, %v325
    %v330 = vperm.slane %v244, 0
    %v332 = vadd.f32 %v327, %v330
    %v333 = vadd.f32 %v328, %v330
    %v334 = vpack.c.bf16 %v333, %v332
    %v336 = vperm.slane %v249, 0
    %v342 = vunpack.c.l.b16 %v245
    %v343 = vunpack.c.l.b16 %v246
    %v344 = vunpack.c.l.b16 %v247
    %v345 = vunpack.c.l.b16 %v248
    %v346 = vpack.c.b16 %v343, %v342
    %v347 = vpack.c.b16 %v345, %v344
    %v351 = vsel %vm272, %v334, 0
    %353 = vmatpush.bf16.msra.mxu0 0
    %354 = vmatpush.bf16.msra.mxu0 0
    %355 = vmatpush.bf16.msra.mxu0 0
    %356 = vmatpush.bf16.msra.mxu0 0
    %357 = vmatpush.bf16.msra.mxu0 0
    %358 = vmatpush.bf16.msra.mxu0 0
    %359 = vmatpush.bf16.msra.mxu0 %v347
    %360 = vmatpush.bf16.msra.mxu0 %v346
    %361 = vmatmul.bf16.gmra.mxu0 %v351
    %v362 = vpop.f32.mrf.mxu0
    %v363 = vadd.f32 %v336, %v362
    %v364 = vpop.f32.mrf.mxu0
    %v365 = vadd.f32 %v336, %v364
    %366 = vdwg.mxu0
    %v367 = vxor.u32 %v363, 2147483648
    %v368 = vxor.u32 %v365, 2147483648
    %v369 = vmul.f32 %v367, 1.442695
    %v370 = vpow.pop %v369
    %v371 = vmul.f32 %v368, 1.442695
    %v372 = vpow.pop %v371
    %v373 = vadd.f32 %v370, 1.0
    %v374 = vadd.f32 %v372, 1.0
    %v375 = vrcp.pop %v373
    %v376 = vmul.f32 %v373, %v375
    %v377 = vsub.f32 1.0, %v376
    %v378 = vmul.f32 %v375, %v377
    %v379 = vadd.f32 %v375, %v378
    %vm380 = vweird.f32 %v373
    %vm381 = vweird.f32 %v375
    %vm382 = vmor %vm380, %vm381
    %v383 = vsel %vm382, %v375, %v379
    %v384 = vand.u32 2147483647, %v373
    %vm385 = vcmp.eq.f32.partialorder %v384, 8.507059e+37
    %v386 = vand.u32 %v373, 2147483648
    %v387 = vor.u32 1.1754944e-38, %v386
    %v388 = vsel %vm385, %v387, %v383
    %v389 = vmul.f32 1.0, %v388
    %v390 = vrcp.pop %v374
    %v391 = vmul.f32 %v374, %v390
    %v392 = vsub.f32 1.0, %v391
    %v393 = vmul.f32 %v390, %v392
    %v394 = vadd.f32 %v390, %v393
    %vm395 = vweird.f32 %v374
    %vm396 = vweird.f32 %v390
    %vm397 = vmor %vm395, %vm396
    %v398 = vsel %vm397, %v390, %v394
    %v399 = vand.u32 2147483647, %v374
    %vm400 = vcmp.eq.f32.partialorder %v399, 8.507059e+37
    %v401 = vand.u32 %v374, 2147483648
    %v402 = vor.u32 1.1754944e-38, %v401
    %v403 = vsel %vm400, %v402, %v398
    %v404 = vmul.f32 1.0, %v403
    %v405 = vmul.f32 %v363, %v389
    %v406 = vmul.f32 %v365, %v404
    %v408 = vperm.slane %v254, 0
    %v414 = vunpack.c.l.b16 %v250
    %v415 = vunpack.c.l.b16 %v251
    %v416 = vunpack.c.l.b16 %v252
    %v417 = vunpack.c.l.b16 %v253
    %v418 = vpack.c.b16 %v415, %v414
    %v419 = vpack.c.b16 %v417, %v416
    %422 = vmatpush.bf16.msra.mxu0 0
    %423 = vmatpush.bf16.msra.mxu0 0
    %424 = vmatpush.bf16.msra.mxu0 0
    %425 = vmatpush.bf16.msra.mxu0 0
    %426 = vmatpush.bf16.msra.mxu0 0
    %427 = vmatpush.bf16.msra.mxu0 0
    %428 = vmatpush.bf16.msra.mxu0 %v419
    %429 = vmatpush.bf16.msra.mxu0 %v418
    %430 = vmatmul.bf16.gmra.mxu0 %v351
    %v431 = vpop.f32.mrf.mxu0
    %v432 = vadd.f32 %v408, %v431
    %v433 = vpop.f32.mrf.mxu0
    %v434 = vadd.f32 %v408, %v433
    %435 = vdwg.mxu0
    %v436 = vmul.f32 %v405, %v432
    %v437 = vmul.f32 %v406, %v434
    %v438 = vpack.c.bf16 %v437, %v436
    %v440 = vperm.slane %v271, 0
    %v458 = vunpack.c.l.b16 %v255
    %v459 = vunpack.c.l.b16 %v256
    %v460 = vunpack.c.l.b16 %v257
    %v461 = vunpack.c.l.b16 %v258
    %v462 = vunpack.c.l.b16 %v259
    %v463 = vunpack.c.l.b16 %v260
    %v464 = vunpack.c.l.b16 %v261
    %v465 = vunpack.c.l.b16 %v262
    %v466 = vunpack.c.l.b16 %v263
    %v467 = vunpack.c.l.b16 %v264
    %v468 = vunpack.c.l.b16 %v265
    %v469 = vunpack.c.l.b16 %v266
    %v470 = vunpack.c.l.b16 %v267
    %v471 = vunpack.c.l.b16 %v268
    %v472 = vunpack.c.l.b16 %v269
    %v473 = vunpack.c.l.b16 %v270
    %v474 = vpack.c.b16 %v459, %v458
    %v475 = vpack.c.b16 %v461, %v460
    %v476 = vpack.c.b16 %v463, %v462
    %v477 = vpack.c.b16 %v465, %v464
    %v478 = vpack.c.b16 %v467, %v466
    %v479 = vpack.c.b16 %v469, %v468
    %v480 = vpack.c.b16 %v471, %v470
    %v481 = vpack.c.b16 %v473, %v472
    %490 = vmatpush.bf16.msra.mxu0 %v481
    %491 = vmatpush.bf16.msra.mxu0 %v480
    %492 = vmatpush.bf16.msra.mxu0 %v479
    %493 = vmatpush.bf16.msra.mxu0 %v478
    %494 = vmatpush.bf16.msra.mxu0 %v477
    %495 = vmatpush.bf16.msra.mxu0 %v476
    %496 = vmatpush.bf16.msra.mxu0 %v475
    %497 = vmatpush.bf16.msra.mxu0 %v474
    %498 = vmatmul.bf16.gmra.mxu0 %v438
    %v499 = vpop.f32.mrf.mxu0
    %v500 = vadd.f32 %v440, %v499
    %v501 = vpop.f32.mrf.mxu0
    %v502 = vadd.f32 %v440, %v501
    %503 = vdwg.mxu0
    %v504 = vmul.f32 %v500, 0.5
    %v505 = vmul.f32 %v502, 0.5
    %v506 = vadd.f32 %v241, %v504
    %v507 = vadd.f32 %v242, %v505
    %v508 = vld [vmem:[%s19] sm:$0x1]
    %v509 = vld [vmem:[%s21] sm:$0x1]
    %v510 = vld [vmem:[%s23] sm:$0xf]
    %v511 = vld [vmem:[%s23 + $0x4] sm:$0xf]
    %v512 = vld [vmem:[%s23 + $0x8] sm:$0xf]
    %v513 = vld [vmem:[%s23 + $0xc] sm:$0xf]
    %v514 = vld [vmem:[%s25] sm:$0x1]
    %v515 = vld [vmem:[%s27] sm:$0xf]
    %v516 = vld [vmem:[%s27 + $0x4] sm:$0xf]
    %v517 = vld [vmem:[%s27 + $0x8] sm:$0xf]
    %v518 = vld [vmem:[%s27 + $0xc] sm:$0xf]
    %v519 = vld [vmem:[%s29] sm:$0x1]
    %v520 = vld [vmem:[%s31] sm:$0xf]
    %v521 = vld [vmem:[%s31 + $0x4] sm:$0xf]
    %v522 = vld [vmem:[%s31 + $0x8] sm:$0xf]
    %v523 = vld [vmem:[%s31 + $0xc] sm:$0xf]
    %v524 = vld [vmem:[%s33] sm:$0x1]
    %v525 = vld [vmem:[%s35] sm:$0xf]
    %v526 = vld [vmem:[%s35 + $0x4] sm:$0xf]
    %v527 = vld [vmem:[%s35 + $0x8] sm:$0xf]
    %v528 = vld [vmem:[%s35 + $0xc] sm:$0xf]
    %v529 = vld [vmem:[%s37] sm:$0x1]
    %v530 = vsel %vm272, %v506, 0.0
    %531 = vadd.xlane.f32.xlu0 %v530
    %v532 = vpop.xlane.xlu0 %531
    %v533 = vsel %vm272, %v507, 0.0
    %534 = vadd.xlane.f32.xlu0 %v533
    %v535 = vpop.xlane.xlu0 %534
    %v536 = vmul.f32 %v532, %v285
    %v537 = vmul.f32 %v535, %v285
    %v538 = vsub.f32 %v506, %v536
    %v539 = vsub.f32 %v507, %v537
    %v540 = vmul.f32 %v538, %v538
    %v541 = vmul.f32 %v539, %v539
    %v542 = vsel %vm272, %v540, 0.0
    %543 = vadd.xlane.f32.xlu0 %v542
    %v544 = vpop.xlane.xlu0 %543
    %v545 = vsel %vm272, %v541, 0.0
    %546 = vadd.xlane.f32.xlu0 %v545
    %v547 = vpop.xlane.xlu0 %546
    %v548 = vmul.f32 %v544, %v285
    %v549 = vmul.f32 %v547, %v285
    %v550 = vadd.f32 %v548, 1e-05
    %v551 = vadd.f32 %v549, 1e-05
    %v552 = vrsqrt.pop %v550
    %v553 = vmul.f32 %v552, %v550
    %v554 = vmul.f32 %v553, %v552
    %v555 = vmul.f32 0.5, %v554
    %v556 = vsub.f32 1.5, %v555
    %v557 = vmul.f32 %v552, %v556
    %vm558 = vweird.f32 %v550
    %vm559 = vweird.f32 %v552
    %vm560 = vmor %vm558, %vm559
    %v561 = vsel %vm560, %v552, %v557
    %v562 = vrsqrt.pop %v551
    %v563 = vmul.f32 %v562, %v551
    %v564 = vmul.f32 %v563, %v562
    %v565 = vmul.f32 0.5, %v564
    %v566 = vsub.f32 1.5, %v565
    %v567 = vmul.f32 %v562, %v566
    %vm568 = vweird.f32 %v551
    %vm569 = vweird.f32 %v562
    %vm570 = vmor %vm568, %vm569
    %v571 = vsel %vm570, %v562, %v567
    %v572 = vmul.f32 %v538, %v561
    %v573 = vmul.f32 %v539, %v571
    %v575 = vperm.slane %v508, 0
    %v577 = vmul.f32 %v572, %v575
    %v578 = vmul.f32 %v573, %v575
    %v580 = vperm.slane %v509, 0
    %v582 = vadd.f32 %v577, %v580
    %v583 = vadd.f32 %v578, %v580
    %v584 = vpack.c.bf16 %v583, %v582
    %v586 = vperm.slane %v514, 0
    %v592 = vunpack.c.l.b16 %v510
    %v593 = vunpack.c.l.b16 %v511
    %v594 = vunpack.c.l.b16 %v512
    %v595 = vunpack.c.l.b16 %v513
    %v596 = vpack.c.b16 %v593, %v592
    %v597 = vpack.c.b16 %v595, %v594
    %v601 = vsel %vm272, %v584, 0
    %603 = vmatpush.bf16.msra.mxu0 0
    %604 = vmatpush.bf16.msra.mxu0 0
    %605 = vmatpush.bf16.msra.mxu0 0
    %606 = vmatpush.bf16.msra.mxu0 0
    %607 = vmatpush.bf16.msra.mxu0 0
    %608 = vmatpush.bf16.msra.mxu0 0
    %609 = vmatpush.bf16.msra.mxu0 %v597
    %610 = vmatpush.bf16.msra.mxu0 %v596
    %611 = vmatmul.bf16.gmra.mxu0 %v601
    %v612 = vpop.f32.mrf.mxu0
    %v613 = vadd.f32 %v586, %v612
    %v614 = vpop.f32.mrf.mxu0
    %v615 = vadd.f32 %v586, %v614
    %616 = vdwg.mxu0
    %v618 = vperm.slane %v519, 0
    %v624 = vunpack.c.l.b16 %v515
    %v625 = vunpack.c.l.b16 %v516
    %v626 = vunpack.c.l.b16 %v517
    %v627 = vunpack.c.l.b16 %v518
    %v628 = vpack.c.b16 %v625, %v624
    %v629 = vpack.c.b16 %v627, %v626
    %632 = vmatpush.bf16.msra.mxu0 0
    %633 = vmatpush.bf16.msra.mxu0 0
    %634 = vmatpush.bf16.msra.mxu0 0
    %635 = vmatpush.bf16.msra.mxu0 0
    %636 = vmatpush.bf16.msra.mxu0 0
    %637 = vmatpush.bf16.msra.mxu0 0
    %638 = vmatpush.bf16.msra.mxu0 %v629
    %639 = vmatpush.bf16.msra.mxu0 %v628
    %640 = vmatmul.bf16.gmra.mxu0 %v601
    %v641 = vpop.f32.mrf.mxu0
    %v642 = vadd.f32 %v618, %v641
    %v643 = vpop.f32.mrf.mxu0
    %v644 = vadd.f32 %v618, %v643
    %645 = vdwg.mxu0
    %v647 = vperm.slane %v524, 0
    %v653 = vunpack.c.l.b16 %v520
    %v654 = vunpack.c.l.b16 %v521
    %v655 = vunpack.c.l.b16 %v522
    %v656 = vunpack.c.l.b16 %v523
    %v657 = vpack.c.b16 %v654, %v653
    %v658 = vpack.c.b16 %v656, %v655
    %661 = vmatpush.bf16.msra.mxu0 0
    %662 = vmatpush.bf16.msra.mxu0 0
    %663 = vmatpush.bf16.msra.mxu0 0
    %664 = vmatpush.bf16.msra.mxu0 0
    %665 = vmatpush.bf16.msra.mxu0 0
    %666 = vmatpush.bf16.msra.mxu0 0
    %667 = vmatpush.bf16.msra.mxu0 %v658
    %668 = vmatpush.bf16.msra.mxu0 %v657
    %669 = vmatmul.bf16.gmra.mxu0 %v601
    %v670 = vpop.f32.mrf.mxu0
    %v671 = vadd.f32 %v647, %v670
    %v672 = vpop.f32.mrf.mxu0
    %v673 = vadd.f32 %v647, %v672
    %674 = vdwg.mxu0
    %v675 = vpack.c.bf16 %v613, %v613
    %v676 = vpack.c.bf16 %v615, %v615
    %v677 = vpack.c.bf16 %v642, %v642
    %v678 = vpack.c.bf16 %v644, %v644
    %v679 = vpack.c.bf16 %v671, %v671
    %v680 = vpack.c.bf16 %v673, %v673
    %vm681 = vcmask 64512
    %v683 = vsel %vm681, %v675, 0
    %v686 = vsel %vm681, %v677, 0
    %688 = vmatpush.bf16.xpose.msra.mxu0 0
    %689 = vmatpush.bf16.xpose.msra.mxu0 0
    %690 = vmatpush.bf16.xpose.msra.mxu0 0
    %691 = vmatpush.bf16.xpose.msra.mxu0 0
    %692 = vmatpush.bf16.xpose.msra.mxu0 0
    %693 = vmatpush.bf16.xpose.msra.mxu0 0
    %694 = vmatpush.bf16.xpose.msra.mxu0 0
    %695 = vmatpush.bf16.xpose.msra.mxu0 %v686
    %696 = vmatmul.bf16.gmra.mxu0 %v683
    %v697 = vpop.f32.mrf.mxu0
    %v698 = vadd.f32 0.0, %v697
    %v699 = vpop.f32.mrf.mxu0
    %700 = vdwg.mxu0
    %v702 = vsel %vm681, %v676, 0
    %v705 = vsel %vm681, %v678, 0
    %707 = vmatpush.bf16.xpose.msra.mxu0 0
    %708 = vmatpush.bf16.xpose.msra.mxu0 0
    %709 = vmatpush.bf16.xpose.msra.mxu0 0
    %710 = vmatpush.bf16.xpose.msra.mxu0 0
    %711 = vmatpush.bf16.xpose.msra.mxu0 0
    %712 = vmatpush.bf16.xpose.msra.mxu0 0
    %713 = vmatpush.bf16.xpose.msra.mxu0 0
    %714 = vmatpush.bf16.xpose.msra.mxu0 %v705
    %715 = vmatmul.bf16.gmra.mxu0 %v702
    %v716 = vpop.f32.mrf.mxu0
    %v717 = vadd.f32 0.0, %v716
    %v718 = vpop.f32.mrf.mxu0
    %719 = vdwg.mxu0
    %v720 = vsel %vm681, %v698, -inf
    %721 = vmax.xlane.f32.xlu0 %v720
    %v722 = vpop.xlane.xlu0 %721
    %v723 = vsel %vm681, %v717, -inf
    %724 = vmax.xlane.f32.xlu0 %v723
    %v725 = vpop.xlane.xlu0 %724
    %v726 = vsub.f32 %v698, %v722
    %v727 = vsub.f32 %v717, %v725
    %v728 = vmul.f32 %v726, 1.442695
    %v729 = vpow.pop %v728
    %v730 = vmul.f32 %v727, 1.442695
    %v731 = vpow.pop %v730
    %v732 = vsel %vm681, %v729, 0.0
    %733 = vadd.xlane.f32.xlu0 %v732
    %v734 = vpop.xlane.xlu0 %733
    %v735 = vsel %vm681, %v731, 0.0
    %736 = vadd.xlane.f32.xlu0 %v735
    %v737 = vpop.xlane.xlu0 %736
    %v738 = vrcp.pop %v734
    %v739 = vrcp.pop %v737
    %v740 = vmul.f32 %v729, %v738
    %v741 = vmul.f32 %v731, %v739
    %v742 = vpack.c.bf16 %v740, %v740
    %v743 = vpack.c.bf16 %v741, %v741
    %v745 = vsel %vm681, %v742, 0
    %vm747 = vcmask 1043456
    %v749 = vsel %vm747, %v679, 0
    %751 = vmatpush.bf16.msra.mxu0 0
    %752 = vmatpush.bf16.msra.mxu0 0
    %753 = vmatpush.bf16.msra.mxu0 0
    %754 = vmatpush.bf16.msra.mxu0 0
    %755 = vmatpush.bf16.msra.mxu0 0
    %756 = vmatpush.bf16.msra.mxu0 0
    %757 = vmatpush.bf16.msra.mxu0 0
    %758 = vmatpush.bf16.msra.mxu0 %v749
    %759 = vmatmul.bf16.gmra.mxu0 %v745
    %v760 = vpop.f32.mrf.mxu0
    %v761 = vadd.f32 0.0, %v760
    %v762 = vpop.f32.mrf.mxu0
    %763 = vdwg.mxu0
    %v765 = vsel %vm681, %v743, 0
    %v768 = vsel %vm747, %v680, 0
    %770 = vmatpush.bf16.msra.mxu0 0
    %771 = vmatpush.bf16.msra.mxu0 0
    %772 = vmatpush.bf16.msra.mxu0 0
    %773 = vmatpush.bf16.msra.mxu0 0
    %774 = vmatpush.bf16.msra.mxu0 0
    %775 = vmatpush.bf16.msra.mxu0 0
    %776 = vmatpush.bf16.msra.mxu0 0
    %777 = vmatpush.bf16.msra.mxu0 %v768
    %778 = vmatmul.bf16.gmra.mxu0 %v765
    %v779 = vpop.f32.mrf.mxu0
    %v780 = vadd.f32 0.0, %v779
    %v781 = vpop.f32.mrf.mxu0
    %782 = vdwg.mxu0
    %v784 = vunpack.c.l.b16 %v675
    %v785 = vpack.c.b16 %v784, %v784
    %786 = vrot.lane.b32.xlu0 %v785, 120
    %v787 = vpop.permute.xlu0 %786
    %v789 = vunpack.c.l.b16 %v677
    %v790 = vpack.c.b16 %v789, %v789
    %791 = vrot.lane.b32.xlu0 %v790, 120
    %v792 = vpop.permute.xlu0 %791
    %v794 = vsel %vm681, %v787, 0
    %v797 = vsel %vm681, %v792, 0
    %799 = vmatpush.bf16.xpose.msra.mxu0 0
    %800 = vmatpush.bf16.xpose.msra.mxu0 0
    %801 = vmatpush.bf16.xpose.msra.mxu0 0
    %802 = vmatpush.bf16.xpose.msra.mxu0 0
    %803 = vmatpush.bf16.xpose.msra.mxu0 0
    %804 = vmatpush.bf16.xpose.msra.mxu0 0
    %805 = vmatpush.bf16.xpose.msra.mxu0 0
    %806 = vmatpush.bf16.xpose.msra.mxu0 %v797
    %807 = vmatmul.bf16.gmra.mxu0 %v794
    %v808 = vpop.f32.mrf.mxu0
    %v809 = vadd.f32 0.0, %v808
    %v810 = vpop.f32.mrf.mxu0
    %811 = vdwg.mxu0
    %v813 = vunpack.c.l.b16 %v676
    %v814 = vpack.c.b16 %v813, %v813
    %815 = vrot.lane.b32.xlu0 %v814, 120
    %v816 = vpop.permute.xlu0 %815
    %v818 = vunpack.c.l.b16 %v678
    %v819 = vpack.c.b16 %v818, %v818
    %820 = vrot.lane.b32.xlu0 %v819, 120
    %v821 = vpop.permute.xlu0 %820
    %v823 = vsel %vm681, %v816, 0
    %v826 = vsel %vm681, %v821, 0
    %828 = vmatpush.bf16.xpose.msra.mxu0 0
    %829 = vmatpush.bf16.xpose.msra.mxu0 0
    %830 = vmatpush.bf16.xpose.msra.mxu0 0
    %831 = vmatpush.bf16.xpose.msra.mxu0 0
    %832 = vmatpush.bf16.xpose.msra.mxu0 0
    %833 = vmatpush.bf16.xpose.msra.mxu0 0
    %834 = vmatpush.bf16.xpose.msra.mxu0 0
    %835 = vmatpush.bf16.xpose.msra.mxu0 %v826
    %836 = vmatmul.bf16.gmra.mxu0 %v823
    %v837 = vpop.f32.mrf.mxu0
    %v838 = vadd.f32 0.0, %v837
    %v839 = vpop.f32.mrf.mxu0
    %840 = vdwg.mxu0
    %v841 = vsel %vm681, %v809, -inf
    %842 = vmax.xlane.f32.xlu0 %v841
    %v843 = vpop.xlane.xlu0 %842
    %v844 = vsel %vm681, %v838, -inf
    %845 = vmax.xlane.f32.xlu0 %v844
    %v846 = vpop.xlane.xlu0 %845
    %v847 = vsub.f32 %v809, %v843
    %v848 = vsub.f32 %v838, %v846
    %v849 = vmul.f32 %v847, 1.442695
    %v850 = vpow.pop %v849
    %v851 = vmul.f32 %v848, 1.442695
    %v852 = vpow.pop %v851
    %v853 = vsel %vm681, %v850, 0.0
    %854 = vadd.xlane.f32.xlu0 %v853
    %v855 = vpop.xlane.xlu0 %854
    %v856 = vsel %vm681, %v852, 0.0
    %857 = vadd.xlane.f32.xlu0 %v856
    %v858 = vpop.xlane.xlu0 %857
    %v859 = vrcp.pop %v855
    %v860 = vrcp.pop %v858
    %v861 = vmul.f32 %v850, %v859
    %v862 = vmul.f32 %v852, %v860
    %v863 = vpack.c.bf16 %v861, %v861
    %v864 = vpack.c.bf16 %v862, %v862
    %v866 = vunpack.c.l.b16 %v679
    %v867 = vpack.c.b16 %v866, %v866
    %868 = vrot.lane.b32.xlu0 %v867, 120
    %v869 = vpop.permute.xlu0 %868
    %v871 = vsel %vm681, %v863, 0
    %v874 = vsel %vm747, %v869, 0
    %876 = vmatpush.bf16.msra.mxu0 0
    %877 = vmatpush.bf16.msra.mxu0 0
    %878 = vmatpush.bf16.msra.mxu0 0
    %879 = vmatpush.bf16.msra.mxu0 0
    %880 = vmatpush.bf16.msra.mxu0 0
    %881 = vmatpush.bf16.msra.mxu0 0
    %882 = vmatpush.bf16.msra.mxu0 0
    %883 = vmatpush.bf16.msra.mxu0 %v874
    %884 = vmatmul.bf16.gmra.mxu0 %v871
    %v885 = vpop.f32.mrf.mxu0
    %v886 = vadd.f32 0.0, %v885
    %v887 = vpop.f32.mrf.mxu0
    %888 = vdwg.mxu0
    %v890 = vunpack.c.l.b16 %v680
    %v891 = vpack.c.b16 %v890, %v890
    %892 = vrot.lane.b32.xlu0 %v891, 120
    %v893 = vpop.permute.xlu0 %892
    %v895 = vsel %vm681, %v864, 0
    %v898 = vsel %vm747, %v893, 0
    %900 = vmatpush.bf16.msra.mxu0 0
    %901 = vmatpush.bf16.msra.mxu0 0
    %902 = vmatpush.bf16.msra.mxu0 0
    %903 = vmatpush.bf16.msra.mxu0 0
    %904 = vmatpush.bf16.msra.mxu0 0
    %905 = vmatpush.bf16.msra.mxu0 0
    %906 = vmatpush.bf16.msra.mxu0 0
    %907 = vmatpush.bf16.msra.mxu0 %v898
    %908 = vmatmul.bf16.gmra.mxu0 %v895
    %v909 = vpop.f32.mrf.mxu0
    %v910 = vadd.f32 0.0, %v909
    %v911 = vpop.f32.mrf.mxu0
    %912 = vdwg.mxu0
    %913 = vrot.lane.b32.xlu0 %v785, 112
    %v914 = vpop.permute.xlu0 %913
    %915 = vrot.lane.b32.xlu0 %v790, 112
    %v916 = vpop.permute.xlu0 %915
    %v918 = vsel %vm681, %v914, 0
    %v921 = vsel %vm681, %v916, 0
    %923 = vmatpush.bf16.xpose.msra.mxu0 0
    %924 = vmatpush.bf16.xpose.msra.mxu0 0
    %925 = vmatpush.bf16.xpose.msra.mxu0 0
    %926 = vmatpush.bf16.xpose.msra.mxu0 0
    %927 = vmatpush.bf16.xpose.msra.mxu0 0
    %928 = vmatpush.bf16.xpose.msra.mxu0 0
    %929 = vmatpush.bf16.xpose.msra.mxu0 0
    %930 = vmatpush.bf16.xpose.msra.mxu0 %v921
    %931 = vmatmul.bf16.gmra.mxu0 %v918
    %v932 = vpop.f32.mrf.mxu0
    %v933 = vadd.f32 0.0, %v932
    %v934 = vpop.f32.mrf.mxu0
    %935 = vdwg.mxu0
    %936 = vrot.lane.b32.xlu0 %v814, 112
    %v937 = vpop.permute.xlu0 %936
    %938 = vrot.lane.b32.xlu0 %v819, 112
    %v939 = vpop.permute.xlu0 %938
    %v941 = vsel %vm681, %v937, 0
    %v944 = vsel %vm681, %v939, 0
    %946 = vmatpush.bf16.xpose.msra.mxu0 0
    %947 = vmatpush.bf16.xpose.msra.mxu0 0
    %948 = vmatpush.bf16.xpose.msra.mxu0 0
    %949 = vmatpush.bf16.xpose.msra.mxu0 0
    %950 = vmatpush.bf16.xpose.msra.mxu0 0
    %951 = vmatpush.bf16.xpose.msra.mxu0 0
    %952 = vmatpush.bf16.xpose.msra.mxu0 0
    %953 = vmatpush.bf16.xpose.msra.mxu0 %v944
    %954 = vmatmul.bf16.gmra.mxu0 %v941
    %v955 = vpop.f32.mrf.mxu0
    %v956 = vadd.f32 0.0, %v955
    %v957 = vpop.f32.mrf.mxu0
    %958 = vdwg.mxu0
    %v959 = vsel %vm681, %v933, -inf
    %960 = vmax.xlane.f32.xlu0 %v959
    %v961 = vpop.xlane.xlu0 %960
    %v962 = vsel %vm681, %v956, -inf
    %963 = vmax.xlane.f32.xlu0 %v962
    %v964 = vpop.xlane.xlu0 %963
    %v965 = vsub.f32 %v933, %v961
    %v966 = vsub.f32 %v956, %v964
    %v967 = vmul.f32 %v965, 1.442695
    %v968 = vpow.pop %v967
    %v969 = vmul.f32 %v966, 1.442695
    %v970 = vpow.pop %v969
    %v971 = vsel %vm681, %v968, 0.0
    %972 = vadd.xlane.f32.xlu0 %v971
    %v973 = vpop.xlane.xlu0 %972
    %v974 = vsel %vm681, %v970, 0.0
    %975 = vadd.xlane.f32.xlu0 %v974
    %v976 = vpop.xlane.xlu0 %975
    %v977 = vrcp.pop %v973
    %v978 = vrcp.pop %v976
    %v979 = vmul.f32 %v968, %v977
    %v980 = vmul.f32 %v970, %v978
    %v981 = vpack.c.bf16 %v979, %v979
    %v982 = vpack.c.bf16 %v980, %v980
    %983 = vrot.lane.b32.xlu0 %v867, 112
    %v984 = vpop.permute.xlu0 %983
    %v986 = vsel %vm681, %v981, 0
    %v989 = vsel %vm747, %v984, 0
    %991 = vmatpush.bf16.msra.mxu0 0
    %992 = vmatpush.bf16.msra.mxu0 0
    %993 = vmatpush.bf16.msra.mxu0 0
    %994 = vmatpush.bf16.msra.mxu0 0
    %995 = vmatpush.bf16.msra.mxu0 0
    %996 = vmatpush.bf16.msra.mxu0 0
    %997 = vmatpush.bf16.msra.mxu0 0
    %998 = vmatpush.bf16.msra.mxu0 %v989
    %999 = vmatmul.bf16.gmra.mxu0 %v986
    %v1000 = vpop.f32.mrf.mxu0
    %v1001 = vadd.f32 0.0, %v1000
    %v1002 = vpop.f32.mrf.mxu0
    %1003 = vdwg.mxu0
    %1004 = vrot.lane.b32.xlu0 %v891, 112
    %v1005 = vpop.permute.xlu0 %1004
    %v1007 = vsel %vm681, %v982, 0
    %v1010 = vsel %vm747, %v1005, 0
    %1012 = vmatpush.bf16.msra.mxu0 0
    %1013 = vmatpush.bf16.msra.mxu0 0
    %1014 = vmatpush.bf16.msra.mxu0 0
    %1015 = vmatpush.bf16.msra.mxu0 0
    %1016 = vmatpush.bf16.msra.mxu0 0
    %1017 = vmatpush.bf16.msra.mxu0 0
    %1018 = vmatpush.bf16.msra.mxu0 0
    %1019 = vmatpush.bf16.msra.mxu0 %v1010
    %1020 = vmatmul.bf16.gmra.mxu0 %v1007
    %v1021 = vpop.f32.mrf.mxu0
    %v1022 = vadd.f32 0.0, %v1021
    %v1023 = vpop.f32.mrf.mxu0
    %1024 = vdwg.mxu0
    %1025 = vrot.lane.b32.xlu0 %v785, 104
    %v1026 = vpop.permute.xlu0 %1025
    %1027 = vrot.lane.b32.xlu0 %v790, 104
    %v1028 = vpop.permute.xlu0 %1027
    %v1030 = vsel %vm681, %v1026, 0
    %v1033 = vsel %vm681, %v1028, 0
    %1035 = vmatpush.bf16.xpose.msra.mxu0 0
    %1036 = vmatpush.bf16.xpose.msra.mxu0 0
    %1037 = vmatpush.bf16.xpose.msra.mxu0 0
    %1038 = vmatpush.bf16.xpose.msra.mxu0 0
    %1039 = vmatpush.bf16.xpose.msra.mxu0 0
    %1040 = vmatpush.bf16.xpose.msra.mxu0 0
    %1041 = vmatpush.bf16.xpose.msra.mxu0 0
    %1042 = vmatpush.bf16.xpose.msra.mxu0 %v1033
    %1043 = vmatmul.bf16.gmra.mxu0 %v1030
    %v1044 = vpop.f32.mrf.mxu0
    %v1045 = vadd.f32 0.0, %v1044
    %v1046 = vpop.f32.mrf.mxu0
    %1047 = vdwg.mxu0
    %1048 = vrot.lane.b32.xlu0 %v814, 104
    %v1049 = vpop.permute.xlu0 %1048
    %1050 = vrot.lane.b32.xlu0 %v819, 104
    %v1051 = vpop.permute.xlu0 %1050
    %v1053 = vsel %vm681, %v1049, 0
    %v1056 = vsel %vm681, %v1051, 0
    %1058 = vmatpush.bf16.xpose.msra.mxu0 0
    %1059 = vmatpush.bf16.xpose.msra.mxu0 0
    %1060 = vmatpush.bf16.xpose.msra.mxu0 0
    %1061 = vmatpush.bf16.xpose.msra.mxu0 0
    %1062 = vmatpush.bf16.xpose.msra.mxu0 0
    %1063 = vmatpush.bf16.xpose.msra.mxu0 0
    %1064 = vmatpush.bf16.xpose.msra.mxu0 0
    %1065 = vmatpush.bf16.xpose.msra.mxu0 %v1056
    %1066 = vmatmul.bf16.gmra.mxu0 %v1053
    %v1067 = vpop.f32.mrf.mxu0
    %v1068 = vadd.f32 0.0, %v1067
    %v1069 = vpop.f32.mrf.mxu0
    %1070 = vdwg.mxu0
    %v1071 = vsel %vm681, %v1045, -inf
    %1072 = vmax.xlane.f32.xlu0 %v1071
    %v1073 = vpop.xlane.xlu0 %1072
    %v1074 = vsel %vm681, %v1068, -inf
    %1075 = vmax.xlane.f32.xlu0 %v1074
    %v1076 = vpop.xlane.xlu0 %1075
    %v1077 = vsub.f32 %v1045, %v1073
    %v1078 = vsub.f32 %v1068, %v1076
    %v1079 = vmul.f32 %v1077, 1.442695
    %v1080 = vpow.pop %v1079
    %v1081 = vmul.f32 %v1078, 1.442695
    %v1082 = vpow.pop %v1081
    %v1083 = vsel %vm681, %v1080, 0.0
    %1084 = vadd.xlane.f32.xlu0 %v1083
    %v1085 = vpop.xlane.xlu0 %1084
    %v1086 = vsel %vm681, %v1082, 0.0
    %1087 = vadd.xlane.f32.xlu0 %v1086
    %v1088 = vpop.xlane.xlu0 %1087
    %v1089 = vrcp.pop %v1085
    %v1090 = vrcp.pop %v1088
    %v1091 = vmul.f32 %v1080, %v1089
    %v1092 = vmul.f32 %v1082, %v1090
    %v1093 = vpack.c.bf16 %v1091, %v1091
    %v1094 = vpack.c.bf16 %v1092, %v1092
    %1095 = vrot.lane.b32.xlu0 %v867, 104
    %v1096 = vpop.permute.xlu0 %1095
    %v1098 = vsel %vm681, %v1093, 0
    %v1101 = vsel %vm747, %v1096, 0
    %1103 = vmatpush.bf16.msra.mxu0 0
    %1104 = vmatpush.bf16.msra.mxu0 0
    %1105 = vmatpush.bf16.msra.mxu0 0
    %1106 = vmatpush.bf16.msra.mxu0 0
    %1107 = vmatpush.bf16.msra.mxu0 0
    %1108 = vmatpush.bf16.msra.mxu0 0
    %1109 = vmatpush.bf16.msra.mxu0 0
    %1110 = vmatpush.bf16.msra.mxu0 %v1101
    %1111 = vmatmul.bf16.gmra.mxu0 %v1098
    %v1112 = vpop.f32.mrf.mxu0
    %v1113 = vadd.f32 0.0, %v1112
    %v1114 = vpop.f32.mrf.mxu0
    %1115 = vdwg.mxu0
    %1116 = vrot.lane.b32.xlu0 %v891, 104
    %v1117 = vpop.permute.xlu0 %1116
    %v1119 = vsel %vm681, %v1094, 0
    %v1122 = vsel %vm747, %v1117, 0
    %1124 = vmatpush.bf16.msra.mxu0 0
    %1125 = vmatpush.bf16.msra.mxu0 0
    %1126 = vmatpush.bf16.msra.mxu0 0
    %1127 = vmatpush.bf16.msra.mxu0 0
    %1128 = vmatpush.bf16.msra.mxu0 0
    %1129 = vmatpush.bf16.msra.mxu0 0
    %1130 = vmatpush.bf16.msra.mxu0 0
    %1131 = vmatpush.bf16.msra.mxu0 %v1122
    %1132 = vmatmul.bf16.gmra.mxu0 %v1119
    %v1133 = vpop.f32.mrf.mxu0
    %v1134 = vadd.f32 0.0, %v1133
    %v1135 = vpop.f32.mrf.mxu0
    %1136 = vdwg.mxu0
    %1139 = vrot.lane.b32.xlu0 %v886, 8
    %v1140 = vpop.permute.xlu0 %1139
    %1141 = vrot.lane.b32.xlu0 %v910, 8
    %v1142 = vpop.permute.xlu0 %1141
    %1147 = vrot.lane.b32.xlu0 %v1001, 16
    %v1148 = vpop.permute.xlu0 %1147
    %1149 = vrot.lane.b32.xlu0 %v1022, 16
    %v1150 = vpop.permute.xlu0 %1149
    %1155 = vrot.lane.b32.xlu0 %v1113, 24
    %v1156 = vpop.permute.xlu0 %1155
    %1157 = vrot.lane.b32.xlu0 %v1134, 24
    %v1158 = vpop.permute.xlu0 %1157
    %v1161 = vsel %vm681, %v761, %v1140
    %v1162 = vsel %vm681, %v780, %v1142
    %vm1163 = vcmask 130048
    %v1164 = vsel %vm1163, %v1161, %v1148
    %v1165 = vsel %vm1163, %v1162, %v1150
    %vm1166 = vcmask 195584
    %v1167 = vsel %vm1166, %v1164, %v1156
    %v1168 = vsel %vm1166, %v1165, %v1158
    %v1169 = vpack.c.bf16 %v1168, %v1167
    %v1171 = vperm.slane %v529, 0
    %v1177 = vunpack.c.l.b16 %v525
    %v1178 = vunpack.c.l.b16 %v526
    %v1179 = vunpack.c.l.b16 %v527
    %v1180 = vunpack.c.l.b16 %v528
    %v1181 = vpack.c.b16 %v1178, %v1177
    %v1182 = vpack.c.b16 %v1180, %v1179
    %v1186 = vsel %vm272, %v1169, 0
    %1188 = vmatpush.bf16.msra.mxu0 0
    %1189 = vmatpush.bf16.msra.mxu0 0
    %1190 = vmatpush.bf16.msra.mxu0 0
    %1191 = vmatpush.bf16.msra.mxu0 0
    %1192 = vmatpush.bf16.msra.mxu0 0
    %1193 = vmatpush.bf16.msra.mxu0 0
    %1194 = vmatpush.bf16.msra.mxu0 %v1182
    %1195 = vmatpush.bf16.msra.mxu0 %v1181
    %1196 = vmatmul.bf16.gmra.mxu0 %v1186
    %v1197 = vpop.f32.mrf.mxu0
    %v1198 = vadd.f32 %v1171, %v1197
    %v1199 = vpop.f32.mrf.mxu0
    %v1200 = vadd.f32 %v1171, %v1199
    %1201 = vdwg.mxu0
    %v1202 = vadd.f32 %v506, %v1198
    %v1203 = vadd.f32 %v507, %v1200
    %v1204 = vld [vmem:[%s39] sm:$0x1]
    %v1205 = vld [vmem:[%s41] sm:$0x1]
    %v1206 = vld [vmem:[%s43] sm:$0xf]
    %v1207 = vld [vmem:[%s43 + $0x4] sm:$0xf]
    %v1208 = vld [vmem:[%s43 + $0x8] sm:$0xf]
    %v1209 = vld [vmem:[%s43 + $0xc] sm:$0xf]
    %v1210 = vld [vmem:[%s45] sm:$0x1]
    %v1211 = vld [vmem:[%s47] sm:$0xf]
    %v1212 = vld [vmem:[%s47 + $0x4] sm:$0xf]
    %v1213 = vld [vmem:[%s47 + $0x8] sm:$0xf]
    %v1214 = vld [vmem:[%s47 + $0xc] sm:$0xf]
    %v1215 = vld [vmem:[%s49] sm:$0x1]
    %v1216 = vld [vmem:[%s53] sm:$0x1]
    %v1217 = vld [vmem:[%s55] sm:$0x1]
    %v1218 = vld [vmem:[%s57] sm:$0x1]
    %v1219 = vld [vmem:[%s59] sm:$0xf]
    %v1220 = vld [vmem:[%s59 + $0x4] sm:$0xf]
    %v1221 = vld [vmem:[%s59 + $0x8] sm:$0xf]
    %v1222 = vld [vmem:[%s59 + $0xc] sm:$0xf]
    %v1223 = vld [vmem:[%s59 + $0x10] sm:$0xf]
    %v1224 = vld [vmem:[%s59 + $0x14] sm:$0xf]
    %v1225 = vld [vmem:[%s59 + $0x18] sm:$0xf]
    %v1226 = vld [vmem:[%s59 + $0x1c] sm:$0xf]
    %v1227 = vld [vmem:[%s61] sm:$0x1]
    %v1228 = vsel %vm272, %v1202, 0.0
    %1229 = vadd.xlane.f32.xlu0 %v1228
    %v1230 = vpop.xlane.xlu0 %1229
    %v1231 = vsel %vm272, %v1203, 0.0
    %1232 = vadd.xlane.f32.xlu0 %v1231
    %v1233 = vpop.xlane.xlu0 %1232
    %v1234 = vmul.f32 %v1230, %v285
    %v1235 = vmul.f32 %v1233, %v285
    %v1236 = vsub.f32 %v1202, %v1234
    %v1237 = vsub.f32 %v1203, %v1235
    %v1238 = vmul.f32 %v1236, %v1236
    %v1239 = vmul.f32 %v1237, %v1237
    %v1240 = vsel %vm272, %v1238, 0.0
    %1241 = vadd.xlane.f32.xlu0 %v1240
    %v1242 = vpop.xlane.xlu0 %1241
    %v1243 = vsel %vm272, %v1239, 0.0
    %1244 = vadd.xlane.f32.xlu0 %v1243
    %v1245 = vpop.xlane.xlu0 %1244
    %v1246 = vmul.f32 %v1242, %v285
    %v1247 = vmul.f32 %v1245, %v285
    %v1248 = vadd.f32 %v1246, 1e-05
    %v1249 = vadd.f32 %v1247, 1e-05
    %v1250 = vrsqrt.pop %v1248
    %v1251 = vmul.f32 %v1250, %v1248
    %v1252 = vmul.f32 %v1251, %v1250
    %v1253 = vmul.f32 0.5, %v1252
    %v1254 = vsub.f32 1.5, %v1253
    %v1255 = vmul.f32 %v1250, %v1254
    %vm1256 = vweird.f32 %v1248
    %vm1257 = vweird.f32 %v1250
    %vm1258 = vmor %vm1256, %vm1257
    %v1259 = vsel %vm1258, %v1250, %v1255
    %v1260 = vrsqrt.pop %v1249
    %v1261 = vmul.f32 %v1260, %v1249
    %v1262 = vmul.f32 %v1261, %v1260
    %v1263 = vmul.f32 0.5, %v1262
    %v1264 = vsub.f32 1.5, %v1263
    %v1265 = vmul.f32 %v1260, %v1264
    %vm1266 = vweird.f32 %v1249
    %vm1267 = vweird.f32 %v1260
    %vm1268 = vmor %vm1266, %vm1267
    %v1269 = vsel %vm1268, %v1260, %v1265
    %v1270 = vmul.f32 %v1236, %v1259
    %v1271 = vmul.f32 %v1237, %v1269
    %v1273 = vperm.slane %v1204, 0
    %v1275 = vmul.f32 %v1270, %v1273
    %v1276 = vmul.f32 %v1271, %v1273
    %v1278 = vperm.slane %v1205, 0
    %v1280 = vadd.f32 %v1275, %v1278
    %v1281 = vadd.f32 %v1276, %v1278
    %v1282 = vpack.c.bf16 %v1281, %v1280
    %v1284 = vperm.slane %v1210, 0
    %v1290 = vunpack.c.l.b16 %v1206
    %v1291 = vunpack.c.l.b16 %v1207
    %v1292 = vunpack.c.l.b16 %v1208
    %v1293 = vunpack.c.l.b16 %v1209
    %v1294 = vpack.c.b16 %v1291, %v1290
    %v1295 = vpack.c.b16 %v1293, %v1292
    %v1299 = vsel %vm272, %v1282, 0
    %1301 = vmatpush.bf16.msra.mxu0 0
    %1302 = vmatpush.bf16.msra.mxu0 0
    %1303 = vmatpush.bf16.msra.mxu0 0
    %1304 = vmatpush.bf16.msra.mxu0 0
    %1305 = vmatpush.bf16.msra.mxu0 0
    %1306 = vmatpush.bf16.msra.mxu0 0
    %1307 = vmatpush.bf16.msra.mxu0 %v1295
    %1308 = vmatpush.bf16.msra.mxu0 %v1294
    %1309 = vmatmul.bf16.gmra.mxu0 %v1299
    %v1310 = vpop.f32.mrf.mxu0
    %v1311 = vadd.f32 %v1284, %v1310
    %v1312 = vpop.f32.mrf.mxu0
    %v1313 = vadd.f32 %v1284, %v1312
    %1314 = vdwg.mxu0
    %v1316 = vperm.slane %v1215, 0
    %v1322 = vunpack.c.l.b16 %v1211
    %v1323 = vunpack.c.l.b16 %v1212
    %v1324 = vunpack.c.l.b16 %v1213
    %v1325 = vunpack.c.l.b16 %v1214
    %v1326 = vpack.c.b16 %v1323, %v1322
    %v1327 = vpack.c.b16 %v1325, %v1324
    %1330 = vmatpush.bf16.msra.mxu0 0
    %1331 = vmatpush.bf16.msra.mxu0 0
    %1332 = vmatpush.bf16.msra.mxu0 0
    %1333 = vmatpush.bf16.msra.mxu0 0
    %1334 = vmatpush.bf16.msra.mxu0 0
    %1335 = vmatpush.bf16.msra.mxu0 0
    %1336 = vmatpush.bf16.msra.mxu0 %v1327
    %1337 = vmatpush.bf16.msra.mxu0 %v1326
    %1338 = vmatmul.bf16.gmra.mxu0 %v1299
    %v1339 = vpop.f32.mrf.mxu0
    %v1340 = vadd.f32 %v1316, %v1339
    %v1341 = vpop.f32.mrf.mxu0
    %v1342 = vadd.f32 %v1316, %v1341
    %1343 = vdwg.mxu0
    %v1344 = vxor.u32 %v1340, 2147483648
    %v1345 = vxor.u32 %v1342, 2147483648
    %v1346 = vmul.f32 %v1344, 1.442695
    %v1347 = vpow.pop %v1346
    %v1348 = vmul.f32 %v1345, 1.442695
    %v1349 = vpow.pop %v1348
    %v1350 = vadd.f32 %v1347, 1.0
    %v1351 = vadd.f32 %v1349, 1.0
    %v1352 = vrcp.pop %v1350
    %v1353 = vmul.f32 %v1350, %v1352
    %v1354 = vsub.f32 1.0, %v1353
    %v1355 = vmul.f32 %v1352, %v1354
    %v1356 = vadd.f32 %v1352, %v1355
    %vm1357 = vweird.f32 %v1350
    %vm1358 = vweird.f32 %v1352
    %vm1359 = vmor %vm1357, %vm1358
    %v1360 = vsel %vm1359, %v1352, %v1356
    %v1361 = vand.u32 2147483647, %v1350
    %vm1362 = vcmp.eq.f32.partialorder %v1361, 8.507059e+37
    %v1363 = vand.u32 %v1350, 2147483648
    %v1364 = vor.u32 1.1754944e-38, %v1363
    %v1365 = vsel %vm1362, %v1364, %v1360
    %v1366 = vmul.f32 1.0, %v1365
    %v1367 = vrcp.pop %v1351
    %v1368 = vmul.f32 %v1351, %v1367
    %v1369 = vsub.f32 1.0, %v1368
    %v1370 = vmul.f32 %v1367, %v1369
    %v1371 = vadd.f32 %v1367, %v1370
    %vm1372 = vweird.f32 %v1351
    %vm1373 = vweird.f32 %v1367
    %vm1374 = vmor %vm1372, %vm1373
    %v1375 = vsel %vm1374, %v1367, %v1371
    %v1376 = vand.u32 2147483647, %v1351
    %vm1377 = vcmp.eq.f32.partialorder %v1376, 8.507059e+37
    %v1378 = vand.u32 %v1351, 2147483648
    %v1379 = vor.u32 1.1754944e-38, %v1378
    %v1380 = vsel %vm1377, %v1379, %v1375
    %v1381 = vmul.f32 1.0, %v1380
    %v1382 = vmul.f32 %v1311, %v1366
    %v1383 = vmul.f32 %v1313, %v1381
    %vm1384 = vcmask 522240
    %1385 = vst.msk [vmem:[#allocation2] sm:$0x7f] %vm1384, 0.0
    %1386 = vst.msk [vmem:[#allocation2 + $0x18] sm:$0x7f] %vm1384, 0.0
    %1387 = vst.msk [vmem:[#allocation2 + $0xf] sm:$0x7f] %vm1384, 0.0
    %1388 = vst.msk [vmem:[#allocation2 + $0x27] sm:$0x7f] %vm1384, 0.0
    %vm1389 = vcmask 523264
    %1390 = vst.msk [vmem:[#allocation2 + $0x7] sm:$0xff] %vm1389, %v1382
    %1391 = vst.msk [vmem:[#allocation2 + $0x1f] sm:$0xff] %vm1389, %v1383
    %v1392 = vld [vmem:[#allocation2] sm:$0xff]
    %v1393 = vld [vmem:[#allocation2 + $0x18] sm:$0xff]
    %v1394 = vpack.c.bf16 %v1393, %v1392
    %v1395 = vld [vmem:[#allocation3] sm:$0xf]
    %v1396 = vld [vmem:[#allocation3 + $0x4] sm:$0xf]
    %v1397 = vld [vmem:[#allocation3 + $0x8] sm:$0xf]
    %v1398 = vld [vmem:[#allocation3 + $0xc] sm:$0xf]
    %v1399 = vld [vmem:[#allocation3 + $0x10] sm:$0xf]
    %v1400 = vld [vmem:[#allocation3 + $0x14] sm:$0xf]
    %v1401 = vld [vmem:[#allocation3 + $0x18] sm:$0xf]
    %v1402 = vld [vmem:[#allocation3 + $0x1c] sm:$0xf]
    %v1403 = vld [vmem:[#allocation2 + $0x1] sm:$0xff]
    %v1404 = vld [vmem:[#allocation2 + $0x19] sm:$0xff]
    %v1405 = vpack.c.bf16 %v1404, %v1403
    %s1406 = scalar_lea.vmem [#allocation3], 32
    %v1407 = vld [vmem:[%s1406] sm:$0xf]
    %v1408 = vld [vmem:[%s1406 + $0x4] sm:$0xf]
    %v1409 = vld [vmem:[%s1406 + $0x8] sm:$0xf]
    %v1410 = vld [vmem:[%s1406 + $0xc] sm:$0xf]
    %v1411 = vld [vmem:[%s1406 + $0x10] sm:$0xf]
    %v1412 = vld [vmem:[%s1406 + $0x14] sm:$0xf]
    %v1413 = vld [vmem:[%s1406 + $0x18] sm:$0xf]
    %v1414 = vld [vmem:[%s1406 + $0x1c] sm:$0xf]
    %v1415 = vld [vmem:[#allocation2 + $0x2] sm:$0xff]
    %v1416 = vld [vmem:[#allocation2 + $0x1a] sm:$0xff]
    %v1417 = vpack.c.bf16 %v1416, %v1415
    %s1418 = scalar_lea.vmem [#allocation3], 64
    %v1419 = vld [vmem:[%s1418] sm:$0xf]
    %v1420 = vld [vmem:[%s1418 + $0x4] sm:$0xf]
    %v1421 = vld [vmem:[%s1418 + $0x8] sm:$0xf]
    %v1422 = vld [vmem:[%s1418 + $0xc] sm:$0xf]
    %v1423 = vld [vmem:[%s1418 + $0x10] sm:$0xf]
    %v1424 = vld [vmem:[%s1418 + $0x14] sm:$0xf]
    %v1425 = vld [vmem:[%s1418 + $0x18] sm:$0xf]
    %v1426 = vld [vmem:[%s1418 + $0x1c] sm:$0xf]
    %v1435 = vunpack.c.l.b16 %v1419
    %v1436 = vunpack.c.l.b16 %v1420
    %v1437 = vunpack.c.l.b16 %v1421
    %v1438 = vunpack.c.l.b16 %v1422
    %v1439 = vunpack.c.l.b16 %v1423
    %v1440 = vunpack.c.l.b16 %v1424
    %v1441 = vunpack.c.l.b16 %v1425
    %v1442 = vunpack.c.l.b16 %v1426
    %v1443 = vpack.c.b16 %v1436, %v1435
    %v1444 = vpack.c.b16 %v1438, %v1437
    %v1445 = vpack.c.b16 %v1440, %v1439
    %v1446 = vpack.c.b16 %v1442, %v1441
    %v1452 = vsel %vm1389, %v1417, 0
    %1454 = vmatpush.bf16.msra.mxu0 0
    %1455 = vmatpush.bf16.msra.mxu0 0
    %1456 = vmatpush.bf16.msra.mxu0 0
    %1457 = vmatpush.bf16.msra.mxu0 0
    %1458 = vmatpush.bf16.msra.mxu0 %v1446
    %1459 = vmatpush.bf16.msra.mxu0 %v1445
    %1460 = vmatpush.bf16.msra.mxu0 %v1444
    %1461 = vmatpush.bf16.msra.mxu0 %v1443
    %1462 = vmatmul.bf16.gmra.mxu0 %v1452
    %v1463 = vpop.f32.mrf.mxu0
    %v1464 = vadd.f32 0.0, %v1463
    %v1465 = vpop.f32.mrf.mxu0
    %v1466 = vadd.f32 0.0, %v1465
    %1467 = vdwg.mxu0
    %v1476 = vunpack.c.l.b16 %v1395
    %v1477 = vunpack.c.l.b16 %v1396
    %v1478 = vunpack.c.l.b16 %v1397
    %v1479 = vunpack.c.l.b16 %v1398
    %v1480 = vunpack.c.l.b16 %v1399
    %v1481 = vunpack.c.l.b16 %v1400
    %v1482 = vunpack.c.l.b16 %v1401
    %v1483 = vunpack.c.l.b16 %v1402
    %v1484 = vpack.c.b16 %v1477, %v1476
    %v1485 = vpack.c.b16 %v1479, %v1478
    %v1486 = vpack.c.b16 %v1481, %v1480
    %v1487 = vpack.c.b16 %v1483, %v1482
    %v1493 = vsel %vm1389, %v1394, 0
    %1495 = vmatpush.bf16.msra.mxu0 0
    %1496 = vmatpush.bf16.msra.mxu0 0
    %1497 = vmatpush.bf16.msra.mxu0 0
    %1498 = vmatpush.bf16.msra.mxu0 0
    %1499 = vmatpush.bf16.msra.mxu0 %v1487
    %1500 = vmatpush.bf16.msra.mxu0 %v1486
    %1501 = vmatpush.bf16.msra.mxu0 %v1485
    %1502 = vmatpush.bf16.msra.mxu0 %v1484
    %1503 = vmatmul.bf16.gmra.mxu0 %v1493
    %v1504 = vpop.f32.mrf.mxu0
    %v1505 = vadd.f32 %v1464, %v1504
    %v1506 = vpop.f32.mrf.mxu0
    %v1507 = vadd.f32 %v1466, %v1506
    %1508 = vdwg.mxu0
    %v1509 = vld [vmem:[#allocation2 + $0x3] sm:$0xff]
    %v1510 = vld [vmem:[#allocation2 + $0x1b] sm:$0xff]
    %v1511 = vpack.c.bf16 %v1510, %v1509
    %s1512 = scalar_lea.vmem [#allocation3], 96
    %v1513 = vld [vmem:[%s1512] sm:$0xf]
    %v1514 = vld [vmem:[%s1512 + $0x4] sm:$0xf]
    %v1515 = vld [vmem:[%s1512 + $0x8] sm:$0xf]
    %v1516 = vld [vmem:[%s1512 + $0xc] sm:$0xf]
    %v1517 = vld [vmem:[%s1512 + $0x10] sm:$0xf]
    %v1518 = vld [vmem:[%s1512 + $0x14] sm:$0xf]
    %v1519 = vld [vmem:[%s1512 + $0x18] sm:$0xf]
    %v1520 = vld [vmem:[%s1512 + $0x1c] sm:$0xf]
    %v1529 = vunpack.c.l.b16 %v1513
    %v1530 = vunpack.c.l.b16 %v1514
    %v1531 = vunpack.c.l.b16 %v1515
    %v1532 = vunpack.c.l.b16 %v1516
    %v1533 = vunpack.c.l.b16 %v1517
    %v1534 = vunpack.c.l.b16 %v1518
    %v1535 = vunpack.c.l.b16 %v1519
    %v1536 = vunpack.c.l.b16 %v1520
    %v1537 = vpack.c.b16 %v1530, %v1529
    %v1538 = vpack.c.b16 %v1532, %v1531
    %v1539 = vpack.c.b16 %v1534, %v1533
    %v1540 = vpack.c.b16 %v1536, %v1535
    %v1546 = vsel %vm1389, %v1511, 0
    %1548 = vmatpush.bf16.msra.mxu0 0
    %1549 = vmatpush.bf16.msra.mxu0 0
    %1550 = vmatpush.bf16.msra.mxu0 0
    %1551 = vmatpush.bf16.msra.mxu0 0
    %1552 = vmatpush.bf16.msra.mxu0 %v1540
    %1553 = vmatpush.bf16.msra.mxu0 %v1539
    %1554 = vmatpush.bf16.msra.mxu0 %v1538
    %1555 = vmatpush.bf16.msra.mxu0 %v1537
    %1556 = vmatmul.bf16.gmra.mxu0 %v1546
    %v1557 = vpop.f32.mrf.mxu0
    %v1558 = vadd.f32 0.0, %v1557
    %v1559 = vpop.f32.mrf.mxu0
    %v1560 = vadd.f32 0.0, %v1559
    %1561 = vdwg.mxu0
    %v1570 = vunpack.c.l.b16 %v1407
    %v1571 = vunpack.c.l.b16 %v1408
    %v1572 = vunpack.c.l.b16 %v1409
    %v1573 = vunpack.c.l.b16 %v1410
    %v1574 = vunpack.c.l.b16 %v1411
    %v1575 = vunpack.c.l.b16 %v1412
    %v1576 = vunpack.c.l.b16 %v1413
    %v1577 = vunpack.c.l.b16 %v1414
    %v1578 = vpack.c.b16 %v1571, %v1570
    %v1579 = vpack.c.b16 %v1573, %v1572
    %v1580 = vpack.c.b16 %v1575, %v1574
    %v1581 = vpack.c.b16 %v1577, %v1576
    %v1587 = vsel %vm1389, %v1405, 0
    %1589 = vmatpush.bf16.msra.mxu0 0
    %1590 = vmatpush.bf16.msra.mxu0 0
    %1591 = vmatpush.bf16.msra.mxu0 0
    %1592 = vmatpush.bf16.msra.mxu0 0
    %1593 = vmatpush.bf16.msra.mxu0 %v1581
    %1594 = vmatpush.bf16.msra.mxu0 %v1580
    %1595 = vmatpush.bf16.msra.mxu0 %v1579
    %1596 = vmatpush.bf16.msra.mxu0 %v1578
    %1597 = vmatmul.bf16.gmra.mxu0 %v1587
    %v1598 = vpop.f32.mrf.mxu0
    %v1599 = vadd.f32 %v1558, %v1598
    %v1600 = vpop.f32.mrf.mxu0
    %v1601 = vadd.f32 %v1560, %v1600
    %1602 = vdwg.mxu0
    %v1603 = vld [vmem:[#allocation2 + $0x4] sm:$0xff]
    %v1604 = vld [vmem:[#allocation2 + $0x1c] sm:$0xff]
    %v1605 = vpack.c.bf16 %v1604, %v1603
    %s1606 = scalar_lea.vmem [#allocation3], 128
    %v1607 = vld [vmem:[%s1606] sm:$0xf]
    %v1608 = vld [vmem:[%s1606 + $0x4] sm:$0xf]
    %v1609 = vld [vmem:[%s1606 + $0x8] sm:$0xf]
    %v1610 = vld [vmem:[%s1606 + $0xc] sm:$0xf]
    %v1611 = vld [vmem:[%s1606 + $0x10] sm:$0xf]
    %v1612 = vld [vmem:[%s1606 + $0x14] sm:$0xf]
    %v1613 = vld [vmem:[%s1606 + $0x18] sm:$0xf]
    %v1614 = vld [vmem:[%s1606 + $0x1c] sm:$0xf]
    %v1623 = vunpack.c.l.b16 %v1607
    %v1624 = vunpack.c.l.b16 %v1608
    %v1625 = vunpack.c.l.b16 %v1609
    %v1626 = vunpack.c.l.b16 %v1610
    %v1627 = vunpack.c.l.b16 %v1611
    %v1628 = vunpack.c.l.b16 %v1612
    %v1629 = vunpack.c.l.b16 %v1613
    %v1630 = vunpack.c.l.b16 %v1614
    %v1631 = vpack.c.b16 %v1624, %v1623
    %v1632 = vpack.c.b16 %v1626, %v1625
    %v1633 = vpack.c.b16 %v1628, %v1627
    %v1634 = vpack.c.b16 %v1630, %v1629
    %v1640 = vsel %vm1389, %v1605, 0
    %1642 = vmatpush.bf16.msra.mxu0 0
    %1643 = vmatpush.bf16.msra.mxu0 0
    %1644 = vmatpush.bf16.msra.mxu0 0
    %1645 = vmatpush.bf16.msra.mxu0 0
    %1646 = vmatpush.bf16.msra.mxu0 %v1634
    %1647 = vmatpush.bf16.msra.mxu0 %v1633
    %1648 = vmatpush.bf16.msra.mxu0 %v1632
    %1649 = vmatpush.bf16.msra.mxu0 %v1631
    %1650 = vmatmul.bf16.gmra.mxu0 %v1640
    %v1651 = vpop.f32.mrf.mxu0
    %v1652 = vadd.f32 0.0, %v1651
    %v1653 = vpop.f32.mrf.mxu0
    %v1654 = vadd.f32 0.0, %v1653
    %1655 = vdwg.mxu0
    %v1656 = vadd.f32 %v1505, %v1652
    %v1657 = vadd.f32 %v1507, %v1654
    %v1658 = vld [vmem:[#allocation2 + $0x5] sm:$0xff]
    %v1659 = vld [vmem:[#allocation2 + $0x1d] sm:$0xff]
    %v1660 = vpack.c.bf16 %v1659, %v1658
    %s1661 = scalar_lea.vmem [#allocation3], 160
    %v1662 = vld [vmem:[%s1661] sm:$0xf]
    %v1663 = vld [vmem:[%s1661 + $0x4] sm:$0xf]
    %v1664 = vld [vmem:[%s1661 + $0x8] sm:$0xf]
    %v1665 = vld [vmem:[%s1661 + $0xc] sm:$0xf]
    %v1666 = vld [vmem:[%s1661 + $0x10] sm:$0xf]
    %v1667 = vld [vmem:[%s1661 + $0x14] sm:$0xf]
    %v1668 = vld [vmem:[%s1661 + $0x18] sm:$0xf]
    %v1669 = vld [vmem:[%s1661 + $0x1c] sm:$0xf]
    %v1678 = vunpack.c.l.b16 %v1662
    %v1679 = vunpack.c.l.b16 %v1663
    %v1680 = vunpack.c.l.b16 %v1664
    %v1681 = vunpack.c.l.b16 %v1665
    %v1682 = vunpack.c.l.b16 %v1666
    %v1683 = vunpack.c.l.b16 %v1667
    %v1684 = vunpack.c.l.b16 %v1668
    %v1685 = vunpack.c.l.b16 %v1669
    %v1686 = vpack.c.b16 %v1679, %v1678
    %v1687 = vpack.c.b16 %v1681, %v1680
    %v1688 = vpack.c.b16 %v1683, %v1682
    %v1689 = vpack.c.b16 %v1685, %v1684
    %v1695 = vsel %vm1389, %v1660, 0
    %1697 = vmatpush.bf16.msra.mxu0 0
    %1698 = vmatpush.bf16.msra.mxu0 0
    %1699 = vmatpush.bf16.msra.mxu0 0
    %1700 = vmatpush.bf16.msra.mxu0 0
    %1701 = vmatpush.bf16.msra.mxu0 %v1689
    %1702 = vmatpush.bf16.msra.mxu0 %v1688
    %1703 = vmatpush.bf16.msra.mxu0 %v1687
    %1704 = vmatpush.bf16.msra.mxu0 %v1686
    %1705 = vmatmul.bf16.gmra.mxu0 %v1695
    %v1706 = vpop.f32.mrf.mxu0
    %v1707 = vadd.f32 0.0, %v1706
    %v1708 = vpop.f32.mrf.mxu0
    %v1709 = vadd.f32 0.0, %v1708
    %1710 = vdwg.mxu0
    %v1711 = vadd.f32 %v1599, %v1707
    %v1712 = vadd.f32 %v1601, %v1709
    %v1713 = vld [vmem:[#allocation2 + $0x6] sm:$0xff]
    %v1714 = vld [vmem:[#allocation2 + $0x1e] sm:$0xff]
    %v1715 = vpack.c.bf16 %v1714, %v1713
    %s1716 = scalar_lea.vmem [#allocation3], 192
    %v1717 = vld [vmem:[%s1716] sm:$0xf]
    %v1718 = vld [vmem:[%s1716 + $0x4] sm:$0xf]
    %v1719 = vld [vmem:[%s1716 + $0x8] sm:$0xf]
    %v1720 = vld [vmem:[%s1716 + $0xc] sm:$0xf]
    %v1721 = vld [vmem:[%s1716 + $0x10] sm:$0xf]
    %v1722 = vld [vmem:[%s1716 + $0x14] sm:$0xf]
    %v1723 = vld [vmem:[%s1716 + $0x18] sm:$0xf]
    %v1724 = vld [vmem:[%s1716 + $0x1c] sm:$0xf]
    %v1733 = vunpack.c.l.b16 %v1717
    %v1734 = vunpack.c.l.b16 %v1718
    %v1735 = vunpack.c.l.b16 %v1719
    %v1736 = vunpack.c.l.b16 %v1720
    %v1737 = vunpack.c.l.b16 %v1721
    %v1738 = vunpack.c.l.b16 %v1722
    %v1739 = vunpack.c.l.b16 %v1723
    %v1740 = vunpack.c.l.b16 %v1724
    %v1741 = vpack.c.b16 %v1734, %v1733
    %v1742 = vpack.c.b16 %v1736, %v1735
    %v1743 = vpack.c.b16 %v1738, %v1737
    %v1744 = vpack.c.b16 %v1740, %v1739
    %v1750 = vsel %vm1389, %v1715, 0
    %1752 = vmatpush.bf16.msra.mxu0 0
    %1753 = vmatpush.bf16.msra.mxu0 0
    %1754 = vmatpush.bf16.msra.mxu0 0
    %1755 = vmatpush.bf16.msra.mxu0 0
    %1756 = vmatpush.bf16.msra.mxu0 %v1744
    %1757 = vmatpush.bf16.msra.mxu0 %v1743
    %1758 = vmatpush.bf16.msra.mxu0 %v1742
    %1759 = vmatpush.bf16.msra.mxu0 %v1741
    %1760 = vmatmul.bf16.gmra.mxu0 %v1750
    %v1761 = vpop.f32.mrf.mxu0
    %v1762 = vadd.f32 0.0, %v1761
    %v1763 = vpop.f32.mrf.mxu0
    %v1764 = vadd.f32 0.0, %v1763
    %1765 = vdwg.mxu0
    %v1766 = vadd.f32 %v1656, %v1762
    %v1767 = vadd.f32 %v1657, %v1764
    %v1768 = vld [vmem:[#allocation2 + $0x7] sm:$0xff]
    %v1769 = vld [vmem:[#allocation2 + $0x1f] sm:$0xff]
    %v1770 = vpack.c.bf16 %v1769, %v1768
    %s1771 = scalar_lea.vmem [#allocation3], 224
    %v1772 = vld [vmem:[%s1771] sm:$0xf]
    %v1773 = vld [vmem:[%s1771 + $0x4] sm:$0xf]
    %v1774 = vld [vmem:[%s1771 + $0x8] sm:$0xf]
    %v1775 = vld [vmem:[%s1771 + $0xc] sm:$0xf]
    %v1776 = vld [vmem:[%s1771 + $0x10] sm:$0xf]
    %v1777 = vld [vmem:[%s1771 + $0x14] sm:$0xf]
    %v1778 = vld [vmem:[%s1771 + $0x18] sm:$0xf]
    %v1779 = vld [vmem:[%s1771 + $0x1c] sm:$0xf]
    %v1788 = vunpack.c.l.b16 %v1772
    %v1789 = vunpack.c.l.b16 %v1773
    %v1790 = vunpack.c.l.b16 %v1774
    %v1791 = vunpack.c.l.b16 %v1775
    %v1792 = vunpack.c.l.b16 %v1776
    %v1793 = vunpack.c.l.b16 %v1777
    %v1794 = vunpack.c.l.b16 %v1778
    %v1795 = vunpack.c.l.b16 %v1779
    %v1796 = vpack.c.b16 %v1789, %v1788
    %v1797 = vpack.c.b16 %v1791, %v1790
    %v1798 = vpack.c.b16 %v1793, %v1792
    %v1799 = vpack.c.b16 %v1795, %v1794
    %v1805 = vsel %vm1389, %v1770, 0
    %1807 = vmatpush.bf16.msra.mxu0 0
    %1808 = vmatpush.bf16.msra.mxu0 0
    %1809 = vmatpush.bf16.msra.mxu0 0
    %1810 = vmatpush.bf16.msra.mxu0 0
    %1811 = vmatpush.bf16.msra.mxu0 %v1799
    %1812 = vmatpush.bf16.msra.mxu0 %v1798
    %1813 = vmatpush.bf16.msra.mxu0 %v1797
    %1814 = vmatpush.bf16.msra.mxu0 %v1796
    %1815 = vmatmul.bf16.gmra.mxu0 %v1805
    %v1816 = vpop.f32.mrf.mxu0
    %v1817 = vadd.f32 0.0, %v1816
    %v1818 = vpop.f32.mrf.mxu0
    %v1819 = vadd.f32 0.0, %v1818
    %1820 = vdwg.mxu0
    %v1821 = vadd.f32 %v1711, %v1817
    %v1822 = vadd.f32 %v1712, %v1819
    %v1823 = vld [vmem:[#allocation2 + $0x8] sm:$0xff]
    %v1824 = vld [vmem:[#allocation2 + $0x20] sm:$0xff]
    %v1825 = vpack.c.bf16 %v1824, %v1823
    %s1826 = scalar_lea.vmem [#allocation3], 256
    %v1827 = vld [vmem:[%s1826] sm:$0xf]
    %v1828 = vld [vmem:[%s1826 + $0x4] sm:$0xf]
    %v1829 = vld [vmem:[%s1826 + $0x8] sm:$0xf]
    %v1830 = vld [vmem:[%s1826 + $0xc] sm:$0xf]
    %v1831 = vld [vmem:[%s1826 + $0x10] sm:$0xf]
    %v1832 = vld [vmem:[%s1826 + $0x14] sm:$0xf]
    %v1833 = vld [vmem:[%s1826 + $0x18] sm:$0xf]
    %v1834 = vld [vmem:[%s1826 + $0x1c] sm:$0xf]
    %v1843 = vunpack.c.l.b16 %v1827
    %v1844 = vunpack.c.l.b16 %v1828
    %v1845 = vunpack.c.l.b16 %v1829
    %v1846 = vunpack.c.l.b16 %v1830
    %v1847 = vunpack.c.l.b16 %v1831
    %v1848 = vunpack.c.l.b16 %v1832
    %v1849 = vunpack.c.l.b16 %v1833
    %v1850 = vunpack.c.l.b16 %v1834
    %v1851 = vpack.c.b16 %v1844, %v1843
    %v1852 = vpack.c.b16 %v1846, %v1845
    %v1853 = vpack.c.b16 %v1848, %v1847
    %v1854 = vpack.c.b16 %v1850, %v1849
    %v1860 = vsel %vm1389, %v1825, 0
    %1862 = vmatpush.bf16.msra.mxu0 0
    %1863 = vmatpush.bf16.msra.mxu0 0
    %1864 = vmatpush.bf16.msra.mxu0 0
    %1865 = vmatpush.bf16.msra.mxu0 0
    %1866 = vmatpush.bf16.msra.mxu0 %v1854
    %1867 = vmatpush.bf16.msra.mxu0 %v1853
    %1868 = vmatpush.bf16.msra.mxu0 %v1852
    %1869 = vmatpush.bf16.msra.mxu0 %v1851
    %1870 = vmatmul.bf16.gmra.mxu0 %v1860
    %v1871 = vpop.f32.mrf.mxu0
    %v1872 = vadd.f32 0.0, %v1871
    %v1873 = vpop.f32.mrf.mxu0
    %v1874 = vadd.f32 0.0, %v1873
    %1875 = vdwg.mxu0
    %v1876 = vadd.f32 %v1766, %v1872
    %v1877 = vadd.f32 %v1767, %v1874
    %v1878 = vld [vmem:[#allocation2 + $0x9] sm:$0xff]
    %v1879 = vld [vmem:[#allocation2 + $0x21] sm:$0xff]
    %v1880 = vpack.c.bf16 %v1879, %v1878
    %s1881 = scalar_lea.vmem [#allocation3], 288
    %v1882 = vld [vmem:[%s1881] sm:$0xf]
    %v1883 = vld [vmem:[%s1881 + $0x4] sm:$0xf]
    %v1884 = vld [vmem:[%s1881 + $0x8] sm:$0xf]
    %v1885 = vld [vmem:[%s1881 + $0xc] sm:$0xf]
    %v1886 = vld [vmem:[%s1881 + $0x10] sm:$0xf]
    %v1887 = vld [vmem:[%s1881 + $0x14] sm:$0xf]
    %v1888 = vld [vmem:[%s1881 + $0x18] sm:$0xf]
    %v1889 = vld [vmem:[%s1881 + $0x1c] sm:$0xf]
    %v1898 = vunpack.c.l.b16 %v1882
    %v1899 = vunpack.c.l.b16 %v1883
    %v1900 = vunpack.c.l.b16 %v1884
    %v1901 = vunpack.c.l.b16 %v1885
    %v1902 = vunpack.c.l.b16 %v1886
    %v1903 = vunpack.c.l.b16 %v1887
    %v1904 = vunpack.c.l.b16 %v1888
    %v1905 = vunpack.c.l.b16 %v1889
    %v1906 = vpack.c.b16 %v1899, %v1898
    %v1907 = vpack.c.b16 %v1901, %v1900
    %v1908 = vpack.c.b16 %v1903, %v1902
    %v1909 = vpack.c.b16 %v1905, %v1904
    %v1915 = vsel %vm1389, %v1880, 0
    %1917 = vmatpush.bf16.msra.mxu0 0
    %1918 = vmatpush.bf16.msra.mxu0 0
    %1919 = vmatpush.bf16.msra.mxu0 0
    %1920 = vmatpush.bf16.msra.mxu0 0
    %1921 = vmatpush.bf16.msra.mxu0 %v1909
    %1922 = vmatpush.bf16.msra.mxu0 %v1908
    %1923 = vmatpush.bf16.msra.mxu0 %v1907
    %1924 = vmatpush.bf16.msra.mxu0 %v1906
    %1925 = vmatmul.bf16.gmra.mxu0 %v1915
    %v1926 = vpop.f32.mrf.mxu0
    %v1927 = vadd.f32 0.0, %v1926
    %v1928 = vpop.f32.mrf.mxu0
    %v1929 = vadd.f32 0.0, %v1928
    %1930 = vdwg.mxu0
    %v1931 = vadd.f32 %v1821, %v1927
    %v1932 = vadd.f32 %v1822, %v1929
    %v1933 = vld [vmem:[#allocation2 + $0xa] sm:$0xff]
    %v1934 = vld [vmem:[#allocation2 + $0x22] sm:$0xff]
    %v1935 = vpack.c.bf16 %v1934, %v1933
    %s1936 = scalar_lea.vmem [#allocation3], 320
    %v1937 = vld [vmem:[%s1936] sm:$0xf]
    %v1938 = vld [vmem:[%s1936 + $0x4] sm:$0xf]
    %v1939 = vld [vmem:[%s1936 + $0x8] sm:$0xf]
    %v1940 = vld [vmem:[%s1936 + $0xc] sm:$0xf]
    %v1941 = vld [vmem:[%s1936 + $0x10] sm:$0xf]
    %v1942 = vld [vmem:[%s1936 + $0x14] sm:$0xf]
    %v1943 = vld [vmem:[%s1936 + $0x18] sm:$0xf]
    %v1944 = vld [vmem:[%s1936 + $0x1c] sm:$0xf]
    %v1953 = vunpack.c.l.b16 %v1937
    %v1954 = vunpack.c.l.b16 %v1938
    %v1955 = vunpack.c.l.b16 %v1939
    %v1956 = vunpack.c.l.b16 %v1940
    %v1957 = vunpack.c.l.b16 %v1941
    %v1958 = vunpack.c.l.b16 %v1942
    %v1959 = vunpack.c.l.b16 %v1943
    %v1960 = vunpack.c.l.b16 %v1944
    %v1961 = vpack.c.b16 %v1954, %v1953
    %v1962 = vpack.c.b16 %v1956, %v1955
    %v1963 = vpack.c.b16 %v1958, %v1957
    %v1964 = vpack.c.b16 %v1960, %v1959
    %v1970 = vsel %vm1389, %v1935, 0
    %1972 = vmatpush.bf16.msra.mxu0 0
    %1973 = vmatpush.bf16.msra.mxu0 0
    %1974 = vmatpush.bf16.msra.mxu0 0
    %1975 = vmatpush.bf16.msra.mxu0 0
    %1976 = vmatpush.bf16.msra.mxu0 %v1964
    %1977 = vmatpush.bf16.msra.mxu0 %v1963
    %1978 = vmatpush.bf16.msra.mxu0 %v1962
    %1979 = vmatpush.bf16.msra.mxu0 %v1961
    %1980 = vmatmul.bf16.gmra.mxu0 %v1970
    %v1981 = vpop.f32.mrf.mxu0
    %v1982 = vadd.f32 0.0, %v1981
    %v1983 = vpop.f32.mrf.mxu0
    %v1984 = vadd.f32 0.0, %v1983
    %1985 = vdwg.mxu0
    %v1986 = vadd.f32 %v1876, %v1982
    %v1987 = vadd.f32 %v1877, %v1984
    %v1988 = vld [vmem:[#allocation2 + $0xb] sm:$0xff]
    %v1989 = vld [vmem:[#allocation2 + $0x23] sm:$0xff]
    %v1990 = vpack.c.bf16 %v1989, %v1988
    %s1991 = scalar_lea.vmem [#allocation3], 352
    %v1992 = vld [vmem:[%s1991] sm:$0xf]
    %v1993 = vld [vmem:[%s1991 + $0x4] sm:$0xf]
    %v1994 = vld [vmem:[%s1991 + $0x8] sm:$0xf]
    %v1995 = vld [vmem:[%s1991 + $0xc] sm:$0xf]
    %v1996 = vld [vmem:[%s1991 + $0x10] sm:$0xf]
    %v1997 = vld [vmem:[%s1991 + $0x14] sm:$0xf]
    %v1998 = vld [vmem:[%s1991 + $0x18] sm:$0xf]
    %v1999 = vld [vmem:[%s1991 + $0x1c] sm:$0xf]
    %v2008 = vunpack.c.l.b16 %v1992
    %v2009 = vunpack.c.l.b16 %v1993
    %v2010 = vunpack.c.l.b16 %v1994
    %v2011 = vunpack.c.l.b16 %v1995
    %v2012 = vunpack.c.l.b16 %v1996
    %v2013 = vunpack.c.l.b16 %v1997
    %v2014 = vunpack.c.l.b16 %v1998
    %v2015 = vunpack.c.l.b16 %v1999
    %v2016 = vpack.c.b16 %v2009, %v2008
    %v2017 = vpack.c.b16 %v2011, %v2010
    %v2018 = vpack.c.b16 %v2013, %v2012
    %v2019 = vpack.c.b16 %v2015, %v2014
    %v2025 = vsel %vm1389, %v1990, 0
    %2027 = vmatpush.bf16.msra.mxu0 0
    %2028 = vmatpush.bf16.msra.mxu0 0
    %2029 = vmatpush.bf16.msra.mxu0 0
    %2030 = vmatpush.bf16.msra.mxu0 0
    %2031 = vmatpush.bf16.msra.mxu0 %v2019
    %2032 = vmatpush.bf16.msra.mxu0 %v2018
    %2033 = vmatpush.bf16.msra.mxu0 %v2017
    %2034 = vmatpush.bf16.msra.mxu0 %v2016
    %2035 = vmatmul.bf16.gmra.mxu0 %v2025
    %v2036 = vpop.f32.mrf.mxu0
    %v2037 = vadd.f32 0.0, %v2036
    %v2038 = vpop.f32.mrf.mxu0
    %v2039 = vadd.f32 0.0, %v2038
    %2040 = vdwg.mxu0
    %v2041 = vadd.f32 %v1931, %v2037
    %v2042 = vadd.f32 %v1932, %v2039
    %v2043 = vld [vmem:[#allocation2 + $0xc] sm:$0xff]
    %v2044 = vld [vmem:[#allocation2 + $0x24] sm:$0xff]
    %v2045 = vpack.c.bf16 %v2044, %v2043
    %s2046 = scalar_lea.vmem [#allocation3], 384
    %v2047 = vld [vmem:[%s2046] sm:$0xf]
    %v2048 = vld [vmem:[%s2046 + $0x4] sm:$0xf]
    %v2049 = vld [vmem:[%s2046 + $0x8] sm:$0xf]
    %v2050 = vld [vmem:[%s2046 + $0xc] sm:$0xf]
    %v2051 = vld [vmem:[%s2046 + $0x10] sm:$0xf]
    %v2052 = vld [vmem:[%s2046 + $0x14] sm:$0xf]
    %v2053 = vld [vmem:[%s2046 + $0x18] sm:$0xf]
    %v2054 = vld [vmem:[%s2046 + $0x1c] sm:$0xf]
    %v2063 = vunpack.c.l.b16 %v2047
    %v2064 = vunpack.c.l.b16 %v2048
    %v2065 = vunpack.c.l.b16 %v2049
    %v2066 = vunpack.c.l.b16 %v2050
    %v2067 = vunpack.c.l.b16 %v2051
    %v2068 = vunpack.c.l.b16 %v2052
    %v2069 = vunpack.c.l.b16 %v2053
    %v2070 = vunpack.c.l.b16 %v2054
    %v2071 = vpack.c.b16 %v2064, %v2063
    %v2072 = vpack.c.b16 %v2066, %v2065
    %v2073 = vpack.c.b16 %v2068, %v2067
    %v2074 = vpack.c.b16 %v2070, %v2069
    %v2080 = vsel %vm1389, %v2045, 0
    %2082 = vmatpush.bf16.msra.mxu0 0
    %2083 = vmatpush.bf16.msra.mxu0 0
    %2084 = vmatpush.bf16.msra.mxu0 0
    %2085 = vmatpush.bf16.msra.mxu0 0
    %2086 = vmatpush.bf16.msra.mxu0 %v2074
    %2087 = vmatpush.bf16.msra.mxu0 %v2073
    %2088 = vmatpush.bf16.msra.mxu0 %v2072
    %2089 = vmatpush.bf16.msra.mxu0 %v2071
    %2090 = vmatmul.bf16.gmra.mxu0 %v2080
    %v2091 = vpop.f32.mrf.mxu0
    %v2092 = vadd.f32 0.0, %v2091
    %v2093 = vpop.f32.mrf.mxu0
    %v2094 = vadd.f32 0.0, %v2093
    %2095 = vdwg.mxu0
    %v2096 = vadd.f32 %v1986, %v2092
    %v2097 = vadd.f32 %v1987, %v2094
    %v2098 = vld [vmem:[#allocation2 + $0xd] sm:$0xff]
    %v2099 = vld [vmem:[#allocation2 + $0x25] sm:$0xff]
    %v2100 = vpack.c.bf16 %v2099, %v2098
    %s2101 = scalar_lea.vmem [#allocation3], 416
    %v2102 = vld [vmem:[%s2101] sm:$0xf]
    %v2103 = vld [vmem:[%s2101 + $0x4] sm:$0xf]
    %v2104 = vld [vmem:[%s2101 + $0x8] sm:$0xf]
    %v2105 = vld [vmem:[%s2101 + $0xc] sm:$0xf]
    %v2106 = vld [vmem:[%s2101 + $0x10] sm:$0xf]
    %v2107 = vld [vmem:[%s2101 + $0x14] sm:$0xf]
    %v2108 = vld [vmem:[%s2101 + $0x18] sm:$0xf]
    %v2109 = vld [vmem:[%s2101 + $0x1c] sm:$0xf]
    %v2118 = vunpack.c.l.b16 %v2102
    %v2119 = vunpack.c.l.b16 %v2103
    %v2120 = vunpack.c.l.b16 %v2104
    %v2121 = vunpack.c.l.b16 %v2105
    %v2122 = vunpack.c.l.b16 %v2106
    %v2123 = vunpack.c.l.b16 %v2107
    %v2124 = vunpack.c.l.b16 %v2108
    %v2125 = vunpack.c.l.b16 %v2109
    %v2126 = vpack.c.b16 %v2119, %v2118
    %v2127 = vpack.c.b16 %v2121, %v2120
    %v2128 = vpack.c.b16 %v2123, %v2122
    %v2129 = vpack.c.b16 %v2125, %v2124
    %v2135 = vsel %vm1389, %v2100, 0
    %2137 = vmatpush.bf16.msra.mxu0 0
    %2138 = vmatpush.bf16.msra.mxu0 0
    %2139 = vmatpush.bf16.msra.mxu0 0
    %2140 = vmatpush.bf16.msra.mxu0 0
    %2141 = vmatpush.bf16.msra.mxu0 %v2129
    %2142 = vmatpush.bf16.msra.mxu0 %v2128
    %2143 = vmatpush.bf16.msra.mxu0 %v2127
    %2144 = vmatpush.bf16.msra.mxu0 %v2126
    %2145 = vmatmul.bf16.gmra.mxu0 %v2135
    %v2146 = vpop.f32.mrf.mxu0
    %v2147 = vadd.f32 0.0, %v2146
    %v2148 = vpop.f32.mrf.mxu0
    %v2149 = vadd.f32 0.0, %v2148
    %2150 = vdwg.mxu0
    %v2151 = vadd.f32 %v2041, %v2147
    %v2152 = vadd.f32 %v2042, %v2149
    %v2153 = vld [vmem:[#allocation2 + $0xe] sm:$0xff]
    %v2154 = vld [vmem:[#allocation2 + $0x26] sm:$0xff]
    %v2155 = vpack.c.bf16 %v2154, %v2153
    %s2156 = scalar_lea.vmem [#allocation3], 448
    %v2157 = vld [vmem:[%s2156] sm:$0xf]
    %v2158 = vld [vmem:[%s2156 + $0x4] sm:$0xf]
    %v2159 = vld [vmem:[%s2156 + $0x8] sm:$0xf]
    %v2160 = vld [vmem:[%s2156 + $0xc] sm:$0xf]
    %v2161 = vld [vmem:[%s2156 + $0x10] sm:$0xf]
    %v2162 = vld [vmem:[%s2156 + $0x14] sm:$0xf]
    %v2163 = vld [vmem:[%s2156 + $0x18] sm:$0xf]
    %v2164 = vld [vmem:[%s2156 + $0x1c] sm:$0xf]
    %v2173 = vunpack.c.l.b16 %v2157
    %v2174 = vunpack.c.l.b16 %v2158
    %v2175 = vunpack.c.l.b16 %v2159
    %v2176 = vunpack.c.l.b16 %v2160
    %v2177 = vunpack.c.l.b16 %v2161
    %v2178 = vunpack.c.l.b16 %v2162
    %v2179 = vunpack.c.l.b16 %v2163
    %v2180 = vunpack.c.l.b16 %v2164
    %v2181 = vpack.c.b16 %v2174, %v2173
    %v2182 = vpack.c.b16 %v2176, %v2175
    %v2183 = vpack.c.b16 %v2178, %v2177
    %v2184 = vpack.c.b16 %v2180, %v2179
    %v2190 = vsel %vm1389, %v2155, 0
    %2192 = vmatpush.bf16.msra.mxu0 0
    %2193 = vmatpush.bf16.msra.mxu0 0
    %2194 = vmatpush.bf16.msra.mxu0 0
    %2195 = vmatpush.bf16.msra.mxu0 0
    %2196 = vmatpush.bf16.msra.mxu0 %v2184
    %2197 = vmatpush.bf16.msra.mxu0 %v2183
    %2198 = vmatpush.bf16.msra.mxu0 %v2182
    %2199 = vmatpush.bf16.msra.mxu0 %v2181
    %2200 = vmatmul.bf16.gmra.mxu0 %v2190
    %v2201 = vpop.f32.mrf.mxu0
    %v2202 = vadd.f32 0.0, %v2201
    %v2203 = vpop.f32.mrf.mxu0
    %v2204 = vadd.f32 0.0, %v2203
    %2205 = vdwg.mxu0
    %v2206 = vadd.f32 %v2096, %v2202
    %v2207 = vadd.f32 %v2097, %v2204
    %v2208 = vadd.f32 %v2206, %v2151
    %v2209 = vadd.f32 %v2207, %v2152
    %v2211 = vperm.slane %v1216, 0
    %v2213 = vadd.f32 %v2208, %v2211
    %v2214 = vadd.f32 %v2209, %v2211
    %v2216 = vperm.slane %v1217, 0
    %v2218 = vmul.f32 %v2213, %v2216
    %v2219 = vmul.f32 %v2214, %v2216
    %v2221 = vperm.slane %v1218, 0
    %v2223 = vadd.f32 %v2218, %v2221
    %v2224 = vadd.f32 %v2219, %v2221
    %v2225 = vxor.u32 %v2223, 2147483648
    %v2226 = vxor.u32 %v2224, 2147483648
    %v2227 = vmul.f32 %v2225, 1.442695
    %v2228 = vpow.pop %v2227
    %v2229 = vmul.f32 %v2226, 1.442695
    %v2230 = vpow.pop %v2229
    %v2231 = vadd.f32 %v2228, 1.0
    %v2232 = vadd.f32 %v2230, 1.0
    %v2233 = vrcp.pop %v2231
    %v2234 = vmul.f32 %v2231, %v2233
    %v2235 = vsub.f32 1.0, %v2234
    %v2236 = vmul.f32 %v2233, %v2235
    %v2237 = vadd.f32 %v2233, %v2236
    %vm2238 = vweird.f32 %v2231
    %vm2239 = vweird.f32 %v2233
    %vm2240 = vmor %vm2238, %vm2239
    %v2241 = vsel %vm2240, %v2233, %v2237
    %v2242 = vand.u32 2147483647, %v2231
    %vm2243 = vcmp.eq.f32.partialorder %v2242, 8.507059e+37
    %v2244 = vand.u32 %v2231, 2147483648
    %v2245 = vor.u32 1.1754944e-38, %v2244
    %v2246 = vsel %vm2243, %v2245, %v2241
    %v2247 = vmul.f32 1.0, %v2246
    %v2248 = vrcp.pop %v2232
    %v2249 = vmul.f32 %v2232, %v2248
    %v2250 = vsub.f32 1.0, %v2249
    %v2251 = vmul.f32 %v2248, %v2250
    %v2252 = vadd.f32 %v2248, %v2251
    %vm2253 = vweird.f32 %v2232
    %vm2254 = vweird.f32 %v2248
    %vm2255 = vmor %vm2253, %vm2254
    %v2256 = vsel %vm2255, %v2248, %v2252
    %v2257 = vand.u32 2147483647, %v2232
    %vm2258 = vcmp.eq.f32.partialorder %v2257, 8.507059e+37
    %v2259 = vand.u32 %v2232, 2147483648
    %v2260 = vor.u32 1.1754944e-38, %v2259
    %v2261 = vsel %vm2258, %v2260, %v2256
    %v2262 = vmul.f32 1.0, %v2261
    %v2263 = vmul.f32 %v2223, %v2247
    %v2264 = vmul.f32 %v2224, %v2262
    %v2265 = vpack.c.bf16 %v2264, %v2263
    %v2267 = vperm.slane %v1227, 0
    %v2277 = vunpack.c.l.b16 %v1219
    %v2278 = vunpack.c.l.b16 %v1220
    %v2279 = vunpack.c.l.b16 %v1221
    %v2280 = vunpack.c.l.b16 %v1222
    %v2281 = vunpack.c.l.b16 %v1223
    %v2282 = vunpack.c.l.b16 %v1224
    %v2283 = vunpack.c.l.b16 %v1225
    %v2284 = vunpack.c.l.b16 %v1226
    %v2285 = vpack.c.b16 %v2278, %v2277
    %v2286 = vpack.c.b16 %v2280, %v2279
    %v2287 = vpack.c.b16 %v2282, %v2281
    %v2288 = vpack.c.b16 %v2284, %v2283
    %v2294 = vsel %vm1389, %v2265, 0
    %2296 = vmatpush.bf16.msra.mxu0 0
    %2297 = vmatpush.bf16.msra.mxu0 0
    %2298 = vmatpush.bf16.msra.mxu0 0
    %2299 = vmatpush.bf16.msra.mxu0 0
    %2300 = vmatpush.bf16.msra.mxu0 %v2288
    %2301 = vmatpush.bf16.msra.mxu0 %v2287
    %2302 = vmatpush.bf16.msra.mxu0 %v2286
    %2303 = vmatpush.bf16.msra.mxu0 %v2285
    %2304 = vmatmul.bf16.gmra.mxu0 %v2294
    %v2305 = vpop.f32.mrf.mxu0
    %v2306 = vadd.f32 %v2267, %v2305
    %v2307 = vpop.f32.mrf.mxu0
    %v2308 = vadd.f32 %v2267, %v2307
    %2309 = vdwg.mxu0
    %v2310 = vadd.f32 %v1202, %v2306
    %v2311 = vadd.f32 %v1203, %v2308
    %v2312 = vld [vmem:[%s63] sm:$0x1]
    %v2313 = vld [vmem:[%s65] sm:$0x1]
    %v2314 = vld [vmem:[%s67] sm:$0xf]
    %v2315 = vld [vmem:[%s67 + $0x4] sm:$0xf]
    %v2316 = vld [vmem:[%s67 + $0x8] sm:$0xf]
    %v2317 = vld [vmem:[%s67 + $0xc] sm:$0xf]
    %v2318 = vld [vmem:[%s69] sm:$0x1]
    %v2319 = vld [vmem:[%s71] sm:$0xf]
    %v2320 = vld [vmem:[%s71 + $0x4] sm:$0xf]
    %v2321 = vld [vmem:[%s71 + $0x8] sm:$0xf]
    %v2322 = vld [vmem:[%s71 + $0xc] sm:$0xf]
    %v2323 = vld [vmem:[#allocation5] sm:$0x1]
    %v2324 = vld [vmem:[%s75] sm:$0xf]
    %v2325 = vld [vmem:[%s75 + $0x4] sm:$0xf]
    %v2326 = vld [vmem:[%s75 + $0x8] sm:$0xf]
    %v2327 = vld [vmem:[%s75 + $0xc] sm:$0xf]
    %v2328 = vld [vmem:[%s75 + $0x10] sm:$0xf]
    %v2329 = vld [vmem:[%s75 + $0x14] sm:$0xf]
    %v2330 = vld [vmem:[%s75 + $0x18] sm:$0xf]
    %v2331 = vld [vmem:[%s75 + $0x1c] sm:$0xf]
    %v2332 = vld [vmem:[%s75 + $0x20] sm:$0xf]
    %v2333 = vld [vmem:[%s75 + $0x24] sm:$0xf]
    %v2334 = vld [vmem:[%s75 + $0x28] sm:$0xf]
    %v2335 = vld [vmem:[%s75 + $0x2c] sm:$0xf]
    %v2336 = vld [vmem:[%s75 + $0x30] sm:$0xf]
    %v2337 = vld [vmem:[%s75 + $0x34] sm:$0xf]
    %v2338 = vld [vmem:[%s75 + $0x38] sm:$0xf]
    %v2339 = vld [vmem:[%s75 + $0x3c] sm:$0xf]
    %v2340 = vld [vmem:[#allocation7] sm:$0x1]
    %v2341 = vsel %vm272, %v2310, 0.0
    %2342 = vadd.xlane.f32.xlu0 %v2341
    %v2343 = vpop.xlane.xlu0 %2342
    %v2344 = vsel %vm272, %v2311, 0.0
    %2345 = vadd.xlane.f32.xlu0 %v2344
    %v2346 = vpop.xlane.xlu0 %2345
    %v2347 = vmul.f32 %v2343, %v285
    %v2348 = vmul.f32 %v2346, %v285
    %v2349 = vsub.f32 %v2310, %v2347
    %v2350 = vsub.f32 %v2311, %v2348
    %v2351 = vmul.f32 %v2349, %v2349
    %v2352 = vmul.f32 %v2350, %v2350
    %v2353 = vsel %vm272, %v2351, 0.0
    %2354 = vadd.xlane.f32.xlu0 %v2353
    %v2355 = vpop.xlane.xlu0 %2354
    %v2356 = vsel %vm272, %v2352, 0.0
    %2357 = vadd.xlane.f32.xlu0 %v2356
    %v2358 = vpop.xlane.xlu0 %2357
    %v2359 = vmul.f32 %v2355, %v285
    %v2360 = vmul.f32 %v2358, %v285
    %v2361 = vadd.f32 %v2359, 1e-05
    %v2362 = vadd.f32 %v2360, 1e-05
    %v2363 = vrsqrt.pop %v2361
    %v2364 = vmul.f32 %v2363, %v2361
    %v2365 = vmul.f32 %v2364, %v2363
    %v2366 = vmul.f32 0.5, %v2365
    %v2367 = vsub.f32 1.5, %v2366
    %v2368 = vmul.f32 %v2363, %v2367
    %vm2369 = vweird.f32 %v2361
    %vm2370 = vweird.f32 %v2363
    %vm2371 = vmor %vm2369, %vm2370
    %v2372 = vsel %vm2371, %v2363, %v2368
    %v2373 = vrsqrt.pop %v2362
    %v2374 = vmul.f32 %v2373, %v2362
    %v2375 = vmul.f32 %v2374, %v2373
    %v2376 = vmul.f32 0.5, %v2375
    %v2377 = vsub.f32 1.5, %v2376
    %v2378 = vmul.f32 %v2373, %v2377
    %vm2379 = vweird.f32 %v2362
    %vm2380 = vweird.f32 %v2373
    %vm2381 = vmor %vm2379, %vm2380
    %v2382 = vsel %vm2381, %v2373, %v2378
    %v2383 = vmul.f32 %v2349, %v2372
    %v2384 = vmul.f32 %v2350, %v2382
    %v2386 = vperm.slane %v2312, 0
    %v2388 = vmul.f32 %v2383, %v2386
    %v2389 = vmul.f32 %v2384, %v2386
    %v2391 = vperm.slane %v2313, 0
    %v2393 = vadd.f32 %v2388, %v2391
    %v2394 = vadd.f32 %v2389, %v2391
    %v2395 = vpack.c.bf16 %v2394, %v2393
    %v2397 = vperm.slane %v2318, 0
    %v2403 = vunpack.c.l.b16 %v2314
    %v2404 = vunpack.c.l.b16 %v2315
    %v2405 = vunpack.c.l.b16 %v2316
    %v2406 = vunpack.c.l.b16 %v2317
    %v2407 = vpack.c.b16 %v2404, %v2403
    %v2408 = vpack.c.b16 %v2406, %v2405
    %v2412 = vsel %vm272, %v2395, 0
    %2414 = vmatpush.bf16.msra.mxu0 0
    %2415 = vmatpush.bf16.msra.mxu0 0
    %2416 = vmatpush.bf16.msra.mxu0 0
    %2417 = vmatpush.bf16.msra.mxu0 0
    %2418 = vmatpush.bf16.msra.mxu0 0
    %2419 = vmatpush.bf16.msra.mxu0 0
    %2420 = vmatpush.bf16.msra.mxu0 %v2408
    %2421 = vmatpush.bf16.msra.mxu0 %v2407
    %2422 = vmatmul.bf16.gmra.mxu0 %v2412
    %v2423 = vpop.f32.mrf.mxu0
    %v2424 = vadd.f32 %v2397, %v2423
    %v2425 = vpop.f32.mrf.mxu0
    %v2426 = vadd.f32 %v2397, %v2425
    %2427 = vdwg.mxu0
    %v2428 = vxor.u32 %v2424, 2147483648
    %v2429 = vxor.u32 %v2426, 2147483648
    %v2430 = vmul.f32 %v2428, 1.442695
    %v2431 = vpow.pop %v2430
    %v2432 = vmul.f32 %v2429, 1.442695
    %v2433 = vpow.pop %v2432
    %v2434 = vadd.f32 %v2431, 1.0
    %v2435 = vadd.f32 %v2433, 1.0
    %v2436 = vrcp.pop %v2434
    %v2437 = vmul.f32 %v2434, %v2436
    %v2438 = vsub.f32 1.0, %v2437
    %v2439 = vmul.f32 %v2436, %v2438
    %v2440 = vadd.f32 %v2436, %v2439
    %vm2441 = vweird.f32 %v2434
    %vm2442 = vweird.f32 %v2436
    %vm2443 = vmor %vm2441, %vm2442
    %v2444 = vsel %vm2443, %v2436, %v2440
    %v2445 = vand.u32 2147483647, %v2434
    %vm2446 = vcmp.eq.f32.partialorder %v2445, 8.507059e+37
    %v2447 = vand.u32 %v2434, 2147483648
    %v2448 = vor.u32 1.1754944e-38, %v2447
    %v2449 = vsel %vm2446, %v2448, %v2444
    %v2450 = vmul.f32 1.0, %v2449
    %v2451 = vrcp.pop %v2435
    %v2452 = vmul.f32 %v2435, %v2451
    %v2453 = vsub.f32 1.0, %v2452
    %v2454 = vmul.f32 %v2451, %v2453
    %v2455 = vadd.f32 %v2451, %v2454
    %vm2456 = vweird.f32 %v2435
    %vm2457 = vweird.f32 %v2451
    %vm2458 = vmor %vm2456, %vm2457
    %v2459 = vsel %vm2458, %v2451, %v2455
    %v2460 = vand.u32 2147483647, %v2435
    %vm2461 = vcmp.eq.f32.partialorder %v2460, 8.507059e+37
    %v2462 = vand.u32 %v2435, 2147483648
    %v2463 = vor.u32 1.1754944e-38, %v2462
    %v2464 = vsel %vm2461, %v2463, %v2459
    %v2465 = vmul.f32 1.0, %v2464
    %v2466 = vmul.f32 %v2424, %v2450
    %v2467 = vmul.f32 %v2426, %v2465
    %v2469 = vperm.slane %v2323, 0
    %v2475 = vunpack.c.l.b16 %v2319
    %v2476 = vunpack.c.l.b16 %v2320
    %v2477 = vunpack.c.l.b16 %v2321
    %v2478 = vunpack.c.l.b16 %v2322
    %v2479 = vpack.c.b16 %v2476, %v2475
    %v2480 = vpack.c.b16 %v2478, %v2477
    %2483 = vmatpush.bf16.msra.mxu0 0
    %2484 = vmatpush.bf16.msra.mxu0 0
    %2485 = vmatpush.bf16.msra.mxu0 0
    %2486 = vmatpush.bf16.msra.mxu0 0
    %2487 = vmatpush.bf16.msra.mxu0 0
    %2488 = vmatpush.bf16.msra.mxu0 0
    %2489 = vmatpush.bf16.msra.mxu0 %v2480
    %2490 = vmatpush.bf16.msra.mxu0 %v2479
    %2491 = vmatmul.bf16.gmra.mxu0 %v2412
    %v2492 = vpop.f32.mrf.mxu0
    %v2493 = vadd.f32 %v2469, %v2492
    %v2494 = vpop.f32.mrf.mxu0
    %v2495 = vadd.f32 %v2469, %v2494
    %2496 = vdwg.mxu0
    %v2497 = vmul.f32 %v2466, %v2493
    %v2498 = vmul.f32 %v2467, %v2495
    %v2499 = vpack.c.bf16 %v2498, %v2497
    %v2501 = vperm.slane %v2340, 0
    %v2519 = vunpack.c.l.b16 %v2324
    %v2520 = vunpack.c.l.b16 %v2325
    %v2521 = vunpack.c.l.b16 %v2326
    %v2522 = vunpack.c.l.b16 %v2327
    %v2523 = vunpack.c.l.b16 %v2328
    %v2524 = vunpack.c.l.b16 %v2329
    %v2525 = vunpack.c.l.b16 %v2330
    %v2526 = vunpack.c.l.b16 %v2331
    %v2527 = vunpack.c.l.b16 %v2332
    %v2528 = vunpack.c.l.b16 %v2333
    %v2529 = vunpack.c.l.b16 %v2334
    %v2530 = vunpack.c.l.b16 %v2335
    %v2531 = vunpack.c.l.b16 %v2336
    %v2532 = vunpack.c.l.b16 %v2337
    %v2533 = vunpack.c.l.b16 %v2338
    %v2534 = vunpack.c.l.b16 %v2339
    %v2535 = vpack.c.b16 %v2520, %v2519
    %v2536 = vpack.c.b16 %v2522, %v2521
    %v2537 = vpack.c.b16 %v2524, %v2523
    %v2538 = vpack.c.b16 %v2526, %v2525
    %v2539 = vpack.c.b16 %v2528, %v2527
    %v2540 = vpack.c.b16 %v2530, %v2529
    %v2541 = vpack.c.b16 %v2532, %v2531
    %v2542 = vpack.c.b16 %v2534, %v2533
    %2551 = vmatpush.bf16.msra.mxu0 %v2542
    %2552 = vmatpush.bf16.msra.mxu0 %v2541
    %2553 = vmatpush.bf16.msra.mxu0 %v2540
    %2554 = vmatpush.bf16.msra.mxu0 %v2539
    %2555 = vmatpush.bf16.msra.mxu0 %v2538
    %2556 = vmatpush.bf16.msra.mxu0 %v2537
    %2557 = vmatpush.bf16.msra.mxu0 %v2536
    %2558 = vmatpush.bf16.msra.mxu0 %v2535
    %2559 = vmatmul.bf16.gmra.mxu0 %v2499
    %v2560 = vpop.f32.mrf.mxu0
    %v2561 = vadd.f32 %v2501, %v2560
    %v2562 = vpop.f32.mrf.mxu0
    %v2563 = vadd.f32 %v2501, %v2562
    %2564 = vdwg.mxu0
    %v2565 = vmul.f32 %v2561, 0.5
    %v2566 = vmul.f32 %v2563, 0.5
    %v2567 = vadd.f32 %v2310, %v2565
    %v2568 = vadd.f32 %v2311, %v2566
    %v2569 = vld [vmem:[#allocation8] sm:$0x1]
    %v2570 = vld [vmem:[#allocation10] sm:$0x1]
    %v2571 = vsel %vm272, %v2567, 0.0
    %2572 = vadd.xlane.f32.xlu0 %v2571
    %v2573 = vpop.xlane.xlu0 %2572
    %v2574 = vsel %vm272, %v2568, 0.0
    %2575 = vadd.xlane.f32.xlu0 %v2574
    %v2576 = vpop.xlane.xlu0 %2575
    %v2577 = vmul.f32 %v2573, %v285
    %v2578 = vmul.f32 %v2576, %v285
    %v2579 = vsub.f32 %v2567, %v2577
    %v2580 = vsub.f32 %v2568, %v2578
    %v2581 = vmul.f32 %v2579, %v2579
    %v2582 = vmul.f32 %v2580, %v2580
    %v2583 = vsel %vm272, %v2581, 0.0
    %2584 = vadd.xlane.f32.xlu0 %v2583
    %v2585 = vpop.xlane.xlu0 %2584
    %v2586 = vsel %vm272, %v2582, 0.0
    %2587 = vadd.xlane.f32.xlu0 %v2586
    %v2588 = vpop.xlane.xlu0 %2587
    %v2589 = vmul.f32 %v2585, %v285
    %v2590 = vmul.f32 %v2588, %v285
    %v2591 = vadd.f32 %v2589, 1e-05
    %v2592 = vadd.f32 %v2590, 1e-05
    %v2593 = vrsqrt.pop %v2591
    %v2594 = vmul.f32 %v2593, %v2591
    %v2595 = vmul.f32 %v2594, %v2593
    %v2596 = vmul.f32 0.5, %v2595
    %v2597 = vsub.f32 1.5, %v2596
    %v2598 = vmul.f32 %v2593, %v2597
    %vm2599 = vweird.f32 %v2591
    %vm2600 = vweird.f32 %v2593
    %vm2601 = vmor %vm2599, %vm2600
    %v2602 = vsel %vm2601, %v2593, %v2598
    %v2603 = vrsqrt.pop %v2592
    %v2604 = vmul.f32 %v2603, %v2592
    %v2605 = vmul.f32 %v2604, %v2603
    %v2606 = vmul.f32 0.5, %v2605
    %v2607 = vsub.f32 1.5, %v2606
    %v2608 = vmul.f32 %v2603, %v2607
    %vm2609 = vweird.f32 %v2592
    %vm2610 = vweird.f32 %v2603
    %vm2611 = vmor %vm2609, %vm2610
    %v2612 = vsel %vm2611, %v2603, %v2608
    %v2613 = vmul.f32 %v2579, %v2602
    %v2614 = vmul.f32 %v2580, %v2612
    %v2616 = vperm.slane %v2569, 0
    %v2618 = vmul.f32 %v2613, %v2616
    %v2619 = vmul.f32 %v2614, %v2616
    %v2621 = vperm.slane %v2570, 0
    %v2623 = vadd.f32 %v2618, %v2621
    %v2624 = vadd.f32 %v2619, %v2621
    %2625 = vst.msk [vmem:[%s83] sm:$0xff] %vm272, %v2623
    %2626 = vst.msk [vmem:[%s83 + $0x8] sm:$0xff] %vm272, %v2624
    // Predicated region
    $region186: #{streaming_conformer_forward.5} parent=1 // pred_check
      _
    $region187: #{streaming_conformer_forward.5} parent=1 // pred_check_branch
      %2628 = sbr.rel (0) target = $region189
    $region188: #{streaming_conformer_forward.5} parent=1 // pred_region
      _
    $region189: #{streaming_conformer_forward.5} parent=1 // pred_fallthru
      _
    // Predicated region
    $region190: #{streaming_conformer_forward.5} parent=1 // pred_check
      _
    $region191: #{streaming_conformer_forward.5} parent=1 // pred_check_branch
      %2630 = sbr.rel (0) target = $region193
    $region192: #{streaming_conformer_forward.5} parent=1 // pred_region
      _
    $region193: #{streaming_conformer_forward.5} parent=1 // pred_fallthru
      _
    %2631 = vsyncpa [#allocation4], 1
    %2632 = vsyncpa [#allocation6], 1
    %2633 = vsyncpa [#allocation9], 1

</llo_original>
